<compile_context>
chip_gen: v7x
topology: tpu7x:2x2x1
jax: 0.10.0
libtpu: 0.0.40
codegen_flags: <defaults>
</compile_context>

<pallas_src>
import jax
import jax.numpy as jnp
from jax.experimental import pallas as pl
from jax.experimental.pallas import tpu as pltpu


# ------------------------------ helpers ------------------------------------ #

def _im2col3x3(xpad, H, W):
    """xpad: (H+2, W+2, Cin) value -> (H*W, 9*Cin) patches, (dh, dw, cin) order."""
    Cin = xpad.shape[-1]
    cols = [xpad[dh:dh + H, dw:dw + W, :].reshape(H * W, Cin)
            for dh in range(3) for dw in range(3)]
    return jnp.concatenate(cols, axis=-1)


# ------------------------------- kernels ----------------------------------- #

def precompute_gates_kernel(x_ref, w_in_ref, b_in_ref, w_x_ref, b_x_ref,
                            gx_ref, xpad_scr, fpad_scr):
    # x_ref:    (1, H, W, Cin)  one (batch, time) frame
    # w_in_ref: (9*Cin, D) bf16 ; b_in_ref: (1, D) f32      (inconv)
    # w_x_ref:  (2, 9*D, 4C) bf16 ; b_x_ref: (2, 1, 4C) f32 (x-path cell conv)
    # gx_ref:   (2, 1, H*W, 4C) f32  x-path gate pre-activations (+bias)
    _, H, W, _ = x_ref.shape
    D = w_in_ref.shape[-1]

    # in-kernel zero-halo padding of the input frame
    xpad_scr[...] = jnp.zeros_like(xpad_scr)
    xpad_scr[1:H + 1, 1:W + 1, :] = x_ref[0]

    # inconv: Conv3d(Cin, D, (1,3,3)) == per-timestep 3x3 conv (im2col matmul)
    patches = _im2col3x3(xpad_scr[...], H, W).astype(jnp.bfloat16)
    feat = jnp.dot(patches, w_in_ref[...],
                   preferred_element_type=jnp.float32) + b_in_ref[...]

    # pad features + im2col once more for the ConvLSTM x-path conv
    fpad_scr[...] = jnp.zeros_like(fpad_scr)
    fpad_scr[1:H + 1, 1:W + 1, :] = feat.reshape(H, W, D)
    fpatches = _im2col3x3(fpad_scr[...], H, W).astype(jnp.bfloat16)

    for d in range(2):  # d=0 forward cell, d=1 backward cell
        gx_ref[d, 0] = (jnp.dot(fpatches, w_x_ref[d],
                                preferred_element_type=jnp.float32)
                        + b_x_ref[d])


def bilstm_recurrence_kernel(seq_ref, gx_ref, w_h_ref, h_out_ref,
                             hpad_scr, c_scr):
    # seq_ref:   (B,) int32 scalar-prefetch (sequence lengths)
    # gx_ref:    (1, 1, 1, H*W, 4C) f32  x-path gates for this (d, b, t)
    # w_h_ref:   (1, 9C, 4C) bf16        h-path conv weights for direction d
    # h_out_ref: (1, 1, H*W, C)          hidden at t = seq_len - 1
    # hpad_scr:  (H+2, W+2, C) f32       hidden with zero halo (carried over t)
    # c_scr:     (H*W, C) f32            cell state (carried over t)
    b = pl.program_id(1)
    t = pl.program_id(2)
    Hp, Wp, C = hpad_scr.shape
    H, W = Hp - 2, Wp - 2

    @pl.when(t == 0)
    def _():
        hpad_scr[...] = jnp.zeros_like(hpad_scr)
        c_scr[...] = jnp.zeros_like(c_scr)

    hpatches = _im2col3x3(hpad_scr[...], H, W).astype(jnp.bfloat16)
    gates = gx_ref[0, 0, 0] + jnp.dot(hpatches, w_h_ref[0],
                                      preferred_element_type=jnp.float32)

    # gate order [i, f, o, g]; batch the three sigmoids into one wide call
    sig = jax.nn.sigmoid(gates[:, :3 * C])
    g = jnp.tanh(gates[:, 3 * C:])
    i = sig[:, 0 * C:1 * C]
    f = sig[:, 1 * C:2 * C]
    o = sig[:, 2 * C:3 * C]

    c_new = f * c_scr[...] + i * g
    h_new = o * jnp.tanh(c_new)

    c_scr[...] = c_new
    hpad_scr[1:H + 1, 1:W + 1, :] = h_new.reshape(H, W, C)

    @pl.when(t == seq_ref[b] - 1)
    def _():
        h_out_ref[0, 0] = h_new.astype(h_out_ref.dtype)


def outconv_classifier_kernel(h_ref, mask_ref, w_out_ref, b_out_ref,
                              logit_ref, spad_scr):
    # h_ref:     (2, 1, H*W, C)  final hidden states (fwd, bwd)
    # mask_ref:  (1, H*W, 1) f32
    # w_out_ref: (9*2C, K) bf16 ; b_out_ref: (1, K) f32
    # logit_ref: (1, 1, K)
    Hp, Wp, C2 = spad_scr.shape
    H, W = Hp - 2, Wp - 2
    C = C2 // 2

    state = jnp.concatenate(
        [h_ref[0, 0].reshape(H, W, C), h_ref[1, 0].reshape(H, W, C)], axis=-1)
    spad_scr[...] = jnp.zeros_like(spad_scr)
    spad_scr[1:H + 1, 1:W + 1, :] = state

    patches = _im2col3x3(spad_scr[...], H, W).astype(jnp.bfloat16)
    z = jnp.dot(patches, w_out_ref[...],
                preferred_element_type=jnp.float32) + b_out_ref[...]

    # log_softmax over classes
    z = z - jnp.max(z, axis=-1, keepdims=True)
    logp = z - jnp.log(jnp.sum(jnp.exp(z), axis=-1, keepdims=True))

    # masked spatial mean -> per-sample multilabel logits
    m = mask_ref[0]                                   # (H*W, 1)
    num_locs = jnp.sum(m, keepdims=True)              # (1, 1)
    pooled = jnp.sum(logp * m, axis=0, keepdims=True) / num_locs
    logit_ref[0] = pooled.astype(logit_ref.dtype)


# --------------------------- pallas_call wrappers --------------------------- #

def run_precompute_gates(x_bt, w_in, b_in, w_x, b_cell):
    BT, H, W, Cin = x_bt.shape
    D = w_in.shape[-1]
    G = w_x.shape[-1]          # 4 * rnn hidden
    return pl.pallas_call(
        precompute_gates_kernel,
        out_shape=jax.ShapeDtypeStruct((2, BT, H * W, G), jnp.float32),
        grid=(BT,),
        in_specs=[
            pl.BlockSpec((1, H, W, Cin), lambda n: (n, 0, 0, 0)),
            pl.BlockSpec((9 * Cin, D), lambda n: (0, 0)),
            pl.BlockSpec((1, D), lambda n: (0, 0)),
            pl.BlockSpec((2, 9 * D, G), lambda n: (0, 0, 0)),
            pl.BlockSpec((2, 1, G), lambda n: (0, 0, 0)),
        ],
        out_specs=pl.BlockSpec((2, 1, H * W, G), lambda n: (0, n, 0, 0)),
        scratch_shapes=[
            pltpu.VMEM((H + 2, W + 2, Cin), jnp.float32),
            pltpu.VMEM((H + 2, W + 2, D), jnp.float32),
        ],
        compiler_params=pltpu.CompilerParams(
            dimension_semantics=("parallel",)),
    )(x_bt, w_in, b_in, w_x, b_cell)


def run_bilstm(gx, w_h, seq_lengths, *, B, T, H, W):
    C = w_h.shape[-1] // 4
    cost = pl.CostEstimate(
        flops=2 * 2 * B * T * H * W * (9 * C) * (4 * C),
        transcendentals=2 * B * T * H * W * 5 * C,
        bytes_accessed=gx.size * gx.dtype.itemsize + w_h.size * 2
                       + 2 * B * H * W * C * 4)
    return pl.pallas_call(
        bilstm_recurrence_kernel,
        out_shape=jax.ShapeDtypeStruct((2, B, H * W, C), jnp.float32),
        grid_spec=pltpu.PrefetchScalarGridSpec(
            num_scalar_prefetch=1,
            grid=(2, B, T),
            in_specs=[
                # forward (d=0) reads block t, backward (d=1) reads T-1-t
                pl.BlockSpec(
                    (1, 1, 1, H * W, 4 * C),
                    lambda d, b, t, seq: (d, b, t + d * (T - 1 - 2 * t), 0, 0)),
                pl.BlockSpec((1, 9 * C, 4 * C),
                             lambda d, b, t, seq: (d, 0, 0)),
            ],
            out_specs=pl.BlockSpec((1, 1, H * W, C),
                                   lambda d, b, t, seq: (d, b, 0, 0)),
            scratch_shapes=[
                pltpu.VMEM((H + 2, W + 2, C), jnp.float32),  # hidden + halo
                pltpu.VMEM((H * W, C), jnp.float32),         # cell state
            ]),
        compiler_params=pltpu.CompilerParams(
            dimension_semantics=("parallel", "parallel", "arbitrary")),
        cost_estimate=cost,
    )(seq_lengths, gx, w_h)


def run_outconv_classifier(h_last, mask, w_out, b_out, *, H, W):
    _, B, HW, C = h_last.shape
    K = w_out.shape[-1]
    out = pl.pallas_call(
        outconv_classifier_kernel,
        out_shape=jax.ShapeDtypeStruct((B, 1, K), jnp.float32),
        grid=(B,),
        in_specs=[
            pl.BlockSpec((2, 1, HW, C), lambda b: (0, b, 0, 0)),
            pl.BlockSpec((1, HW, 1), lambda b: (b, 0, 0)),
            pl.BlockSpec((9 * 2 * C, K), lambda b: (0, 0)),
            pl.BlockSpec((1, K), lambda b: (0, 0)),
        ],
        out_specs=pl.BlockSpec((1, 1, K), lambda b: (b, 0, 0)),
        scratch_shapes=[pltpu.VMEM((H + 2, W + 2, 2 * C), jnp.float32)],
        compiler_params=pltpu.CompilerParams(
            dimension_semantics=("parallel",)),
    )(h_last, mask, w_out, b_out)
    return out[:, 0, :]


# ------------------------------- model glue --------------------------------- #

def init_params(key, *, input_dim=4, conv3d_dim=32, rnn_hidden=32, nclasses=8):
    ks = jax.random.split(key, 8)
    s = 0.1
    C, D = rnn_hidden, conv3d_dim

    def conv_w(k, cin, cout):
        return s * jax.random.normal(k, (3, 3, cin, cout), jnp.float32)

    w_in = conv_w(ks[0], input_dim, D)
    b_in = s * jax.random.normal(ks[1], (1, D), jnp.float32)

    # ConvLSTM cells: Conv2d(D + C, 4C, 3x3, padding=1, bias=True) over cat([x, h]).
    w_cell_f = conv_w(ks[2], D + C, 4 * C)
    w_cell_b = conv_w(ks[3], D + C, 4 * C)
    b_cell_f = s * jax.random.normal(ks[4], (1, 4 * C), jnp.float32)
    b_cell_b = s * jax.random.normal(ks[5], (1, 4 * C), jnp.float32)

    w_out = conv_w(ks[6], 2 * C, nclasses)
    b_out = s * jax.random.normal(ks[7], (1, nclasses), jnp.float32)

    def split_xh(w):  # split cat([x, h]) conv weight along Cin BEFORE flattening
        wx = w[:, :, :D, :].reshape(9 * D, 4 * C)
        wh = w[:, :, D:, :].reshape(9 * C, 4 * C)
        return wx, wh

    wx_f, wh_f = split_xh(w_cell_f)
    wx_b, wh_b = split_xh(w_cell_b)

    return dict(
        w_in=w_in.reshape(9 * input_dim, D).astype(jnp.bfloat16),
        b_in=b_in,
        w_x=jnp.stack([wx_f, wx_b], 0).astype(jnp.bfloat16),    # (2, 9D, 4C)
        w_h=jnp.stack([wh_f, wh_b], 0).astype(jnp.bfloat16),    # (2, 9C, 4C)
        b_cell=jnp.stack([b_cell_f, b_cell_b], 0),              # (2, 1, 4C)
        w_out=w_out.reshape(9 * 2 * C, nclasses).astype(jnp.bfloat16),
        b_out=b_out,
    )


def birnn_classifier(params, x, unk_masks, seq_lengths):
    """x: (B, T, Cin, H, W); unk_masks: (B, H, W, 1) bool; seq_lengths: (B,).
    Returns (B, nclasses) masked-mean log_softmax logits (classifier head)."""
    B, T, Cin, H, W = x.shape
    C = params["w_h"].shape[-1] // 4

    # NTCHW -> channels-last per (batch, time) frame
    x_bt = jnp.transpose(x, (0, 1, 3, 4, 2)).reshape(B * T, H, W, Cin)

    # K1: inconv + x-path gate pre-activations for both directions
    gx = run_precompute_gates(x_bt, params["w_in"], params["b_in"],
                              params["w_x"], params["b_cell"])
    gx = gx.reshape(2, B, T, H * W, 4 * C)

    # K2: fused bidirectional ConvLSTM recurrence; hidden at t = seq_len - 1
    h_last = run_bilstm(gx, params["w_h"], seq_lengths.astype(jnp.int32),
                        B=B, T=T, H=H, W=W)

    # K3: outconv + log_softmax + masked spatial mean -> (B, nclasses)
    mask = unk_masks.astype(jnp.float32).reshape(B, H * W, 1)
    return run_outconv_classifier(h_last, mask, params["w_out"],
                                  params["b_out"], H=H, W=W)


if __name__ == "__main__":
    key = jax.random.PRNGKey(0)
    kx, km, kp = jax.random.split(key, 3)

    B, T, Cin, H, W = 2, 8, 4, 16, 16
    hidden, nclasses = 32, 8

    x = jax.random.normal(kx, (B, T, Cin, H, W), jnp.float32)
    unk_masks = jax.random.uniform(km, (B, H, W, 1)) > 0.3
    seq_lengths = jnp.full((B,), T, jnp.int32)

    params = init_params(kp, input_dim=Cin, conv3d_dim=hidden,
                         rnn_hidden=hidden, nclasses=nclasses)

    logits = jax.jit(birnn_classifier)(params, x, unk_masks, seq_lengths)
    logits = jax.block_until_ready(logits)

    assert logits.shape == (B, nclasses), logits.shape
    assert bool(jnp.all(jnp.isfinite(logits)))
    print("KERNEL_OK")
</pallas_src>

<mosaic_0001>
module attributes {stable_mosaic.version = 11 : i64} {
  func.func @precompute_gates_kernel(%arg0: i32, %arg1: memref<1x16x16x4xf32, #tpu.memory_space<vmem>>, %arg2: memref<36x32xbf16, #tpu.memory_space<vmem>>, %arg3: memref<1x32xf32, #tpu.memory_space<vmem>>, %arg4: memref<2x288x128xbf16, #tpu.memory_space<vmem>>, %arg5: memref<2x1x128xf32, #tpu.memory_space<vmem>>, %arg6: memref<2x1x256x128xf32, #tpu.memory_space<vmem>>, %arg7: memref<18x18x4xf32, #tpu.memory_space<vmem>>, %arg8: memref<18x18x32xf32, #tpu.memory_space<vmem>>) attributes {dimension_semantics = [#tpu.dimension_semantics<parallel>], iteration_bounds = array<i64: 16>, scalar_prefetch = 0 : i64, scratch_operands = 2 : i64, tpu.core_type = #tpu.core_type<tc>, window_params = [{transform_indices = @transform_0, window_bounds = array<i64: 1, 16, 16, 4>}, {pipeline_mode = #tpu.pipeline_mode<synchronous>, transform_indices = @transform_1, window_bounds = array<i64: 36, 32>}, {pipeline_mode = #tpu.pipeline_mode<synchronous>, transform_indices = @transform_2, window_bounds = array<i64: 1, 32>}, {pipeline_mode = #tpu.pipeline_mode<synchronous>, transform_indices = @transform_3, window_bounds = array<i64: 2, 288, 128>}, {pipeline_mode = #tpu.pipeline_mode<synchronous>, transform_indices = @transform_4, window_bounds = array<i64: 2, 1, 128>}, {transform_indices = @transform_5, window_bounds = array<i64: 2, 1, 256, 128>}]} {
    %cst = arith.constant 0.000000e+00 : f32
    %0 = vector.broadcast %cst : f32 to vector<18x18x4xf32>
    %c0 = arith.constant 0 : index
    %c0_0 = arith.constant 0 : index
    %c0_1 = arith.constant 0 : index
    %1 = vector.load %arg7[%c0, %c0_0, %c0_1] : memref<18x18x4xf32, #tpu.memory_space<vmem>>, vector<18x18x4xf32>
    tpu.vector_store %arg7[%c0, %c0_0, %c0_1], %0 {strides = array<i32>} : memref<18x18x4xf32, #tpu.memory_space<vmem>>, vector<18x18x4xf32>,
    %c0_2 = arith.constant 0 : index
    %c0_3 = arith.constant 0 : index
    %c0_4 = arith.constant 0 : index
    %c0_5 = arith.constant 0 : index
    %2 = vector.load %arg1[%c0_2, %c0_3, %c0_4, %c0_5] : memref<1x16x16x4xf32, #tpu.memory_space<vmem>>, vector<1x16x16x4xf32>
    %3 = vector.shape_cast %2 : vector<1x16x16x4xf32> to vector<16x16x4xf32>
    %c1 = arith.constant 1 : index
    %c1_6 = arith.constant 1 : index
    %c0_7 = arith.constant 0 : index
    %4 = vector.load %arg7[%c1, %c1_6, %c0_7] : memref<18x18x4xf32, #tpu.memory_space<vmem>>, vector<16x16x4xf32>
    tpu.vector_store %arg7[%c1, %c1_6, %c0_7], %3 {strides = array<i32>} : memref<18x18x4xf32, #tpu.memory_space<vmem>>, vector<16x16x4xf32>,
    %c0_8 = arith.constant 0 : index
    %c0_9 = arith.constant 0 : index
    %c0_10 = arith.constant 0 : index
    %5 = vector.load %arg7[%c0_8, %c0_9, %c0_10] : memref<18x18x4xf32, #tpu.memory_space<vmem>>, vector<18x18x4xf32>
    %6 = vector.extract_strided_slice %5 {offsets = [0, 0, 0], sizes = [16, 16, 4], strides = [1, 1, 1]} : vector<18x18x4xf32> to vector<16x16x4xf32>
    %7 = vector.shape_cast %6 : vector<16x16x4xf32> to vector<256x4xf32>
    %8 = vector.extract_strided_slice %5 {offsets = [0, 1, 0], sizes = [16, 16, 4], strides = [1, 1, 1]} : vector<18x18x4xf32> to vector<16x16x4xf32>
    %9 = vector.shape_cast %8 : vector<16x16x4xf32> to vector<256x4xf32>
    %10 = vector.extract_strided_slice %5 {offsets = [0, 2, 0], sizes = [16, 16, 4], strides = [1, 1, 1]} : vector<18x18x4xf32> to vector<16x16x4xf32>
    %11 = vector.shape_cast %10 : vector<16x16x4xf32> to vector<256x4xf32>
    %12 = vector.extract_strided_slice %5 {offsets = [1, 0, 0], sizes = [16, 16, 4], strides = [1, 1, 1]} : vector<18x18x4xf32> to vector<16x16x4xf32>
    %13 = vector.shape_cast %12 : vector<16x16x4xf32> to vector<256x4xf32>
    %14 = vector.extract_strided_slice %5 {offsets = [1, 1, 0], sizes = [16, 16, 4], strides = [1, 1, 1]} : vector<18x18x4xf32> to vector<16x16x4xf32>
    %15 = vector.shape_cast %14 : vector<16x16x4xf32> to vector<256x4xf32>
    %16 = vector.extract_strided_slice %5 {offsets = [1, 2, 0], sizes = [16, 16, 4], strides = [1, 1, 1]} : vector<18x18x4xf32> to vector<16x16x4xf32>
    %17 = vector.shape_cast %16 : vector<16x16x4xf32> to vector<256x4xf32>
    %18 = vector.extract_strided_slice %5 {offsets = [2, 0, 0], sizes = [16, 16, 4], strides = [1, 1, 1]} : vector<18x18x4xf32> to vector<16x16x4xf32>
    %19 = vector.shape_cast %18 : vector<16x16x4xf32> to vector<256x4xf32>
    %20 = vector.extract_strided_slice %5 {offsets = [2, 1, 0], sizes = [16, 16, 4], strides = [1, 1, 1]} : vector<18x18x4xf32> to vector<16x16x4xf32>
    %21 = vector.shape_cast %20 : vector<16x16x4xf32> to vector<256x4xf32>
    %22 = vector.extract_strided_slice %5 {offsets = [2, 2, 0], sizes = [16, 16, 4], strides = [1, 1, 1]} : vector<18x18x4xf32> to vector<16x16x4xf32>
    %23 = vector.shape_cast %22 : vector<16x16x4xf32> to vector<256x4xf32>
    %24 = tpu.concatenate %7, %9, %11, %13, %15, %17, %19, %21, %23 in 1 : vector<256x4xf32>, vector<256x4xf32>, vector<256x4xf32>, vector<256x4xf32>, vector<256x4xf32>, vector<256x4xf32>, vector<256x4xf32>, vector<256x4xf32>, vector<256x4xf32> -> vector<256x36xf32>
    %25 = arith.truncf %24 : vector<256x36xf32> to vector<256x36xbf16>
    %c0_11 = arith.constant 0 : index
    %c0_12 = arith.constant 0 : index
    %26 = vector.load %arg2[%c0_11, %c0_12] : memref<36x32xbf16, #tpu.memory_space<vmem>>, vector<36x32xbf16>
    %cst_13 = arith.constant dense<0.000000e+00> : vector<256x32xf32>
    %27 = tpu.matmul %25, %26, %cst_13 {dimension_numbers = #tpu.dot_dimension_numbers<[1], [0], [0], [1], [0, 0, 1, 1], [], []>} : vector<256x36xbf16>, vector<36x32xbf16>, vector<256x32xf32> -> vector<256x32xf32>
    %c0_14 = arith.constant 0 : index
    %c0_15 = arith.constant 0 : index
    %28 = vector.load %arg3[%c0_14, %c0_15] : memref<1x32xf32, #tpu.memory_space<vmem>>, vector<1x32xf32>
    %29 = vector.broadcast %28 : vector<1x32xf32> to vector<256x32xf32>
    %30 = arith.addf %27, %29 : vector<256x32xf32>
    %cst_16 = arith.constant 0.000000e+00 : f32
    %31 = vector.broadcast %cst_16 : f32 to vector<18x18x32xf32>
    %c0_17 = arith.constant 0 : index
    %c0_18 = arith.constant 0 : index
    %c0_19 = arith.constant 0 : index
    %32 = vector.load %arg8[%c0_17, %c0_18, %c0_19] : memref<18x18x32xf32, #tpu.memory_space<vmem>>, vector<18x18x32xf32>
    tpu.vector_store %arg8[%c0_17, %c0_18, %c0_19], %31 {strides = array<i32>} : memref<18x18x32xf32, #tpu.memory_space<vmem>>, vector<18x18x32xf32>,
    %33 = vector.shape_cast %30 : vector<256x32xf32> to vector<16x16x32xf32>
    %c1_20 = arith.constant 1 : index
    %c1_21 = arith.constant 1 : index
    %c0_22 = arith.constant 0 : index
    %34 = vector.load %arg8[%c1_20, %c1_21, %c0_22] : memref<18x18x32xf32, #tpu.memory_space<vmem>>, vector<16x16x32xf32>
    tpu.vector_store %arg8[%c1_20, %c1_21, %c0_22], %33 {strides = array<i32>} : memref<18x18x32xf32, #tpu.memory_space<vmem>>, vector<16x16x32xf32>,
    %c0_23 = arith.constant 0 : index
    %c0_24 = arith.constant 0 : index
    %c0_25 = arith.constant 0 : index
    %35 = vector.load %arg8[%c0_23, %c0_24, %c0_25] : memref<18x18x32xf32, #tpu.memory_space<vmem>>, vector<18x18x32xf32>
    %36 = vector.extract_strided_slice %35 {offsets = [0, 0, 0], sizes = [16, 16, 32], strides = [1, 1, 1]} : vector<18x18x32xf32> to vector<16x16x32xf32>
    %37 = vector.shape_cast %36 : vector<16x16x32xf32> to vector<256x32xf32>
    %38 = vector.extract_strided_slice %35 {offsets = [0, 1, 0], sizes = [16, 16, 32], strides = [1, 1, 1]} : vector<18x18x32xf32> to vector<16x16x32xf32>
    %39 = vector.shape_cast %38 : vector<16x16x32xf32> to vector<256x32xf32>
    %40 = vector.extract_strided_slice %35 {offsets = [0, 2, 0], sizes = [16, 16, 32], strides = [1, 1, 1]} : vector<18x18x32xf32> to vector<16x16x32xf32>
    %41 = vector.shape_cast %40 : vector<16x16x32xf32> to vector<256x32xf32>
    %42 = vector.extract_strided_slice %35 {offsets = [1, 0, 0], sizes = [16, 16, 32], strides = [1, 1, 1]} : vector<18x18x32xf32> to vector<16x16x32xf32>
    %43 = vector.shape_cast %42 : vector<16x16x32xf32> to vector<256x32xf32>
    %44 = vector.extract_strided_slice %35 {offsets = [1, 1, 0], sizes = [16, 16, 32], strides = [1, 1, 1]} : vector<18x18x32xf32> to vector<16x16x32xf32>
    %45 = vector.shape_cast %44 : vector<16x16x32xf32> to vector<256x32xf32>
    %46 = vector.extract_strided_slice %35 {offsets = [1, 2, 0], sizes = [16, 16, 32], strides = [1, 1, 1]} : vector<18x18x32xf32> to vector<16x16x32xf32>
    %47 = vector.shape_cast %46 : vector<16x16x32xf32> to vector<256x32xf32>
    %48 = vector.extract_strided_slice %35 {offsets = [2, 0, 0], sizes = [16, 16, 32], strides = [1, 1, 1]} : vector<18x18x32xf32> to vector<16x16x32xf32>
    %49 = vector.shape_cast %48 : vector<16x16x32xf32> to vector<256x32xf32>
    %50 = vector.extract_strided_slice %35 {offsets = [2, 1, 0], sizes = [16, 16, 32], strides = [1, 1, 1]} : vector<18x18x32xf32> to vector<16x16x32xf32>
    %51 = vector.shape_cast %50 : vector<16x16x32xf32> to vector<256x32xf32>
    %52 = vector.extract_strided_slice %35 {offsets = [2, 2, 0], sizes = [16, 16, 32], strides = [1, 1, 1]} : vector<18x18x32xf32> to vector<16x16x32xf32>
    %53 = vector.shape_cast %52 : vector<16x16x32xf32> to vector<256x32xf32>
    %54 = tpu.concatenate %37, %39, %41, %43, %45, %47, %49, %51, %53 in 1 : vector<256x32xf32>, vector<256x32xf32>, vector<256x32xf32>, vector<256x32xf32>, vector<256x32xf32>, vector<256x32xf32>, vector<256x32xf32>, vector<256x32xf32>, vector<256x32xf32> -> vector<256x288xf32>
    %55 = arith.truncf %54 : vector<256x288xf32> to vector<256x288xbf16>
    %c0_26 = arith.constant 0 : index
    %c0_27 = arith.constant 0 : index
    %c0_28 = arith.constant 0 : index
    %56 = vector.load %arg4[%c0_26, %c0_27, %c0_28] : memref<2x288x128xbf16, #tpu.memory_space<vmem>>, vector<1x288x128xbf16>
    %57 = vector.shape_cast %56 : vector<1x288x128xbf16> to vector<288x128xbf16>
    %cst_29 = arith.constant dense<0.000000e+00> : vector<256x128xf32>
    %58 = tpu.matmul %55, %57, %cst_29 {dimension_numbers = #tpu.dot_dimension_numbers<[1], [0], [0], [1], [0, 0, 1, 1], [], []>} : vector<256x288xbf16>, vector<288x128xbf16>, vector<256x128xf32> -> vector<256x128xf32>
    %c0_30 = arith.constant 0 : index
    %c0_31 = arith.constant 0 : index
    %c0_32 = arith.constant 0 : index
    %59 = vector.load %arg5[%c0_30, %c0_31, %c0_32] : memref<2x1x128xf32, #tpu.memory_space<vmem>>, vector<1x1x128xf32>
    %60 = vector.shape_cast %59 : vector<1x1x128xf32> to vector<1x128xf32>
    %61 = vector.broadcast %60 : vector<1x128xf32> to vector<256x128xf32>
    %62 = arith.addf %58, %61 : vector<256x128xf32>
    %c0_33 = arith.constant 0 : index
    %c0_34 = arith.constant 0 : index
    %c0_35 = arith.constant 0 : index
    %c0_36 = arith.constant 0 : index
    %63 = vector.load %arg6[%c0_33, %c0_34, %c0_35, %c0_36] : memref<2x1x256x128xf32, #tpu.memory_space<vmem>>, vector<1x1x256x128xf32>
    %64 = vector.shape_cast %63 : vector<1x1x256x128xf32> to vector<256x128xf32>
    %65 = vector.shape_cast %62 : vector<256x128xf32> to vector<1x1x256x128xf32>
    tpu.vector_store %arg6[%c0_33, %c0_34, %c0_35, %c0_36], %65 {strides = array<i32>} : memref<2x1x256x128xf32, #tpu.memory_space<vmem>>, vector<1x1x256x128xf32>,
    %c1_37 = arith.constant 1 : index
    %c0_38 = arith.constant 0 : index
    %c0_39 = arith.constant 0 : index
    %66 = vector.load %arg4[%c1_37, %c0_38, %c0_39] : memref<2x288x128xbf16, #tpu.memory_space<vmem>>, vector<1x288x128xbf16>
    %67 = vector.shape_cast %66 : vector<1x288x128xbf16> to vector<288x128xbf16>
    %cst_40 = arith.constant dense<0.000000e+00> : vector<256x128xf32>
    %68 = tpu.matmul %55, %67, %cst_40 {dimension_numbers = #tpu.dot_dimension_numbers<[1], [0], [0], [1], [0, 0, 1, 1], [], []>} : vector<256x288xbf16>, vector<288x128xbf16>, vector<256x128xf32> -> vector<256x128xf32>
    %c1_41 = arith.constant 1 : index
    %c0_42 = arith.constant 0 : index
    %c0_43 = arith.constant 0 : index
    %69 = vector.load %arg5[%c1_41, %c0_42, %c0_43] : memref<2x1x128xf32, #tpu.memory_space<vmem>>, vector<1x1x128xf32>
    %70 = vector.shape_cast %69 : vector<1x1x128xf32> to vector<1x128xf32>
    %71 = vector.broadcast %70 : vector<1x128xf32> to vector<256x128xf32>
    %72 = arith.addf %68, %71 : vector<256x128xf32>
    %c1_44 = arith.constant 1 : index
    %c0_45 = arith.constant 0 : index
    %c0_46 = arith.constant 0 : index
    %c0_47 = arith.constant 0 : index
    %73 = vector.load %arg6[%c1_44, %c0_45, %c0_46, %c0_47] : memref<2x1x256x128xf32, #tpu.memory_space<vmem>>, vector<1x1x256x128xf32>
    %74 = vector.shape_cast %73 : vector<1x1x256x128xf32> to vector<256x128xf32>
    %75 = vector.shape_cast %72 : vector<256x128xf32> to vector<1x1x256x128xf32>
    tpu.vector_store %arg6[%c1_44, %c0_45, %c0_46, %c0_47], %75 {strides = array<i32>} : memref<2x1x256x128xf32, #tpu.memory_space<vmem>>, vector<1x1x256x128xf32>,
    return
  }
  func.func @transform_0(%arg0: i32) -> (i32, i32, i32, i32) {
    %c0_i32 = arith.constant 0 : i32
    %c0_i32_0 = arith.constant 0 : i32
    %c0_i32_1 = arith.constant 0 : i32
    %c0_i32_2 = arith.constant 0 : i32
    return %arg0, %c0_i32, %c0_i32_0, %c0_i32_1 : i32, i32, i32, i32
  }
  func.func @transform_1(%arg0: i32) -> (i32, i32) {
    %c0_i32 = arith.constant 0 : i32
    %c0_i32_0 = arith.constant 0 : i32
    %c0_i32_1 = arith.constant 0 : i32
    return %c0_i32, %c0_i32_0 : i32, i32
  }
  func.func @transform_2(%arg0: i32) -> (i32, i32) {
    %c0_i32 = arith.constant 0 : i32
    %c0_i32_0 = arith.constant 0 : i32
    %c0_i32_1 = arith.constant 0 : i32
    return %c0_i32, %c0_i32_0 : i32, i32
  }
  func.func @transform_3(%arg0: i32) -> (i32, i32, i32) {
    %c0_i32 = arith.constant 0 : i32
    %c0_i32_0 = arith.constant 0 : i32
    %c0_i32_1 = arith.constant 0 : i32
    %c0_i32_2 = arith.constant 0 : i32
    return %c0_i32, %c0_i32_0, %c0_i32_1 : i32, i32, i32
  }
  func.func @transform_4(%arg0: i32) -> (i32, i32, i32) {
    %c0_i32 = arith.constant 0 : i32
    %c0_i32_0 = arith.constant 0 : i32
    %c0_i32_1 = arith.constant 0 : i32
    %c0_i32_2 = arith.constant 0 : i32
    return %c0_i32, %c0_i32_0, %c0_i32_1 : i32, i32, i32
  }
  func.func @transform_5(%arg0: i32) -> (i32, i32, i32, i32) {
    %c0_i32 = arith.constant 0 : i32
    %c0_i32_0 = arith.constant 0 : i32
    %c0_i32_1 = arith.constant 0 : i32
    %c0_i32_2 = arith.constant 0 : i32
    return %c0_i32, %arg0, %c0_i32_0, %c0_i32_1 : i32, i32, i32, i32
  }
}

module attributes {stable_mosaic.version = 11 : i64} {
  func.func @bilstm_recurrence_kernel(%arg0: i32, %arg1: i32, %arg2: i32, %arg3: memref<2xi32, #tpu.memory_space<smem>>, %arg4: memref<1x1x1x256x128xf32, #tpu.memory_space<vmem>>, %arg5: memref<1x288x128xbf16, #tpu.memory_space<vmem>>, %arg6: memref<1x1x256x32xf32, #tpu.memory_space<vmem>>, %arg7: memref<18x18x32xf32, #tpu.memory_space<vmem>>, %arg8: memref<256x32xf32, #tpu.memory_space<vmem>>) attributes {dimension_semantics = [#tpu.dimension_semantics<parallel>, #tpu.dimension_semantics<parallel>, #tpu.dimension_semantics<arbitrary>], iteration_bounds = array<i64: 2, 2, 8>, scalar_prefetch = 1 : i64, scratch_operands = 2 : i64, tpu.core_type = #tpu.core_type<tc>, window_params = [{transform_indices = @transform_0, window_bounds = array<i64: 1, 1, 1, 256, 128>}, {transform_indices = @transform_1, window_bounds = array<i64: 1, 288, 128>}, {transform_indices = @transform_2, window_bounds = array<i64: 1, 1, 256, 32>}]} {
    %c0_i32 = arith.constant 0 : i32
    %0 = arith.cmpi eq, %arg2, %c0_i32 : i32
    %1 = arith.extui %0 : i1 to i32
    %c0_i32_0 = arith.constant 0 : i32
    %2 = arith.cmpi ne, %1, %c0_i32_0 : i32
    scf.if %2 {
      %cst_19 = arith.constant 0.000000e+00 : f32
      %56 = vector.broadcast %cst_19 : f32 to vector<18x18x32xf32>
      %c0_20 = arith.constant 0 : index
      %c0_21 = arith.constant 0 : index
      %c0_22 = arith.constant 0 : index
      %57 = vector.load %arg7[%c0_20, %c0_21, %c0_22] : memref<18x18x32xf32, #tpu.memory_space<vmem>>, vector<18x18x32xf32>
      tpu.vector_store %arg7[%c0_20, %c0_21, %c0_22], %56 {strides = array<i32>} : memref<18x18x32xf32, #tpu.memory_space<vmem>>, vector<18x18x32xf32>,
      %cst_23 = arith.constant 0.000000e+00 : f32
      %58 = vector.broadcast %cst_23 : f32 to vector<256x32xf32>
      %c0_24 = arith.constant 0 : index
      %c0_25 = arith.constant 0 : index
      %59 = vector.load %arg8[%c0_24, %c0_25] : memref<256x32xf32, #tpu.memory_space<vmem>>, vector<256x32xf32>
      tpu.vector_store %arg8[%c0_24, %c0_25], %58 {strides = array<i32>} : memref<256x32xf32, #tpu.memory_space<vmem>>, vector<256x32xf32>,
    } else {
    }
    %c0 = arith.constant 0 : index
    %c0_1 = arith.constant 0 : index
    %c0_2 = arith.constant 0 : index
    %3 = vector.load %arg7[%c0, %c0_1, %c0_2] : memref<18x18x32xf32, #tpu.memory_space<vmem>>, vector<18x18x32xf32>
    %4 = vector.extract_strided_slice %3 {offsets = [0, 0, 0], sizes = [16, 16, 32], strides = [1, 1, 1]} : vector<18x18x32xf32> to vector<16x16x32xf32>
    %5 = vector.shape_cast %4 : vector<16x16x32xf32> to vector<256x32xf32>
    %6 = vector.extract_strided_slice %3 {offsets = [0, 1, 0], sizes = [16, 16, 32], strides = [1, 1, 1]} : vector<18x18x32xf32> to vector<16x16x32xf32>
    %7 = vector.shape_cast %6 : vector<16x16x32xf32> to vector<256x32xf32>
    %8 = vector.extract_strided_slice %3 {offsets = [0, 2, 0], sizes = [16, 16, 32], strides = [1, 1, 1]} : vector<18x18x32xf32> to vector<16x16x32xf32>
    %9 = vector.shape_cast %8 : vector<16x16x32xf32> to vector<256x32xf32>
    %10 = vector.extract_strided_slice %3 {offsets = [1, 0, 0], sizes = [16, 16, 32], strides = [1, 1, 1]} : vector<18x18x32xf32> to vector<16x16x32xf32>
    %11 = vector.shape_cast %10 : vector<16x16x32xf32> to vector<256x32xf32>
    %12 = vector.extract_strided_slice %3 {offsets = [1, 1, 0], sizes = [16, 16, 32], strides = [1, 1, 1]} : vector<18x18x32xf32> to vector<16x16x32xf32>
    %13 = vector.shape_cast %12 : vector<16x16x32xf32> to vector<256x32xf32>
    %14 = vector.extract_strided_slice %3 {offsets = [1, 2, 0], sizes = [16, 16, 32], strides = [1, 1, 1]} : vector<18x18x32xf32> to vector<16x16x32xf32>
    %15 = vector.shape_cast %14 : vector<16x16x32xf32> to vector<256x32xf32>
    %16 = vector.extract_strided_slice %3 {offsets = [2, 0, 0], sizes = [16, 16, 32], strides = [1, 1, 1]} : vector<18x18x32xf32> to vector<16x16x32xf32>
    %17 = vector.shape_cast %16 : vector<16x16x32xf32> to vector<256x32xf32>
    %18 = vector.extract_strided_slice %3 {offsets = [2, 1, 0], sizes = [16, 16, 32], strides = [1, 1, 1]} : vector<18x18x32xf32> to vector<16x16x32xf32>
    %19 = vector.shape_cast %18 : vector<16x16x32xf32> to vector<256x32xf32>
    %20 = vector.extract_strided_slice %3 {offsets = [2, 2, 0], sizes = [16, 16, 32], strides = [1, 1, 1]} : vector<18x18x32xf32> to vector<16x16x32xf32>
    %21 = vector.shape_cast %20 : vector<16x16x32xf32> to vector<256x32xf32>
    %22 = tpu.concatenate %5, %7, %9, %11, %13, %15, %17, %19, %21 in 1 : vector<256x32xf32>, vector<256x32xf32>, vector<256x32xf32>, vector<256x32xf32>, vector<256x32xf32>, vector<256x32xf32>, vector<256x32xf32>, vector<256x32xf32>, vector<256x32xf32> -> vector<256x288xf32>
    %23 = arith.truncf %22 : vector<256x288xf32> to vector<256x288xbf16>
    %c0_3 = arith.constant 0 : index
    %c0_4 = arith.constant 0 : index
    %c0_5 = arith.constant 0 : index
    %c0_6 = arith.constant 0 : index
    %c0_7 = arith.constant 0 : index
    %24 = vector.load %arg4[%c0_3, %c0_4, %c0_5, %c0_6, %c0_7] : memref<1x1x1x256x128xf32, #tpu.memory_space<vmem>>, vector<1x1x1x256x128xf32>
    %25 = vector.shape_cast %24 : vector<1x1x1x256x128xf32> to vector<256x128xf32>
    %c0_8 = arith.constant 0 : index
    %c0_9 = arith.constant 0 : index
    %c0_10 = arith.constant 0 : index
    %26 = vector.load %arg5[%c0_8, %c0_9, %c0_10] : memref<1x288x128xbf16, #tpu.memory_space<vmem>>, vector<1x288x128xbf16>
    %27 = vector.shape_cast %26 : vector<1x288x128xbf16> to vector<288x128xbf16>
    %cst = arith.constant dense<0.000000e+00> : vector<256x128xf32>
    %28 = tpu.matmul %23, %27, %cst {dimension_numbers = #tpu.dot_dimension_numbers<[1], [0], [0], [1], [0, 0, 1, 1], [], []>} : vector<256x288xbf16>, vector<288x128xbf16>, vector<256x128xf32> -> vector<256x128xf32>
    %29 = arith.addf %25, %28 : vector<256x128xf32>
    %30 = vector.extract_strided_slice %29 {offsets = [0, 0], sizes = [256, 96], strides = [1, 1]} : vector<256x128xf32> to vector<256x96xf32>
    %31 = arith.negf %30 : vector<256x96xf32>
    %32 = math.exp %31 : vector<256x96xf32>
    %cst_11 = arith.constant 1.000000e+00 : f32
    %33 = vector.broadcast %cst_11 : f32 to vector<256x96xf32>
    %34 = arith.addf %33, %32 : vector<256x96xf32>
    %35 = arith.divf %33, %34 : vector<256x96xf32>
    %36 = vector.extract_strided_slice %29 {offsets = [0, 96], sizes = [256, 32], strides = [1, 1]} : vector<256x128xf32> to vector<256x32xf32>
    %37 = math.tanh %36 : vector<256x32xf32>
    %38 = vector.extract_strided_slice %35 {offsets = [0, 0], sizes = [256, 32], strides = [1, 1]} : vector<256x96xf32> to vector<256x32xf32>
    %39 = vector.extract_strided_slice %35 {offsets = [0, 32], sizes = [256, 32], strides = [1, 1]} : vector<256x96xf32> to vector<256x32xf32>
    %40 = vector.extract_strided_slice %35 {offsets = [0, 64], sizes = [256, 32], strides = [1, 1]} : vector<256x96xf32> to vector<256x32xf32>
    %c0_12 = arith.constant 0 : index
    %c0_13 = arith.constant 0 : index
    %41 = vector.load %arg8[%c0_12, %c0_13] : memref<256x32xf32, #tpu.memory_space<vmem>>, vector<256x32xf32>
    %42 = arith.mulf %39, %41 : vector<256x32xf32>
    %43 = arith.mulf %38, %37 : vector<256x32xf32>
    %44 = arith.addf %42, %43 : vector<256x32xf32>
    %45 = math.tanh %44 : vector<256x32xf32>
    %46 = arith.mulf %40, %45 : vector<256x32xf32>
    %c0_14 = arith.constant 0 : index
    %c0_15 = arith.constant 0 : index
    %47 = vector.load %arg8[%c0_14, %c0_15] : memref<256x32xf32, #tpu.memory_space<vmem>>, vector<256x32xf32>
    tpu.vector_store %arg8[%c0_14, %c0_15], %44 {strides = array<i32>} : memref<256x32xf32, #tpu.memory_space<vmem>>, vector<256x32xf32>,
    %48 = vector.shape_cast %46 : vector<256x32xf32> to vector<16x16x32xf32>
    %c1 = arith.constant 1 : index
    %c1_16 = arith.constant 1 : index
    %c0_17 = arith.constant 0 : index
    %49 = vector.load %arg7[%c1, %c1_16, %c0_17] : memref<18x18x32xf32, #tpu.memory_space<vmem>>, vector<16x16x32xf32>
    tpu.vector_store %arg7[%c1, %c1_16, %c0_17], %48 {strides = array<i32>} : memref<18x18x32xf32, #tpu.memory_space<vmem>>, vector<16x16x32xf32>,
    %50 = arith.index_cast %arg1 : i32 to index
    %51 = memref.load %arg3[%50] : memref<2xi32, #tpu.memory_space<smem>>
    %c1_i32 = arith.constant 1 : i32
    %52 = arith.subi %51, %c1_i32 : i32
    %53 = arith.cmpi eq, %arg2, %52 : i32
    %54 = arith.extui %53 : i1 to i32
    %c0_i32_18 = arith.constant 0 : i32
    %55 = arith.cmpi ne, %54, %c0_i32_18 : i32
    scf.if %55 {
      %c0_19 = arith.constant 0 : index
      %c0_20 = arith.constant 0 : index
      %c0_21 = arith.constant 0 : index
      %c0_22 = arith.constant 0 : index
      %56 = vector.load %arg6[%c0_19, %c0_20, %c0_21, %c0_22] : memref<1x1x256x32xf32, #tpu.memory_space<vmem>>, vector<1x1x256x32xf32>
      %57 = vector.shape_cast %56 : vector<1x1x256x32xf32> to vector<256x32xf32>
      %58 = vector.shape_cast %46 : vector<256x32xf32> to vector<1x1x256x32xf32>
      tpu.vector_store %arg6[%c0_19, %c0_20, %c0_21, %c0_22], %58 {strides = array<i32>} : memref<1x1x256x32xf32, #tpu.memory_space<vmem>>, vector<1x1x256x32xf32>,
    } else {
    }
    return
  }
  func.func @transform_0(%arg0: i32, %arg1: i32, %arg2: i32, %arg3: memref<2xi32, #tpu.memory_space<smem>>) -> (i32, i32, i32, i32, i32) {
    %c2_i32 = arith.constant 2 : i32
    %0 = arith.muli %c2_i32, %arg2 : i32
    %c7_i32 = arith.constant 7 : i32
    %1 = arith.subi %c7_i32, %0 : i32
    %2 = arith.muli %arg0, %1 : i32
    %3 = arith.addi %arg2, %2 : i32
    %c0_i32 = arith.constant 0 : i32
    %c0_i32_0 = arith.constant 0 : i32
    %c0_i32_1 = arith.constant 0 : i32
    return %arg0, %arg1, %3, %c0_i32, %c0_i32_0 : i32, i32, i32, i32, i32
  }
  func.func @transform_1(%arg0: i32, %arg1: i32, %arg2: i32, %arg3: memref<2xi32, #tpu.memory_space<smem>>) -> (i32, i32, i32) {
    %c0_i32 = arith.constant 0 : i32
    %c0_i32_0 = arith.constant 0 : i32
    %c0_i32_1 = arith.constant 0 : i32
    return %arg0, %c0_i32, %c0_i32_0 : i32, i32, i32
  }
  func.func @transform_2(%arg0: i32, %arg1: i32, %arg2: i32, %arg3: memref<2xi32, #tpu.memory_space<smem>>) -> (i32, i32, i32, i32) {
    %c0_i32 = arith.constant 0 : i32
    %c0_i32_0 = arith.constant 0 : i32
    %c0_i32_1 = arith.constant 0 : i32
    return %arg0, %arg1, %c0_i32, %c0_i32_0 : i32, i32, i32, i32
  }
}

module attributes {stable_mosaic.version = 11 : i64} {
  func.func @outconv_classifier_kernel(%arg0: i32, %arg1: memref<2x1x256x32xf32, #tpu.memory_space<vmem>>, %arg2: memref<1x256x1xf32, #tpu.memory_space<vmem>>, %arg3: memref<576x8xbf16, #tpu.memory_space<vmem>>, %arg4: memref<1x8xf32, #tpu.memory_space<vmem>>, %arg5: memref<1x1x8xf32, #tpu.memory_space<vmem>>, %arg6: memref<18x18x64xf32, #tpu.memory_space<vmem>>) attributes {dimension_semantics = [#tpu.dimension_semantics<parallel>], iteration_bounds = array<i64: 2>, scalar_prefetch = 0 : i64, scratch_operands = 1 : i64, tpu.core_type = #tpu.core_type<tc>, window_params = [{transform_indices = @transform_0, window_bounds = array<i64: 2, 1, 256, 32>}, {transform_indices = @transform_1, window_bounds = array<i64: 1, 256, 1>}, {pipeline_mode = #tpu.pipeline_mode<synchronous>, transform_indices = @transform_2, window_bounds = array<i64: 576, 8>}, {pipeline_mode = #tpu.pipeline_mode<synchronous>, transform_indices = @transform_3, window_bounds = array<i64: 1, 8>}, {transform_indices = @transform_4, window_bounds = array<i64: 1, 1, 8>}]} {
    %c0 = arith.constant 0 : index
    %c0_0 = arith.constant 0 : index
    %c0_1 = arith.constant 0 : index
    %c0_2 = arith.constant 0 : index
    %0 = vector.load %arg1[%c0, %c0_0, %c0_1, %c0_2] : memref<2x1x256x32xf32, #tpu.memory_space<vmem>>, vector<1x1x256x32xf32>
    %1 = vector.shape_cast %0 : vector<1x1x256x32xf32> to vector<256x32xf32>
    %2 = vector.shape_cast %1 : vector<256x32xf32> to vector<16x16x32xf32>
    %c1 = arith.constant 1 : index
    %c0_3 = arith.constant 0 : index
    %c0_4 = arith.constant 0 : index
    %c0_5 = arith.constant 0 : index
    %3 = vector.load %arg1[%c1, %c0_3, %c0_4, %c0_5] : memref<2x1x256x32xf32, #tpu.memory_space<vmem>>, vector<1x1x256x32xf32>
    %4 = vector.shape_cast %3 : vector<1x1x256x32xf32> to vector<256x32xf32>
    %5 = vector.shape_cast %4 : vector<256x32xf32> to vector<16x16x32xf32>
    %6 = tpu.concatenate %2, %5 in 2 : vector<16x16x32xf32>, vector<16x16x32xf32> -> vector<16x16x64xf32>
    %cst = arith.constant 0.000000e+00 : f32
    %7 = vector.broadcast %cst : f32 to vector<18x18x64xf32>
    %c0_6 = arith.constant 0 : index
    %c0_7 = arith.constant 0 : index
    %c0_8 = arith.constant 0 : index
    %8 = vector.load %arg6[%c0_6, %c0_7, %c0_8] : memref<18x18x64xf32, #tpu.memory_space<vmem>>, vector<18x18x64xf32>
    tpu.vector_store %arg6[%c0_6, %c0_7, %c0_8], %7 {strides = array<i32>} : memref<18x18x64xf32, #tpu.memory_space<vmem>>, vector<18x18x64xf32>,
    %c1_9 = arith.constant 1 : index
    %c1_10 = arith.constant 1 : index
    %c0_11 = arith.constant 0 : index
    %9 = vector.load %arg6[%c1_9, %c1_10, %c0_11] : memref<18x18x64xf32, #tpu.memory_space<vmem>>, vector<16x16x64xf32>
    tpu.vector_store %arg6[%c1_9, %c1_10, %c0_11], %6 {strides = array<i32>} : memref<18x18x64xf32, #tpu.memory_space<vmem>>, vector<16x16x64xf32>,
    %c0_12 = arith.constant 0 : index
    %c0_13 = arith.constant 0 : index
    %c0_14 = arith.constant 0 : index
    %10 = vector.load %arg6[%c0_12, %c0_13, %c0_14] : memref<18x18x64xf32, #tpu.memory_space<vmem>>, vector<18x18x64xf32>
    %11 = vector.extract_strided_slice %10 {offsets = [0, 0, 0], sizes = [16, 16, 64], strides = [1, 1, 1]} : vector<18x18x64xf32> to vector<16x16x64xf32>
    %12 = vector.shape_cast %11 : vector<16x16x64xf32> to vector<256x64xf32>
    %13 = vector.extract_strided_slice %10 {offsets = [0, 1, 0], sizes = [16, 16, 64], strides = [1, 1, 1]} : vector<18x18x64xf32> to vector<16x16x64xf32>
    %14 = vector.shape_cast %13 : vector<16x16x64xf32> to vector<256x64xf32>
    %15 = vector.extract_strided_slice %10 {offsets = [0, 2, 0], sizes = [16, 16, 64], strides = [1, 1, 1]} : vector<18x18x64xf32> to vector<16x16x64xf32>
    %16 = vector.shape_cast %15 : vector<16x16x64xf32> to vector<256x64xf32>
    %17 = vector.extract_strided_slice %10 {offsets = [1, 0, 0], sizes = [16, 16, 64], strides = [1, 1, 1]} : vector<18x18x64xf32> to vector<16x16x64xf32>
    %18 = vector.shape_cast %17 : vector<16x16x64xf32> to vector<256x64xf32>
    %19 = vector.extract_strided_slice %10 {offsets = [1, 1, 0], sizes = [16, 16, 64], strides = [1, 1, 1]} : vector<18x18x64xf32> to vector<16x16x64xf32>
    %20 = vector.shape_cast %19 : vector<16x16x64xf32> to vector<256x64xf32>
    %21 = vector.extract_strided_slice %10 {offsets = [1, 2, 0], sizes = [16, 16, 64], strides = [1, 1, 1]} : vector<18x18x64xf32> to vector<16x16x64xf32>
    %22 = vector.shape_cast %21 : vector<16x16x64xf32> to vector<256x64xf32>
    %23 = vector.extract_strided_slice %10 {offsets = [2, 0, 0], sizes = [16, 16, 64], strides = [1, 1, 1]} : vector<18x18x64xf32> to vector<16x16x64xf32>
    %24 = vector.shape_cast %23 : vector<16x16x64xf32> to vector<256x64xf32>
    %25 = vector.extract_strided_slice %10 {offsets = [2, 1, 0], sizes = [16, 16, 64], strides = [1, 1, 1]} : vector<18x18x64xf32> to vector<16x16x64xf32>
    %26 = vector.shape_cast %25 : vector<16x16x64xf32> to vector<256x64xf32>
    %27 = vector.extract_strided_slice %10 {offsets = [2, 2, 0], sizes = [16, 16, 64], strides = [1, 1, 1]} : vector<18x18x64xf32> to vector<16x16x64xf32>
    %28 = vector.shape_cast %27 : vector<16x16x64xf32> to vector<256x64xf32>
    %29 = tpu.concatenate %12, %14, %16, %18, %20, %22, %24, %26, %28 in 1 : vector<256x64xf32>, vector<256x64xf32>, vector<256x64xf32>, vector<256x64xf32>, vector<256x64xf32>, vector<256x64xf32>, vector<256x64xf32>, vector<256x64xf32>, vector<256x64xf32> -> vector<256x576xf32>
    %30 = arith.truncf %29 : vector<256x576xf32> to vector<256x576xbf16>
    %c0_15 = arith.constant 0 : index
    %c0_16 = arith.constant 0 : index
    %31 = vector.load %arg3[%c0_15, %c0_16] : memref<576x8xbf16, #tpu.memory_space<vmem>>, vector<576x8xbf16>
    %cst_17 = arith.constant dense<0.000000e+00> : vector<256x8xf32>
    %32 = tpu.matmul %30, %31, %cst_17 {dimension_numbers = #tpu.dot_dimension_numbers<[1], [0], [0], [1], [0, 0, 1, 1], [], []>} : vector<256x576xbf16>, vector<576x8xbf16>, vector<256x8xf32> -> vector<256x8xf32>
    %c0_18 = arith.constant 0 : index
    %c0_19 = arith.constant 0 : index
    %33 = vector.load %arg4[%c0_18, %c0_19] : memref<1x8xf32, #tpu.memory_space<vmem>>, vector<1x8xf32>
    %34 = vector.broadcast %33 : vector<1x8xf32> to vector<256x8xf32>
    %35 = arith.addf %32, %34 : vector<256x8xf32>
    %cst_20 = arith.constant dense<0xFF800000> : vector<256xf32>
    %36 = vector.multi_reduction <maximumf>, %35, %cst_20 [1] : vector<256x8xf32> to vector<256xf32>
    %37 = vector.shape_cast %36 : vector<256xf32> to vector<256x1xf32>
    %38 = vector.broadcast %37 : vector<256x1xf32> to vector<256x8xf32>
    %39 = arith.subf %35, %38 : vector<256x8xf32>
    %40 = math.exp %39 : vector<256x8xf32>
    %cst_21 = arith.constant dense<0.000000e+00> : vector<256xf32>
    %41 = vector.multi_reduction <add>, %40, %cst_21 [1] : vector<256x8xf32> to vector<256xf32>
    %42 = vector.shape_cast %41 : vector<256xf32> to vector<256x1xf32>
    %43 = math.log %42 : vector<256x1xf32>
    %44 = vector.broadcast %43 : vector<256x1xf32> to vector<256x8xf32>
    %45 = arith.subf %39, %44 : vector<256x8xf32>
    %c0_22 = arith.constant 0 : index
    %c0_23 = arith.constant 0 : index
    %c0_24 = arith.constant 0 : index
    %46 = vector.load %arg2[%c0_22, %c0_23, %c0_24] : memref<1x256x1xf32, #tpu.memory_space<vmem>>, vector<1x256x1xf32>
    %47 = vector.shape_cast %46 : vector<1x256x1xf32> to vector<256x1xf32>
    %48 = vector.shape_cast %47 : vector<256x1xf32> to vector<1x256x1xf32>
    %cst_25 = arith.constant dense<0.000000e+00> : vector<1xf32>
    %49 = vector.multi_reduction <add>, %48, %cst_25 [1, 2] : vector<1x256x1xf32> to vector<1xf32>
    %50 = vector.shape_cast %49 : vector<1xf32> to vector<1x1x1xf32>
    %51 = vector.extract %50[0, 0, 0] : f32 from vector<1x1x1xf32>
    %52 = vector.broadcast %51 : f32 to vector<1x1xf32>
    %53 = vector.broadcast %47 : vector<256x1xf32> to vector<256x8xf32>
    %54 = arith.mulf %45, %53 : vector<256x8xf32>
    %cst_26 = arith.constant dense<0.000000e+00> : vector<8xf32>
    %55 = vector.multi_reduction <add>, %54, %cst_26 [0] : vector<256x8xf32> to vector<8xf32>
    %56 = vector.shape_cast %55 : vector<8xf32> to vector<1x8xf32>
    %57 = vector.broadcast %52 : vector<1x1xf32> to vector<1x8xf32>
    %58 = arith.divf %56, %57 : vector<1x8xf32>
    %c0_27 = arith.constant 0 : index
    %c0_28 = arith.constant 0 : index
    %c0_29 = arith.constant 0 : index
    %59 = vector.load %arg5[%c0_27, %c0_28, %c0_29] : memref<1x1x8xf32, #tpu.memory_space<vmem>>, vector<1x1x8xf32>
    %60 = vector.shape_cast %59 : vector<1x1x8xf32> to vector<1x8xf32>
    %61 = vector.shape_cast %58 : vector<1x8xf32> to vector<1x1x8xf32>
    tpu.vector_store %arg5[%c0_27, %c0_28, %c0_29], %61 {strides = array<i32>} : memref<1x1x8xf32, #tpu.memory_space<vmem>>, vector<1x1x8xf32>,
    return
  }
  func.func @transform_0(%arg0: i32) -> (i32, i32, i32, i32) {
    %c0_i32 = arith.constant 0 : i32
    %c0_i32_0 = arith.constant 0 : i32
    %c0_i32_1 = arith.constant 0 : i32
    %c0_i32_2 = arith.constant 0 : i32
    return %c0_i32, %arg0, %c0_i32_0, %c0_i32_1 : i32, i32, i32, i32
  }
  func.func @transform_1(%arg0: i32) -> (i32, i32, i32) {
    %c0_i32 = arith.constant 0 : i32
    %c0_i32_0 = arith.constant 0 : i32
    %c0_i32_1 = arith.constant 0 : i32
    return %arg0, %c0_i32, %c0_i32_0 : i32, i32, i32
  }
  func.func @transform_2(%arg0: i32) -> (i32, i32) {
    %c0_i32 = arith.constant 0 : i32
    %c0_i32_0 = arith.constant 0 : i32
    %c0_i32_1 = arith.constant 0 : i32
    return %c0_i32, %c0_i32_0 : i32, i32
  }
  func.func @transform_3(%arg0: i32) -> (i32, i32) {
    %c0_i32 = arith.constant 0 : i32
    %c0_i32_0 = arith.constant 0 : i32
    %c0_i32_1 = arith.constant 0 : i32
    return %c0_i32, %c0_i32_0 : i32, i32
  }
  func.func @transform_4(%arg0: i32) -> (i32, i32, i32) {
    %c0_i32 = arith.constant 0 : i32
    %c0_i32_0 = arith.constant 0 : i32
    %c0_i32_1 = arith.constant 0 : i32
    return %arg0, %c0_i32, %c0_i32_0 : i32, i32, i32
  }
}

</mosaic_0001>

<llo_original>
// kernel: birnn_classifier.4
$region0: #{birnn_classifier.4}
  #allocation0 [shape = 'u32[]', space=smem, size = 0x4, offset = 0x4, fixed_abs, tag = 'smem constant byte address 0x4 - core index']
  #allocation1 [shape = 'u32[144,128]{1,0:T(1,128)}', space=vmem, size = 0x12000, scoped, tag = 'internal scratch']
  #allocation2 [shape = 'f32[18,18,32]{2,1,0:T(8,128)}', space=vmem, size = 0x36000, scoped, tag = 'scratch operand']
  #allocation3 [shape = 'f32[256,32]{1,0:T(8,128)}', space=vmem, size = 0x20000, scoped, tag = 'scratch operand']
  #allocation4 [shape = 's32[1]{0}', space=sflag, size = 0x4, scoped, tag = 'scoped memory for birnn_classifier.4']
  #allocation5 [shape = 'u8[512]{0}', space=smem, size = 0x200, scoped, tag = 'prefetched SMEM operand 0']
  %s0 = inlined_call_operand.vmem [shape: s32[2], index: 0, kind: input, shape index: {}]
  %s1 = inlined_call_operand.vmem [shape: f32[2,2,8,256,128], index: 1, kind: input, shape index: {}]
  %s2 = inlined_call_operand.vmem [shape: bf16[2,288,128], index: 2, kind: input, shape index: {}]
  %s3 = inlined_call_operand.vmem [shape: f32[2,2,256,32], index: 3, kind: output, shape index: {}]
  %s4 = sld [smem:[#allocation0]]
  $region49: #{birnn_classifier.4} parent=0
    _
  %s6 = ssub.s32 1, %s4
  %s7 = scalar_select 0, %s6, %s4
  %s8 = sshll.u32 %s0, 4
  %s9 = int_to_ptr.vmem [resolvable:$true] %s8
  %11 = dma.vmem_to_smem %s9, 16, [#allocation5], [#allocation4]
  %12 = dma.done [#allocation4], 16
  %13 = sfence
  loop: start=0, step=1, limit=34
  $region2: #{birnn_classifier.4} parent=0 // loop_pre_header
    _
  $region3: #{birnn_classifier.4} parent=0 // loop_header
    %s15 = sphi 0, %s19
    %p16 = scmp.ge.s32.totalorder %s15, 34
    %s22 = sphi 0, %s41
    %s23 = sphi 0, %s37
    %s24 = sphi 0, %s33
    %s25 = sphi 0, %s22
    %s26 = sphi 0, %s23
    %s27 = sphi 0, %s24
    %s28 = sphi 0, %s25
    %s29 = sphi 0, %s26
    %s30 = sphi 0, %s27
    %s56 = sphi 0, %s58
    %s59 = sphi 0, %s56
    %s60 = sphi 0, %s59
    %s76 = sphi 0, %s60
    %s82 = sphi 0, %s84
    %s85 = sphi 0, %s82
    %s86 = sphi 0, %s85
    %s102 = sphi 0, %s86
    %s110 = sphi 0, %s112
    %s113 = sphi 0, %s110
    %s114 = sphi 0, %s113
    %s130 = sphi 0, %s114
  $region4: #{birnn_classifier.4} parent=0 // loop_header_branch
    %18 = sbr.rel (%p16) target = $region8
  $region5: #{birnn_classifier.4} parent=0 // loop_body
    %s20 = ssub.s32 %s15, 1
    %s21 = ssub.s32 %s15, 2
    %s31 = sadd.s32 1, %s24
    %p32 = scmp.ge.s32.totalorder %s31, 8
    %s33 = scalar_select %p32, 0, %s31
    %s34 = sadd.s32 1, %s23
    %s35 = scalar_select %p32, %s34, %s23
    %p36 = scmp.ge.s32.totalorder %s35, 2
    %s37 = scalar_select %p36, 0, %s35
    %s38 = sadd.s32 1, %s22
    %s39 = scalar_select %p36, %s38, %s22
    %p40 = scmp.ge.s32.totalorder %s39, 2
    %s41 = scalar_select %p40, 0, %s39
    %s42 = smul.u32 %s24, 2
    %s43 = ssub.s32 7, %s42
    %s44 = smul.u32 %s22, %s43
    %s45 = sadd.s32 %s24, %s44
    %s46 = smul.u32 %s33, 2
    %s47 = ssub.s32 7, %s46
    %s48 = smul.u32 %s41, %s47
    %s49 = sadd.s32 %s33, %s48
    %s50 = ssub.s32 %s22, %s41
    %s51 = ssub.s32 %s23, %s37
    %s52 = sor.u32 %s50, %s51
    %s53 = ssub.s32 %s45, %s49
    %s54 = sor.u32 %s52, %s53
    %p55 = scmp.eq.s32.totalorder %s54, 0
    %s57 = sadd.s32 %s56, 1
    %s58 = scalar_select %p55, %s56, %s57
    %p61 = pneg %p55
    %p62 = scmp.eq.s32.totalorder %s15, 31
    %p63 = por %p61, %p62
    %p64 = scmp.ne.s32.totalorder %s56, %s59
    %p65 = scmp.eq.s32.totalorder %s15, 0
    %p66 = por %p64, %p65
    %p67 = scmp.ne.s32.totalorder %s56, %s59
    %p68 = scmp.eq.s32.totalorder %s20, 31
    %p69 = por %p67, %p68
    %p70 = scmp.ne.s32.totalorder %s59, %s60
    %p71 = scmp.eq.s32.totalorder %s20, 0
    %p72 = por %p70, %p71
    %p73 = scmp.ne.s32.totalorder %s59, %s60
    %p74 = scmp.eq.s32.totalorder %s21, 31
    %p75 = por %p73, %p74
    %p77 = scmp.ne.s32.totalorder %s60, %s76
    %p78 = scmp.eq.s32.totalorder %s21, 0
    %p79 = por %p77, %p78
    %s80 = ssub.s32 %s22, %s41
    %p81 = scmp.eq.s32.totalorder %s80, 0
    %s83 = sadd.s32 %s82, 1
    %s84 = scalar_select %p81, %s82, %s83
    %p87 = pneg %p81
    %p88 = scmp.eq.s32.totalorder %s15, 31
    %p89 = por %p87, %p88
    %p90 = scmp.ne.s32.totalorder %s82, %s85
    %p91 = scmp.eq.s32.totalorder %s15, 0
    %p92 = por %p90, %p91
    %p93 = scmp.ne.s32.totalorder %s82, %s85
    %p94 = scmp.eq.s32.totalorder %s20, 31
    %p95 = por %p93, %p94
    %p96 = scmp.ne.s32.totalorder %s85, %s86
    %p97 = scmp.eq.s32.totalorder %s20, 0
    %p98 = por %p96, %p97
    %p99 = scmp.ne.s32.totalorder %s85, %s86
    %p100 = scmp.eq.s32.totalorder %s21, 31
    %p101 = por %p99, %p100
    %p103 = scmp.ne.s32.totalorder %s86, %s102
    %p104 = scmp.eq.s32.totalorder %s21, 0
    %p105 = por %p103, %p104
    %s106 = ssub.s32 %s22, %s41
    %s107 = ssub.s32 %s23, %s37
    %s108 = sor.u32 %s106, %s107
    %p109 = scmp.eq.s32.totalorder %s108, 0
    %s111 = sadd.s32 %s110, 1
    %s112 = scalar_select %p109, %s110, %s111
    %p115 = pneg %p109
    %p116 = scmp.eq.s32.totalorder %s15, 31
    %p117 = por %p115, %p116
    %p118 = scmp.ne.s32.totalorder %s110, %s113
    %p119 = scmp.eq.s32.totalorder %s15, 0
    %p120 = por %p118, %p119
    %p121 = scmp.ne.s32.totalorder %s110, %s113
    %p122 = scmp.eq.s32.totalorder %s20, 31
    %p123 = por %p121, %p122
    %p124 = scmp.ne.s32.totalorder %s113, %s114
    %p125 = scmp.eq.s32.totalorder %s20, 0
    %p126 = por %p124, %p125
    %p127 = scmp.ne.s32.totalorder %s113, %s114
    %p128 = scmp.eq.s32.totalorder %s21, 31
    %p129 = por %p127, %p128
    %p131 = scmp.ne.s32.totalorder %s114, %s130
    %p132 = scmp.eq.s32.totalorder %s21, 0
    %p133 = por %p131, %p132
    %p134 = scmp.le.s32.totalorder 1, %s15
    %p135 = scmp.lt.s32.totalorder %s15, 33
    %p136 = pnand %p134, %p135
    %p137 = pneg %p136
    // Predicated region
    $region9: #{birnn_classifier.4} parent=5 // pred_check
      _
    $region10: #{birnn_classifier.4} parent=5 // pred_check_branch
      %139 = sbr.rel (%p136) target = $region12
    $region11: #{birnn_classifier.4} parent=5 // pred_region
      %s140 = ssub.s32 %s15, 1
    $region12: #{birnn_classifier.4} parent=5 // pred_fallthru
      _
    %p141 = scmp.lt.s32.totalorder %s15, 32
    // Predicated region
    $region13: #{birnn_classifier.4} parent=5 // pred_check
      %p142 = pneg %p141
    $region14: #{birnn_classifier.4} parent=5 // pred_check_branch
      %144 = sbr.rel (%p142) target = $region16
    $region15: #{birnn_classifier.4} parent=5 // pred_region
      // Predicated region
      $region17: #{birnn_classifier.4} parent=15 // pred_check
        %p145 = pneg %p66
      $region18: #{birnn_classifier.4} parent=15 // pred_check_branch
        %147 = sbr.rel (%p145) target = $region20
      $region19: #{birnn_classifier.4} parent=15 // pred_region
        %s148 = smul.u32 %s24, 2
        %s149 = ssub.s32 7, %s148
        %s150 = smul.u32 %s22, %s149
        %s151 = sadd.s32 %s24, %s150
        %p152 = scmp.lt.s32.totalorder %s22, 1
        %s153 = scalar_select %p152, %s22, 1
        %p154 = scmp.lt.s32.totalorder %s23, 1
        %s155 = scalar_select %p154, %s23, 1
        %p156 = scmp.lt.s32.totalorder %s151, 7
        %s157 = scalar_select %p156, %s151, 7
        %s158 = smul.addr %s157, 32
        %s159 = smul.addr %s155, 256
        %s160 = sadd.s32 %s158, %s159
        %s161 = smul.addr %s153, 512
        %s162 = sadd.s32 %s160, %s161
        %s163 = smul.addr %s162, 8
        %s164 = scalar_lea.vmem %s1, %s163
        %s165 = smul.u32 %s24, 2
        %s166 = ssub.s32 7, %s165
        %s167 = smul.u32 %s22, %s166
        %s168 = sadd.s32 %s24, %s167
      $region20: #{birnn_classifier.4} parent=15 // pred_fallthru
        _
      // Predicated region
      $region21: #{birnn_classifier.4} parent=15 // pred_check
        %p169 = pneg %p92
      $region22: #{birnn_classifier.4} parent=15 // pred_check_branch
        %171 = sbr.rel (%p169) target = $region24
      $region23: #{birnn_classifier.4} parent=15 // pred_region
        %p172 = scmp.lt.s32.totalorder %s22, 1
        %s173 = scalar_select %p172, %s22, 1
        %s174 = smul.addr %s173, 36
        %s175 = smul.addr %s174, 4
        %s176 = scalar_lea.vmem %s2, %s175
      $region24: #{birnn_classifier.4} parent=15 // pred_fallthru
        _
    $region16: #{birnn_classifier.4} parent=5 // pred_fallthru
      _
    %p177 = scmp.le.s32.totalorder 1, %s15
    %p178 = scmp.lt.s32.totalorder %s15, 33
    %p179 = pnand %p177, %p178
    %p180 = pneg %p179
    // Predicated region
    $region25: #{birnn_classifier.4} parent=5 // pred_check
      _
    $region26: #{birnn_classifier.4} parent=5 // pred_check_branch
      %182 = sbr.rel (%p179) target = $region28
    $region27: #{birnn_classifier.4} parent=5 // pred_region
      %s183 = ssub.s32 %s15, 1
      %s184 = smul.u32 %s27, 2
      %s185 = ssub.s32 7, %s184
      %s186 = smul.u32 %s25, %s185
      %s187 = sadd.s32 %s27, %s186
      %p188 = scmp.lt.s32.totalorder %s25, 1
      %s189 = scalar_select %p188, %s25, 1
      %p190 = scmp.lt.s32.totalorder %s26, 1
      %s191 = scalar_select %p190, %s26, 1
      %p192 = scmp.lt.s32.totalorder %s187, 7
      %s193 = scalar_select %p192, %s187, 7
      %s194 = smul.addr %s193, 32
      %s195 = smul.addr %s191, 256
      %s196 = sadd.s32 %s194, %s195
      %s197 = smul.addr %s189, 512
      %s198 = sadd.s32 %s196, %s197
      %s199 = smul.addr %s198, 8
      %s200 = scalar_lea.vmem %s1, %s199
      %p201 = pneg %p72
      %p202 = pneg %p69
      %p203 = scmp.lt.s32.totalorder %s25, 1
      %s204 = scalar_select %p203, %s25, 1
      %s205 = smul.addr %s204, 36
      %s206 = smul.addr %s205, 4
      %s207 = scalar_lea.vmem %s2, %s206
      %p208 = pneg %p98
      %p209 = pneg %p95
      %p210 = pneg %p126
      %p211 = pneg %p123
      %p212 = scmp.lt.s32.totalorder %s25, 1
      %s213 = scalar_select %p212, %s25, 1
      %p214 = scmp.lt.s32.totalorder %s26, 1
      %s215 = scalar_select %p214, %s26, 1
      %s216 = smul.addr %s215, 32
      %s217 = smul.addr %s213, 64
      %s218 = sadd.s32 %s216, %s217
      %s219 = smul.addr %s218, 8
      %s220 = scalar_lea.vmem %s3, %s219
      %s221 = smul.u32 %s27, 2
      %s222 = ssub.s32 7, %s221
      %s223 = smul.u32 %s25, %s222
      %s224 = sadd.s32 %s27, %s223
      %p225 = scmp.lt.s32.totalorder %s25, 1
      %s226 = scalar_select %p225, %s25, 1
      %p227 = scmp.lt.s32.totalorder %s26, 1
      %s228 = scalar_select %p227, %s26, 1
      %p229 = scmp.lt.s32.totalorder %s224, 7
      %s230 = scalar_select %p229, %s224, 7
      %s231 = smul.addr %s230, 32
      %s232 = smul.addr %s228, 256
      %s233 = sadd.s32 %s231, %s232
      %s234 = smul.addr %s226, 512
      %s235 = sadd.s32 %s233, %s234
      %s236 = smul.addr %s235, 8
      %s237 = scalar_lea.vmem %s1, %s236
      %s238 = smul.u32 %s27, 2
      %s239 = ssub.s32 7, %s238
      %s240 = smul.u32 %s25, %s239
      %s241 = sadd.s32 %s27, %s240
      %p242 = scmp.lt.s32.totalorder %s25, 1
      %s243 = scalar_select %p242, %s25, 1
      %s244 = smul.addr %s243, 36
      %s245 = smul.addr %s244, 4
      %s246 = scalar_lea.vmem %s2, %s245
      %p247 = scmp.lt.s32.totalorder %s25, 1
      %s248 = scalar_select %p247, %s25, 1
      %p249 = scmp.lt.s32.totalorder %s26, 1
      %s250 = scalar_select %p249, %s26, 1
      %s251 = smul.addr %s250, 32
      %s252 = smul.addr %s248, 64
      %s253 = sadd.s32 %s251, %s252
      %s254 = smul.addr %s253, 8
      %s255 = scalar_lea.vmem %s3, %s254
      %p257 = scmp.eq.s32.totalorder %s27, 0
      // Predicated region
      $region29: #{birnn_classifier.4} parent=27 // pred_check
        %p258 = pneg %p257
      $region30: #{birnn_classifier.4} parent=27 // pred_check_branch
        %260 = sbr.rel (%p258) target = $region32
      $region31: #{birnn_classifier.4} parent=27 // pred_region
        %vm261 = vcmask 261120
        %262 = vst.msk [vmem:[#allocation2] sm:$0xff] %vm261, 0.0
        %263 = vst.msk [vmem:[#allocation2 + $0x8] sm:$0xff] %vm261, 0.0
        %vm264 = vcmask 254976
        %265 = vst.msk [vmem:[#allocation2 + $0x10] sm:$0x3] %vm264, 0.0
        %266 = vst.msk [vmem:[#allocation2 + $0x18] sm:$0xff] %vm261, 0.0
        %267 = vst.msk [vmem:[#allocation2 + $0x20] sm:$0xff] %vm261, 0.0
        %268 = vst.msk [vmem:[#allocation2 + $0x28] sm:$0x3] %vm264, 0.0
        %269 = vst.msk [vmem:[#allocation2 + $0x30] sm:$0xff] %vm261, 0.0
        %270 = vst.msk [vmem:[#allocation2 + $0x38] sm:$0xff] %vm261, 0.0
        %271 = vst.msk [vmem:[#allocation2 + $0x40] sm:$0x3] %vm264, 0.0
        %272 = vst.msk [vmem:[#allocation2 + $0x48] sm:$0xff] %vm261, 0.0
        %273 = vst.msk [vmem:[#allocation2 + $0x50] sm:$0xff] %vm261, 0.0
        %274 = vst.msk [vmem:[#allocation2 + $0x58] sm:$0x3] %vm264, 0.0
        %275 = vst.msk [vmem:[#allocation2 + $0x60] sm:$0xff] %vm261, 0.0
        %276 = vst.msk [vmem:[#allocation2 + $0x68] sm:$0xff] %vm261, 0.0
        %277 = vst.msk [vmem:[#allocation2 + $0x70] sm:$0x3] %vm264, 0.0
        %278 = vst.msk [vmem:[#allocation2 + $0x78] sm:$0xff] %vm261, 0.0
        %279 = vst.msk [vmem:[#allocation2 + $0x80] sm:$0xff] %vm261, 0.0
        %280 = vst.msk [vmem:[#allocation2 + $0x88] sm:$0x3] %vm264, 0.0
        %281 = vst.msk [vmem:[#allocation2 + $0x90] sm:$0xff] %vm261, 0.0
        %282 = vst.msk [vmem:[#allocation2 + $0x98] sm:$0xff] %vm261, 0.0
        %283 = vst.msk [vmem:[#allocation2 + $0xa0] sm:$0x3] %vm264, 0.0
        %284 = vst.msk [vmem:[#allocation2 + $0xa8] sm:$0xff] %vm261, 0.0
        %285 = vst.msk [vmem:[#allocation2 + $0xb0] sm:$0xff] %vm261, 0.0
        %286 = vst.msk [vmem:[#allocation2 + $0xb8] sm:$0x3] %vm264, 0.0
        %287 = vst.msk [vmem:[#allocation2 + $0xc0] sm:$0xff] %vm261, 0.0
        %288 = vst.msk [vmem:[#allocation2 + $0xc8] sm:$0xff] %vm261, 0.0
        %289 = vst.msk [vmem:[#allocation2 + $0xd0] sm:$0x3] %vm264, 0.0
        %290 = vst.msk [vmem:[#allocation2 + $0xd8] sm:$0xff] %vm261, 0.0
        %291 = vst.msk [vmem:[#allocation2 + $0xe0] sm:$0xff] %vm261, 0.0
        %292 = vst.msk [vmem:[#allocation2 + $0xe8] sm:$0x3] %vm264, 0.0
        %293 = vst.msk [vmem:[#allocation2 + $0xf0] sm:$0xff] %vm261, 0.0
        %294 = vst.msk [vmem:[#allocation2 + $0xf8] sm:$0xff] %vm261, 0.0
        %295 = vst.msk [vmem:[#allocation2 + $0x100] sm:$0x3] %vm264, 0.0
        %296 = vst.msk [vmem:[#allocation2 + $0x108] sm:$0xff] %vm261, 0.0
        %297 = vst.msk [vmem:[#allocation2 + $0x110] sm:$0xff] %vm261, 0.0
        %298 = vst.msk [vmem:[#allocation2 + $0x118] sm:$0x3] %vm264, 0.0
        %299 = vst.msk [vmem:[#allocation2 + $0x120] sm:$0xff] %vm261, 0.0
        %300 = vst.msk [vmem:[#allocation2 + $0x128] sm:$0xff] %vm261, 0.0
        %301 = vst.msk [vmem:[#allocation2 + $0x130] sm:$0x3] %vm264, 0.0
        %302 = vst.msk [vmem:[#allocation2 + $0x138] sm:$0xff] %vm261, 0.0
        %303 = vst.msk [vmem:[#allocation2 + $0x140] sm:$0xff] %vm261, 0.0
        %304 = vst.msk [vmem:[#allocation2 + $0x148] sm:$0x3] %vm264, 0.0
        %305 = vst.msk [vmem:[#allocation2 + $0x150] sm:$0xff] %vm261, 0.0
        %306 = vst.msk [vmem:[#allocation2 + $0x158] sm:$0xff] %vm261, 0.0
        %307 = vst.msk [vmem:[#allocation2 + $0x160] sm:$0x3] %vm264, 0.0
        %308 = vst.msk [vmem:[#allocation2 + $0x168] sm:$0xff] %vm261, 0.0
        %309 = vst.msk [vmem:[#allocation2 + $0x170] sm:$0xff] %vm261, 0.0
        %310 = vst.msk [vmem:[#allocation2 + $0x178] sm:$0x3] %vm264, 0.0
        %311 = vst.msk [vmem:[#allocation2 + $0x180] sm:$0xff] %vm261, 0.0
        %312 = vst.msk [vmem:[#allocation2 + $0x188] sm:$0xff] %vm261, 0.0
        %313 = vst.msk [vmem:[#allocation2 + $0x190] sm:$0x3] %vm264, 0.0
        %314 = vst.msk [vmem:[#allocation2 + $0x198] sm:$0xff] %vm261, 0.0
        %315 = vst.msk [vmem:[#allocation2 + $0x1a0] sm:$0xff] %vm261, 0.0
        %316 = vst.msk [vmem:[#allocation2 + $0x1a8] sm:$0x3] %vm264, 0.0
        %317 = vst.msk [vmem:[#allocation3] sm:$0xff] %vm261, 0.0
        %318 = vst.msk [vmem:[#allocation3 + $0x8] sm:$0xff] %vm261, 0.0
        %319 = vst.msk [vmem:[#allocation3 + $0x10] sm:$0xff] %vm261, 0.0
        %320 = vst.msk [vmem:[#allocation3 + $0x18] sm:$0xff] %vm261, 0.0
        %321 = vst.msk [vmem:[#allocation3 + $0x20] sm:$0xff] %vm261, 0.0
        %322 = vst.msk [vmem:[#allocation3 + $0x28] sm:$0xff] %vm261, 0.0
        %323 = vst.msk [vmem:[#allocation3 + $0x30] sm:$0xff] %vm261, 0.0
        %324 = vst.msk [vmem:[#allocation3 + $0x38] sm:$0xff] %vm261, 0.0
        %325 = vst.msk [vmem:[#allocation3 + $0x40] sm:$0xff] %vm261, 0.0
        %326 = vst.msk [vmem:[#allocation3 + $0x48] sm:$0xff] %vm261, 0.0
        %327 = vst.msk [vmem:[#allocation3 + $0x50] sm:$0xff] %vm261, 0.0
        %328 = vst.msk [vmem:[#allocation3 + $0x58] sm:$0xff] %vm261, 0.0
        %329 = vst.msk [vmem:[#allocation3 + $0x60] sm:$0xff] %vm261, 0.0
        %330 = vst.msk [vmem:[#allocation3 + $0x68] sm:$0xff] %vm261, 0.0
        %331 = vst.msk [vmem:[#allocation3 + $0x70] sm:$0xff] %vm261, 0.0
        %332 = vst.msk [vmem:[#allocation3 + $0x78] sm:$0xff] %vm261, 0.0
        %333 = vst.msk [vmem:[#allocation3 + $0x80] sm:$0xff] %vm261, 0.0
        %334 = vst.msk [vmem:[#allocation3 + $0x88] sm:$0xff] %vm261, 0.0
        %335 = vst.msk [vmem:[#allocation3 + $0x90] sm:$0xff] %vm261, 0.0
        %336 = vst.msk [vmem:[#allocation3 + $0x98] sm:$0xff] %vm261, 0.0
        %337 = vst.msk [vmem:[#allocation3 + $0xa0] sm:$0xff] %vm261, 0.0
        %338 = vst.msk [vmem:[#allocation3 + $0xa8] sm:$0xff] %vm261, 0.0
        %339 = vst.msk [vmem:[#allocation3 + $0xb0] sm:$0xff] %vm261, 0.0
        %340 = vst.msk [vmem:[#allocation3 + $0xb8] sm:$0xff] %vm261, 0.0
        %341 = vst.msk [vmem:[#allocation3 + $0xc0] sm:$0xff] %vm261, 0.0
        %342 = vst.msk [vmem:[#allocation3 + $0xc8] sm:$0xff] %vm261, 0.0
        %343 = vst.msk [vmem:[#allocation3 + $0xd0] sm:$0xff] %vm261, 0.0
        %344 = vst.msk [vmem:[#allocation3 + $0xd8] sm:$0xff] %vm261, 0.0
        %345 = vst.msk [vmem:[#allocation3 + $0xe0] sm:$0xff] %vm261, 0.0
        %346 = vst.msk [vmem:[#allocation3 + $0xe8] sm:$0xff] %vm261, 0.0
        %347 = vst.msk [vmem:[#allocation3 + $0xf0] sm:$0xff] %vm261, 0.0
        %348 = vst.msk [vmem:[#allocation3 + $0xf8] sm:$0xff] %vm261, 0.0
      $region32: #{birnn_classifier.4} parent=27 // pred_fallthru
        _
      %v349 = vld [vmem:[#allocation2] sm:$0xff]
      %v350 = vld [vmem:[#allocation2 + $0x8] sm:$0xff]
      %v351 = vld [vmem:[#allocation2 + $0x10] sm:$0x3]
      %v352 = vld [vmem:[#allocation2 + $0x18] sm:$0xff]
      %v353 = vld [vmem:[#allocation2 + $0x20] sm:$0xff]
      %v354 = vld [vmem:[#allocation2 + $0x28] sm:$0x3]
      %v355 = vld [vmem:[#allocation2 + $0x30] sm:$0xff]
      %v356 = vld [vmem:[#allocation2 + $0x38] sm:$0xff]
      %v357 = vld [vmem:[#allocation2 + $0x40] sm:$0x3]
      %v358 = vld [vmem:[#allocation2 + $0x48] sm:$0xff]
      %v359 = vld [vmem:[#allocation2 + $0x50] sm:$0xff]
      %v360 = vld [vmem:[#allocation2 + $0x58] sm:$0x3]
      %v361 = vld [vmem:[#allocation2 + $0x60] sm:$0xff]
      %v362 = vld [vmem:[#allocation2 + $0x68] sm:$0xff]
      %v363 = vld [vmem:[#allocation2 + $0x70] sm:$0x3]
      %v364 = vld [vmem:[#allocation2 + $0x78] sm:$0xff]
      %v365 = vld [vmem:[#allocation2 + $0x80] sm:$0xff]
      %v366 = vld [vmem:[#allocation2 + $0x88] sm:$0x3]
      %v367 = vld [vmem:[#allocation2 + $0x90] sm:$0xff]
      %v368 = vld [vmem:[#allocation2 + $0x98] sm:$0xff]
      %v369 = vld [vmem:[#allocation2 + $0xa0] sm:$0x3]
      %v370 = vld [vmem:[#allocation2 + $0xa8] sm:$0xff]
      %v371 = vld [vmem:[#allocation2 + $0xb0] sm:$0xff]
      %v372 = vld [vmem:[#allocation2 + $0xb8] sm:$0x3]
      %v373 = vld [vmem:[#allocation2 + $0xc0] sm:$0xff]
      %v374 = vld [vmem:[#allocation2 + $0xc8] sm:$0xff]
      %v375 = vld [vmem:[#allocation2 + $0xd0] sm:$0x3]
      %v376 = vld [vmem:[#allocation2 + $0xd8] sm:$0xff]
      %v377 = vld [vmem:[#allocation2 + $0xe0] sm:$0xff]
      %v378 = vld [vmem:[#allocation2 + $0xe8] sm:$0x3]
      %v379 = vld [vmem:[#allocation2 + $0xf0] sm:$0xff]
      %v380 = vld [vmem:[#allocation2 + $0xf8] sm:$0xff]
      %v381 = vld [vmem:[#allocation2 + $0x100] sm:$0x3]
      %v382 = vld [vmem:[#allocation2 + $0x108] sm:$0xff]
      %v383 = vld [vmem:[#allocation2 + $0x110] sm:$0xff]
      %v384 = vld [vmem:[#allocation2 + $0x118] sm:$0x3]
      %v385 = vld [vmem:[#allocation2 + $0x120] sm:$0xff]
      %v386 = vld [vmem:[#allocation2 + $0x128] sm:$0xff]
      %v387 = vld [vmem:[#allocation2 + $0x130] sm:$0x3]
      %v388 = vld [vmem:[#allocation2 + $0x138] sm:$0xff]
      %v389 = vld [vmem:[#allocation2 + $0x140] sm:$0xff]
      %v390 = vld [vmem:[#allocation2 + $0x148] sm:$0x3]
      %v391 = vld [vmem:[#allocation2 + $0x150] sm:$0xff]
      %v392 = vld [vmem:[#allocation2 + $0x158] sm:$0xff]
      %v393 = vld [vmem:[#allocation2 + $0x160] sm:$0x3]
      %v394 = vld [vmem:[#allocation2 + $0x168] sm:$0xff]
      %v395 = vld [vmem:[#allocation2 + $0x170] sm:$0xff]
      %v396 = vld [vmem:[#allocation2 + $0x178] sm:$0x3]
      %v397 = vld [vmem:[#allocation2 + $0x180] sm:$0xff]
      %v398 = vld [vmem:[#allocation2 + $0x188] sm:$0xff]
      %v399 = vld [vmem:[#allocation2 + $0x190] sm:$0x3]
      %v400 = vld [vmem:[#allocation2 + $0x198] sm:$0xff]
      %v401 = vld [vmem:[#allocation2 + $0x1a0] sm:$0xff]
      %v402 = vld [vmem:[#allocation2 + $0x1a8] sm:$0x3]
      %vm451 = vcmask 1046528
      %v452 = vrot.slane %v349, 1
      %v453 = vrot.slane %v350, 1
      %v454 = vsel %vm451, %v452, %v453
      %v455 = vrot.slane %v351, 1
      %v456 = vsel %vm451, %v453, %v455
      %v457 = vrot.slane %v352, 1
      %v458 = vrot.slane %v353, 1
      %v459 = vsel %vm451, %v457, %v458
      %v460 = vrot.slane %v354, 1
      %v461 = vsel %vm451, %v458, %v460
      %v462 = vrot.slane %v355, 1
      %v463 = vrot.slane %v356, 1
      %v464 = vsel %vm451, %v462, %v463
      %v465 = vrot.slane %v357, 1
      %v466 = vsel %vm451, %v463, %v465
      %v467 = vrot.slane %v358, 1
      %v468 = vrot.slane %v359, 1
      %v469 = vsel %vm451, %v467, %v468
      %v470 = vrot.slane %v360, 1
      %v471 = vsel %vm451, %v468, %v470
      %v472 = vrot.slane %v361, 1
      %v473 = vrot.slane %v362, 1
      %v474 = vsel %vm451, %v472, %v473
      %v475 = vrot.slane %v363, 1
      %v476 = vsel %vm451, %v473, %v475
      %v477 = vrot.slane %v364, 1
      %v478 = vrot.slane %v365, 1
      %v479 = vsel %vm451, %v477, %v478
      %v480 = vrot.slane %v366, 1
      %v481 = vsel %vm451, %v478, %v480
      %v482 = vrot.slane %v367, 1
      %v483 = vrot.slane %v368, 1
      %v484 = vsel %vm451, %v482, %v483
      %v485 = vrot.slane %v369, 1
      %v486 = vsel %vm451, %v483, %v485
      %v487 = vrot.slane %v370, 1
      %v488 = vrot.slane %v371, 1
      %v489 = vsel %vm451, %v487, %v488
      %v490 = vrot.slane %v372, 1
      %v491 = vsel %vm451, %v488, %v490
      %v492 = vrot.slane %v373, 1
      %v493 = vrot.slane %v374, 1
      %v494 = vsel %vm451, %v492, %v493
      %v495 = vrot.slane %v375, 1
      %v496 = vsel %vm451, %v493, %v495
      %v497 = vrot.slane %v376, 1
      %v498 = vrot.slane %v377, 1
      %v499 = vsel %vm451, %v497, %v498
      %v500 = vrot.slane %v378, 1
      %v501 = vsel %vm451, %v498, %v500
      %v502 = vrot.slane %v379, 1
      %v503 = vrot.slane %v380, 1
      %v504 = vsel %vm451, %v502, %v503
      %v505 = vrot.slane %v381, 1
      %v506 = vsel %vm451, %v503, %v505
      %v507 = vrot.slane %v382, 1
      %v508 = vrot.slane %v383, 1
      %v509 = vsel %vm451, %v507, %v508
      %v510 = vrot.slane %v384, 1
      %v511 = vsel %vm451, %v508, %v510
      %v512 = vrot.slane %v385, 1
      %v513 = vrot.slane %v386, 1
      %v514 = vsel %vm451, %v512, %v513
      %v515 = vrot.slane %v387, 1
      %v516 = vsel %vm451, %v513, %v515
      %v517 = vrot.slane %v388, 1
      %v518 = vrot.slane %v389, 1
      %v519 = vsel %vm451, %v517, %v518
      %v520 = vrot.slane %v390, 1
      %v521 = vsel %vm451, %v518, %v520
      %v522 = vrot.slane %v391, 1
      %v523 = vrot.slane %v392, 1
      %v524 = vsel %vm451, %v522, %v523
      %v525 = vrot.slane %v393, 1
      %v526 = vsel %vm451, %v523, %v525
      %v527 = vrot.slane %v394, 1
      %v528 = vrot.slane %v395, 1
      %v529 = vsel %vm451, %v527, %v528
      %v530 = vrot.slane %v396, 1
      %v531 = vsel %vm451, %v528, %v530
      %vm532 = vcmask 1045504
      %v533 = vrot.slane %v349, 2
      %v534 = vrot.slane %v350, 2
      %v535 = vsel %vm532, %v533, %v534
      %v536 = vrot.slane %v351, 2
      %v537 = vsel %vm532, %v534, %v536
      %v538 = vrot.slane %v352, 2
      %v539 = vrot.slane %v353, 2
      %v540 = vsel %vm532, %v538, %v539
      %v541 = vrot.slane %v354, 2
      %v542 = vsel %vm532, %v539, %v541
      %v543 = vrot.slane %v355, 2
      %v544 = vrot.slane %v356, 2
      %v545 = vsel %vm532, %v543, %v544
      %v546 = vrot.slane %v357, 2
      %v547 = vsel %vm532, %v544, %v546
      %v548 = vrot.slane %v358, 2
      %v549 = vrot.slane %v359, 2
      %v550 = vsel %vm532, %v548, %v549
      %v551 = vrot.slane %v360, 2
      %v552 = vsel %vm532, %v549, %v551
      %v553 = vrot.slane %v361, 2
      %v554 = vrot.slane %v362, 2
      %v555 = vsel %vm532, %v553, %v554
      %v556 = vrot.slane %v363, 2
      %v557 = vsel %vm532, %v554, %v556
      %v558 = vrot.slane %v364, 2
      %v559 = vrot.slane %v365, 2
      %v560 = vsel %vm532, %v558, %v559
      %v561 = vrot.slane %v366, 2
      %v562 = vsel %vm532, %v559, %v561
      %v563 = vrot.slane %v367, 2
      %v564 = vrot.slane %v368, 2
      %v565 = vsel %vm532, %v563, %v564
      %v566 = vrot.slane %v369, 2
      %v567 = vsel %vm532, %v564, %v566
      %v568 = vrot.slane %v370, 2
      %v569 = vrot.slane %v371, 2
      %v570 = vsel %vm532, %v568, %v569
      %v571 = vrot.slane %v372, 2
      %v572 = vsel %vm532, %v569, %v571
      %v573 = vrot.slane %v373, 2
      %v574 = vrot.slane %v374, 2
      %v575 = vsel %vm532, %v573, %v574
      %v576 = vrot.slane %v375, 2
      %v577 = vsel %vm532, %v574, %v576
      %v578 = vrot.slane %v376, 2
      %v579 = vrot.slane %v377, 2
      %v580 = vsel %vm532, %v578, %v579
      %v581 = vrot.slane %v378, 2
      %v582 = vsel %vm532, %v579, %v581
      %v583 = vrot.slane %v379, 2
      %v584 = vrot.slane %v380, 2
      %v585 = vsel %vm532, %v583, %v584
      %v586 = vrot.slane %v381, 2
      %v587 = vsel %vm532, %v584, %v586
      %v588 = vrot.slane %v382, 2
      %v589 = vrot.slane %v383, 2
      %v590 = vsel %vm532, %v588, %v589
      %v591 = vrot.slane %v384, 2
      %v592 = vsel %vm532, %v589, %v591
      %v593 = vrot.slane %v385, 2
      %v594 = vrot.slane %v386, 2
      %v595 = vsel %vm532, %v593, %v594
      %v596 = vrot.slane %v387, 2
      %v597 = vsel %vm532, %v594, %v596
      %v598 = vrot.slane %v388, 2
      %v599 = vrot.slane %v389, 2
      %v600 = vsel %vm532, %v598, %v599
      %v601 = vrot.slane %v390, 2
      %v602 = vsel %vm532, %v599, %v601
      %v603 = vrot.slane %v391, 2
      %v604 = vrot.slane %v392, 2
      %v605 = vsel %vm532, %v603, %v604
      %v606 = vrot.slane %v393, 2
      %v607 = vsel %vm532, %v604, %v606
      %v608 = vrot.slane %v394, 2
      %v609 = vrot.slane %v395, 2
      %v610 = vsel %vm532, %v608, %v609
      %v611 = vrot.slane %v396, 2
      %v612 = vsel %vm532, %v609, %v611
      %v616 = vrot.slane %v397, 1
      %v617 = vrot.slane %v398, 1
      %v618 = vsel %vm451, %v616, %v617
      %v619 = vrot.slane %v399, 1
      %v620 = vsel %vm451, %v617, %v619
      %v653 = vrot.slane %v397, 2
      %v654 = vrot.slane %v398, 2
      %v655 = vsel %vm532, %v653, %v654
      %v656 = vrot.slane %v399, 2
      %v657 = vsel %vm532, %v654, %v656
      %v661 = vrot.slane %v400, 1
      %v662 = vrot.slane %v401, 1
      %v663 = vsel %vm451, %v661, %v662
      %v664 = vrot.slane %v402, 1
      %v665 = vsel %vm451, %v662, %v664
      %v666 = vrot.slane %v400, 2
      %v667 = vrot.slane %v401, 2
      %v668 = vsel %vm532, %v666, %v667
      %v669 = vrot.slane %v402, 2
      %v670 = vsel %vm532, %v667, %v669
      %703 = vrot.lane.b32.xlu0 %v454, 32
      %v704 = vpop.permute.xlu0 %703
      %705 = vrot.lane.b32.xlu0 %v456, 32
      %v706 = vpop.permute.xlu0 %705
      %707 = vrot.lane.b32.xlu0 %v459, 32
      %v708 = vpop.permute.xlu0 %707
      %709 = vrot.lane.b32.xlu0 %v461, 32
      %v710 = vpop.permute.xlu0 %709
      %711 = vrot.lane.b32.xlu0 %v464, 32
      %v712 = vpop.permute.xlu0 %711
      %713 = vrot.lane.b32.xlu0 %v466, 32
      %v714 = vpop.permute.xlu0 %713
      %715 = vrot.lane.b32.xlu0 %v469, 32
      %v716 = vpop.permute.xlu0 %715
      %717 = vrot.lane.b32.xlu0 %v471, 32
      %v718 = vpop.permute.xlu0 %717
      %719 = vrot.lane.b32.xlu0 %v474, 32
      %v720 = vpop.permute.xlu0 %719
      %721 = vrot.lane.b32.xlu0 %v476, 32
      %v722 = vpop.permute.xlu0 %721
      %723 = vrot.lane.b32.xlu0 %v479, 32
      %v724 = vpop.permute.xlu0 %723
      %725 = vrot.lane.b32.xlu0 %v481, 32
      %v726 = vpop.permute.xlu0 %725
      %727 = vrot.lane.b32.xlu0 %v484, 32
      %v728 = vpop.permute.xlu0 %727
      %729 = vrot.lane.b32.xlu0 %v486, 32
      %v730 = vpop.permute.xlu0 %729
      %731 = vrot.lane.b32.xlu0 %v489, 32
      %v732 = vpop.permute.xlu0 %731
      %733 = vrot.lane.b32.xlu0 %v491, 32
      %v734 = vpop.permute.xlu0 %733
      %735 = vrot.lane.b32.xlu0 %v494, 32
      %v736 = vpop.permute.xlu0 %735
      %737 = vrot.lane.b32.xlu0 %v496, 32
      %v738 = vpop.permute.xlu0 %737
      %739 = vrot.lane.b32.xlu0 %v499, 32
      %v740 = vpop.permute.xlu0 %739
      %741 = vrot.lane.b32.xlu0 %v501, 32
      %v742 = vpop.permute.xlu0 %741
      %743 = vrot.lane.b32.xlu0 %v504, 32
      %v744 = vpop.permute.xlu0 %743
      %745 = vrot.lane.b32.xlu0 %v506, 32
      %v746 = vpop.permute.xlu0 %745
      %747 = vrot.lane.b32.xlu0 %v509, 32
      %v748 = vpop.permute.xlu0 %747
      %749 = vrot.lane.b32.xlu0 %v511, 32
      %v750 = vpop.permute.xlu0 %749
      %751 = vrot.lane.b32.xlu0 %v514, 32
      %v752 = vpop.permute.xlu0 %751
      %753 = vrot.lane.b32.xlu0 %v516, 32
      %v754 = vpop.permute.xlu0 %753
      %755 = vrot.lane.b32.xlu0 %v519, 32
      %v756 = vpop.permute.xlu0 %755
      %757 = vrot.lane.b32.xlu0 %v521, 32
      %v758 = vpop.permute.xlu0 %757
      %759 = vrot.lane.b32.xlu0 %v524, 32
      %v760 = vpop.permute.xlu0 %759
      %761 = vrot.lane.b32.xlu0 %v526, 32
      %v762 = vpop.permute.xlu0 %761
      %763 = vrot.lane.b32.xlu0 %v529, 32
      %v764 = vpop.permute.xlu0 %763
      %765 = vrot.lane.b32.xlu0 %v531, 32
      %v766 = vpop.permute.xlu0 %765
      %799 = vrot.lane.b32.xlu0 %v535, 64
      %v800 = vpop.permute.xlu0 %799
      %801 = vrot.lane.b32.xlu0 %v537, 64
      %v802 = vpop.permute.xlu0 %801
      %803 = vrot.lane.b32.xlu0 %v540, 64
      %v804 = vpop.permute.xlu0 %803
      %805 = vrot.lane.b32.xlu0 %v542, 64
      %v806 = vpop.permute.xlu0 %805
      %807 = vrot.lane.b32.xlu0 %v545, 64
      %v808 = vpop.permute.xlu0 %807
      %809 = vrot.lane.b32.xlu0 %v547, 64
      %v810 = vpop.permute.xlu0 %809
      %811 = vrot.lane.b32.xlu0 %v550, 64
      %v812 = vpop.permute.xlu0 %811
      %813 = vrot.lane.b32.xlu0 %v552, 64
      %v814 = vpop.permute.xlu0 %813
      %815 = vrot.lane.b32.xlu0 %v555, 64
      %v816 = vpop.permute.xlu0 %815
      %817 = vrot.lane.b32.xlu0 %v557, 64
      %v818 = vpop.permute.xlu0 %817
      %819 = vrot.lane.b32.xlu0 %v560, 64
      %v820 = vpop.permute.xlu0 %819
      %821 = vrot.lane.b32.xlu0 %v562, 64
      %v822 = vpop.permute.xlu0 %821
      %823 = vrot.lane.b32.xlu0 %v565, 64
      %v824 = vpop.permute.xlu0 %823
      %825 = vrot.lane.b32.xlu0 %v567, 64
      %v826 = vpop.permute.xlu0 %825
      %827 = vrot.lane.b32.xlu0 %v570, 64
      %v828 = vpop.permute.xlu0 %827
      %829 = vrot.lane.b32.xlu0 %v572, 64
      %v830 = vpop.permute.xlu0 %829
      %831 = vrot.lane.b32.xlu0 %v575, 64
      %v832 = vpop.permute.xlu0 %831
      %833 = vrot.lane.b32.xlu0 %v577, 64
      %v834 = vpop.permute.xlu0 %833
      %835 = vrot.lane.b32.xlu0 %v580, 64
      %v836 = vpop.permute.xlu0 %835
      %837 = vrot.lane.b32.xlu0 %v582, 64
      %v838 = vpop.permute.xlu0 %837
      %839 = vrot.lane.b32.xlu0 %v585, 64
      %v840 = vpop.permute.xlu0 %839
      %841 = vrot.lane.b32.xlu0 %v587, 64
      %v842 = vpop.permute.xlu0 %841
      %843 = vrot.lane.b32.xlu0 %v590, 64
      %v844 = vpop.permute.xlu0 %843
      %845 = vrot.lane.b32.xlu0 %v592, 64
      %v846 = vpop.permute.xlu0 %845
      %847 = vrot.lane.b32.xlu0 %v595, 64
      %v848 = vpop.permute.xlu0 %847
      %849 = vrot.lane.b32.xlu0 %v597, 64
      %v850 = vpop.permute.xlu0 %849
      %851 = vrot.lane.b32.xlu0 %v600, 64
      %v852 = vpop.permute.xlu0 %851
      %853 = vrot.lane.b32.xlu0 %v602, 64
      %v854 = vpop.permute.xlu0 %853
      %855 = vrot.lane.b32.xlu0 %v605, 64
      %v856 = vpop.permute.xlu0 %855
      %857 = vrot.lane.b32.xlu0 %v607, 64
      %v858 = vpop.permute.xlu0 %857
      %859 = vrot.lane.b32.xlu0 %v610, 64
      %v860 = vpop.permute.xlu0 %859
      %861 = vrot.lane.b32.xlu0 %v612, 64
      %v862 = vpop.permute.xlu0 %861
      %895 = vrot.lane.b32.xlu0 %v352, 96
      %v896 = vpop.permute.xlu0 %895
      %897 = vrot.lane.b32.xlu0 %v353, 96
      %v898 = vpop.permute.xlu0 %897
      %899 = vrot.lane.b32.xlu0 %v355, 96
      %v900 = vpop.permute.xlu0 %899
      %901 = vrot.lane.b32.xlu0 %v356, 96
      %v902 = vpop.permute.xlu0 %901
      %903 = vrot.lane.b32.xlu0 %v358, 96
      %v904 = vpop.permute.xlu0 %903
      %905 = vrot.lane.b32.xlu0 %v359, 96
      %v906 = vpop.permute.xlu0 %905
      %907 = vrot.lane.b32.xlu0 %v361, 96
      %v908 = vpop.permute.xlu0 %907
      %909 = vrot.lane.b32.xlu0 %v362, 96
      %v910 = vpop.permute.xlu0 %909
      %911 = vrot.lane.b32.xlu0 %v364, 96
      %v912 = vpop.permute.xlu0 %911
      %913 = vrot.lane.b32.xlu0 %v365, 96
      %v914 = vpop.permute.xlu0 %913
      %915 = vrot.lane.b32.xlu0 %v367, 96
      %v916 = vpop.permute.xlu0 %915
      %917 = vrot.lane.b32.xlu0 %v368, 96
      %v918 = vpop.permute.xlu0 %917
      %919 = vrot.lane.b32.xlu0 %v370, 96
      %v920 = vpop.permute.xlu0 %919
      %921 = vrot.lane.b32.xlu0 %v371, 96
      %v922 = vpop.permute.xlu0 %921
      %923 = vrot.lane.b32.xlu0 %v373, 96
      %v924 = vpop.permute.xlu0 %923
      %925 = vrot.lane.b32.xlu0 %v374, 96
      %v926 = vpop.permute.xlu0 %925
      %927 = vrot.lane.b32.xlu0 %v376, 96
      %v928 = vpop.permute.xlu0 %927
      %929 = vrot.lane.b32.xlu0 %v377, 96
      %v930 = vpop.permute.xlu0 %929
      %931 = vrot.lane.b32.xlu0 %v379, 96
      %v932 = vpop.permute.xlu0 %931
      %933 = vrot.lane.b32.xlu0 %v380, 96
      %v934 = vpop.permute.xlu0 %933
      %935 = vrot.lane.b32.xlu0 %v382, 96
      %v936 = vpop.permute.xlu0 %935
      %937 = vrot.lane.b32.xlu0 %v383, 96
      %v938 = vpop.permute.xlu0 %937
      %939 = vrot.lane.b32.xlu0 %v385, 96
      %v940 = vpop.permute.xlu0 %939
      %941 = vrot.lane.b32.xlu0 %v386, 96
      %v942 = vpop.permute.xlu0 %941
      %943 = vrot.lane.b32.xlu0 %v388, 96
      %v944 = vpop.permute.xlu0 %943
      %945 = vrot.lane.b32.xlu0 %v389, 96
      %v946 = vpop.permute.xlu0 %945
      %947 = vrot.lane.b32.xlu0 %v391, 96
      %v948 = vpop.permute.xlu0 %947
      %949 = vrot.lane.b32.xlu0 %v392, 96
      %v950 = vpop.permute.xlu0 %949
      %951 = vrot.lane.b32.xlu0 %v394, 96
      %v952 = vpop.permute.xlu0 %951
      %953 = vrot.lane.b32.xlu0 %v395, 96
      %v954 = vpop.permute.xlu0 %953
      %955 = vrot.lane.b32.xlu0 %v397, 96
      %v956 = vpop.permute.xlu0 %955
      %957 = vrot.lane.b32.xlu0 %v398, 96
      %v958 = vpop.permute.xlu0 %957
      %991 = vrot.lane.b32.xlu0 %v540, 32
      %v992 = vpop.permute.xlu0 %991
      %993 = vrot.lane.b32.xlu0 %v542, 32
      %v994 = vpop.permute.xlu0 %993
      %995 = vrot.lane.b32.xlu0 %v545, 32
      %v996 = vpop.permute.xlu0 %995
      %997 = vrot.lane.b32.xlu0 %v547, 32
      %v998 = vpop.permute.xlu0 %997
      %999 = vrot.lane.b32.xlu0 %v550, 32
      %v1000 = vpop.permute.xlu0 %999
      %1001 = vrot.lane.b32.xlu0 %v552, 32
      %v1002 = vpop.permute.xlu0 %1001
      %1003 = vrot.lane.b32.xlu0 %v555, 32
      %v1004 = vpop.permute.xlu0 %1003
      %1005 = vrot.lane.b32.xlu0 %v557, 32
      %v1006 = vpop.permute.xlu0 %1005
      %1007 = vrot.lane.b32.xlu0 %v560, 32
      %v1008 = vpop.permute.xlu0 %1007
      %1009 = vrot.lane.b32.xlu0 %v562, 32
      %v1010 = vpop.permute.xlu0 %1009
      %1011 = vrot.lane.b32.xlu0 %v565, 32
      %v1012 = vpop.permute.xlu0 %1011
      %1013 = vrot.lane.b32.xlu0 %v567, 32
      %v1014 = vpop.permute.xlu0 %1013
      %1015 = vrot.lane.b32.xlu0 %v570, 32
      %v1016 = vpop.permute.xlu0 %1015
      %1017 = vrot.lane.b32.xlu0 %v572, 32
      %v1018 = vpop.permute.xlu0 %1017
      %1019 = vrot.lane.b32.xlu0 %v575, 32
      %v1020 = vpop.permute.xlu0 %1019
      %1021 = vrot.lane.b32.xlu0 %v577, 32
      %v1022 = vpop.permute.xlu0 %1021
      %1023 = vrot.lane.b32.xlu0 %v580, 32
      %v1024 = vpop.permute.xlu0 %1023
      %1025 = vrot.lane.b32.xlu0 %v582, 32
      %v1026 = vpop.permute.xlu0 %1025
      %1027 = vrot.lane.b32.xlu0 %v585, 32
      %v1028 = vpop.permute.xlu0 %1027
      %1029 = vrot.lane.b32.xlu0 %v587, 32
      %v1030 = vpop.permute.xlu0 %1029
      %1031 = vrot.lane.b32.xlu0 %v590, 32
      %v1032 = vpop.permute.xlu0 %1031
      %1033 = vrot.lane.b32.xlu0 %v592, 32
      %v1034 = vpop.permute.xlu0 %1033
      %1035 = vrot.lane.b32.xlu0 %v595, 32
      %v1036 = vpop.permute.xlu0 %1035
      %1037 = vrot.lane.b32.xlu0 %v597, 32
      %v1038 = vpop.permute.xlu0 %1037
      %1039 = vrot.lane.b32.xlu0 %v600, 32
      %v1040 = vpop.permute.xlu0 %1039
      %1041 = vrot.lane.b32.xlu0 %v602, 32
      %v1042 = vpop.permute.xlu0 %1041
      %1043 = vrot.lane.b32.xlu0 %v605, 32
      %v1044 = vpop.permute.xlu0 %1043
      %1045 = vrot.lane.b32.xlu0 %v607, 32
      %v1046 = vpop.permute.xlu0 %1045
      %1047 = vrot.lane.b32.xlu0 %v610, 32
      %v1048 = vpop.permute.xlu0 %1047
      %1049 = vrot.lane.b32.xlu0 %v612, 32
      %v1050 = vpop.permute.xlu0 %1049
      %1051 = vrot.lane.b32.xlu0 %v655, 32
      %v1052 = vpop.permute.xlu0 %1051
      %1053 = vrot.lane.b32.xlu0 %v657, 32
      %v1054 = vpop.permute.xlu0 %1053
      %1087 = vrot.lane.b32.xlu0 %v355, 64
      %v1088 = vpop.permute.xlu0 %1087
      %1089 = vrot.lane.b32.xlu0 %v356, 64
      %v1090 = vpop.permute.xlu0 %1089
      %1091 = vrot.lane.b32.xlu0 %v358, 64
      %v1092 = vpop.permute.xlu0 %1091
      %1093 = vrot.lane.b32.xlu0 %v359, 64
      %v1094 = vpop.permute.xlu0 %1093
      %1095 = vrot.lane.b32.xlu0 %v361, 64
      %v1096 = vpop.permute.xlu0 %1095
      %1097 = vrot.lane.b32.xlu0 %v362, 64
      %v1098 = vpop.permute.xlu0 %1097
      %1099 = vrot.lane.b32.xlu0 %v364, 64
      %v1100 = vpop.permute.xlu0 %1099
      %1101 = vrot.lane.b32.xlu0 %v365, 64
      %v1102 = vpop.permute.xlu0 %1101
      %1103 = vrot.lane.b32.xlu0 %v367, 64
      %v1104 = vpop.permute.xlu0 %1103
      %1105 = vrot.lane.b32.xlu0 %v368, 64
      %v1106 = vpop.permute.xlu0 %1105
      %1107 = vrot.lane.b32.xlu0 %v370, 64
      %v1108 = vpop.permute.xlu0 %1107
      %1109 = vrot.lane.b32.xlu0 %v371, 64
      %v1110 = vpop.permute.xlu0 %1109
      %1111 = vrot.lane.b32.xlu0 %v373, 64
      %v1112 = vpop.permute.xlu0 %1111
      %1113 = vrot.lane.b32.xlu0 %v374, 64
      %v1114 = vpop.permute.xlu0 %1113
      %1115 = vrot.lane.b32.xlu0 %v376, 64
      %v1116 = vpop.permute.xlu0 %1115
      %1117 = vrot.lane.b32.xlu0 %v377, 64
      %v1118 = vpop.permute.xlu0 %1117
      %1119 = vrot.lane.b32.xlu0 %v379, 64
      %v1120 = vpop.permute.xlu0 %1119
      %1121 = vrot.lane.b32.xlu0 %v380, 64
      %v1122 = vpop.permute.xlu0 %1121
      %1123 = vrot.lane.b32.xlu0 %v382, 64
      %v1124 = vpop.permute.xlu0 %1123
      %1125 = vrot.lane.b32.xlu0 %v383, 64
      %v1126 = vpop.permute.xlu0 %1125
      %1127 = vrot.lane.b32.xlu0 %v385, 64
      %v1128 = vpop.permute.xlu0 %1127
      %1129 = vrot.lane.b32.xlu0 %v386, 64
      %v1130 = vpop.permute.xlu0 %1129
      %1131 = vrot.lane.b32.xlu0 %v388, 64
      %v1132 = vpop.permute.xlu0 %1131
      %1133 = vrot.lane.b32.xlu0 %v389, 64
      %v1134 = vpop.permute.xlu0 %1133
      %1135 = vrot.lane.b32.xlu0 %v391, 64
      %v1136 = vpop.permute.xlu0 %1135
      %1137 = vrot.lane.b32.xlu0 %v392, 64
      %v1138 = vpop.permute.xlu0 %1137
      %1139 = vrot.lane.b32.xlu0 %v394, 64
      %v1140 = vpop.permute.xlu0 %1139
      %1141 = vrot.lane.b32.xlu0 %v395, 64
      %v1142 = vpop.permute.xlu0 %1141
      %1143 = vrot.lane.b32.xlu0 %v397, 64
      %v1144 = vpop.permute.xlu0 %1143
      %1145 = vrot.lane.b32.xlu0 %v398, 64
      %v1146 = vpop.permute.xlu0 %1145
      %1147 = vrot.lane.b32.xlu0 %v400, 64
      %v1148 = vpop.permute.xlu0 %1147
      %1149 = vrot.lane.b32.xlu0 %v401, 64
      %v1150 = vpop.permute.xlu0 %1149
      %1183 = vrot.lane.b32.xlu0 %v464, 96
      %v1184 = vpop.permute.xlu0 %1183
      %1185 = vrot.lane.b32.xlu0 %v466, 96
      %v1186 = vpop.permute.xlu0 %1185
      %1187 = vrot.lane.b32.xlu0 %v469, 96
      %v1188 = vpop.permute.xlu0 %1187
      %1189 = vrot.lane.b32.xlu0 %v471, 96
      %v1190 = vpop.permute.xlu0 %1189
      %1191 = vrot.lane.b32.xlu0 %v474, 96
      %v1192 = vpop.permute.xlu0 %1191
      %1193 = vrot.lane.b32.xlu0 %v476, 96
      %v1194 = vpop.permute.xlu0 %1193
      %1195 = vrot.lane.b32.xlu0 %v479, 96
      %v1196 = vpop.permute.xlu0 %1195
      %1197 = vrot.lane.b32.xlu0 %v481, 96
      %v1198 = vpop.permute.xlu0 %1197
      %1199 = vrot.lane.b32.xlu0 %v484, 96
      %v1200 = vpop.permute.xlu0 %1199
      %1201 = vrot.lane.b32.xlu0 %v486, 96
      %v1202 = vpop.permute.xlu0 %1201
      %1203 = vrot.lane.b32.xlu0 %v489, 96
      %v1204 = vpop.permute.xlu0 %1203
      %1205 = vrot.lane.b32.xlu0 %v491, 96
      %v1206 = vpop.permute.xlu0 %1205
      %1207 = vrot.lane.b32.xlu0 %v494, 96
      %v1208 = vpop.permute.xlu0 %1207
      %1209 = vrot.lane.b32.xlu0 %v496, 96
      %v1210 = vpop.permute.xlu0 %1209
      %1211 = vrot.lane.b32.xlu0 %v499, 96
      %v1212 = vpop.permute.xlu0 %1211
      %1213 = vrot.lane.b32.xlu0 %v501, 96
      %v1214 = vpop.permute.xlu0 %1213
      %1215 = vrot.lane.b32.xlu0 %v504, 96
      %v1216 = vpop.permute.xlu0 %1215
      %1217 = vrot.lane.b32.xlu0 %v506, 96
      %v1218 = vpop.permute.xlu0 %1217
      %1219 = vrot.lane.b32.xlu0 %v509, 96
      %v1220 = vpop.permute.xlu0 %1219
      %1221 = vrot.lane.b32.xlu0 %v511, 96
      %v1222 = vpop.permute.xlu0 %1221
      %1223 = vrot.lane.b32.xlu0 %v514, 96
      %v1224 = vpop.permute.xlu0 %1223
      %1225 = vrot.lane.b32.xlu0 %v516, 96
      %v1226 = vpop.permute.xlu0 %1225
      %1227 = vrot.lane.b32.xlu0 %v519, 96
      %v1228 = vpop.permute.xlu0 %1227
      %1229 = vrot.lane.b32.xlu0 %v521, 96
      %v1230 = vpop.permute.xlu0 %1229
      %1231 = vrot.lane.b32.xlu0 %v524, 96
      %v1232 = vpop.permute.xlu0 %1231
      %1233 = vrot.lane.b32.xlu0 %v526, 96
      %v1234 = vpop.permute.xlu0 %1233
      %1235 = vrot.lane.b32.xlu0 %v529, 96
      %v1236 = vpop.permute.xlu0 %1235
      %1237 = vrot.lane.b32.xlu0 %v531, 96
      %v1238 = vpop.permute.xlu0 %1237
      %1239 = vrot.lane.b32.xlu0 %v618, 96
      %v1240 = vpop.permute.xlu0 %1239
      %1241 = vrot.lane.b32.xlu0 %v620, 96
      %v1242 = vpop.permute.xlu0 %1241
      %1243 = vrot.lane.b32.xlu0 %v663, 96
      %v1244 = vpop.permute.xlu0 %1243
      %1245 = vrot.lane.b32.xlu0 %v665, 96
      %v1246 = vpop.permute.xlu0 %1245
      %vm1279 = vcmask 261120
      %v1280 = vsel %vm1279, %v349, %v704
      %v1281 = vsel %vm1279, %v350, %v706
      %v1282 = vsel %vm1279, %v352, %v708
      %v1283 = vsel %vm1279, %v353, %v710
      %v1284 = vsel %vm1279, %v355, %v712
      %v1285 = vsel %vm1279, %v356, %v714
      %v1286 = vsel %vm1279, %v358, %v716
      %v1287 = vsel %vm1279, %v359, %v718
      %v1288 = vsel %vm1279, %v361, %v720
      %v1289 = vsel %vm1279, %v362, %v722
      %v1290 = vsel %vm1279, %v364, %v724
      %v1291 = vsel %vm1279, %v365, %v726
      %v1292 = vsel %vm1279, %v367, %v728
      %v1293 = vsel %vm1279, %v368, %v730
      %v1294 = vsel %vm1279, %v370, %v732
      %v1295 = vsel %vm1279, %v371, %v734
      %v1296 = vsel %vm1279, %v373, %v736
      %v1297 = vsel %vm1279, %v374, %v738
      %v1298 = vsel %vm1279, %v376, %v740
      %v1299 = vsel %vm1279, %v377, %v742
      %v1300 = vsel %vm1279, %v379, %v744
      %v1301 = vsel %vm1279, %v380, %v746
      %v1302 = vsel %vm1279, %v382, %v748
      %v1303 = vsel %vm1279, %v383, %v750
      %v1304 = vsel %vm1279, %v385, %v752
      %v1305 = vsel %vm1279, %v386, %v754
      %v1306 = vsel %vm1279, %v388, %v756
      %v1307 = vsel %vm1279, %v389, %v758
      %v1308 = vsel %vm1279, %v391, %v760
      %v1309 = vsel %vm1279, %v392, %v762
      %v1310 = vsel %vm1279, %v394, %v764
      %v1311 = vsel %vm1279, %v395, %v766
      %vm1312 = vcmask 523264
      %v1313 = vsel %vm1312, %v1280, %v800
      %v1314 = vsel %vm1312, %v1281, %v802
      %v1315 = vsel %vm1312, %v1282, %v804
      %v1316 = vsel %vm1312, %v1283, %v806
      %v1317 = vsel %vm1312, %v1284, %v808
      %v1318 = vsel %vm1312, %v1285, %v810
      %v1319 = vsel %vm1312, %v1286, %v812
      %v1320 = vsel %vm1312, %v1287, %v814
      %v1321 = vsel %vm1312, %v1288, %v816
      %v1322 = vsel %vm1312, %v1289, %v818
      %v1323 = vsel %vm1312, %v1290, %v820
      %v1324 = vsel %vm1312, %v1291, %v822
      %v1325 = vsel %vm1312, %v1292, %v824
      %v1326 = vsel %vm1312, %v1293, %v826
      %v1327 = vsel %vm1312, %v1294, %v828
      %v1328 = vsel %vm1312, %v1295, %v830
      %v1329 = vsel %vm1312, %v1296, %v832
      %v1330 = vsel %vm1312, %v1297, %v834
      %v1331 = vsel %vm1312, %v1298, %v836
      %v1332 = vsel %vm1312, %v1299, %v838
      %v1333 = vsel %vm1312, %v1300, %v840
      %v1334 = vsel %vm1312, %v1301, %v842
      %v1335 = vsel %vm1312, %v1302, %v844
      %v1336 = vsel %vm1312, %v1303, %v846
      %v1337 = vsel %vm1312, %v1304, %v848
      %v1338 = vsel %vm1312, %v1305, %v850
      %v1339 = vsel %vm1312, %v1306, %v852
      %v1340 = vsel %vm1312, %v1307, %v854
      %v1341 = vsel %vm1312, %v1308, %v856
      %v1342 = vsel %vm1312, %v1309, %v858
      %v1343 = vsel %vm1312, %v1310, %v860
      %v1344 = vsel %vm1312, %v1311, %v862
      %vm1345 = vcmask 785408
      %v1346 = vsel %vm1345, %v1313, %v896
      %v1347 = vsel %vm1345, %v1314, %v898
      %v1348 = vsel %vm1345, %v1315, %v900
      %v1349 = vsel %vm1345, %v1316, %v902
      %v1350 = vsel %vm1345, %v1317, %v904
      %v1351 = vsel %vm1345, %v1318, %v906
      %v1352 = vsel %vm1345, %v1319, %v908
      %v1353 = vsel %vm1345, %v1320, %v910
      %v1354 = vsel %vm1345, %v1321, %v912
      %v1355 = vsel %vm1345, %v1322, %v914
      %v1356 = vsel %vm1345, %v1323, %v916
      %v1357 = vsel %vm1345, %v1324, %v918
      %v1358 = vsel %vm1345, %v1325, %v920
      %v1359 = vsel %vm1345, %v1326, %v922
      %v1360 = vsel %vm1345, %v1327, %v924
      %v1361 = vsel %vm1345, %v1328, %v926
      %v1362 = vsel %vm1345, %v1329, %v928
      %v1363 = vsel %vm1345, %v1330, %v930
      %v1364 = vsel %vm1345, %v1331, %v932
      %v1365 = vsel %vm1345, %v1332, %v934
      %v1366 = vsel %vm1345, %v1333, %v936
      %v1367 = vsel %vm1345, %v1334, %v938
      %v1368 = vsel %vm1345, %v1335, %v940
      %v1369 = vsel %vm1345, %v1336, %v942
      %v1370 = vsel %vm1345, %v1337, %v944
      %v1371 = vsel %vm1345, %v1338, %v946
      %v1372 = vsel %vm1345, %v1339, %v948
      %v1373 = vsel %vm1345, %v1340, %v950
      %v1374 = vsel %vm1345, %v1341, %v952
      %v1375 = vsel %vm1345, %v1342, %v954
      %v1376 = vsel %vm1345, %v1343, %v956
      %v1377 = vsel %vm1345, %v1344, %v958
      %v1378 = vsel %vm1279, %v459, %v992
      %v1379 = vsel %vm1279, %v461, %v994
      %v1380 = vsel %vm1279, %v464, %v996
      %v1381 = vsel %vm1279, %v466, %v998
      %v1382 = vsel %vm1279, %v469, %v1000
      %v1383 = vsel %vm1279, %v471, %v1002
      %v1384 = vsel %vm1279, %v474, %v1004
      %v1385 = vsel %vm1279, %v476, %v1006
      %v1386 = vsel %vm1279, %v479, %v1008
      %v1387 = vsel %vm1279, %v481, %v1010
      %v1388 = vsel %vm1279, %v484, %v1012
      %v1389 = vsel %vm1279, %v486, %v1014
      %v1390 = vsel %vm1279, %v489, %v1016
      %v1391 = vsel %vm1279, %v491, %v1018
      %v1392 = vsel %vm1279, %v494, %v1020
      %v1393 = vsel %vm1279, %v496, %v1022
      %v1394 = vsel %vm1279, %v499, %v1024
      %v1395 = vsel %vm1279, %v501, %v1026
      %v1396 = vsel %vm1279, %v504, %v1028
      %v1397 = vsel %vm1279, %v506, %v1030
      %v1398 = vsel %vm1279, %v509, %v1032
      %v1399 = vsel %vm1279, %v511, %v1034
      %v1400 = vsel %vm1279, %v514, %v1036
      %v1401 = vsel %vm1279, %v516, %v1038
      %v1402 = vsel %vm1279, %v519, %v1040
      %v1403 = vsel %vm1279, %v521, %v1042
      %v1404 = vsel %vm1279, %v524, %v1044
      %v1405 = vsel %vm1279, %v526, %v1046
      %v1406 = vsel %vm1279, %v529, %v1048
      %v1407 = vsel %vm1279, %v531, %v1050
      %v1408 = vsel %vm1279, %v618, %v1052
      %v1409 = vsel %vm1279, %v620, %v1054
      %v1410 = vsel %vm1312, %v1378, %v1088
      %v1411 = vsel %vm1312, %v1379, %v1090
      %v1412 = vsel %vm1312, %v1380, %v1092
      %v1413 = vsel %vm1312, %v1381, %v1094
      %v1414 = vsel %vm1312, %v1382, %v1096
      %v1415 = vsel %vm1312, %v1383, %v1098
      %v1416 = vsel %vm1312, %v1384, %v1100
      %v1417 = vsel %vm1312, %v1385, %v1102
      %v1418 = vsel %vm1312, %v1386, %v1104
      %v1419 = vsel %vm1312, %v1387, %v1106
      %v1420 = vsel %vm1312, %v1388, %v1108
      %v1421 = vsel %vm1312, %v1389, %v1110
      %v1422 = vsel %vm1312, %v1390, %v1112
      %v1423 = vsel %vm1312, %v1391, %v1114
      %v1424 = vsel %vm1312, %v1392, %v1116
      %v1425 = vsel %vm1312, %v1393, %v1118
      %v1426 = vsel %vm1312, %v1394, %v1120
      %v1427 = vsel %vm1312, %v1395, %v1122
      %v1428 = vsel %vm1312, %v1396, %v1124
      %v1429 = vsel %vm1312, %v1397, %v1126
      %v1430 = vsel %vm1312, %v1398, %v1128
      %v1431 = vsel %vm1312, %v1399, %v1130
      %v1432 = vsel %vm1312, %v1400, %v1132
      %v1433 = vsel %vm1312, %v1401, %v1134
      %v1434 = vsel %vm1312, %v1402, %v1136
      %v1435 = vsel %vm1312, %v1403, %v1138
      %v1436 = vsel %vm1312, %v1404, %v1140
      %v1437 = vsel %vm1312, %v1405, %v1142
      %v1438 = vsel %vm1312, %v1406, %v1144
      %v1439 = vsel %vm1312, %v1407, %v1146
      %v1440 = vsel %vm1312, %v1408, %v1148
      %v1441 = vsel %vm1312, %v1409, %v1150
      %v1442 = vsel %vm1345, %v1410, %v1184
      %v1443 = vsel %vm1345, %v1411, %v1186
      %v1444 = vsel %vm1345, %v1412, %v1188
      %v1445 = vsel %vm1345, %v1413, %v1190
      %v1446 = vsel %vm1345, %v1414, %v1192
      %v1447 = vsel %vm1345, %v1415, %v1194
      %v1448 = vsel %vm1345, %v1416, %v1196
      %v1449 = vsel %vm1345, %v1417, %v1198
      %v1450 = vsel %vm1345, %v1418, %v1200
      %v1451 = vsel %vm1345, %v1419, %v1202
      %v1452 = vsel %vm1345, %v1420, %v1204
      %v1453 = vsel %vm1345, %v1421, %v1206
      %v1454 = vsel %vm1345, %v1422, %v1208
      %v1455 = vsel %vm1345, %v1423, %v1210
      %v1456 = vsel %vm1345, %v1424, %v1212
      %v1457 = vsel %vm1345, %v1425, %v1214
      %v1458 = vsel %vm1345, %v1426, %v1216
      %v1459 = vsel %vm1345, %v1427, %v1218
      %v1460 = vsel %vm1345, %v1428, %v1220
      %v1461 = vsel %vm1345, %v1429, %v1222
      %v1462 = vsel %vm1345, %v1430, %v1224
      %v1463 = vsel %vm1345, %v1431, %v1226
      %v1464 = vsel %vm1345, %v1432, %v1228
      %v1465 = vsel %vm1345, %v1433, %v1230
      %v1466 = vsel %vm1345, %v1434, %v1232
      %v1467 = vsel %vm1345, %v1435, %v1234
      %v1468 = vsel %vm1345, %v1436, %v1236
      %v1469 = vsel %vm1345, %v1437, %v1238
      %v1470 = vsel %vm1345, %v1438, %v1240
      %v1471 = vsel %vm1345, %v1439, %v1242
      %v1472 = vsel %vm1345, %v1440, %v1244
      %v1473 = vsel %vm1345, %v1441, %v1246
      %v1474 = vpack.c.bf16 %v1347, %v1346
      %v1475 = vpack.c.bf16 %v1443, %v1442
      %v1476 = vpack.c.bf16 %v547, %v545
      %v1477 = vpack.c.bf16 %v1349, %v1348
      %v1478 = vpack.c.bf16 %v1445, %v1444
      %v1479 = vpack.c.bf16 %v552, %v550
      %v1480 = vpack.c.bf16 %v1351, %v1350
      %v1481 = vpack.c.bf16 %v1447, %v1446
      %v1482 = vpack.c.bf16 %v557, %v555
      %v1483 = vpack.c.bf16 %v1353, %v1352
      %v1484 = vpack.c.bf16 %v1449, %v1448
      %v1485 = vpack.c.bf16 %v562, %v560
      %v1486 = vpack.c.bf16 %v1355, %v1354
      %v1487 = vpack.c.bf16 %v1451, %v1450
      %v1488 = vpack.c.bf16 %v567, %v565
      %v1489 = vpack.c.bf16 %v1357, %v1356
      %v1490 = vpack.c.bf16 %v1453, %v1452
      %v1491 = vpack.c.bf16 %v572, %v570
      %v1492 = vpack.c.bf16 %v1359, %v1358
      %v1493 = vpack.c.bf16 %v1455, %v1454
      %v1494 = vpack.c.bf16 %v577, %v575
      %v1495 = vpack.c.bf16 %v1361, %v1360
      %v1496 = vpack.c.bf16 %v1457, %v1456
      %v1497 = vpack.c.bf16 %v582, %v580
      %v1498 = vpack.c.bf16 %v1363, %v1362
      %v1499 = vpack.c.bf16 %v1459, %v1458
      %v1500 = vpack.c.bf16 %v587, %v585
      %v1501 = vpack.c.bf16 %v1365, %v1364
      %v1502 = vpack.c.bf16 %v1461, %v1460
      %v1503 = vpack.c.bf16 %v592, %v590
      %v1504 = vpack.c.bf16 %v1367, %v1366
      %v1505 = vpack.c.bf16 %v1463, %v1462
      %v1506 = vpack.c.bf16 %v597, %v595
      %v1507 = vpack.c.bf16 %v1369, %v1368
      %v1508 = vpack.c.bf16 %v1465, %v1464
      %v1509 = vpack.c.bf16 %v602, %v600
      %v1510 = vpack.c.bf16 %v1371, %v1370
      %v1511 = vpack.c.bf16 %v1467, %v1466
      %v1512 = vpack.c.bf16 %v607, %v605
      %v1513 = vpack.c.bf16 %v1373, %v1372
      %v1514 = vpack.c.bf16 %v1469, %v1468
      %v1515 = vpack.c.bf16 %v612, %v610
      %v1516 = vpack.c.bf16 %v1375, %v1374
      %v1517 = vpack.c.bf16 %v1471, %v1470
      %v1518 = vpack.c.bf16 %v657, %v655
      %v1519 = vpack.c.bf16 %v1377, %v1376
      %v1520 = vpack.c.bf16 %v1473, %v1472
      %v1521 = vpack.c.bf16 %v670, %v668
      %v1522 = vld [vmem:[%s237] sm:$0xff]
      %v1523 = vld [vmem:[%s237 + $0x8] sm:$0xff]
      %v1524 = vld [vmem:[%s237 + $0x10] sm:$0xff]
      %v1525 = vld [vmem:[%s237 + $0x18] sm:$0xff]
      %v1526 = vld [vmem:[%s237 + $0x20] sm:$0xff]
      %v1527 = vld [vmem:[%s237 + $0x28] sm:$0xff]
      %v1528 = vld [vmem:[%s237 + $0x30] sm:$0xff]
      %v1529 = vld [vmem:[%s237 + $0x38] sm:$0xff]
      %v1530 = vld [vmem:[%s237 + $0x40] sm:$0xff]
      %v1531 = vld [vmem:[%s237 + $0x48] sm:$0xff]
      %v1532 = vld [vmem:[%s237 + $0x50] sm:$0xff]
      %v1533 = vld [vmem:[%s237 + $0x58] sm:$0xff]
      %v1534 = vld [vmem:[%s237 + $0x60] sm:$0xff]
      %v1535 = vld [vmem:[%s237 + $0x68] sm:$0xff]
      %v1536 = vld [vmem:[%s237 + $0x70] sm:$0xff]
      %v1537 = vld [vmem:[%s237 + $0x78] sm:$0xff]
      %v1538 = vld [vmem:[%s237 + $0x80] sm:$0xff]
      %v1539 = vld [vmem:[%s237 + $0x88] sm:$0xff]
      %v1540 = vld [vmem:[%s237 + $0x90] sm:$0xff]
      %v1541 = vld [vmem:[%s237 + $0x98] sm:$0xff]
      %v1542 = vld [vmem:[%s237 + $0xa0] sm:$0xff]
      %v1543 = vld [vmem:[%s237 + $0xa8] sm:$0xff]
      %v1544 = vld [vmem:[%s237 + $0xb0] sm:$0xff]
      %v1545 = vld [vmem:[%s237 + $0xb8] sm:$0xff]
      %v1546 = vld [vmem:[%s237 + $0xc0] sm:$0xff]
      %v1547 = vld [vmem:[%s237 + $0xc8] sm:$0xff]
      %v1548 = vld [vmem:[%s237 + $0xd0] sm:$0xff]
      %v1549 = vld [vmem:[%s237 + $0xd8] sm:$0xff]
      %v1550 = vld [vmem:[%s237 + $0xe0] sm:$0xff]
      %v1551 = vld [vmem:[%s237 + $0xe8] sm:$0xff]
      %v1552 = vld [vmem:[%s237 + $0xf0] sm:$0xff]
      %v1553 = vld [vmem:[%s237 + $0xf8] sm:$0xff]
      %v1554 = vld [vmem:[%s246] sm:$0xf]
      %v1555 = vld [vmem:[%s246 + $0x4] sm:$0xf]
      %v1556 = vld [vmem:[%s246 + $0x8] sm:$0xf]
      %v1557 = vld [vmem:[%s246 + $0xc] sm:$0xf]
      %v1558 = vld [vmem:[%s246 + $0x10] sm:$0xf]
      %v1559 = vld [vmem:[%s246 + $0x14] sm:$0xf]
      %v1560 = vld [vmem:[%s246 + $0x18] sm:$0xf]
      %v1561 = vld [vmem:[%s246 + $0x1c] sm:$0xf]
      %v1562 = vld [vmem:[%s246 + $0x20] sm:$0xf]
      %v1563 = vld [vmem:[%s246 + $0x24] sm:$0xf]
      %v1564 = vld [vmem:[%s246 + $0x28] sm:$0xf]
      %v1565 = vld [vmem:[%s246 + $0x2c] sm:$0xf]
      %v1566 = vld [vmem:[%s246 + $0x30] sm:$0xf]
      %v1567 = vld [vmem:[%s246 + $0x34] sm:$0xf]
      %v1568 = vld [vmem:[%s246 + $0x38] sm:$0xf]
      %v1569 = vld [vmem:[%s246 + $0x3c] sm:$0xf]
      %v1570 = vld [vmem:[%s246 + $0x40] sm:$0xf]
      %v1571 = vld [vmem:[%s246 + $0x44] sm:$0xf]
      %v1572 = vld [vmem:[%s246 + $0x48] sm:$0xf]
      %v1573 = vld [vmem:[%s246 + $0x4c] sm:$0xf]
      %v1574 = vld [vmem:[%s246 + $0x50] sm:$0xf]
      %v1575 = vld [vmem:[%s246 + $0x54] sm:$0xf]
      %v1576 = vld [vmem:[%s246 + $0x58] sm:$0xf]
      %v1577 = vld [vmem:[%s246 + $0x5c] sm:$0xf]
      %v1578 = vld [vmem:[%s246 + $0x60] sm:$0xf]
      %v1579 = vld [vmem:[%s246 + $0x64] sm:$0xf]
      %v1580 = vld [vmem:[%s246 + $0x68] sm:$0xf]
      %v1581 = vld [vmem:[%s246 + $0x6c] sm:$0xf]
      %v1582 = vld [vmem:[%s246 + $0x70] sm:$0xf]
      %v1583 = vld [vmem:[%s246 + $0x74] sm:$0xf]
      %v1584 = vld [vmem:[%s246 + $0x78] sm:$0xf]
      %v1585 = vld [vmem:[%s246 + $0x7c] sm:$0xf]
      %v1586 = vld [vmem:[%s246 + $0x80] sm:$0xf]
      %v1587 = vld [vmem:[%s246 + $0x84] sm:$0xf]
      %v1588 = vld [vmem:[%s246 + $0x88] sm:$0xf]
      %v1589 = vld [vmem:[%s246 + $0x8c] sm:$0xf]
      %v1626 = vunpack.c.l.b16 %v1554
      %v1627 = vunpack.c.l.b16 %v1555
      %v1628 = vunpack.c.l.b16 %v1556
      %v1629 = vunpack.c.l.b16 %v1557
      %v1630 = vunpack.c.l.b16 %v1558
      %v1631 = vunpack.c.l.b16 %v1559
      %v1632 = vunpack.c.l.b16 %v1560
      %v1633 = vunpack.c.l.b16 %v1561
      %v1634 = vunpack.c.l.b16 %v1562
      %v1635 = vunpack.c.l.b16 %v1563
      %v1636 = vunpack.c.l.b16 %v1564
      %v1637 = vunpack.c.l.b16 %v1565
      %v1638 = vunpack.c.l.b16 %v1566
      %v1639 = vunpack.c.l.b16 %v1567
      %v1640 = vunpack.c.l.b16 %v1568
      %v1641 = vunpack.c.l.b16 %v1569
      %v1642 = vunpack.c.l.b16 %v1570
      %v1643 = vunpack.c.l.b16 %v1571
      %v1644 = vunpack.c.l.b16 %v1572
      %v1645 = vunpack.c.l.b16 %v1573
      %v1646 = vunpack.c.l.b16 %v1574
      %v1647 = vunpack.c.l.b16 %v1575
      %v1648 = vunpack.c.l.b16 %v1576
      %v1649 = vunpack.c.l.b16 %v1577
      %v1650 = vunpack.c.l.b16 %v1578
      %v1651 = vunpack.c.l.b16 %v1579
      %v1652 = vunpack.c.l.b16 %v1580
      %v1653 = vunpack.c.l.b16 %v1581
      %v1654 = vunpack.c.l.b16 %v1582
      %v1655 = vunpack.c.l.b16 %v1583
      %v1656 = vunpack.c.l.b16 %v1584
      %v1657 = vunpack.c.l.b16 %v1585
      %v1658 = vunpack.c.l.b16 %v1586
      %v1659 = vunpack.c.l.b16 %v1587
      %v1660 = vunpack.c.l.b16 %v1588
      %v1661 = vunpack.c.l.b16 %v1589
      %v1662 = vpack.c.b16 %v1627, %v1626
      %v1663 = vpack.c.b16 %v1629, %v1628
      %v1664 = vpack.c.b16 %v1631, %v1630
      %v1665 = vpack.c.b16 %v1633, %v1632
      %v1666 = vpack.c.b16 %v1635, %v1634
      %v1667 = vpack.c.b16 %v1637, %v1636
      %v1668 = vpack.c.b16 %v1639, %v1638
      %v1669 = vpack.c.b16 %v1641, %v1640
      %v1670 = vpack.c.b16 %v1643, %v1642
      %v1671 = vpack.c.b16 %v1645, %v1644
      %v1672 = vpack.c.b16 %v1647, %v1646
      %v1673 = vpack.c.b16 %v1649, %v1648
      %v1674 = vpack.c.b16 %v1651, %v1650
      %v1675 = vpack.c.b16 %v1653, %v1652
      %v1676 = vpack.c.b16 %v1655, %v1654
      %v1677 = vpack.c.b16 %v1657, %v1656
      %v1678 = vpack.c.b16 %v1659, %v1658
      %v1679 = vpack.c.b16 %v1661, %v1660
      %v1699 = vsel %vm1279, %v1476, 0
      %v1702 = vsel %vm1279, %v1479, 0
      %v1705 = vsel %vm1279, %v1482, 0
      %v1708 = vsel %vm1279, %v1485, 0
      %v1711 = vsel %vm1279, %v1488, 0
      %v1714 = vsel %vm1279, %v1491, 0
      %v1717 = vsel %vm1279, %v1494, 0
      %v1720 = vsel %vm1279, %v1497, 0
      %v1723 = vsel %vm1279, %v1500, 0
      %v1726 = vsel %vm1279, %v1503, 0
      %v1729 = vsel %vm1279, %v1506, 0
      %v1732 = vsel %vm1279, %v1509, 0
      %v1735 = vsel %vm1279, %v1512, 0
      %v1738 = vsel %vm1279, %v1515, 0
      %v1741 = vsel %vm1279, %v1518, 0
      %v1744 = vsel %vm1279, %v1521, 0
      %1746 = vmatprep.subr.bf16.mxu0 0
      %1747 = vmatpush1.bf16.msra.mxu0 %v1662
      %1748 = vmatprep.subr.bf16.mxu0 0
      %1749 = vmatpush1.bf16.msra.mxu0 %v1663
      %1750 = vmatprep.subr.bf16.mxu0 0
      %1751 = vmatpush1.bf16.msra.mxu0 %v1664
      %1752 = vmatprep.subr.bf16.mxu0 0
      %1753 = vmatpush1.bf16.msra.mxu0 %v1665
      %1754 = vmatprep.subr.bf16.mxu0 0
      %1755 = vmatpush1.bf16.msra.mxu0 %v1666
      %1756 = vmatprep.subr.bf16.mxu0 0
      %1757 = vmatpush1.bf16.msra.mxu0 %v1667
      %1758 = vmatprep.subr.bf16.mxu0 0
      %1759 = vmatpush1.bf16.msra.mxu0 %v1668
      %1760 = vmatprep.subr.bf16.mxu0 0
      %1761 = vmatpush1.bf16.msra.mxu0 %v1669
      %1762 = vmatprep.subr.bf16.mxu0 0
      %1763 = vmatpush1.bf16.msra.mxu0 %v1670
      %1764 = vmatprep.subr.bf16.mxu0 0
      %1765 = vmatpush1.bf16.msra.mxu0 %v1671
      %1766 = vmatprep.subr.bf16.mxu0 0
      %1767 = vmatpush1.bf16.msra.mxu0 %v1672
      %1768 = vmatprep.subr.bf16.mxu0 0
      %1769 = vmatpush1.bf16.msra.mxu0 %v1673
      %1770 = vmatprep.subr.bf16.mxu0 0
      %1771 = vmatpush1.bf16.msra.mxu0 %v1674
      %1772 = vmatprep.subr.bf16.mxu0 0
      %1773 = vmatpush1.bf16.msra.mxu0 %v1675
      %1774 = vmatprep.subr.bf16.mxu0 0
      %1775 = vmatpush1.bf16.msra.mxu0 %v1676
      %1776 = vmatprep.subr.bf16.mxu0 0
      %1777 = vmatpush1.bf16.msra.mxu0 %v1677
      %1778 = vmatprep.mubr.bf16.mxu0 %v1475
      %1779 = vmatmul.mubr.bf16.gmra.mrb[0].mxu0 %v1474
      %v1780 = vpop.f32.mrb[0].mxu0
      %v1781 = vadd.f32 0.0, %v1780
      %v1782 = vpop.f32.mrb[0].mxu0
      %v1783 = vpop.f32.mrb[0].mxu0
      %v1784 = vadd.f32 0.0, %v1783
      %v1785 = vpop.f32.mrb[0].mxu0
      %1786 = vmatprep.mubr.bf16.mxu0 %v1478
      %1787 = vmatmul.mubr.bf16.gmra.mrb[0].mxu0 %v1477
      %v1788 = vpop.f32.mrb[0].mxu0
      %v1789 = vadd.f32 0.0, %v1788
      %v1790 = vpop.f32.mrb[0].mxu0
      %v1791 = vpop.f32.mrb[0].mxu0
      %v1792 = vadd.f32 0.0, %v1791
      %v1793 = vpop.f32.mrb[0].mxu0
      %1794 = vmatprep.mubr.bf16.mxu0 %v1481
      %1795 = vmatmul.mubr.bf16.gmra.mrb[0].mxu0 %v1480
      %v1796 = vpop.f32.mrb[0].mxu0
      %v1797 = vadd.f32 0.0, %v1796
      %v1798 = vpop.f32.mrb[0].mxu0
      %v1799 = vpop.f32.mrb[0].mxu0
      %v1800 = vadd.f32 0.0, %v1799
      %v1801 = vpop.f32.mrb[0].mxu0
      %1802 = vmatprep.mubr.bf16.mxu0 %v1484
      %1803 = vmatmul.mubr.bf16.gmra.mrb[0].mxu0 %v1483
      %v1804 = vpop.f32.mrb[0].mxu0
      %v1805 = vadd.f32 0.0, %v1804
      %v1806 = vpop.f32.mrb[0].mxu0
      %v1807 = vpop.f32.mrb[0].mxu0
      %v1808 = vadd.f32 0.0, %v1807
      %v1809 = vpop.f32.mrb[0].mxu0
      %1810 = vmatprep.mubr.bf16.mxu0 %v1487
      %1811 = vmatmul.mubr.bf16.gmra.mrb[0].mxu0 %v1486
      %v1812 = vpop.f32.mrb[0].mxu0
      %v1813 = vadd.f32 0.0, %v1812
      %v1814 = vpop.f32.mrb[0].mxu0
      %v1815 = vpop.f32.mrb[0].mxu0
      %v1816 = vadd.f32 0.0, %v1815
      %v1817 = vpop.f32.mrb[0].mxu0
      %1818 = vmatprep.mubr.bf16.mxu0 %v1490
      %1819 = vmatmul.mubr.bf16.gmra.mrb[0].mxu0 %v1489
      %v1820 = vpop.f32.mrb[0].mxu0
      %v1821 = vadd.f32 0.0, %v1820
      %v1822 = vpop.f32.mrb[0].mxu0
      %v1823 = vpop.f32.mrb[0].mxu0
      %v1824 = vadd.f32 0.0, %v1823
      %v1825 = vpop.f32.mrb[0].mxu0
      %1826 = vmatprep.mubr.bf16.mxu0 %v1493
      %1827 = vmatmul.mubr.bf16.gmra.mrb[0].mxu0 %v1492
      %v1828 = vpop.f32.mrb[0].mxu0
      %v1829 = vadd.f32 0.0, %v1828
      %v1830 = vpop.f32.mrb[0].mxu0
      %v1831 = vpop.f32.mrb[0].mxu0
      %v1832 = vadd.f32 0.0, %v1831
      %v1833 = vpop.f32.mrb[0].mxu0
      %1834 = vmatprep.mubr.bf16.mxu0 %v1496
      %1835 = vmatmul.mubr.bf16.gmra.mrb[0].mxu0 %v1495
      %v1836 = vpop.f32.mrb[0].mxu0
      %v1837 = vadd.f32 0.0, %v1836
      %v1838 = vpop.f32.mrb[0].mxu0
      %v1839 = vpop.f32.mrb[0].mxu0
      %v1840 = vadd.f32 0.0, %v1839
      %v1841 = vpop.f32.mrb[0].mxu0
      %1842 = vmatprep.mubr.bf16.mxu0 %v1499
      %1843 = vmatmul.mubr.bf16.gmra.mrb[0].mxu0 %v1498
      %v1844 = vpop.f32.mrb[0].mxu0
      %v1845 = vadd.f32 0.0, %v1844
      %v1846 = vpop.f32.mrb[0].mxu0
      %v1847 = vpop.f32.mrb[0].mxu0
      %v1848 = vadd.f32 0.0, %v1847
      %v1849 = vpop.f32.mrb[0].mxu0
      %1850 = vmatprep.mubr.bf16.mxu0 %v1502
      %1851 = vmatmul.mubr.bf16.gmra.mrb[0].mxu0 %v1501
      %v1852 = vpop.f32.mrb[0].mxu0
      %v1853 = vadd.f32 0.0, %v1852
      %v1854 = vpop.f32.mrb[0].mxu0
      %v1855 = vpop.f32.mrb[0].mxu0
      %v1856 = vadd.f32 0.0, %v1855
      %v1857 = vpop.f32.mrb[0].mxu0
      %1858 = vmatprep.mubr.bf16.mxu0 %v1505
      %1859 = vmatmul.mubr.bf16.gmra.mrb[0].mxu0 %v1504
      %v1860 = vpop.f32.mrb[0].mxu0
      %v1861 = vadd.f32 0.0, %v1860
      %v1862 = vpop.f32.mrb[0].mxu0
      %v1863 = vpop.f32.mrb[0].mxu0
      %v1864 = vadd.f32 0.0, %v1863
      %v1865 = vpop.f32.mrb[0].mxu0
      %1866 = vmatprep.mubr.bf16.mxu0 %v1508
      %1867 = vmatmul.mubr.bf16.gmra.mrb[0].mxu0 %v1507
      %v1868 = vpop.f32.mrb[0].mxu0
      %v1869 = vadd.f32 0.0, %v1868
      %v1870 = vpop.f32.mrb[0].mxu0
      %v1871 = vpop.f32.mrb[0].mxu0
      %v1872 = vadd.f32 0.0, %v1871
      %v1873 = vpop.f32.mrb[0].mxu0
      %1874 = vmatprep.mubr.bf16.mxu0 %v1511
      %1875 = vmatmul.mubr.bf16.gmra.mrb[0].mxu0 %v1510
      %v1876 = vpop.f32.mrb[0].mxu0
      %v1877 = vadd.f32 0.0, %v1876
      %v1878 = vpop.f32.mrb[0].mxu0
      %v1879 = vpop.f32.mrb[0].mxu0
      %v1880 = vadd.f32 0.0, %v1879
      %v1881 = vpop.f32.mrb[0].mxu0
      %1882 = vmatprep.mubr.bf16.mxu0 %v1514
      %1883 = vmatmul.mubr.bf16.gmra.mrb[0].mxu0 %v1513
      %v1884 = vpop.f32.mrb[0].mxu0
      %v1885 = vadd.f32 0.0, %v1884
      %v1886 = vpop.f32.mrb[0].mxu0
      %v1887 = vpop.f32.mrb[0].mxu0
      %v1888 = vadd.f32 0.0, %v1887
      %v1889 = vpop.f32.mrb[0].mxu0
      %1890 = vmatprep.mubr.bf16.mxu0 %v1517
      %1891 = vmatmul.mubr.bf16.gmra.mrb[0].mxu0 %v1516
      %v1892 = vpop.f32.mrb[0].mxu0
      %v1893 = vadd.f32 0.0, %v1892
      %v1894 = vpop.f32.mrb[0].mxu0
      %v1895 = vpop.f32.mrb[0].mxu0
      %v1896 = vadd.f32 0.0, %v1895
      %v1897 = vpop.f32.mrb[0].mxu0
      %1898 = vmatprep.mubr.bf16.mxu0 %v1520
      %1899 = vmatmul.mubr.bf16.gmra.mrb[0].mxu0 %v1519
      %v1900 = vpop.f32.mrb[0].mxu0
      %v1901 = vadd.f32 0.0, %v1900
      %v1902 = vpop.f32.mrb[0].mxu0
      %v1903 = vpop.f32.mrb[0].mxu0
      %v1904 = vadd.f32 0.0, %v1903
      %v1905 = vpop.f32.mrb[0].mxu0
      %1906 = vdwg.mxu0
      %1907 = vmatprep.subr.bf16.mxu0 0
      %1908 = vmatpush1.bf16.msra.mxu0 %v1678
      %1909 = vmatprep.subr.bf16.mxu0 0
      %1910 = vmatpush1.bf16.msra.mxu0 %v1679
      %1911 = vmatprep.subr.bf16.mxu0 0
      %1912 = vmatpush1.bf16.msra.mxu0 0
      %1913 = vmatprep.subr.bf16.mxu0 0
      %1914 = vmatpush1.bf16.msra.mxu0 0
      %1915 = vmatprep.subr.bf16.mxu0 0
      %1916 = vmatpush1.bf16.msra.mxu0 0
      %1917 = vmatprep.subr.bf16.mxu0 0
      %1918 = vmatpush1.bf16.msra.mxu0 0
      %1919 = vmatprep.subr.bf16.mxu0 0
      %1920 = vmatpush1.bf16.msra.mxu0 0
      %1921 = vmatprep.subr.bf16.mxu0 0
      %1922 = vmatpush1.bf16.msra.mxu0 0
      %1923 = vmatprep.subr.bf16.mxu0 0
      %1924 = vmatpush1.bf16.msra.mxu0 0
      %1925 = vmatprep.subr.bf16.mxu0 0
      %1926 = vmatpush1.bf16.msra.mxu0 0
      %1927 = vmatprep.subr.bf16.mxu0 0
      %1928 = vmatpush1.bf16.msra.mxu0 0
      %1929 = vmatprep.subr.bf16.mxu0 0
      %1930 = vmatpush1.bf16.msra.mxu0 0
      %1931 = vmatprep.subr.bf16.mxu0 0
      %1932 = vmatpush1.bf16.msra.mxu0 0
      %1933 = vmatprep.subr.bf16.mxu0 0
      %1934 = vmatpush1.bf16.msra.mxu0 0
      %1935 = vmatprep.subr.bf16.mxu0 0
      %1936 = vmatpush1.bf16.msra.mxu0 0
      %1937 = vmatprep.subr.bf16.mxu0 0
      %1938 = vmatpush1.bf16.msra.mxu0 0
      %1939 = vmatprep.mubr.bf16.mxu0 0
      %1940 = vmatmul.mubr.bf16.gmra.mrb[0].mxu0 %v1699
      %v1941 = vpop.f32.mrb[0].mxu0
      %v1942 = vadd.f32 %v1781, %v1941
      %v1943 = vpop.f32.mrb[0].mxu0
      %v1944 = vpop.f32.mrb[0].mxu0
      %v1945 = vadd.f32 %v1784, %v1944
      %v1946 = vpop.f32.mrb[0].mxu0
      %1947 = vmatprep.mubr.bf16.mxu0 0
      %1948 = vmatmul.mubr.bf16.gmra.mrb[0].mxu0 %v1702
      %v1949 = vpop.f32.mrb[0].mxu0
      %v1950 = vadd.f32 %v1789, %v1949
      %v1951 = vpop.f32.mrb[0].mxu0
      %v1952 = vpop.f32.mrb[0].mxu0
      %v1953 = vadd.f32 %v1792, %v1952
      %v1954 = vpop.f32.mrb[0].mxu0
      %1955 = vmatprep.mubr.bf16.mxu0 0
      %1956 = vmatmul.mubr.bf16.gmra.mrb[0].mxu0 %v1705
      %v1957 = vpop.f32.mrb[0].mxu0
      %v1958 = vadd.f32 %v1797, %v1957
      %v1959 = vpop.f32.mrb[0].mxu0
      %v1960 = vpop.f32.mrb[0].mxu0
      %v1961 = vadd.f32 %v1800, %v1960
      %v1962 = vpop.f32.mrb[0].mxu0
      %1963 = vmatprep.mubr.bf16.mxu0 0
      %1964 = vmatmul.mubr.bf16.gmra.mrb[0].mxu0 %v1708
      %v1965 = vpop.f32.mrb[0].mxu0
      %v1966 = vadd.f32 %v1805, %v1965
      %v1967 = vpop.f32.mrb[0].mxu0
      %v1968 = vpop.f32.mrb[0].mxu0
      %v1969 = vadd.f32 %v1808, %v1968
      %v1970 = vpop.f32.mrb[0].mxu0
      %1971 = vmatprep.mubr.bf16.mxu0 0
      %1972 = vmatmul.mubr.bf16.gmra.mrb[0].mxu0 %v1711
      %v1973 = vpop.f32.mrb[0].mxu0
      %v1974 = vadd.f32 %v1813, %v1973
      %v1975 = vpop.f32.mrb[0].mxu0
      %v1976 = vpop.f32.mrb[0].mxu0
      %v1977 = vadd.f32 %v1816, %v1976
      %v1978 = vpop.f32.mrb[0].mxu0
      %1979 = vmatprep.mubr.bf16.mxu0 0
      %1980 = vmatmul.mubr.bf16.gmra.mrb[0].mxu0 %v1714
      %v1981 = vpop.f32.mrb[0].mxu0
      %v1982 = vadd.f32 %v1821, %v1981
      %v1983 = vpop.f32.mrb[0].mxu0
      %v1984 = vpop.f32.mrb[0].mxu0
      %v1985 = vadd.f32 %v1824, %v1984
      %v1986 = vpop.f32.mrb[0].mxu0
      %1987 = vmatprep.mubr.bf16.mxu0 0
      %1988 = vmatmul.mubr.bf16.gmra.mrb[0].mxu0 %v1717
      %v1989 = vpop.f32.mrb[0].mxu0
      %v1990 = vadd.f32 %v1829, %v1989
      %v1991 = vpop.f32.mrb[0].mxu0
      %v1992 = vpop.f32.mrb[0].mxu0
      %v1993 = vadd.f32 %v1832, %v1992
      %v1994 = vpop.f32.mrb[0].mxu0
      %1995 = vmatprep.mubr.bf16.mxu0 0
      %1996 = vmatmul.mubr.bf16.gmra.mrb[0].mxu0 %v1720
      %v1997 = vpop.f32.mrb[0].mxu0
      %v1998 = vadd.f32 %v1837, %v1997
      %v1999 = vpop.f32.mrb[0].mxu0
      %v2000 = vpop.f32.mrb[0].mxu0
      %v2001 = vadd.f32 %v1840, %v2000
      %v2002 = vpop.f32.mrb[0].mxu0
      %2003 = vmatprep.mubr.bf16.mxu0 0
      %2004 = vmatmul.mubr.bf16.gmra.mrb[0].mxu0 %v1723
      %v2005 = vpop.f32.mrb[0].mxu0
      %v2006 = vadd.f32 %v1845, %v2005
      %v2007 = vpop.f32.mrb[0].mxu0
      %v2008 = vpop.f32.mrb[0].mxu0
      %v2009 = vadd.f32 %v1848, %v2008
      %v2010 = vpop.f32.mrb[0].mxu0
      %2011 = vmatprep.mubr.bf16.mxu0 0
      %2012 = vmatmul.mubr.bf16.gmra.mrb[0].mxu0 %v1726
      %v2013 = vpop.f32.mrb[0].mxu0
      %v2014 = vadd.f32 %v1853, %v2013
      %v2015 = vpop.f32.mrb[0].mxu0
      %v2016 = vpop.f32.mrb[0].mxu0
      %v2017 = vadd.f32 %v1856, %v2016
      %v2018 = vpop.f32.mrb[0].mxu0
      %2019 = vmatprep.mubr.bf16.mxu0 0
      %2020 = vmatmul.mubr.bf16.gmra.mrb[0].mxu0 %v1729
      %v2021 = vpop.f32.mrb[0].mxu0
      %v2022 = vadd.f32 %v1861, %v2021
      %v2023 = vpop.f32.mrb[0].mxu0
      %v2024 = vpop.f32.mrb[0].mxu0
      %v2025 = vadd.f32 %v1864, %v2024
      %v2026 = vpop.f32.mrb[0].mxu0
      %2027 = vmatprep.mubr.bf16.mxu0 0
      %2028 = vmatmul.mubr.bf16.gmra.mrb[0].mxu0 %v1732
      %v2029 = vpop.f32.mrb[0].mxu0
      %v2030 = vadd.f32 %v1869, %v2029
      %v2031 = vpop.f32.mrb[0].mxu0
      %v2032 = vpop.f32.mrb[0].mxu0
      %v2033 = vadd.f32 %v1872, %v2032
      %v2034 = vpop.f32.mrb[0].mxu0
      %2035 = vmatprep.mubr.bf16.mxu0 0
      %2036 = vmatmul.mubr.bf16.gmra.mrb[0].mxu0 %v1735
      %v2037 = vpop.f32.mrb[0].mxu0
      %v2038 = vadd.f32 %v1877, %v2037
      %v2039 = vpop.f32.mrb[0].mxu0
      %v2040 = vpop.f32.mrb[0].mxu0
      %v2041 = vadd.f32 %v1880, %v2040
      %v2042 = vpop.f32.mrb[0].mxu0
      %2043 = vmatprep.mubr.bf16.mxu0 0
      %2044 = vmatmul.mubr.bf16.gmra.mrb[0].mxu0 %v1738
      %v2045 = vpop.f32.mrb[0].mxu0
      %v2046 = vadd.f32 %v1885, %v2045
      %v2047 = vpop.f32.mrb[0].mxu0
      %v2048 = vpop.f32.mrb[0].mxu0
      %v2049 = vadd.f32 %v1888, %v2048
      %v2050 = vpop.f32.mrb[0].mxu0
      %2051 = vmatprep.mubr.bf16.mxu0 0
      %2052 = vmatmul.mubr.bf16.gmra.mrb[0].mxu0 %v1741
      %v2053 = vpop.f32.mrb[0].mxu0
      %v2054 = vadd.f32 %v1893, %v2053
      %v2055 = vpop.f32.mrb[0].mxu0
      %v2056 = vpop.f32.mrb[0].mxu0
      %v2057 = vadd.f32 %v1896, %v2056
      %v2058 = vpop.f32.mrb[0].mxu0
      %2059 = vmatprep.mubr.bf16.mxu0 0
      %2060 = vmatmul.mubr.bf16.gmra.mrb[0].mxu0 %v1744
      %v2061 = vpop.f32.mrb[0].mxu0
      %v2062 = vadd.f32 %v1901, %v2061
      %v2063 = vpop.f32.mrb[0].mxu0
      %v2064 = vpop.f32.mrb[0].mxu0
      %v2065 = vadd.f32 %v1904, %v2064
      %v2066 = vpop.f32.mrb[0].mxu0
      %2067 = vdwg.mxu0
      %v2068 = vadd.f32 %v1522, %v1942
      %v2069 = vadd.f32 %v1523, %v1945
      %v2070 = vadd.f32 %v1524, %v1950
      %v2071 = vadd.f32 %v1525, %v1953
      %v2072 = vadd.f32 %v1526, %v1958
      %v2073 = vadd.f32 %v1527, %v1961
      %v2074 = vadd.f32 %v1528, %v1966
      %v2075 = vadd.f32 %v1529, %v1969
      %v2076 = vadd.f32 %v1530, %v1974
      %v2077 = vadd.f32 %v1531, %v1977
      %v2078 = vadd.f32 %v1532, %v1982
      %v2079 = vadd.f32 %v1533, %v1985
      %v2080 = vadd.f32 %v1534, %v1990
      %v2081 = vadd.f32 %v1535, %v1993
      %v2082 = vadd.f32 %v1536, %v1998
      %v2083 = vadd.f32 %v1537, %v2001
      %v2084 = vadd.f32 %v1538, %v2006
      %v2085 = vadd.f32 %v1539, %v2009
      %v2086 = vadd.f32 %v1540, %v2014
      %v2087 = vadd.f32 %v1541, %v2017
      %v2088 = vadd.f32 %v1542, %v2022
      %v2089 = vadd.f32 %v1543, %v2025
      %v2090 = vadd.f32 %v1544, %v2030
      %v2091 = vadd.f32 %v1545, %v2033
      %v2092 = vadd.f32 %v1546, %v2038
      %v2093 = vadd.f32 %v1547, %v2041
      %v2094 = vadd.f32 %v1548, %v2046
      %v2095 = vadd.f32 %v1549, %v2049
      %v2096 = vadd.f32 %v1550, %v2054
      %v2097 = vadd.f32 %v1551, %v2057
      %v2098 = vadd.f32 %v1552, %v2062
      %v2099 = vadd.f32 %v1553, %v2065
      %v2100 = vxor.u32 %v2068, 2147483648
      %v2101 = vxor.u32 %v2069, 2147483648
      %v2102 = vxor.u32 %v2070, 2147483648
      %v2103 = vxor.u32 %v2071, 2147483648
      %v2104 = vxor.u32 %v2072, 2147483648
      %v2105 = vxor.u32 %v2073, 2147483648
      %v2106 = vxor.u32 %v2074, 2147483648
      %v2107 = vxor.u32 %v2075, 2147483648
      %v2108 = vxor.u32 %v2076, 2147483648
      %v2109 = vxor.u32 %v2077, 2147483648
      %v2110 = vxor.u32 %v2078, 2147483648
      %v2111 = vxor.u32 %v2079, 2147483648
      %v2112 = vxor.u32 %v2080, 2147483648
      %v2113 = vxor.u32 %v2081, 2147483648
      %v2114 = vxor.u32 %v2082, 2147483648
      %v2115 = vxor.u32 %v2083, 2147483648
      %v2116 = vxor.u32 %v2084, 2147483648
      %v2117 = vxor.u32 %v2085, 2147483648
      %v2118 = vxor.u32 %v2086, 2147483648
      %v2119 = vxor.u32 %v2087, 2147483648
      %v2120 = vxor.u32 %v2088, 2147483648
      %v2121 = vxor.u32 %v2089, 2147483648
      %v2122 = vxor.u32 %v2090, 2147483648
      %v2123 = vxor.u32 %v2091, 2147483648
      %v2124 = vxor.u32 %v2092, 2147483648
      %v2125 = vxor.u32 %v2093, 2147483648
      %v2126 = vxor.u32 %v2094, 2147483648
      %v2127 = vxor.u32 %v2095, 2147483648
      %v2128 = vxor.u32 %v2096, 2147483648
      %v2129 = vxor.u32 %v2097, 2147483648
      %v2130 = vxor.u32 %v2098, 2147483648
      %v2131 = vxor.u32 %v2099, 2147483648
      %v2132 = vmul.f32 %v2100, 1.442695
      %v2133 = vpow.pop %v2132
      %v2134 = vmul.f32 %v2101, 1.442695
      %v2135 = vpow.pop %v2134
      %v2136 = vmul.f32 %v2102, 1.442695
      %v2137 = vpow.pop %v2136
      %v2138 = vmul.f32 %v2103, 1.442695
      %v2139 = vpow.pop %v2138
      %v2140 = vmul.f32 %v2104, 1.442695
      %v2141 = vpow.pop %v2140
      %v2142 = vmul.f32 %v2105, 1.442695
      %v2143 = vpow.pop %v2142
      %v2144 = vmul.f32 %v2106, 1.442695
      %v2145 = vpow.pop %v2144
      %v2146 = vmul.f32 %v2107, 1.442695
      %v2147 = vpow.pop %v2146
      %v2148 = vmul.f32 %v2108, 1.442695
      %v2149 = vpow.pop %v2148
      %v2150 = vmul.f32 %v2109, 1.442695
      %v2151 = vpow.pop %v2150
      %v2152 = vmul.f32 %v2110, 1.442695
      %v2153 = vpow.pop %v2152
      %v2154 = vmul.f32 %v2111, 1.442695
      %v2155 = vpow.pop %v2154
      %v2156 = vmul.f32 %v2112, 1.442695
      %v2157 = vpow.pop %v2156
      %v2158 = vmul.f32 %v2113, 1.442695
      %v2159 = vpow.pop %v2158
      %v2160 = vmul.f32 %v2114, 1.442695
      %v2161 = vpow.pop %v2160
      %v2162 = vmul.f32 %v2115, 1.442695
      %v2163 = vpow.pop %v2162
      %v2164 = vmul.f32 %v2116, 1.442695
      %v2165 = vpow.pop %v2164
      %v2166 = vmul.f32 %v2117, 1.442695
      %v2167 = vpow.pop %v2166
      %v2168 = vmul.f32 %v2118, 1.442695
      %v2169 = vpow.pop %v2168
      %v2170 = vmul.f32 %v2119, 1.442695
      %v2171 = vpow.pop %v2170
      %v2172 = vmul.f32 %v2120, 1.442695
      %v2173 = vpow.pop %v2172
      %v2174 = vmul.f32 %v2121, 1.442695
      %v2175 = vpow.pop %v2174
      %v2176 = vmul.f32 %v2122, 1.442695
      %v2177 = vpow.pop %v2176
      %v2178 = vmul.f32 %v2123, 1.442695
      %v2179 = vpow.pop %v2178
      %v2180 = vmul.f32 %v2124, 1.442695
      %v2181 = vpow.pop %v2180
      %v2182 = vmul.f32 %v2125, 1.442695
      %v2183 = vpow.pop %v2182
      %v2184 = vmul.f32 %v2126, 1.442695
      %v2185 = vpow.pop %v2184
      %v2186 = vmul.f32 %v2127, 1.442695
      %v2187 = vpow.pop %v2186
      %v2188 = vmul.f32 %v2128, 1.442695
      %v2189 = vpow.pop %v2188
      %v2190 = vmul.f32 %v2129, 1.442695
      %v2191 = vpow.pop %v2190
      %v2192 = vmul.f32 %v2130, 1.442695
      %v2193 = vpow.pop %v2192
      %v2194 = vmul.f32 %v2131, 1.442695
      %v2195 = vpow.pop %v2194
      %v2196 = vadd.f32 %v2133, 1.0
      %v2197 = vadd.f32 %v2135, 1.0
      %v2198 = vadd.f32 %v2137, 1.0
      %v2199 = vadd.f32 %v2139, 1.0
      %v2200 = vadd.f32 %v2141, 1.0
      %v2201 = vadd.f32 %v2143, 1.0
      %v2202 = vadd.f32 %v2145, 1.0
      %v2203 = vadd.f32 %v2147, 1.0
      %v2204 = vadd.f32 %v2149, 1.0
      %v2205 = vadd.f32 %v2151, 1.0
      %v2206 = vadd.f32 %v2153, 1.0
      %v2207 = vadd.f32 %v2155, 1.0
      %v2208 = vadd.f32 %v2157, 1.0
      %v2209 = vadd.f32 %v2159, 1.0
      %v2210 = vadd.f32 %v2161, 1.0
      %v2211 = vadd.f32 %v2163, 1.0
      %v2212 = vadd.f32 %v2165, 1.0
      %v2213 = vadd.f32 %v2167, 1.0
      %v2214 = vadd.f32 %v2169, 1.0
      %v2215 = vadd.f32 %v2171, 1.0
      %v2216 = vadd.f32 %v2173, 1.0
      %v2217 = vadd.f32 %v2175, 1.0
      %v2218 = vadd.f32 %v2177, 1.0
      %v2219 = vadd.f32 %v2179, 1.0
      %v2220 = vadd.f32 %v2181, 1.0
      %v2221 = vadd.f32 %v2183, 1.0
      %v2222 = vadd.f32 %v2185, 1.0
      %v2223 = vadd.f32 %v2187, 1.0
      %v2224 = vadd.f32 %v2189, 1.0
      %v2225 = vadd.f32 %v2191, 1.0
      %v2226 = vadd.f32 %v2193, 1.0
      %v2227 = vadd.f32 %v2195, 1.0
      %v2228 = vrcp.pop %v2196
      %v2229 = vmul.f32 1.0, %v2228
      %v2230 = vrcp.pop %v2197
      %v2231 = vmul.f32 1.0, %v2230
      %v2232 = vrcp.pop %v2198
      %v2233 = vmul.f32 1.0, %v2232
      %v2234 = vrcp.pop %v2199
      %v2235 = vmul.f32 1.0, %v2234
      %v2236 = vrcp.pop %v2200
      %v2237 = vmul.f32 1.0, %v2236
      %v2238 = vrcp.pop %v2201
      %v2239 = vmul.f32 1.0, %v2238
      %v2240 = vrcp.pop %v2202
      %v2241 = vmul.f32 1.0, %v2240
      %v2242 = vrcp.pop %v2203
      %v2243 = vmul.f32 1.0, %v2242
      %v2244 = vrcp.pop %v2204
      %v2245 = vmul.f32 1.0, %v2244
      %v2246 = vrcp.pop %v2205
      %v2247 = vmul.f32 1.0, %v2246
      %v2248 = vrcp.pop %v2206
      %v2249 = vmul.f32 1.0, %v2248
      %v2250 = vrcp.pop %v2207
      %v2251 = vmul.f32 1.0, %v2250
      %v2252 = vrcp.pop %v2208
      %v2253 = vmul.f32 1.0, %v2252
      %v2254 = vrcp.pop %v2209
      %v2255 = vmul.f32 1.0, %v2254
      %v2256 = vrcp.pop %v2210
      %v2257 = vmul.f32 1.0, %v2256
      %v2258 = vrcp.pop %v2211
      %v2259 = vmul.f32 1.0, %v2258
      %v2260 = vrcp.pop %v2212
      %v2261 = vmul.f32 1.0, %v2260
      %v2262 = vrcp.pop %v2213
      %v2263 = vmul.f32 1.0, %v2262
      %v2264 = vrcp.pop %v2214
      %v2265 = vmul.f32 1.0, %v2264
      %v2266 = vrcp.pop %v2215
      %v2267 = vmul.f32 1.0, %v2266
      %v2268 = vrcp.pop %v2216
      %v2269 = vmul.f32 1.0, %v2268
      %v2270 = vrcp.pop %v2217
      %v2271 = vmul.f32 1.0, %v2270
      %v2272 = vrcp.pop %v2218
      %v2273 = vmul.f32 1.0, %v2272
      %v2274 = vrcp.pop %v2219
      %v2275 = vmul.f32 1.0, %v2274
      %v2276 = vrcp.pop %v2220
      %v2277 = vmul.f32 1.0, %v2276
      %v2278 = vrcp.pop %v2221
      %v2279 = vmul.f32 1.0, %v2278
      %v2280 = vrcp.pop %v2222
      %v2281 = vmul.f32 1.0, %v2280
      %v2282 = vrcp.pop %v2223
      %v2283 = vmul.f32 1.0, %v2282
      %v2284 = vrcp.pop %v2224
      %v2285 = vmul.f32 1.0, %v2284
      %v2286 = vrcp.pop %v2225
      %v2287 = vmul.f32 1.0, %v2286
      %v2288 = vrcp.pop %v2226
      %v2289 = vmul.f32 1.0, %v2288
      %v2290 = vrcp.pop %v2227
      %v2291 = vmul.f32 1.0, %v2290
      %v2292 = vtanh.pop %v2068
      %v2293 = vtanh.pop %v2069
      %v2294 = vtanh.pop %v2070
      %v2295 = vtanh.pop %v2071
      %v2296 = vtanh.pop %v2072
      %v2297 = vtanh.pop %v2073
      %v2298 = vtanh.pop %v2074
      %v2299 = vtanh.pop %v2075
      %v2300 = vtanh.pop %v2076
      %v2301 = vtanh.pop %v2077
      %v2302 = vtanh.pop %v2078
      %v2303 = vtanh.pop %v2079
      %v2304 = vtanh.pop %v2080
      %v2305 = vtanh.pop %v2081
      %v2306 = vtanh.pop %v2082
      %v2307 = vtanh.pop %v2083
      %v2308 = vtanh.pop %v2084
      %v2309 = vtanh.pop %v2085
      %v2310 = vtanh.pop %v2086
      %v2311 = vtanh.pop %v2087
      %v2312 = vtanh.pop %v2088
      %v2313 = vtanh.pop %v2089
      %v2314 = vtanh.pop %v2090
      %v2315 = vtanh.pop %v2091
      %v2316 = vtanh.pop %v2092
      %v2317 = vtanh.pop %v2093
      %v2318 = vtanh.pop %v2094
      %v2319 = vtanh.pop %v2095
      %v2320 = vtanh.pop %v2096
      %v2321 = vtanh.pop %v2097
      %v2322 = vtanh.pop %v2098
      %v2323 = vtanh.pop %v2099
      %v2324 = vld [vmem:[#allocation3] sm:$0xff]
      %v2325 = vld [vmem:[#allocation3 + $0x8] sm:$0xff]
      %v2326 = vld [vmem:[#allocation3 + $0x10] sm:$0xff]
      %v2327 = vld [vmem:[#allocation3 + $0x18] sm:$0xff]
      %v2328 = vld [vmem:[#allocation3 + $0x20] sm:$0xff]
      %v2329 = vld [vmem:[#allocation3 + $0x28] sm:$0xff]
      %v2330 = vld [vmem:[#allocation3 + $0x30] sm:$0xff]
      %v2331 = vld [vmem:[#allocation3 + $0x38] sm:$0xff]
      %v2332 = vld [vmem:[#allocation3 + $0x40] sm:$0xff]
      %v2333 = vld [vmem:[#allocation3 + $0x48] sm:$0xff]
      %v2334 = vld [vmem:[#allocation3 + $0x50] sm:$0xff]
      %v2335 = vld [vmem:[#allocation3 + $0x58] sm:$0xff]
      %v2336 = vld [vmem:[#allocation3 + $0x60] sm:$0xff]
      %v2337 = vld [vmem:[#allocation3 + $0x68] sm:$0xff]
      %v2338 = vld [vmem:[#allocation3 + $0x70] sm:$0xff]
      %v2339 = vld [vmem:[#allocation3 + $0x78] sm:$0xff]
      %v2340 = vld [vmem:[#allocation3 + $0x80] sm:$0xff]
      %v2341 = vld [vmem:[#allocation3 + $0x88] sm:$0xff]
      %v2342 = vld [vmem:[#allocation3 + $0x90] sm:$0xff]
      %v2343 = vld [vmem:[#allocation3 + $0x98] sm:$0xff]
      %v2344 = vld [vmem:[#allocation3 + $0xa0] sm:$0xff]
      %v2345 = vld [vmem:[#allocation3 + $0xa8] sm:$0xff]
      %v2346 = vld [vmem:[#allocation3 + $0xb0] sm:$0xff]
      %v2347 = vld [vmem:[#allocation3 + $0xb8] sm:$0xff]
      %v2348 = vld [vmem:[#allocation3 + $0xc0] sm:$0xff]
      %v2349 = vld [vmem:[#allocation3 + $0xc8] sm:$0xff]
      %v2350 = vld [vmem:[#allocation3 + $0xd0] sm:$0xff]
      %v2351 = vld [vmem:[#allocation3 + $0xd8] sm:$0xff]
      %v2352 = vld [vmem:[#allocation3 + $0xe0] sm:$0xff]
      %v2353 = vld [vmem:[#allocation3 + $0xe8] sm:$0xff]
      %v2354 = vld [vmem:[#allocation3 + $0xf0] sm:$0xff]
      %v2355 = vld [vmem:[#allocation3 + $0xf8] sm:$0xff]
      %2388 = vrot.lane.b32.xlu0 %v2324, 32
      %v2389 = vpop.permute.xlu0 %2388
      %2390 = vrot.lane.b32.xlu0 %v2325, 32
      %v2391 = vpop.permute.xlu0 %2390
      %2392 = vrot.lane.b32.xlu0 %v2326, 32
      %v2393 = vpop.permute.xlu0 %2392
      %2394 = vrot.lane.b32.xlu0 %v2327, 32
      %v2395 = vpop.permute.xlu0 %2394
      %2396 = vrot.lane.b32.xlu0 %v2328, 32
      %v2397 = vpop.permute.xlu0 %2396
      %2398 = vrot.lane.b32.xlu0 %v2329, 32
      %v2399 = vpop.permute.xlu0 %2398
      %2400 = vrot.lane.b32.xlu0 %v2330, 32
      %v2401 = vpop.permute.xlu0 %2400
      %2402 = vrot.lane.b32.xlu0 %v2331, 32
      %v2403 = vpop.permute.xlu0 %2402
      %2404 = vrot.lane.b32.xlu0 %v2332, 32
      %v2405 = vpop.permute.xlu0 %2404
      %2406 = vrot.lane.b32.xlu0 %v2333, 32
      %v2407 = vpop.permute.xlu0 %2406
      %2408 = vrot.lane.b32.xlu0 %v2334, 32
      %v2409 = vpop.permute.xlu0 %2408
      %2410 = vrot.lane.b32.xlu0 %v2335, 32
      %v2411 = vpop.permute.xlu0 %2410
      %2412 = vrot.lane.b32.xlu0 %v2336, 32
      %v2413 = vpop.permute.xlu0 %2412
      %2414 = vrot.lane.b32.xlu0 %v2337, 32
      %v2415 = vpop.permute.xlu0 %2414
      %2416 = vrot.lane.b32.xlu0 %v2338, 32
      %v2417 = vpop.permute.xlu0 %2416
      %2418 = vrot.lane.b32.xlu0 %v2339, 32
      %v2419 = vpop.permute.xlu0 %2418
      %2420 = vrot.lane.b32.xlu0 %v2340, 32
      %v2421 = vpop.permute.xlu0 %2420
      %2422 = vrot.lane.b32.xlu0 %v2341, 32
      %v2423 = vpop.permute.xlu0 %2422
      %2424 = vrot.lane.b32.xlu0 %v2342, 32
      %v2425 = vpop.permute.xlu0 %2424
      %2426 = vrot.lane.b32.xlu0 %v2343, 32
      %v2427 = vpop.permute.xlu0 %2426
      %2428 = vrot.lane.b32.xlu0 %v2344, 32
      %v2429 = vpop.permute.xlu0 %2428
      %2430 = vrot.lane.b32.xlu0 %v2345, 32
      %v2431 = vpop.permute.xlu0 %2430
      %2432 = vrot.lane.b32.xlu0 %v2346, 32
      %v2433 = vpop.permute.xlu0 %2432
      %2434 = vrot.lane.b32.xlu0 %v2347, 32
      %v2435 = vpop.permute.xlu0 %2434
      %2436 = vrot.lane.b32.xlu0 %v2348, 32
      %v2437 = vpop.permute.xlu0 %2436
      %2438 = vrot.lane.b32.xlu0 %v2349, 32
      %v2439 = vpop.permute.xlu0 %2438
      %2440 = vrot.lane.b32.xlu0 %v2350, 32
      %v2441 = vpop.permute.xlu0 %2440
      %2442 = vrot.lane.b32.xlu0 %v2351, 32
      %v2443 = vpop.permute.xlu0 %2442
      %2444 = vrot.lane.b32.xlu0 %v2352, 32
      %v2445 = vpop.permute.xlu0 %2444
      %2446 = vrot.lane.b32.xlu0 %v2353, 32
      %v2447 = vpop.permute.xlu0 %2446
      %2448 = vrot.lane.b32.xlu0 %v2354, 32
      %v2449 = vpop.permute.xlu0 %2448
      %2450 = vrot.lane.b32.xlu0 %v2355, 32
      %v2451 = vpop.permute.xlu0 %2450
      %v2484 = vmul.f32 %v2229, %v2389
      %v2485 = vmul.f32 %v2231, %v2391
      %v2486 = vmul.f32 %v2233, %v2393
      %v2487 = vmul.f32 %v2235, %v2395
      %v2488 = vmul.f32 %v2237, %v2397
      %v2489 = vmul.f32 %v2239, %v2399
      %v2490 = vmul.f32 %v2241, %v2401
      %v2491 = vmul.f32 %v2243, %v2403
      %v2492 = vmul.f32 %v2245, %v2405
      %v2493 = vmul.f32 %v2247, %v2407
      %v2494 = vmul.f32 %v2249, %v2409
      %v2495 = vmul.f32 %v2251, %v2411
      %v2496 = vmul.f32 %v2253, %v2413
      %v2497 = vmul.f32 %v2255, %v2415
      %v2498 = vmul.f32 %v2257, %v2417
      %v2499 = vmul.f32 %v2259, %v2419
      %v2500 = vmul.f32 %v2261, %v2421
      %v2501 = vmul.f32 %v2263, %v2423
      %v2502 = vmul.f32 %v2265, %v2425
      %v2503 = vmul.f32 %v2267, %v2427
      %v2504 = vmul.f32 %v2269, %v2429
      %v2505 = vmul.f32 %v2271, %v2431
      %v2506 = vmul.f32 %v2273, %v2433
      %v2507 = vmul.f32 %v2275, %v2435
      %v2508 = vmul.f32 %v2277, %v2437
      %v2509 = vmul.f32 %v2279, %v2439
      %v2510 = vmul.f32 %v2281, %v2441
      %v2511 = vmul.f32 %v2283, %v2443
      %v2512 = vmul.f32 %v2285, %v2445
      %v2513 = vmul.f32 %v2287, %v2447
      %v2514 = vmul.f32 %v2289, %v2449
      %v2515 = vmul.f32 %v2291, %v2451
      %2548 = vrot.lane.b32.xlu0 %v2292, 32
      %v2549 = vpop.permute.xlu0 %2548
      %2550 = vrot.lane.b32.xlu0 %v2293, 32
      %v2551 = vpop.permute.xlu0 %2550
      %2552 = vrot.lane.b32.xlu0 %v2294, 32
      %v2553 = vpop.permute.xlu0 %2552
      %2554 = vrot.lane.b32.xlu0 %v2295, 32
      %v2555 = vpop.permute.xlu0 %2554
      %2556 = vrot.lane.b32.xlu0 %v2296, 32
      %v2557 = vpop.permute.xlu0 %2556
      %2558 = vrot.lane.b32.xlu0 %v2297, 32
      %v2559 = vpop.permute.xlu0 %2558
      %2560 = vrot.lane.b32.xlu0 %v2298, 32
      %v2561 = vpop.permute.xlu0 %2560
      %2562 = vrot.lane.b32.xlu0 %v2299, 32
      %v2563 = vpop.permute.xlu0 %2562
      %2564 = vrot.lane.b32.xlu0 %v2300, 32
      %v2565 = vpop.permute.xlu0 %2564
      %2566 = vrot.lane.b32.xlu0 %v2301, 32
      %v2567 = vpop.permute.xlu0 %2566
      %2568 = vrot.lane.b32.xlu0 %v2302, 32
      %v2569 = vpop.permute.xlu0 %2568
      %2570 = vrot.lane.b32.xlu0 %v2303, 32
      %v2571 = vpop.permute.xlu0 %2570
      %2572 = vrot.lane.b32.xlu0 %v2304, 32
      %v2573 = vpop.permute.xlu0 %2572
      %2574 = vrot.lane.b32.xlu0 %v2305, 32
      %v2575 = vpop.permute.xlu0 %2574
      %2576 = vrot.lane.b32.xlu0 %v2306, 32
      %v2577 = vpop.permute.xlu0 %2576
      %2578 = vrot.lane.b32.xlu0 %v2307, 32
      %v2579 = vpop.permute.xlu0 %2578
      %2580 = vrot.lane.b32.xlu0 %v2308, 32
      %v2581 = vpop.permute.xlu0 %2580
      %2582 = vrot.lane.b32.xlu0 %v2309, 32
      %v2583 = vpop.permute.xlu0 %2582
      %2584 = vrot.lane.b32.xlu0 %v2310, 32
      %v2585 = vpop.permute.xlu0 %2584
      %2586 = vrot.lane.b32.xlu0 %v2311, 32
      %v2587 = vpop.permute.xlu0 %2586
      %2588 = vrot.lane.b32.xlu0 %v2312, 32
      %v2589 = vpop.permute.xlu0 %2588
      %2590 = vrot.lane.b32.xlu0 %v2313, 32
      %v2591 = vpop.permute.xlu0 %2590
      %2592 = vrot.lane.b32.xlu0 %v2314, 32
      %v2593 = vpop.permute.xlu0 %2592
      %2594 = vrot.lane.b32.xlu0 %v2315, 32
      %v2595 = vpop.permute.xlu0 %2594
      %2596 = vrot.lane.b32.xlu0 %v2316, 32
      %v2597 = vpop.permute.xlu0 %2596
      %2598 = vrot.lane.b32.xlu0 %v2317, 32
      %v2599 = vpop.permute.xlu0 %2598
      %2600 = vrot.lane.b32.xlu0 %v2318, 32
      %v2601 = vpop.permute.xlu0 %2600
      %2602 = vrot.lane.b32.xlu0 %v2319, 32
      %v2603 = vpop.permute.xlu0 %2602
      %2604 = vrot.lane.b32.xlu0 %v2320, 32
      %v2605 = vpop.permute.xlu0 %2604
      %2606 = vrot.lane.b32.xlu0 %v2321, 32
      %v2607 = vpop.permute.xlu0 %2606
      %2608 = vrot.lane.b32.xlu0 %v2322, 32
      %v2609 = vpop.permute.xlu0 %2608
      %2610 = vrot.lane.b32.xlu0 %v2323, 32
      %v2611 = vpop.permute.xlu0 %2610
      %v2644 = vmul.f32 %v2229, %v2549
      %v2645 = vmul.f32 %v2231, %v2551
      %v2646 = vmul.f32 %v2233, %v2553
      %v2647 = vmul.f32 %v2235, %v2555
      %v2648 = vmul.f32 %v2237, %v2557
      %v2649 = vmul.f32 %v2239, %v2559
      %v2650 = vmul.f32 %v2241, %v2561
      %v2651 = vmul.f32 %v2243, %v2563
      %v2652 = vmul.f32 %v2245, %v2565
      %v2653 = vmul.f32 %v2247, %v2567
      %v2654 = vmul.f32 %v2249, %v2569
      %v2655 = vmul.f32 %v2251, %v2571
      %v2656 = vmul.f32 %v2253, %v2573
      %v2657 = vmul.f32 %v2255, %v2575
      %v2658 = vmul.f32 %v2257, %v2577
      %v2659 = vmul.f32 %v2259, %v2579
      %v2660 = vmul.f32 %v2261, %v2581
      %v2661 = vmul.f32 %v2263, %v2583
      %v2662 = vmul.f32 %v2265, %v2585
      %v2663 = vmul.f32 %v2267, %v2587
      %v2664 = vmul.f32 %v2269, %v2589
      %v2665 = vmul.f32 %v2271, %v2591
      %v2666 = vmul.f32 %v2273, %v2593
      %v2667 = vmul.f32 %v2275, %v2595
      %v2668 = vmul.f32 %v2277, %v2597
      %v2669 = vmul.f32 %v2279, %v2599
      %v2670 = vmul.f32 %v2281, %v2601
      %v2671 = vmul.f32 %v2283, %v2603
      %v2672 = vmul.f32 %v2285, %v2605
      %v2673 = vmul.f32 %v2287, %v2607
      %v2674 = vmul.f32 %v2289, %v2609
      %v2675 = vmul.f32 %v2291, %v2611
      %2708 = vrot.lane.b32.xlu0 %v2644, 32
      %v2709 = vpop.permute.xlu0 %2708
      %2710 = vrot.lane.b32.xlu0 %v2645, 32
      %v2711 = vpop.permute.xlu0 %2710
      %2712 = vrot.lane.b32.xlu0 %v2646, 32
      %v2713 = vpop.permute.xlu0 %2712
      %2714 = vrot.lane.b32.xlu0 %v2647, 32
      %v2715 = vpop.permute.xlu0 %2714
      %2716 = vrot.lane.b32.xlu0 %v2648, 32
      %v2717 = vpop.permute.xlu0 %2716
      %2718 = vrot.lane.b32.xlu0 %v2649, 32
      %v2719 = vpop.permute.xlu0 %2718
      %2720 = vrot.lane.b32.xlu0 %v2650, 32
      %v2721 = vpop.permute.xlu0 %2720
      %2722 = vrot.lane.b32.xlu0 %v2651, 32
      %v2723 = vpop.permute.xlu0 %2722
      %2724 = vrot.lane.b32.xlu0 %v2652, 32
      %v2725 = vpop.permute.xlu0 %2724
      %2726 = vrot.lane.b32.xlu0 %v2653, 32
      %v2727 = vpop.permute.xlu0 %2726
      %2728 = vrot.lane.b32.xlu0 %v2654, 32
      %v2729 = vpop.permute.xlu0 %2728
      %2730 = vrot.lane.b32.xlu0 %v2655, 32
      %v2731 = vpop.permute.xlu0 %2730
      %2732 = vrot.lane.b32.xlu0 %v2656, 32
      %v2733 = vpop.permute.xlu0 %2732
      %2734 = vrot.lane.b32.xlu0 %v2657, 32
      %v2735 = vpop.permute.xlu0 %2734
      %2736 = vrot.lane.b32.xlu0 %v2658, 32
      %v2737 = vpop.permute.xlu0 %2736
      %2738 = vrot.lane.b32.xlu0 %v2659, 32
      %v2739 = vpop.permute.xlu0 %2738
      %2740 = vrot.lane.b32.xlu0 %v2660, 32
      %v2741 = vpop.permute.xlu0 %2740
      %2742 = vrot.lane.b32.xlu0 %v2661, 32
      %v2743 = vpop.permute.xlu0 %2742
      %2744 = vrot.lane.b32.xlu0 %v2662, 32
      %v2745 = vpop.permute.xlu0 %2744
      %2746 = vrot.lane.b32.xlu0 %v2663, 32
      %v2747 = vpop.permute.xlu0 %2746
      %2748 = vrot.lane.b32.xlu0 %v2664, 32
      %v2749 = vpop.permute.xlu0 %2748
      %2750 = vrot.lane.b32.xlu0 %v2665, 32
      %v2751 = vpop.permute.xlu0 %2750
      %2752 = vrot.lane.b32.xlu0 %v2666, 32
      %v2753 = vpop.permute.xlu0 %2752
      %2754 = vrot.lane.b32.xlu0 %v2667, 32
      %v2755 = vpop.permute.xlu0 %2754
      %2756 = vrot.lane.b32.xlu0 %v2668, 32
      %v2757 = vpop.permute.xlu0 %2756
      %2758 = vrot.lane.b32.xlu0 %v2669, 32
      %v2759 = vpop.permute.xlu0 %2758
      %2760 = vrot.lane.b32.xlu0 %v2670, 32
      %v2761 = vpop.permute.xlu0 %2760
      %2762 = vrot.lane.b32.xlu0 %v2671, 32
      %v2763 = vpop.permute.xlu0 %2762
      %2764 = vrot.lane.b32.xlu0 %v2672, 32
      %v2765 = vpop.permute.xlu0 %2764
      %2766 = vrot.lane.b32.xlu0 %v2673, 32
      %v2767 = vpop.permute.xlu0 %2766
      %2768 = vrot.lane.b32.xlu0 %v2674, 32
      %v2769 = vpop.permute.xlu0 %2768
      %2770 = vrot.lane.b32.xlu0 %v2675, 32
      %v2771 = vpop.permute.xlu0 %2770
      %v2804 = vadd.f32 %v2484, %v2709
      %v2805 = vadd.f32 %v2485, %v2711
      %v2806 = vadd.f32 %v2486, %v2713
      %v2807 = vadd.f32 %v2487, %v2715
      %v2808 = vadd.f32 %v2488, %v2717
      %v2809 = vadd.f32 %v2489, %v2719
      %v2810 = vadd.f32 %v2490, %v2721
      %v2811 = vadd.f32 %v2491, %v2723
      %v2812 = vadd.f32 %v2492, %v2725
      %v2813 = vadd.f32 %v2493, %v2727
      %v2814 = vadd.f32 %v2494, %v2729
      %v2815 = vadd.f32 %v2495, %v2731
      %v2816 = vadd.f32 %v2496, %v2733
      %v2817 = vadd.f32 %v2497, %v2735
      %v2818 = vadd.f32 %v2498, %v2737
      %v2819 = vadd.f32 %v2499, %v2739
      %v2820 = vadd.f32 %v2500, %v2741
      %v2821 = vadd.f32 %v2501, %v2743
      %v2822 = vadd.f32 %v2502, %v2745
      %v2823 = vadd.f32 %v2503, %v2747
      %v2824 = vadd.f32 %v2504, %v2749
      %v2825 = vadd.f32 %v2505, %v2751
      %v2826 = vadd.f32 %v2506, %v2753
      %v2827 = vadd.f32 %v2507, %v2755
      %v2828 = vadd.f32 %v2508, %v2757
      %v2829 = vadd.f32 %v2509, %v2759
      %v2830 = vadd.f32 %v2510, %v2761
      %v2831 = vadd.f32 %v2511, %v2763
      %v2832 = vadd.f32 %v2512, %v2765
      %v2833 = vadd.f32 %v2513, %v2767
      %v2834 = vadd.f32 %v2514, %v2769
      %v2835 = vadd.f32 %v2515, %v2771
      %v2836 = vtanh.pop %v2804
      %v2837 = vtanh.pop %v2805
      %v2838 = vtanh.pop %v2806
      %v2839 = vtanh.pop %v2807
      %v2840 = vtanh.pop %v2808
      %v2841 = vtanh.pop %v2809
      %v2842 = vtanh.pop %v2810
      %v2843 = vtanh.pop %v2811
      %v2844 = vtanh.pop %v2812
      %v2845 = vtanh.pop %v2813
      %v2846 = vtanh.pop %v2814
      %v2847 = vtanh.pop %v2815
      %v2848 = vtanh.pop %v2816
      %v2849 = vtanh.pop %v2817
      %v2850 = vtanh.pop %v2818
      %v2851 = vtanh.pop %v2819
      %v2852 = vtanh.pop %v2820
      %v2853 = vtanh.pop %v2821
      %v2854 = vtanh.pop %v2822
      %v2855 = vtanh.pop %v2823
      %v2856 = vtanh.pop %v2824
      %v2857 = vtanh.pop %v2825
      %v2858 = vtanh.pop %v2826
      %v2859 = vtanh.pop %v2827
      %v2860 = vtanh.pop %v2828
      %v2861 = vtanh.pop %v2829
      %v2862 = vtanh.pop %v2830
      %v2863 = vtanh.pop %v2831
      %v2864 = vtanh.pop %v2832
      %v2865 = vtanh.pop %v2833
      %v2866 = vtanh.pop %v2834
      %v2867 = vtanh.pop %v2835
      %2900 = vrot.lane.b32.xlu0 %v2836, 32
      %v2901 = vpop.permute.xlu0 %2900
      %2902 = vrot.lane.b32.xlu0 %v2837, 32
      %v2903 = vpop.permute.xlu0 %2902
      %2904 = vrot.lane.b32.xlu0 %v2838, 32
      %v2905 = vpop.permute.xlu0 %2904
      %2906 = vrot.lane.b32.xlu0 %v2839, 32
      %v2907 = vpop.permute.xlu0 %2906
      %2908 = vrot.lane.b32.xlu0 %v2840, 32
      %v2909 = vpop.permute.xlu0 %2908
      %2910 = vrot.lane.b32.xlu0 %v2841, 32
      %v2911 = vpop.permute.xlu0 %2910
      %2912 = vrot.lane.b32.xlu0 %v2842, 32
      %v2913 = vpop.permute.xlu0 %2912
      %2914 = vrot.lane.b32.xlu0 %v2843, 32
      %v2915 = vpop.permute.xlu0 %2914
      %2916 = vrot.lane.b32.xlu0 %v2844, 32
      %v2917 = vpop.permute.xlu0 %2916
      %2918 = vrot.lane.b32.xlu0 %v2845, 32
      %v2919 = vpop.permute.xlu0 %2918
      %2920 = vrot.lane.b32.xlu0 %v2846, 32
      %v2921 = vpop.permute.xlu0 %2920
      %2922 = vrot.lane.b32.xlu0 %v2847, 32
      %v2923 = vpop.permute.xlu0 %2922
      %2924 = vrot.lane.b32.xlu0 %v2848, 32
      %v2925 = vpop.permute.xlu0 %2924
      %2926 = vrot.lane.b32.xlu0 %v2849, 32
      %v2927 = vpop.permute.xlu0 %2926
      %2928 = vrot.lane.b32.xlu0 %v2850, 32
      %v2929 = vpop.permute.xlu0 %2928
      %2930 = vrot.lane.b32.xlu0 %v2851, 32
      %v2931 = vpop.permute.xlu0 %2930
      %2932 = vrot.lane.b32.xlu0 %v2852, 32
      %v2933 = vpop.permute.xlu0 %2932
      %2934 = vrot.lane.b32.xlu0 %v2853, 32
      %v2935 = vpop.permute.xlu0 %2934
      %2936 = vrot.lane.b32.xlu0 %v2854, 32
      %v2937 = vpop.permute.xlu0 %2936
      %2938 = vrot.lane.b32.xlu0 %v2855, 32
      %v2939 = vpop.permute.xlu0 %2938
      %2940 = vrot.lane.b32.xlu0 %v2856, 32
      %v2941 = vpop.permute.xlu0 %2940
      %2942 = vrot.lane.b32.xlu0 %v2857, 32
      %v2943 = vpop.permute.xlu0 %2942
      %2944 = vrot.lane.b32.xlu0 %v2858, 32
      %v2945 = vpop.permute.xlu0 %2944
      %2946 = vrot.lane.b32.xlu0 %v2859, 32
      %v2947 = vpop.permute.xlu0 %2946
      %2948 = vrot.lane.b32.xlu0 %v2860, 32
      %v2949 = vpop.permute.xlu0 %2948
      %2950 = vrot.lane.b32.xlu0 %v2861, 32
      %v2951 = vpop.permute.xlu0 %2950
      %2952 = vrot.lane.b32.xlu0 %v2862, 32
      %v2953 = vpop.permute.xlu0 %2952
      %2954 = vrot.lane.b32.xlu0 %v2863, 32
      %v2955 = vpop.permute.xlu0 %2954
      %2956 = vrot.lane.b32.xlu0 %v2864, 32
      %v2957 = vpop.permute.xlu0 %2956
      %2958 = vrot.lane.b32.xlu0 %v2865, 32
      %v2959 = vpop.permute.xlu0 %2958
      %2960 = vrot.lane.b32.xlu0 %v2866, 32
      %v2961 = vpop.permute.xlu0 %2960
      %2962 = vrot.lane.b32.xlu0 %v2867, 32
      %v2963 = vpop.permute.xlu0 %2962
      %v2996 = vmul.f32 %v2229, %v2901
      %v2997 = vmul.f32 %v2231, %v2903
      %v2998 = vmul.f32 %v2233, %v2905
      %v2999 = vmul.f32 %v2235, %v2907
      %v3000 = vmul.f32 %v2237, %v2909
      %v3001 = vmul.f32 %v2239, %v2911
      %v3002 = vmul.f32 %v2241, %v2913
      %v3003 = vmul.f32 %v2243, %v2915
      %v3004 = vmul.f32 %v2245, %v2917
      %v3005 = vmul.f32 %v2247, %v2919
      %v3006 = vmul.f32 %v2249, %v2921
      %v3007 = vmul.f32 %v2251, %v2923
      %v3008 = vmul.f32 %v2253, %v2925
      %v3009 = vmul.f32 %v2255, %v2927
      %v3010 = vmul.f32 %v2257, %v2929
      %v3011 = vmul.f32 %v2259, %v2931
      %v3012 = vmul.f32 %v2261, %v2933
      %v3013 = vmul.f32 %v2263, %v2935
      %v3014 = vmul.f32 %v2265, %v2937
      %v3015 = vmul.f32 %v2267, %v2939
      %v3016 = vmul.f32 %v2269, %v2941
      %v3017 = vmul.f32 %v2271, %v2943
      %v3018 = vmul.f32 %v2273, %v2945
      %v3019 = vmul.f32 %v2275, %v2947
      %v3020 = vmul.f32 %v2277, %v2949
      %v3021 = vmul.f32 %v2279, %v2951
      %v3022 = vmul.f32 %v2281, %v2953
      %v3023 = vmul.f32 %v2283, %v2955
      %v3024 = vmul.f32 %v2285, %v2957
      %v3025 = vmul.f32 %v2287, %v2959
      %v3026 = vmul.f32 %v2289, %v2961
      %v3027 = vmul.f32 %v2291, %v2963
      %3060 = vrot.lane.b32.xlu0 %v2804, 96
      %v3061 = vpop.permute.xlu0 %3060
      %3062 = vrot.lane.b32.xlu0 %v2805, 96
      %v3063 = vpop.permute.xlu0 %3062
      %3064 = vrot.lane.b32.xlu0 %v2806, 96
      %v3065 = vpop.permute.xlu0 %3064
      %3066 = vrot.lane.b32.xlu0 %v2807, 96
      %v3067 = vpop.permute.xlu0 %3066
      %3068 = vrot.lane.b32.xlu0 %v2808, 96
      %v3069 = vpop.permute.xlu0 %3068
      %3070 = vrot.lane.b32.xlu0 %v2809, 96
      %v3071 = vpop.permute.xlu0 %3070
      %3072 = vrot.lane.b32.xlu0 %v2810, 96
      %v3073 = vpop.permute.xlu0 %3072
      %3074 = vrot.lane.b32.xlu0 %v2811, 96
      %v3075 = vpop.permute.xlu0 %3074
      %3076 = vrot.lane.b32.xlu0 %v2812, 96
      %v3077 = vpop.permute.xlu0 %3076
      %3078 = vrot.lane.b32.xlu0 %v2813, 96
      %v3079 = vpop.permute.xlu0 %3078
      %3080 = vrot.lane.b32.xlu0 %v2814, 96
      %v3081 = vpop.permute.xlu0 %3080
      %3082 = vrot.lane.b32.xlu0 %v2815, 96
      %v3083 = vpop.permute.xlu0 %3082
      %3084 = vrot.lane.b32.xlu0 %v2816, 96
      %v3085 = vpop.permute.xlu0 %3084
      %3086 = vrot.lane.b32.xlu0 %v2817, 96
      %v3087 = vpop.permute.xlu0 %3086
      %3088 = vrot.lane.b32.xlu0 %v2818, 96
      %v3089 = vpop.permute.xlu0 %3088
      %3090 = vrot.lane.b32.xlu0 %v2819, 96
      %v3091 = vpop.permute.xlu0 %3090
      %3092 = vrot.lane.b32.xlu0 %v2820, 96
      %v3093 = vpop.permute.xlu0 %3092
      %3094 = vrot.lane.b32.xlu0 %v2821, 96
      %v3095 = vpop.permute.xlu0 %3094
      %3096 = vrot.lane.b32.xlu0 %v2822, 96
      %v3097 = vpop.permute.xlu0 %3096
      %3098 = vrot.lane.b32.xlu0 %v2823, 96
      %v3099 = vpop.permute.xlu0 %3098
      %3100 = vrot.lane.b32.xlu0 %v2824, 96
      %v3101 = vpop.permute.xlu0 %3100
      %3102 = vrot.lane.b32.xlu0 %v2825, 96
      %v3103 = vpop.permute.xlu0 %3102
      %3104 = vrot.lane.b32.xlu0 %v2826, 96
      %v3105 = vpop.permute.xlu0 %3104
      %3106 = vrot.lane.b32.xlu0 %v2827, 96
      %v3107 = vpop.permute.xlu0 %3106
      %3108 = vrot.lane.b32.xlu0 %v2828, 96
      %v3109 = vpop.permute.xlu0 %3108
      %3110 = vrot.lane.b32.xlu0 %v2829, 96
      %v3111 = vpop.permute.xlu0 %3110
      %3112 = vrot.lane.b32.xlu0 %v2830, 96
      %v3113 = vpop.permute.xlu0 %3112
      %3114 = vrot.lane.b32.xlu0 %v2831, 96
      %v3115 = vpop.permute.xlu0 %3114
      %3116 = vrot.lane.b32.xlu0 %v2832, 96
      %v3117 = vpop.permute.xlu0 %3116
      %3118 = vrot.lane.b32.xlu0 %v2833, 96
      %v3119 = vpop.permute.xlu0 %3118
      %3120 = vrot.lane.b32.xlu0 %v2834, 96
      %v3121 = vpop.permute.xlu0 %3120
      %3122 = vrot.lane.b32.xlu0 %v2835, 96
      %v3123 = vpop.permute.xlu0 %3122
      %3156 = vst.msk [vmem:[#allocation3] sm:$0xff] %vm1279, %v3061
      %3157 = vst.msk [vmem:[#allocation3 + $0x8] sm:$0xff] %vm1279, %v3063
      %3158 = vst.msk [vmem:[#allocation3 + $0x10] sm:$0xff] %vm1279, %v3065
      %3159 = vst.msk [vmem:[#allocation3 + $0x18] sm:$0xff] %vm1279, %v3067
      %3160 = vst.msk [vmem:[#allocation3 + $0x20] sm:$0xff] %vm1279, %v3069
      %3161 = vst.msk [vmem:[#allocation3 + $0x28] sm:$0xff] %vm1279, %v3071
      %3162 = vst.msk [vmem:[#allocation3 + $0x30] sm:$0xff] %vm1279, %v3073
      %3163 = vst.msk [vmem:[#allocation3 + $0x38] sm:$0xff] %vm1279, %v3075
      %3164 = vst.msk [vmem:[#allocation3 + $0x40] sm:$0xff] %vm1279, %v3077
      %3165 = vst.msk [vmem:[#allocation3 + $0x48] sm:$0xff] %vm1279, %v3079
      %3166 = vst.msk [vmem:[#allocation3 + $0x50] sm:$0xff] %vm1279, %v3081
      %3167 = vst.msk [vmem:[#allocation3 + $0x58] sm:$0xff] %vm1279, %v3083
      %3168 = vst.msk [vmem:[#allocation3 + $0x60] sm:$0xff] %vm1279, %v3085
      %3169 = vst.msk [vmem:[#allocation3 + $0x68] sm:$0xff] %vm1279, %v3087
      %3170 = vst.msk [vmem:[#allocation3 + $0x70] sm:$0xff] %vm1279, %v3089
      %3171 = vst.msk [vmem:[#allocation3 + $0x78] sm:$0xff] %vm1279, %v3091
      %3172 = vst.msk [vmem:[#allocation3 + $0x80] sm:$0xff] %vm1279, %v3093
      %3173 = vst.msk [vmem:[#allocation3 + $0x88] sm:$0xff] %vm1279, %v3095
      %3174 = vst.msk [vmem:[#allocation3 + $0x90] sm:$0xff] %vm1279, %v3097
      %3175 = vst.msk [vmem:[#allocation3 + $0x98] sm:$0xff] %vm1279, %v3099
      %3176 = vst.msk [vmem:[#allocation3 + $0xa0] sm:$0xff] %vm1279, %v3101
      %3177 = vst.msk [vmem:[#allocation3 + $0xa8] sm:$0xff] %vm1279, %v3103
      %3178 = vst.msk [vmem:[#allocation3 + $0xb0] sm:$0xff] %vm1279, %v3105
      %3179 = vst.msk [vmem:[#allocation3 + $0xb8] sm:$0xff] %vm1279, %v3107
      %3180 = vst.msk [vmem:[#allocation3 + $0xc0] sm:$0xff] %vm1279, %v3109
      %3181 = vst.msk [vmem:[#allocation3 + $0xc8] sm:$0xff] %vm1279, %v3111
      %3182 = vst.msk [vmem:[#allocation3 + $0xd0] sm:$0xff] %vm1279, %v3113
      %3183 = vst.msk [vmem:[#allocation3 + $0xd8] sm:$0xff] %vm1279, %v3115
      %3184 = vst.msk [vmem:[#allocation3 + $0xe0] sm:$0xff] %vm1279, %v3117
      %3185 = vst.msk [vmem:[#allocation3 + $0xe8] sm:$0xff] %vm1279, %v3119
      %3186 = vst.msk [vmem:[#allocation3 + $0xf0] sm:$0xff] %vm1279, %v3121
      %3187 = vst.msk [vmem:[#allocation3 + $0xf8] sm:$0xff] %vm1279, %v3123
      %3220 = vrot.lane.b32.xlu0 %v2996, 64
      %v3221 = vpop.permute.xlu0 %3220
      %3222 = vrot.lane.b32.xlu0 %v2997, 64
      %v3223 = vpop.permute.xlu0 %3222
      %3224 = vrot.lane.b32.xlu0 %v2998, 64
      %v3225 = vpop.permute.xlu0 %3224
      %3226 = vrot.lane.b32.xlu0 %v2999, 64
      %v3227 = vpop.permute.xlu0 %3226
      %3228 = vrot.lane.b32.xlu0 %v3000, 64
      %v3229 = vpop.permute.xlu0 %3228
      %3230 = vrot.lane.b32.xlu0 %v3001, 64
      %v3231 = vpop.permute.xlu0 %3230
      %3232 = vrot.lane.b32.xlu0 %v3002, 64
      %v3233 = vpop.permute.xlu0 %3232
      %3234 = vrot.lane.b32.xlu0 %v3003, 64
      %v3235 = vpop.permute.xlu0 %3234
      %3236 = vrot.lane.b32.xlu0 %v3004, 64
      %v3237 = vpop.permute.xlu0 %3236
      %3238 = vrot.lane.b32.xlu0 %v3005, 64
      %v3239 = vpop.permute.xlu0 %3238
      %3240 = vrot.lane.b32.xlu0 %v3006, 64
      %v3241 = vpop.permute.xlu0 %3240
      %3242 = vrot.lane.b32.xlu0 %v3007, 64
      %v3243 = vpop.permute.xlu0 %3242
      %3244 = vrot.lane.b32.xlu0 %v3008, 64
      %v3245 = vpop.permute.xlu0 %3244
      %3246 = vrot.lane.b32.xlu0 %v3009, 64
      %v3247 = vpop.permute.xlu0 %3246
      %3248 = vrot.lane.b32.xlu0 %v3010, 64
      %v3249 = vpop.permute.xlu0 %3248
      %3250 = vrot.lane.b32.xlu0 %v3011, 64
      %v3251 = vpop.permute.xlu0 %3250
      %3252 = vrot.lane.b32.xlu0 %v3012, 64
      %v3253 = vpop.permute.xlu0 %3252
      %3254 = vrot.lane.b32.xlu0 %v3013, 64
      %v3255 = vpop.permute.xlu0 %3254
      %3256 = vrot.lane.b32.xlu0 %v3014, 64
      %v3257 = vpop.permute.xlu0 %3256
      %3258 = vrot.lane.b32.xlu0 %v3015, 64
      %v3259 = vpop.permute.xlu0 %3258
      %3260 = vrot.lane.b32.xlu0 %v3016, 64
      %v3261 = vpop.permute.xlu0 %3260
      %3262 = vrot.lane.b32.xlu0 %v3017, 64
      %v3263 = vpop.permute.xlu0 %3262
      %3264 = vrot.lane.b32.xlu0 %v3018, 64
      %v3265 = vpop.permute.xlu0 %3264
      %3266 = vrot.lane.b32.xlu0 %v3019, 64
      %v3267 = vpop.permute.xlu0 %3266
      %3268 = vrot.lane.b32.xlu0 %v3020, 64
      %v3269 = vpop.permute.xlu0 %3268
      %3270 = vrot.lane.b32.xlu0 %v3021, 64
      %v3271 = vpop.permute.xlu0 %3270
      %3272 = vrot.lane.b32.xlu0 %v3022, 64
      %v3273 = vpop.permute.xlu0 %3272
      %3274 = vrot.lane.b32.xlu0 %v3023, 64
      %v3275 = vpop.permute.xlu0 %3274
      %3276 = vrot.lane.b32.xlu0 %v3024, 64
      %v3277 = vpop.permute.xlu0 %3276
      %3278 = vrot.lane.b32.xlu0 %v3025, 64
      %v3279 = vpop.permute.xlu0 %3278
      %3280 = vrot.lane.b32.xlu0 %v3026, 64
      %v3281 = vpop.permute.xlu0 %3280
      %3282 = vrot.lane.b32.xlu0 %v3027, 64
      %v3283 = vpop.permute.xlu0 %3282
      %s3316 = scalar_lea.vmem [#allocation2], 24
      %3317 = vst.msk [vmem:[%s3316 + $0x1] sm:$0xff] %vm1279, %v3221
      %3318 = vst.msk [vmem:[%s3316 + $0x9] sm:$0xff] %vm1279, %v3223
      %3319 = vst.msk [vmem:[%s3316 + $0x19] sm:$0xff] %vm1279, %v3225
      %3320 = vst.msk [vmem:[%s3316 + $0x21] sm:$0xff] %vm1279, %v3227
      %3321 = vst.msk [vmem:[%s3316 + $0x31] sm:$0xff] %vm1279, %v3229
      %3322 = vst.msk [vmem:[%s3316 + $0x39] sm:$0xff] %vm1279, %v3231
      %3323 = vst.msk [vmem:[%s3316 + $0x49] sm:$0xff] %vm1279, %v3233
      %3324 = vst.msk [vmem:[%s3316 + $0x51] sm:$0xff] %vm1279, %v3235
      %3325 = vst.msk [vmem:[%s3316 + $0x61] sm:$0xff] %vm1279, %v3237
      %3326 = vst.msk [vmem:[%s3316 + $0x69] sm:$0xff] %vm1279, %v3239
      %3327 = vst.msk [vmem:[%s3316 + $0x79] sm:$0xff] %vm1279, %v3241
      %3328 = vst.msk [vmem:[%s3316 + $0x81] sm:$0xff] %vm1279, %v3243
      %3329 = vst.msk [vmem:[%s3316 + $0x91] sm:$0xff] %vm1279, %v3245
      %3330 = vst.msk [vmem:[%s3316 + $0x99] sm:$0xff] %vm1279, %v3247
      %3331 = vst.msk [vmem:[%s3316 + $0xa9] sm:$0xff] %vm1279, %v3249
      %3332 = vst.msk [vmem:[%s3316 + $0xb1] sm:$0xff] %vm1279, %v3251
      %3333 = vst.msk [vmem:[%s3316 + $0xc1] sm:$0xff] %vm1279, %v3253
      %3334 = vst.msk [vmem:[%s3316 + $0xc9] sm:$0xff] %vm1279, %v3255
      %3335 = vst.msk [vmem:[%s3316 + $0xd9] sm:$0xff] %vm1279, %v3257
      %3336 = vst.msk [vmem:[%s3316 + $0xe1] sm:$0xff] %vm1279, %v3259
      %3337 = vst.msk [vmem:[%s3316 + $0xf1] sm:$0xff] %vm1279, %v3261
      %3338 = vst.msk [vmem:[%s3316 + $0xf9] sm:$0xff] %vm1279, %v3263
      %3339 = vst.msk [vmem:[%s3316 + $0x109] sm:$0xff] %vm1279, %v3265
      %3340 = vst.msk [vmem:[%s3316 + $0x111] sm:$0xff] %vm1279, %v3267
      %3341 = vst.msk [vmem:[%s3316 + $0x121] sm:$0xff] %vm1279, %v3269
      %3342 = vst.msk [vmem:[%s3316 + $0x129] sm:$0xff] %vm1279, %v3271
      %3343 = vst.msk [vmem:[%s3316 + $0x139] sm:$0xff] %vm1279, %v3273
      %3344 = vst.msk [vmem:[%s3316 + $0x141] sm:$0xff] %vm1279, %v3275
      %3345 = vst.msk [vmem:[%s3316 + $0x151] sm:$0xff] %vm1279, %v3277
      %3346 = vst.msk [vmem:[%s3316 + $0x159] sm:$0xff] %vm1279, %v3279
      %3347 = vst.msk [vmem:[%s3316 + $0x169] sm:$0xff] %vm1279, %v3281
      %3348 = vst.msk [vmem:[%s3316 + $0x171] sm:$0xff] %vm1279, %v3283
      %s3349 = sld [smem:[#allocation5 + %s26]]
      %s3350 = ssub.s32 %s3349, 1
      %p3351 = scmp.eq.s32.totalorder %s27, %s3350
      // Predicated region
      $region33: #{birnn_classifier.4} parent=27 // pred_check
        %p3352 = pneg %p3351
      $region34: #{birnn_classifier.4} parent=27 // pred_check_branch
        %3354 = sbr.rel (%p3352) target = $region36
      $region35: #{birnn_classifier.4} parent=27 // pred_region
        %3355 = vst.msk [vmem:[%s255] sm:$0xff] %vm1279, %v3221
        %3356 = vst.msk [vmem:[%s255 + $0x8] sm:$0xff] %vm1279, %v3223
        %3357 = vst.msk [vmem:[%s255 + $0x10] sm:$0xff] %vm1279, %v3225
        %3358 = vst.msk [vmem:[%s255 + $0x18] sm:$0xff] %vm1279, %v3227
        %3359 = vst.msk [vmem:[%s255 + $0x20] sm:$0xff] %vm1279, %v3229
        %3360 = vst.msk [vmem:[%s255 + $0x28] sm:$0xff] %vm1279, %v3231
        %3361 = vst.msk [vmem:[%s255 + $0x30] sm:$0xff] %vm1279, %v3233
        %3362 = vst.msk [vmem:[%s255 + $0x38] sm:$0xff] %vm1279, %v3235
        %3363 = vst.msk [vmem:[%s255 + $0x40] sm:$0xff] %vm1279, %v3237
        %3364 = vst.msk [vmem:[%s255 + $0x48] sm:$0xff] %vm1279, %v3239
        %3365 = vst.msk [vmem:[%s255 + $0x50] sm:$0xff] %vm1279, %v3241
        %3366 = vst.msk [vmem:[%s255 + $0x58] sm:$0xff] %vm1279, %v3243
        %3367 = vst.msk [vmem:[%s255 + $0x60] sm:$0xff] %vm1279, %v3245
        %3368 = vst.msk [vmem:[%s255 + $0x68] sm:$0xff] %vm1279, %v3247
        %3369 = vst.msk [vmem:[%s255 + $0x70] sm:$0xff] %vm1279, %v3249
        %3370 = vst.msk [vmem:[%s255 + $0x78] sm:$0xff] %vm1279, %v3251
        %3371 = vst.msk [vmem:[%s255 + $0x80] sm:$0xff] %vm1279, %v3253
        %3372 = vst.msk [vmem:[%s255 + $0x88] sm:$0xff] %vm1279, %v3255
        %3373 = vst.msk [vmem:[%s255 + $0x90] sm:$0xff] %vm1279, %v3257
        %3374 = vst.msk [vmem:[%s255 + $0x98] sm:$0xff] %vm1279, %v3259
        %3375 = vst.msk [vmem:[%s255 + $0xa0] sm:$0xff] %vm1279, %v3261
        %3376 = vst.msk [vmem:[%s255 + $0xa8] sm:$0xff] %vm1279, %v3263
        %3377 = vst.msk [vmem:[%s255 + $0xb0] sm:$0xff] %vm1279, %v3265
        %3378 = vst.msk [vmem:[%s255 + $0xb8] sm:$0xff] %vm1279, %v3267
        %3379 = vst.msk [vmem:[%s255 + $0xc0] sm:$0xff] %vm1279, %v3269
        %3380 = vst.msk [vmem:[%s255 + $0xc8] sm:$0xff] %vm1279, %v3271
        %3381 = vst.msk [vmem:[%s255 + $0xd0] sm:$0xff] %vm1279, %v3273
        %3382 = vst.msk [vmem:[%s255 + $0xd8] sm:$0xff] %vm1279, %v3275
        %3383 = vst.msk [vmem:[%s255 + $0xe0] sm:$0xff] %vm1279, %v3277
        %3384 = vst.msk [vmem:[%s255 + $0xe8] sm:$0xff] %vm1279, %v3279
        %3385 = vst.msk [vmem:[%s255 + $0xf0] sm:$0xff] %vm1279, %v3281
        %3386 = vst.msk [vmem:[%s255 + $0xf8] sm:$0xff] %vm1279, %v3283
      $region36: #{birnn_classifier.4} parent=27 // pred_fallthru
        _
      %p3387 = scmp.lt.s32.totalorder %s25, 1
      %s3388 = scalar_select %p3387, %s25, 1
      %p3389 = scmp.lt.s32.totalorder %s26, 1
      %s3390 = scalar_select %p3389, %s26, 1
      %s3391 = smul.addr %s3390, 32
      %s3392 = smul.addr %s3388, 64
      %s3393 = sadd.s32 %s3391, %s3392
      %s3394 = smul.addr %s3393, 8
      %s3395 = scalar_lea.vmem %s3, %s3394
      // Predicated region
      $region37: #{birnn_classifier.4} parent=27 // pred_check
        %p3396 = pneg %p123
      $region38: #{birnn_classifier.4} parent=27 // pred_check_branch
        %3398 = sbr.rel (%p3396) target = $region40
      $region39: #{birnn_classifier.4} parent=27 // pred_region
        _
      $region40: #{birnn_classifier.4} parent=27 // pred_fallthru
        _
    $region28: #{birnn_classifier.4} parent=5 // pred_fallthru
      _
    %p3399 = scmp.le.s32.totalorder 2, %s15
    // Predicated region
    $region41: #{birnn_classifier.4} parent=5 // pred_check
      %p3400 = pneg %p3399
    $region42: #{birnn_classifier.4} parent=5 // pred_check_branch
      %3402 = sbr.rel (%p3400) target = $region44
    $region43: #{birnn_classifier.4} parent=5 // pred_region
      %s3403 = ssub.s32 %s15, 2
      // Predicated region
      $region45: #{birnn_classifier.4} parent=43 // pred_check
        %p3404 = pneg %p129
      $region46: #{birnn_classifier.4} parent=43 // pred_check_branch
        %3406 = sbr.rel (%p3404) target = $region48
      $region47: #{birnn_classifier.4} parent=43 // pred_region
        %p3407 = scmp.lt.s32.totalorder %s28, 1
        %s3408 = scalar_select %p3407, %s28, 1
        %p3409 = scmp.lt.s32.totalorder %s29, 1
        %s3410 = scalar_select %p3409, %s29, 1
        %s3411 = smul.addr %s3410, 32
        %s3412 = smul.addr %s3408, 64
        %s3413 = sadd.s32 %s3411, %s3412
        %s3414 = smul.addr %s3413, 8
        %s3415 = scalar_lea.vmem %s3, %s3414
      $region48: #{birnn_classifier.4} parent=43 // pred_fallthru
        _
    $region44: #{birnn_classifier.4} parent=5 // pred_fallthru
      _
  $region6: #{birnn_classifier.4} parent=0 // loop_footer
    %s19 = sadd.s32 1, %s15
  $region7: #{birnn_classifier.4} parent=0 // loop_footer_branch
    %14 = sbr.rel target = $region3
  $region8: #{birnn_classifier.4} parent=0 // loop_exit
    _

// kernel: birnn_classifier.3
$region0: #{birnn_classifier.3}
  #allocation0 [shape = 'u32[]', space=smem, size = 0x4, offset = 0x4, fixed_abs, tag = 'smem constant byte address 0x4 - core index']
  #allocation1 [shape = 'u32[144,128]{1,0:T(1,128)}', space=vmem, size = 0x12000, scoped, tag = 'internal scratch']
  #allocation2 [shape = 'f32[18,18,4]{2,1,0:T(8,128)}', space=vmem, size = 0x36000, scoped, tag = 'scratch operand']
  #allocation3 [shape = 'f32[18,18,32]{2,1,0:T(8,128)}', space=vmem, size = 0x36000, scoped, tag = 'scratch operand']
  %s0 = inlined_call_operand.vmem [shape: f32[16,16,16,4], index: 0, kind: input, shape index: {}]
  %s1 = inlined_call_operand.vmem [shape: bf16[36,32], index: 1, kind: input, shape index: {}]
  %s2 = inlined_call_operand.hbm [shape: f32[1,32], index: 2, kind: input, shape index: {}]
  %s3 = inlined_call_operand.hbm [shape: bf16[2,288,128], index: 3, kind: input, shape index: {}]
  %s4 = inlined_call_operand.hbm [shape: f32[2,1,128], index: 4, kind: input, shape index: {}]
  %s5 = inlined_call_operand.vmem [shape: f32[2,16,256,128], index: 5, kind: output, shape index: {}]
  %s6 = sld [smem:[#allocation0]]
  $region99: #{birnn_classifier.3} parent=0
    _
  %s8 = ssub.s32 1, %s6
  %s9 = scalar_select 0, %s8, %s6
  $region1: #{birnn_classifier.3} parent=0
    #allocation4 [shape = 'u8[512]{0}', space=vmem, size = 0x400, scoped, tag = 'input window, operand 2, single buffered']
    #allocation5 [shape = 's32[2]{0}', space=sflag, size = 0x8, scoped, tag = 'scoped memory for birnn_classifier.3']
    #allocation6 [shape = 'u8[147456]{0}', space=vmem, size = 0x24000, scoped, tag = 'input window, operand 3, single buffered']
    #allocation7 [shape = 's32[1]{0}', space=sflag, size = 0x4, scoped, tag = 'scoped memory for birnn_classifier.3']
    #allocation8 [shape = 'u8[1024]{0}', space=vmem, size = 0x400, scoped, tag = 'input window, operand 4, single buffered']
    #allocation9 [shape = 'u8[524288]{0}', space=vmem, size = 0x80000, scoped, tag = 'output window, operand 0']
    %10 = vsyncpa [#allocation5], 0
    %11 = vsyncpa [#allocation7], 0
    loop: start=0, step=1, limit=18
    $region2: #{birnn_classifier.3} parent=1 // loop_pre_header
      _
    $region3: #{birnn_classifier.3} parent=1 // loop_header
      %s13 = sphi 0, %s17
      %p14 = scmp.ge.s32.totalorder %s13, 18
      %s23 = sphi 0, %s25
      %s26 = sphi 0, %s23
      %s27 = sphi 0, %s26
      %s43 = sphi 0, %s27
      %s47 = sphi 0, %s47
      %s49 = sphi 0, %s47
      %s50 = sphi 0, %s49
      %s64 = sphi 0, %s50
      %s68 = sphi 0, %s68
      %s70 = sphi 0, %s68
      %s71 = sphi 0, %s70
      %s85 = sphi 0, %s71
      %s89 = sphi 0, %s89
      %s91 = sphi 0, %s89
      %s92 = sphi 0, %s91
      %s106 = sphi 0, %s92
      %s110 = sphi 0, %s110
      %s112 = sphi 0, %s110
      %s113 = sphi 0, %s112
      %s127 = sphi 0, %s113
      %s133 = sphi 0, %s135
      %s136 = sphi 0, %s133
      %s137 = sphi 0, %s136
      %s153 = sphi 0, %s137
    $region4: #{birnn_classifier.3} parent=1 // loop_header_branch
      %16 = sbr.rel (%p14) target = $region8
    $region5: #{birnn_classifier.3} parent=1 // loop_body
      %s18 = ssub.s32 %s13, 1
      %s19 = ssub.s32 %s13, 2
      %s20 = sadd.s32 %s13, 1
      %s21 = ssub.s32 %s13, %s20
      %p22 = scmp.eq.s32.totalorder %s21, 0
      %s24 = sadd.s32 %s23, 1
      %s25 = scalar_select %p22, %s23, %s24
      %p28 = pneg %p22
      %p29 = scmp.eq.s32.totalorder %s13, 15
      %p30 = por %p28, %p29
      %p31 = scmp.ne.s32.totalorder %s23, %s26
      %p32 = scmp.eq.s32.totalorder %s13, 0
      %p33 = por %p31, %p32
      %p34 = scmp.ne.s32.totalorder %s23, %s26
      %p35 = scmp.eq.s32.totalorder %s18, 15
      %p36 = por %p34, %p35
      %p37 = scmp.ne.s32.totalorder %s26, %s27
      %p38 = scmp.eq.s32.totalorder %s18, 0
      %p39 = por %p37, %p38
      %p40 = scmp.ne.s32.totalorder %s26, %s27
      %p41 = scmp.eq.s32.totalorder %s19, 15
      %p42 = por %p40, %p41
      %p44 = scmp.ne.s32.totalorder %s27, %s43
      %p45 = scmp.eq.s32.totalorder %s19, 0
      %p46 = por %p44, %p45
      %s48 = sadd.s32 %s47, 1
      %p51 = scmp.eq.s32.totalorder %s13, 15
      %p52 = scmp.ne.s32.totalorder %s47, %s49
      %p53 = scmp.eq.s32.totalorder %s13, 0
      %p54 = por %p52, %p53
      %p55 = scmp.ne.s32.totalorder %s47, %s49
      %p56 = scmp.eq.s32.totalorder %s18, 15
      %p57 = por %p55, %p56
      %p58 = scmp.ne.s32.totalorder %s49, %s50
      %p59 = scmp.eq.s32.totalorder %s18, 0
      %p60 = por %p58, %p59
      %p61 = scmp.ne.s32.totalorder %s49, %s50
      %p62 = scmp.eq.s32.totalorder %s19, 15
      %p63 = por %p61, %p62
      %p65 = scmp.ne.s32.totalorder %s50, %s64
      %p66 = scmp.eq.s32.totalorder %s19, 0
      %p67 = por %p65, %p66
      %s69 = sadd.s32 %s68, 1
      %p72 = scmp.eq.s32.totalorder %s13, 15
      %p73 = scmp.ne.s32.totalorder %s68, %s70
      %p74 = scmp.eq.s32.totalorder %s13, 0
      %p75 = por %p73, %p74
      %p76 = scmp.ne.s32.totalorder %s68, %s70
      %p77 = scmp.eq.s32.totalorder %s18, 15
      %p78 = por %p76, %p77
      %p79 = scmp.ne.s32.totalorder %s70, %s71
      %p80 = scmp.eq.s32.totalorder %s18, 0
      %p81 = por %p79, %p80
      %p82 = scmp.ne.s32.totalorder %s70, %s71
      %p83 = scmp.eq.s32.totalorder %s19, 15
      %p84 = por %p82, %p83
      %p86 = scmp.ne.s32.totalorder %s71, %s85
      %p87 = scmp.eq.s32.totalorder %s19, 0
      %p88 = por %p86, %p87
      %s90 = sadd.s32 %s89, 1
      %p93 = scmp.eq.s32.totalorder %s13, 15
      %p94 = scmp.ne.s32.totalorder %s89, %s91
      %p95 = scmp.eq.s32.totalorder %s13, 0
      %p96 = por %p94, %p95
      %p97 = scmp.ne.s32.totalorder %s89, %s91
      %p98 = scmp.eq.s32.totalorder %s18, 15
      %p99 = por %p97, %p98
      %p100 = scmp.ne.s32.totalorder %s91, %s92
      %p101 = scmp.eq.s32.totalorder %s18, 0
      %p102 = por %p100, %p101
      %p103 = scmp.ne.s32.totalorder %s91, %s92
      %p104 = scmp.eq.s32.totalorder %s19, 15
      %p105 = por %p103, %p104
      %p107 = scmp.ne.s32.totalorder %s92, %s106
      %p108 = scmp.eq.s32.totalorder %s19, 0
      %p109 = por %p107, %p108
      %s111 = sadd.s32 %s110, 1
      %p114 = scmp.eq.s32.totalorder %s13, 15
      %p115 = scmp.ne.s32.totalorder %s110, %s112
      %p116 = scmp.eq.s32.totalorder %s13, 0
      %p117 = por %p115, %p116
      %p118 = scmp.ne.s32.totalorder %s110, %s112
      %p119 = scmp.eq.s32.totalorder %s18, 15
      %p120 = por %p118, %p119
      %p121 = scmp.ne.s32.totalorder %s112, %s113
      %p122 = scmp.eq.s32.totalorder %s18, 0
      %p123 = por %p121, %p122
      %p124 = scmp.ne.s32.totalorder %s112, %s113
      %p125 = scmp.eq.s32.totalorder %s19, 15
      %p126 = por %p124, %p125
      %p128 = scmp.ne.s32.totalorder %s113, %s127
      %p129 = scmp.eq.s32.totalorder %s19, 0
      %p130 = por %p128, %p129
      %s131 = ssub.s32 %s13, %s20
      %p132 = scmp.eq.s32.totalorder %s131, 0
      %s134 = sadd.s32 %s133, 1
      %s135 = scalar_select %p132, %s133, %s134
      %p138 = pneg %p132
      %p139 = scmp.eq.s32.totalorder %s13, 15
      %p140 = por %p138, %p139
      %p141 = scmp.ne.s32.totalorder %s133, %s136
      %p142 = scmp.eq.s32.totalorder %s13, 0
      %p143 = por %p141, %p142
      %p144 = scmp.ne.s32.totalorder %s133, %s136
      %p145 = scmp.eq.s32.totalorder %s18, 15
      %p146 = por %p144, %p145
      %p147 = scmp.ne.s32.totalorder %s136, %s137
      %p148 = scmp.eq.s32.totalorder %s18, 0
      %p149 = por %p147, %p148
      %p150 = scmp.ne.s32.totalorder %s136, %s137
      %p151 = scmp.eq.s32.totalorder %s19, 15
      %p152 = por %p150, %p151
      %p154 = scmp.ne.s32.totalorder %s137, %s153
      %p155 = scmp.eq.s32.totalorder %s19, 0
      %p156 = por %p154, %p155
      %p157 = scmp.le.s32.totalorder 1, %s13
      %p158 = scmp.lt.s32.totalorder %s13, 17
      %p159 = pnand %p157, %p158
      %p160 = pneg %p159
      // Predicated region
      $region9: #{birnn_classifier.3} parent=5 // pred_check
        _
      $region10: #{birnn_classifier.3} parent=5 // pred_check_branch
        %162 = sbr.rel (%p159) target = $region12
      $region11: #{birnn_classifier.3} parent=5 // pred_region
        %s163 = ssub.s32 %s13, 1
        // Predicated region
        $region13: #{birnn_classifier.3} parent=11 // pred_check
          %p164 = pneg %p60
        $region14: #{birnn_classifier.3} parent=11 // pred_check_branch
          %166 = sbr.rel (%p164) target = $region16
        $region15: #{birnn_classifier.3} parent=11 // pred_region
          _
        $region16: #{birnn_classifier.3} parent=11 // pred_fallthru
          _
        // Predicated region
        $region17: #{birnn_classifier.3} parent=11 // pred_check
          %p167 = pneg %p81
        $region18: #{birnn_classifier.3} parent=11 // pred_check_branch
          %169 = sbr.rel (%p167) target = $region20
        $region19: #{birnn_classifier.3} parent=11 // pred_region
          %s171 = ssub.s32 16, 16
          %172 = vsyncadd [#allocation5], %s171
          %s174 = sshll.u32 [#allocation4], 4
          %s175 = int_to_ptr.vmem [resolvable:$true] %s174
          %177 = dma.hbm_to_vmem [thread:$0]  %s2, 16, %s175, [#allocation5]
        $region20: #{birnn_classifier.3} parent=11 // pred_fallthru
          _
        // Predicated region
        $region21: #{birnn_classifier.3} parent=11 // pred_check
          %p178 = pneg %p102
        $region22: #{birnn_classifier.3} parent=11 // pred_check_branch
          %180 = sbr.rel (%p178) target = $region24
        $region23: #{birnn_classifier.3} parent=11 // pred_region
          %s182 = ssub.s32 4608, 4608
          %183 = vsyncadd [#allocation7], %s182
          %s184 = sshll.u32 [#allocation6], 4
          %s185 = int_to_ptr.vmem [resolvable:$true] %s184
          %190 = dma.hbm_to_vmem [thread:$0]  %s3, 4608, %s185, [#allocation7], 64, 64, 4
        $region24: #{birnn_classifier.3} parent=11 // pred_fallthru
          _
        // Predicated region
        $region25: #{birnn_classifier.3} parent=11 // pred_check
          %p191 = pneg %p123
        $region26: #{birnn_classifier.3} parent=11 // pred_check_branch
          %193 = sbr.rel (%p191) target = $region28
        $region27: #{birnn_classifier.3} parent=11 // pred_region
          %s195 = ssub.s32 32, 32
          %196 = vsyncadd [#allocation7], %s195
          %s197 = sshll.u32 [#allocation8], 4
          %s198 = int_to_ptr.vmem [resolvable:$true] %s197
          %203 = dma.hbm_to_vmem [thread:$0]  %s4, 32, %s198, [#allocation7], 16, 16, 1
        $region28: #{birnn_classifier.3} parent=11 // pred_fallthru
          _
      $region12: #{birnn_classifier.3} parent=5 // pred_fallthru
        _
      %p204 = scmp.lt.s32.totalorder %s13, 16
      // Predicated region
      $region29: #{birnn_classifier.3} parent=5 // pred_check
        %p205 = pneg %p204
      $region30: #{birnn_classifier.3} parent=5 // pred_check_branch
        %207 = sbr.rel (%p205) target = $region32
      $region31: #{birnn_classifier.3} parent=5 // pred_region
        // Predicated region
        $region33: #{birnn_classifier.3} parent=31 // pred_check
          %p208 = pneg %p33
        $region34: #{birnn_classifier.3} parent=31 // pred_check_branch
          %210 = sbr.rel (%p208) target = $region36
        $region35: #{birnn_classifier.3} parent=31 // pred_region
          %p211 = scmp.lt.s32.totalorder %s13, 15
          %s212 = scalar_select %p211, %s13, 15
          %s213 = smul.addr %s212, 32
          %s214 = smul.addr %s213, 8
          %s215 = scalar_lea.vmem %s0, %s214
        $region36: #{birnn_classifier.3} parent=31 // pred_fallthru
          _
      $region32: #{birnn_classifier.3} parent=5 // pred_fallthru
        _
      %p216 = scmp.le.s32.totalorder 1, %s13
      %p217 = scmp.lt.s32.totalorder %s13, 17
      %p218 = pnand %p216, %p217
      %p219 = pneg %p218
      // Predicated region
      $region37: #{birnn_classifier.3} parent=5 // pred_check
        _
      $region38: #{birnn_classifier.3} parent=5 // pred_check_branch
        %221 = sbr.rel (%p218) target = $region40
      $region39: #{birnn_classifier.3} parent=5 // pred_region
        %s222 = ssub.s32 %s13, 1
        // Predicated region
        $region41: #{birnn_classifier.3} parent=39 // pred_check
          %p223 = pneg %p81
        $region42: #{birnn_classifier.3} parent=39 // pred_check_branch
          %225 = sbr.rel (%p223) target = $region44
        $region43: #{birnn_classifier.3} parent=39 // pred_region
          %226 = dma.done [#allocation5], 16
        $region44: #{birnn_classifier.3} parent=39 // pred_fallthru
          _
        // Predicated region
        $region45: #{birnn_classifier.3} parent=39 // pred_check
          %p227 = pneg %p102
        $region46: #{birnn_classifier.3} parent=39 // pred_check_branch
          %229 = sbr.rel (%p227) target = $region48
        $region47: #{birnn_classifier.3} parent=39 // pred_region
          %230 = dma.done [#allocation7], 4608
        $region48: #{birnn_classifier.3} parent=39 // pred_fallthru
          _
        // Predicated region
        $region49: #{birnn_classifier.3} parent=39 // pred_check
          %p231 = pneg %p123
        $region50: #{birnn_classifier.3} parent=39 // pred_check_branch
          %233 = sbr.rel (%p231) target = $region52
        $region51: #{birnn_classifier.3} parent=39 // pred_region
          %234 = dma.done [#allocation7], 32
        $region52: #{birnn_classifier.3} parent=39 // pred_fallthru
          _
        %p235 = scmp.lt.s32.totalorder %s18, 15
        %s236 = scalar_select %p235, %s18, 15
        %s237 = smul.addr %s236, 32
        %s238 = smul.addr %s237, 8
        %s239 = scalar_lea.vmem %s0, %s238
        %p240 = pneg %p39
        %p241 = pneg %p36
        %p242 = pneg %p60
        %p243 = pneg %p57
        %p244 = pneg %p81
        %p245 = pneg %p78
        %p246 = pneg %p102
        %p247 = pneg %p99
        %p248 = pneg %p123
        %p249 = pneg %p120
        %p250 = pneg %p149
        %p251 = pneg %p146
        %s252 = sand.u32 %s136, 1
        %s253 = sand.u32 %s136, 1
        %s254 = smul.addr %s253, 512
        %s255 = scalar_lea.vmem [#allocation9], %s254
        %p256 = scmp.lt.s32.totalorder %s18, 15
        %s257 = scalar_select %p256, %s18, 15
        %s258 = smul.addr %s257, 32
        %s259 = smul.addr %s258, 8
        %s260 = scalar_lea.vmem %s0, %s259
        %vm262 = vcmask 31744
        %263 = vst.msk [vmem:[#allocation2] sm:$0xff] %vm262, 0.0
        %264 = vst.msk [vmem:[#allocation2 + $0x8] sm:$0xff] %vm262, 0.0
        %vm265 = vcmask 25600
        %266 = vst.msk [vmem:[#allocation2 + $0x10] sm:$0x3] %vm265, 0.0
        %267 = vst.msk [vmem:[#allocation2 + $0x18] sm:$0xff] %vm262, 0.0
        %268 = vst.msk [vmem:[#allocation2 + $0x20] sm:$0xff] %vm262, 0.0
        %269 = vst.msk [vmem:[#allocation2 + $0x28] sm:$0x3] %vm265, 0.0
        %270 = vst.msk [vmem:[#allocation2 + $0x30] sm:$0xff] %vm262, 0.0
        %271 = vst.msk [vmem:[#allocation2 + $0x38] sm:$0xff] %vm262, 0.0
        %272 = vst.msk [vmem:[#allocation2 + $0x40] sm:$0x3] %vm265, 0.0
        %273 = vst.msk [vmem:[#allocation2 + $0x48] sm:$0xff] %vm262, 0.0
        %274 = vst.msk [vmem:[#allocation2 + $0x50] sm:$0xff] %vm262, 0.0
        %275 = vst.msk [vmem:[#allocation2 + $0x58] sm:$0x3] %vm265, 0.0
        %276 = vst.msk [vmem:[#allocation2 + $0x60] sm:$0xff] %vm262, 0.0
        %277 = vst.msk [vmem:[#allocation2 + $0x68] sm:$0xff] %vm262, 0.0
        %278 = vst.msk [vmem:[#allocation2 + $0x70] sm:$0x3] %vm265, 0.0
        %279 = vst.msk [vmem:[#allocation2 + $0x78] sm:$0xff] %vm262, 0.0
        %280 = vst.msk [vmem:[#allocation2 + $0x80] sm:$0xff] %vm262, 0.0
        %281 = vst.msk [vmem:[#allocation2 + $0x88] sm:$0x3] %vm265, 0.0
        %282 = vst.msk [vmem:[#allocation2 + $0x90] sm:$0xff] %vm262, 0.0
        %283 = vst.msk [vmem:[#allocation2 + $0x98] sm:$0xff] %vm262, 0.0
        %284 = vst.msk [vmem:[#allocation2 + $0xa0] sm:$0x3] %vm265, 0.0
        %285 = vst.msk [vmem:[#allocation2 + $0xa8] sm:$0xff] %vm262, 0.0
        %286 = vst.msk [vmem:[#allocation2 + $0xb0] sm:$0xff] %vm262, 0.0
        %287 = vst.msk [vmem:[#allocation2 + $0xb8] sm:$0x3] %vm265, 0.0
        %288 = vst.msk [vmem:[#allocation2 + $0xc0] sm:$0xff] %vm262, 0.0
        %289 = vst.msk [vmem:[#allocation2 + $0xc8] sm:$0xff] %vm262, 0.0
        %290 = vst.msk [vmem:[#allocation2 + $0xd0] sm:$0x3] %vm265, 0.0
        %291 = vst.msk [vmem:[#allocation2 + $0xd8] sm:$0xff] %vm262, 0.0
        %292 = vst.msk [vmem:[#allocation2 + $0xe0] sm:$0xff] %vm262, 0.0
        %293 = vst.msk [vmem:[#allocation2 + $0xe8] sm:$0x3] %vm265, 0.0
        %294 = vst.msk [vmem:[#allocation2 + $0xf0] sm:$0xff] %vm262, 0.0
        %295 = vst.msk [vmem:[#allocation2 + $0xf8] sm:$0xff] %vm262, 0.0
        %296 = vst.msk [vmem:[#allocation2 + $0x100] sm:$0x3] %vm265, 0.0
        %297 = vst.msk [vmem:[#allocation2 + $0x108] sm:$0xff] %vm262, 0.0
        %298 = vst.msk [vmem:[#allocation2 + $0x110] sm:$0xff] %vm262, 0.0
        %299 = vst.msk [vmem:[#allocation2 + $0x118] sm:$0x3] %vm265, 0.0
        %300 = vst.msk [vmem:[#allocation2 + $0x120] sm:$0xff] %vm262, 0.0
        %301 = vst.msk [vmem:[#allocation2 + $0x128] sm:$0xff] %vm262, 0.0
        %302 = vst.msk [vmem:[#allocation2 + $0x130] sm:$0x3] %vm265, 0.0
        %303 = vst.msk [vmem:[#allocation2 + $0x138] sm:$0xff] %vm262, 0.0
        %304 = vst.msk [vmem:[#allocation2 + $0x140] sm:$0xff] %vm262, 0.0
        %305 = vst.msk [vmem:[#allocation2 + $0x148] sm:$0x3] %vm265, 0.0
        %306 = vst.msk [vmem:[#allocation2 + $0x150] sm:$0xff] %vm262, 0.0
        %307 = vst.msk [vmem:[#allocation2 + $0x158] sm:$0xff] %vm262, 0.0
        %308 = vst.msk [vmem:[#allocation2 + $0x160] sm:$0x3] %vm265, 0.0
        %309 = vst.msk [vmem:[#allocation2 + $0x168] sm:$0xff] %vm262, 0.0
        %310 = vst.msk [vmem:[#allocation2 + $0x170] sm:$0xff] %vm262, 0.0
        %311 = vst.msk [vmem:[#allocation2 + $0x178] sm:$0x3] %vm265, 0.0
        %312 = vst.msk [vmem:[#allocation2 + $0x180] sm:$0xff] %vm262, 0.0
        %313 = vst.msk [vmem:[#allocation2 + $0x188] sm:$0xff] %vm262, 0.0
        %314 = vst.msk [vmem:[#allocation2 + $0x190] sm:$0x3] %vm265, 0.0
        %315 = vst.msk [vmem:[#allocation2 + $0x198] sm:$0xff] %vm262, 0.0
        %316 = vst.msk [vmem:[#allocation2 + $0x1a0] sm:$0xff] %vm262, 0.0
        %317 = vst.msk [vmem:[#allocation2 + $0x1a8] sm:$0x3] %vm265, 0.0
        %v318 = vld [vmem:[%s260] sm:$0xff]
        %v319 = vld [vmem:[%s260 + $0x8] sm:$0xff]
        %v320 = vld [vmem:[%s260 + $0x10] sm:$0xff]
        %v321 = vld [vmem:[%s260 + $0x18] sm:$0xff]
        %v322 = vld [vmem:[%s260 + $0x20] sm:$0xff]
        %v323 = vld [vmem:[%s260 + $0x28] sm:$0xff]
        %v324 = vld [vmem:[%s260 + $0x30] sm:$0xff]
        %v325 = vld [vmem:[%s260 + $0x38] sm:$0xff]
        %v326 = vld [vmem:[%s260 + $0x40] sm:$0xff]
        %v327 = vld [vmem:[%s260 + $0x48] sm:$0xff]
        %v328 = vld [vmem:[%s260 + $0x50] sm:$0xff]
        %v329 = vld [vmem:[%s260 + $0x58] sm:$0xff]
        %v330 = vld [vmem:[%s260 + $0x60] sm:$0xff]
        %v331 = vld [vmem:[%s260 + $0x68] sm:$0xff]
        %v332 = vld [vmem:[%s260 + $0x70] sm:$0xff]
        %v333 = vld [vmem:[%s260 + $0x78] sm:$0xff]
        %v334 = vld [vmem:[%s260 + $0x80] sm:$0xff]
        %v335 = vld [vmem:[%s260 + $0x88] sm:$0xff]
        %v336 = vld [vmem:[%s260 + $0x90] sm:$0xff]
        %v337 = vld [vmem:[%s260 + $0x98] sm:$0xff]
        %v338 = vld [vmem:[%s260 + $0xa0] sm:$0xff]
        %v339 = vld [vmem:[%s260 + $0xa8] sm:$0xff]
        %v340 = vld [vmem:[%s260 + $0xb0] sm:$0xff]
        %v341 = vld [vmem:[%s260 + $0xb8] sm:$0xff]
        %v342 = vld [vmem:[%s260 + $0xc0] sm:$0xff]
        %v343 = vld [vmem:[%s260 + $0xc8] sm:$0xff]
        %v344 = vld [vmem:[%s260 + $0xd0] sm:$0xff]
        %v345 = vld [vmem:[%s260 + $0xd8] sm:$0xff]
        %v346 = vld [vmem:[%s260 + $0xe0] sm:$0xff]
        %v347 = vld [vmem:[%s260 + $0xe8] sm:$0xff]
        %v348 = vld [vmem:[%s260 + $0xf0] sm:$0xff]
        %v349 = vld [vmem:[%s260 + $0xf8] sm:$0xff]
        %s350 = scalar_lea.vmem [#allocation2], 24
        %351 = vst.msk [vmem:[%s350 + $0x1] sm:$0xff] %vm262, %v318
        %352 = vst.msk [vmem:[%s350 + $0x9] sm:$0xff] %vm262, %v319
        %353 = vst.msk [vmem:[%s350 + $0x19] sm:$0xff] %vm262, %v320
        %354 = vst.msk [vmem:[%s350 + $0x21] sm:$0xff] %vm262, %v321
        %355 = vst.msk [vmem:[%s350 + $0x31] sm:$0xff] %vm262, %v322
        %356 = vst.msk [vmem:[%s350 + $0x39] sm:$0xff] %vm262, %v323
        %357 = vst.msk [vmem:[%s350 + $0x49] sm:$0xff] %vm262, %v324
        %358 = vst.msk [vmem:[%s350 + $0x51] sm:$0xff] %vm262, %v325
        %359 = vst.msk [vmem:[%s350 + $0x61] sm:$0xff] %vm262, %v326
        %360 = vst.msk [vmem:[%s350 + $0x69] sm:$0xff] %vm262, %v327
        %361 = vst.msk [vmem:[%s350 + $0x79] sm:$0xff] %vm262, %v328
        %362 = vst.msk [vmem:[%s350 + $0x81] sm:$0xff] %vm262, %v329
        %363 = vst.msk [vmem:[%s350 + $0x91] sm:$0xff] %vm262, %v330
        %364 = vst.msk [vmem:[%s350 + $0x99] sm:$0xff] %vm262, %v331
        %365 = vst.msk [vmem:[%s350 + $0xa9] sm:$0xff] %vm262, %v332
        %366 = vst.msk [vmem:[%s350 + $0xb1] sm:$0xff] %vm262, %v333
        %367 = vst.msk [vmem:[%s350 + $0xc1] sm:$0xff] %vm262, %v334
        %368 = vst.msk [vmem:[%s350 + $0xc9] sm:$0xff] %vm262, %v335
        %369 = vst.msk [vmem:[%s350 + $0xd9] sm:$0xff] %vm262, %v336
        %370 = vst.msk [vmem:[%s350 + $0xe1] sm:$0xff] %vm262, %v337
        %371 = vst.msk [vmem:[%s350 + $0xf1] sm:$0xff] %vm262, %v338
        %372 = vst.msk [vmem:[%s350 + $0xf9] sm:$0xff] %vm262, %v339
        %373 = vst.msk [vmem:[%s350 + $0x109] sm:$0xff] %vm262, %v340
        %374 = vst.msk [vmem:[%s350 + $0x111] sm:$0xff] %vm262, %v341
        %375 = vst.msk [vmem:[%s350 + $0x121] sm:$0xff] %vm262, %v342
        %376 = vst.msk [vmem:[%s350 + $0x129] sm:$0xff] %vm262, %v343
        %377 = vst.msk [vmem:[%s350 + $0x139] sm:$0xff] %vm262, %v344
        %378 = vst.msk [vmem:[%s350 + $0x141] sm:$0xff] %vm262, %v345
        %379 = vst.msk [vmem:[%s350 + $0x151] sm:$0xff] %vm262, %v346
        %380 = vst.msk [vmem:[%s350 + $0x159] sm:$0xff] %vm262, %v347
        %381 = vst.msk [vmem:[%s350 + $0x169] sm:$0xff] %vm262, %v348
        %382 = vst.msk [vmem:[%s350 + $0x171] sm:$0xff] %vm262, %v349
        %v383 = vld [vmem:[#allocation2] sm:$0xff]
        %v384 = vld [vmem:[#allocation2 + $0x8] sm:$0xff]
        %v385 = vld [vmem:[#allocation2 + $0x10] sm:$0x3]
        %v386 = vld [vmem:[#allocation2 + $0x18] sm:$0xff]
        %v387 = vld [vmem:[#allocation2 + $0x20] sm:$0xff]
        %v388 = vld [vmem:[#allocation2 + $0x28] sm:$0x3]
        %v389 = vld [vmem:[#allocation2 + $0x30] sm:$0xff]
        %v390 = vld [vmem:[#allocation2 + $0x38] sm:$0xff]
        %v391 = vld [vmem:[#allocation2 + $0x40] sm:$0x3]
        %v392 = vld [vmem:[#allocation2 + $0x48] sm:$0xff]
        %v393 = vld [vmem:[#allocation2 + $0x50] sm:$0xff]
        %v394 = vld [vmem:[#allocation2 + $0x58] sm:$0x3]
        %v395 = vld [vmem:[#allocation2 + $0x60] sm:$0xff]
        %v396 = vld [vmem:[#allocation2 + $0x68] sm:$0xff]
        %v397 = vld [vmem:[#allocation2 + $0x70] sm:$0x3]
        %v398 = vld [vmem:[#allocation2 + $0x78] sm:$0xff]
        %v399 = vld [vmem:[#allocation2 + $0x80] sm:$0xff]
        %v400 = vld [vmem:[#allocation2 + $0x88] sm:$0x3]
        %v401 = vld [vmem:[#allocation2 + $0x90] sm:$0xff]
        %v402 = vld [vmem:[#allocation2 + $0x98] sm:$0xff]
        %v403 = vld [vmem:[#allocation2 + $0xa0] sm:$0x3]
        %v404 = vld [vmem:[#allocation2 + $0xa8] sm:$0xff]
        %v405 = vld [vmem:[#allocation2 + $0xb0] sm:$0xff]
        %v406 = vld [vmem:[#allocation2 + $0xb8] sm:$0x3]
        %v407 = vld [vmem:[#allocation2 + $0xc0] sm:$0xff]
        %v408 = vld [vmem:[#allocation2 + $0xc8] sm:$0xff]
        %v409 = vld [vmem:[#allocation2 + $0xd0] sm:$0x3]
        %v410 = vld [vmem:[#allocation2 + $0xd8] sm:$0xff]
        %v411 = vld [vmem:[#allocation2 + $0xe0] sm:$0xff]
        %v412 = vld [vmem:[#allocation2 + $0xe8] sm:$0x3]
        %v413 = vld [vmem:[#allocation2 + $0xf0] sm:$0xff]
        %v414 = vld [vmem:[#allocation2 + $0xf8] sm:$0xff]
        %v415 = vld [vmem:[#allocation2 + $0x100] sm:$0x3]
        %v416 = vld [vmem:[#allocation2 + $0x108] sm:$0xff]
        %v417 = vld [vmem:[#allocation2 + $0x110] sm:$0xff]
        %v418 = vld [vmem:[#allocation2 + $0x118] sm:$0x3]
        %v419 = vld [vmem:[#allocation2 + $0x120] sm:$0xff]
        %v420 = vld [vmem:[#allocation2 + $0x128] sm:$0xff]
        %v421 = vld [vmem:[#allocation2 + $0x130] sm:$0x3]
        %v422 = vld [vmem:[#allocation2 + $0x138] sm:$0xff]
        %v423 = vld [vmem:[#allocation2 + $0x140] sm:$0xff]
        %v424 = vld [vmem:[#allocation2 + $0x148] sm:$0x3]
        %v425 = vld [vmem:[#allocation2 + $0x150] sm:$0xff]
        %v426 = vld [vmem:[#allocation2 + $0x158] sm:$0xff]
        %v427 = vld [vmem:[#allocation2 + $0x160] sm:$0x3]
        %v428 = vld [vmem:[#allocation2 + $0x168] sm:$0xff]
        %v429 = vld [vmem:[#allocation2 + $0x170] sm:$0xff]
        %v430 = vld [vmem:[#allocation2 + $0x178] sm:$0x3]
        %v431 = vld [vmem:[#allocation2 + $0x180] sm:$0xff]
        %v432 = vld [vmem:[#allocation2 + $0x188] sm:$0xff]
        %v433 = vld [vmem:[#allocation2 + $0x190] sm:$0x3]
        %v434 = vld [vmem:[#allocation2 + $0x198] sm:$0xff]
        %v435 = vld [vmem:[#allocation2 + $0x1a0] sm:$0xff]
        %v436 = vld [vmem:[#allocation2 + $0x1a8] sm:$0x3]
        %vm485 = vcmask 1046528
        %v486 = vrot.slane %v383, 1
        %v487 = vrot.slane %v384, 1
        %v488 = vsel %vm485, %v486, %v487
        %v489 = vrot.slane %v385, 1
        %v490 = vsel %vm485, %v487, %v489
        %v491 = vrot.slane %v386, 1
        %v492 = vrot.slane %v387, 1
        %v493 = vsel %vm485, %v491, %v492
        %v494 = vrot.slane %v388, 1
        %v495 = vsel %vm485, %v492, %v494
        %v496 = vrot.slane %v389, 1
        %v497 = vrot.slane %v390, 1
        %v498 = vsel %vm485, %v496, %v497
        %v499 = vrot.slane %v391, 1
        %v500 = vsel %vm485, %v497, %v499
        %v501 = vrot.slane %v392, 1
        %v502 = vrot.slane %v393, 1
        %v503 = vsel %vm485, %v501, %v502
        %v504 = vrot.slane %v394, 1
        %v505 = vsel %vm485, %v502, %v504
        %v506 = vrot.slane %v395, 1
        %v507 = vrot.slane %v396, 1
        %v508 = vsel %vm485, %v506, %v507
        %v509 = vrot.slane %v397, 1
        %v510 = vsel %vm485, %v507, %v509
        %v511 = vrot.slane %v398, 1
        %v512 = vrot.slane %v399, 1
        %v513 = vsel %vm485, %v511, %v512
        %v514 = vrot.slane %v400, 1
        %v515 = vsel %vm485, %v512, %v514
        %v516 = vrot.slane %v401, 1
        %v517 = vrot.slane %v402, 1
        %v518 = vsel %vm485, %v516, %v517
        %v519 = vrot.slane %v403, 1
        %v520 = vsel %vm485, %v517, %v519
        %v521 = vrot.slane %v404, 1
        %v522 = vrot.slane %v405, 1
        %v523 = vsel %vm485, %v521, %v522
        %v524 = vrot.slane %v406, 1
        %v525 = vsel %vm485, %v522, %v524
        %v526 = vrot.slane %v407, 1
        %v527 = vrot.slane %v408, 1
        %v528 = vsel %vm485, %v526, %v527
        %v529 = vrot.slane %v409, 1
        %v530 = vsel %vm485, %v527, %v529
        %v531 = vrot.slane %v410, 1
        %v532 = vrot.slane %v411, 1
        %v533 = vsel %vm485, %v531, %v532
        %v534 = vrot.slane %v412, 1
        %v535 = vsel %vm485, %v532, %v534
        %v536 = vrot.slane %v413, 1
        %v537 = vrot.slane %v414, 1
        %v538 = vsel %vm485, %v536, %v537
        %v539 = vrot.slane %v415, 1
        %v540 = vsel %vm485, %v537, %v539
        %v541 = vrot.slane %v416, 1
        %v542 = vrot.slane %v417, 1
        %v543 = vsel %vm485, %v541, %v542
        %v544 = vrot.slane %v418, 1
        %v545 = vsel %vm485, %v542, %v544
        %v546 = vrot.slane %v419, 1
        %v547 = vrot.slane %v420, 1
        %v548 = vsel %vm485, %v546, %v547
        %v549 = vrot.slane %v421, 1
        %v550 = vsel %vm485, %v547, %v549
        %v551 = vrot.slane %v422, 1
        %v552 = vrot.slane %v423, 1
        %v553 = vsel %vm485, %v551, %v552
        %v554 = vrot.slane %v424, 1
        %v555 = vsel %vm485, %v552, %v554
        %v556 = vrot.slane %v425, 1
        %v557 = vrot.slane %v426, 1
        %v558 = vsel %vm485, %v556, %v557
        %v559 = vrot.slane %v427, 1
        %v560 = vsel %vm485, %v557, %v559
        %v561 = vrot.slane %v428, 1
        %v562 = vrot.slane %v429, 1
        %v563 = vsel %vm485, %v561, %v562
        %v564 = vrot.slane %v430, 1
        %v565 = vsel %vm485, %v562, %v564
        %vm566 = vcmask 1045504
        %v567 = vrot.slane %v383, 2
        %v568 = vrot.slane %v384, 2
        %v569 = vsel %vm566, %v567, %v568
        %v570 = vrot.slane %v385, 2
        %v571 = vsel %vm566, %v568, %v570
        %v572 = vrot.slane %v386, 2
        %v573 = vrot.slane %v387, 2
        %v574 = vsel %vm566, %v572, %v573
        %v575 = vrot.slane %v388, 2
        %v576 = vsel %vm566, %v573, %v575
        %v577 = vrot.slane %v389, 2
        %v578 = vrot.slane %v390, 2
        %v579 = vsel %vm566, %v577, %v578
        %v580 = vrot.slane %v391, 2
        %v581 = vsel %vm566, %v578, %v580
        %v582 = vrot.slane %v392, 2
        %v583 = vrot.slane %v393, 2
        %v584 = vsel %vm566, %v582, %v583
        %v585 = vrot.slane %v394, 2
        %v586 = vsel %vm566, %v583, %v585
        %v587 = vrot.slane %v395, 2
        %v588 = vrot.slane %v396, 2
        %v589 = vsel %vm566, %v587, %v588
        %v590 = vrot.slane %v397, 2
        %v591 = vsel %vm566, %v588, %v590
        %v592 = vrot.slane %v398, 2
        %v593 = vrot.slane %v399, 2
        %v594 = vsel %vm566, %v592, %v593
        %v595 = vrot.slane %v400, 2
        %v596 = vsel %vm566, %v593, %v595
        %v597 = vrot.slane %v401, 2
        %v598 = vrot.slane %v402, 2
        %v599 = vsel %vm566, %v597, %v598
        %v600 = vrot.slane %v403, 2
        %v601 = vsel %vm566, %v598, %v600
        %v602 = vrot.slane %v404, 2
        %v603 = vrot.slane %v405, 2
        %v604 = vsel %vm566, %v602, %v603
        %v605 = vrot.slane %v406, 2
        %v606 = vsel %vm566, %v603, %v605
        %v607 = vrot.slane %v407, 2
        %v608 = vrot.slane %v408, 2
        %v609 = vsel %vm566, %v607, %v608
        %v610 = vrot.slane %v409, 2
        %v611 = vsel %vm566, %v608, %v610
        %v612 = vrot.slane %v410, 2
        %v613 = vrot.slane %v411, 2
        %v614 = vsel %vm566, %v612, %v613
        %v615 = vrot.slane %v412, 2
        %v616 = vsel %vm566, %v613, %v615
        %v617 = vrot.slane %v413, 2
        %v618 = vrot.slane %v414, 2
        %v619 = vsel %vm566, %v617, %v618
        %v620 = vrot.slane %v415, 2
        %v621 = vsel %vm566, %v618, %v620
        %v622 = vrot.slane %v416, 2
        %v623 = vrot.slane %v417, 2
        %v624 = vsel %vm566, %v622, %v623
        %v625 = vrot.slane %v418, 2
        %v626 = vsel %vm566, %v623, %v625
        %v627 = vrot.slane %v419, 2
        %v628 = vrot.slane %v420, 2
        %v629 = vsel %vm566, %v627, %v628
        %v630 = vrot.slane %v421, 2
        %v631 = vsel %vm566, %v628, %v630
        %v632 = vrot.slane %v422, 2
        %v633 = vrot.slane %v423, 2
        %v634 = vsel %vm566, %v632, %v633
        %v635 = vrot.slane %v424, 2
        %v636 = vsel %vm566, %v633, %v635
        %v637 = vrot.slane %v425, 2
        %v638 = vrot.slane %v426, 2
        %v639 = vsel %vm566, %v637, %v638
        %v640 = vrot.slane %v427, 2
        %v641 = vsel %vm566, %v638, %v640
        %v642 = vrot.slane %v428, 2
        %v643 = vrot.slane %v429, 2
        %v644 = vsel %vm566, %v642, %v643
        %v645 = vrot.slane %v430, 2
        %v646 = vsel %vm566, %v643, %v645
        %v650 = vrot.slane %v431, 1
        %v651 = vrot.slane %v432, 1
        %v652 = vsel %vm485, %v650, %v651
        %v653 = vrot.slane %v433, 1
        %v654 = vsel %vm485, %v651, %v653
        %v655 = vrot.slane %v431, 2
        %v656 = vrot.slane %v432, 2
        %v657 = vsel %vm566, %v655, %v656
        %v658 = vrot.slane %v433, 2
        %v659 = vsel %vm566, %v656, %v658
        %v663 = vrot.slane %v434, 1
        %v664 = vrot.slane %v435, 1
        %v665 = vsel %vm485, %v663, %v664
        %v666 = vrot.slane %v436, 1
        %v667 = vsel %vm485, %v664, %v666
        %v668 = vrot.slane %v434, 2
        %v669 = vrot.slane %v435, 2
        %v670 = vsel %vm566, %v668, %v669
        %v671 = vrot.slane %v436, 2
        %v672 = vsel %vm566, %v669, %v671
        %673 = vrot.lane.b32.xlu0 %v488, 4
        %v674 = vpop.permute.xlu0 %673
        %675 = vrot.lane.b32.xlu0 %v490, 4
        %v676 = vpop.permute.xlu0 %675
        %677 = vrot.lane.b32.xlu0 %v493, 4
        %v678 = vpop.permute.xlu0 %677
        %679 = vrot.lane.b32.xlu0 %v495, 4
        %v680 = vpop.permute.xlu0 %679
        %681 = vrot.lane.b32.xlu0 %v498, 4
        %v682 = vpop.permute.xlu0 %681
        %683 = vrot.lane.b32.xlu0 %v500, 4
        %v684 = vpop.permute.xlu0 %683
        %685 = vrot.lane.b32.xlu0 %v503, 4
        %v686 = vpop.permute.xlu0 %685
        %687 = vrot.lane.b32.xlu0 %v505, 4
        %v688 = vpop.permute.xlu0 %687
        %689 = vrot.lane.b32.xlu0 %v508, 4
        %v690 = vpop.permute.xlu0 %689
        %691 = vrot.lane.b32.xlu0 %v510, 4
        %v692 = vpop.permute.xlu0 %691
        %693 = vrot.lane.b32.xlu0 %v513, 4
        %v694 = vpop.permute.xlu0 %693
        %695 = vrot.lane.b32.xlu0 %v515, 4
        %v696 = vpop.permute.xlu0 %695
        %697 = vrot.lane.b32.xlu0 %v518, 4
        %v698 = vpop.permute.xlu0 %697
        %699 = vrot.lane.b32.xlu0 %v520, 4
        %v700 = vpop.permute.xlu0 %699
        %701 = vrot.lane.b32.xlu0 %v523, 4
        %v702 = vpop.permute.xlu0 %701
        %703 = vrot.lane.b32.xlu0 %v525, 4
        %v704 = vpop.permute.xlu0 %703
        %705 = vrot.lane.b32.xlu0 %v528, 4
        %v706 = vpop.permute.xlu0 %705
        %707 = vrot.lane.b32.xlu0 %v530, 4
        %v708 = vpop.permute.xlu0 %707
        %709 = vrot.lane.b32.xlu0 %v533, 4
        %v710 = vpop.permute.xlu0 %709
        %711 = vrot.lane.b32.xlu0 %v535, 4
        %v712 = vpop.permute.xlu0 %711
        %713 = vrot.lane.b32.xlu0 %v538, 4
        %v714 = vpop.permute.xlu0 %713
        %715 = vrot.lane.b32.xlu0 %v540, 4
        %v716 = vpop.permute.xlu0 %715
        %717 = vrot.lane.b32.xlu0 %v543, 4
        %v718 = vpop.permute.xlu0 %717
        %719 = vrot.lane.b32.xlu0 %v545, 4
        %v720 = vpop.permute.xlu0 %719
        %721 = vrot.lane.b32.xlu0 %v548, 4
        %v722 = vpop.permute.xlu0 %721
        %723 = vrot.lane.b32.xlu0 %v550, 4
        %v724 = vpop.permute.xlu0 %723
        %725 = vrot.lane.b32.xlu0 %v553, 4
        %v726 = vpop.permute.xlu0 %725
        %727 = vrot.lane.b32.xlu0 %v555, 4
        %v728 = vpop.permute.xlu0 %727
        %729 = vrot.lane.b32.xlu0 %v558, 4
        %v730 = vpop.permute.xlu0 %729
        %731 = vrot.lane.b32.xlu0 %v560, 4
        %v732 = vpop.permute.xlu0 %731
        %733 = vrot.lane.b32.xlu0 %v563, 4
        %v734 = vpop.permute.xlu0 %733
        %735 = vrot.lane.b32.xlu0 %v565, 4
        %v736 = vpop.permute.xlu0 %735
        %769 = vrot.lane.b32.xlu0 %v569, 8
        %v770 = vpop.permute.xlu0 %769
        %771 = vrot.lane.b32.xlu0 %v571, 8
        %v772 = vpop.permute.xlu0 %771
        %773 = vrot.lane.b32.xlu0 %v574, 8
        %v774 = vpop.permute.xlu0 %773
        %775 = vrot.lane.b32.xlu0 %v576, 8
        %v776 = vpop.permute.xlu0 %775
        %777 = vrot.lane.b32.xlu0 %v579, 8
        %v778 = vpop.permute.xlu0 %777
        %779 = vrot.lane.b32.xlu0 %v581, 8
        %v780 = vpop.permute.xlu0 %779
        %781 = vrot.lane.b32.xlu0 %v584, 8
        %v782 = vpop.permute.xlu0 %781
        %783 = vrot.lane.b32.xlu0 %v586, 8
        %v784 = vpop.permute.xlu0 %783
        %785 = vrot.lane.b32.xlu0 %v589, 8
        %v786 = vpop.permute.xlu0 %785
        %787 = vrot.lane.b32.xlu0 %v591, 8
        %v788 = vpop.permute.xlu0 %787
        %789 = vrot.lane.b32.xlu0 %v594, 8
        %v790 = vpop.permute.xlu0 %789
        %791 = vrot.lane.b32.xlu0 %v596, 8
        %v792 = vpop.permute.xlu0 %791
        %793 = vrot.lane.b32.xlu0 %v599, 8
        %v794 = vpop.permute.xlu0 %793
        %795 = vrot.lane.b32.xlu0 %v601, 8
        %v796 = vpop.permute.xlu0 %795
        %797 = vrot.lane.b32.xlu0 %v604, 8
        %v798 = vpop.permute.xlu0 %797
        %799 = vrot.lane.b32.xlu0 %v606, 8
        %v800 = vpop.permute.xlu0 %799
        %801 = vrot.lane.b32.xlu0 %v609, 8
        %v802 = vpop.permute.xlu0 %801
        %803 = vrot.lane.b32.xlu0 %v611, 8
        %v804 = vpop.permute.xlu0 %803
        %805 = vrot.lane.b32.xlu0 %v614, 8
        %v806 = vpop.permute.xlu0 %805
        %807 = vrot.lane.b32.xlu0 %v616, 8
        %v808 = vpop.permute.xlu0 %807
        %809 = vrot.lane.b32.xlu0 %v619, 8
        %v810 = vpop.permute.xlu0 %809
        %811 = vrot.lane.b32.xlu0 %v621, 8
        %v812 = vpop.permute.xlu0 %811
        %813 = vrot.lane.b32.xlu0 %v624, 8
        %v814 = vpop.permute.xlu0 %813
        %815 = vrot.lane.b32.xlu0 %v626, 8
        %v816 = vpop.permute.xlu0 %815
        %817 = vrot.lane.b32.xlu0 %v629, 8
        %v818 = vpop.permute.xlu0 %817
        %819 = vrot.lane.b32.xlu0 %v631, 8
        %v820 = vpop.permute.xlu0 %819
        %821 = vrot.lane.b32.xlu0 %v634, 8
        %v822 = vpop.permute.xlu0 %821
        %823 = vrot.lane.b32.xlu0 %v636, 8
        %v824 = vpop.permute.xlu0 %823
        %825 = vrot.lane.b32.xlu0 %v639, 8
        %v826 = vpop.permute.xlu0 %825
        %827 = vrot.lane.b32.xlu0 %v641, 8
        %v828 = vpop.permute.xlu0 %827
        %829 = vrot.lane.b32.xlu0 %v644, 8
        %v830 = vpop.permute.xlu0 %829
        %831 = vrot.lane.b32.xlu0 %v646, 8
        %v832 = vpop.permute.xlu0 %831
        %865 = vrot.lane.b32.xlu0 %v386, 12
        %v866 = vpop.permute.xlu0 %865
        %867 = vrot.lane.b32.xlu0 %v387, 12
        %v868 = vpop.permute.xlu0 %867
        %869 = vrot.lane.b32.xlu0 %v389, 12
        %v870 = vpop.permute.xlu0 %869
        %871 = vrot.lane.b32.xlu0 %v390, 12
        %v872 = vpop.permute.xlu0 %871
        %873 = vrot.lane.b32.xlu0 %v392, 12
        %v874 = vpop.permute.xlu0 %873
        %875 = vrot.lane.b32.xlu0 %v393, 12
        %v876 = vpop.permute.xlu0 %875
        %877 = vrot.lane.b32.xlu0 %v395, 12
        %v878 = vpop.permute.xlu0 %877
        %879 = vrot.lane.b32.xlu0 %v396, 12
        %v880 = vpop.permute.xlu0 %879
        %881 = vrot.lane.b32.xlu0 %v398, 12
        %v882 = vpop.permute.xlu0 %881
        %883 = vrot.lane.b32.xlu0 %v399, 12
        %v884 = vpop.permute.xlu0 %883
        %885 = vrot.lane.b32.xlu0 %v401, 12
        %v886 = vpop.permute.xlu0 %885
        %887 = vrot.lane.b32.xlu0 %v402, 12
        %v888 = vpop.permute.xlu0 %887
        %889 = vrot.lane.b32.xlu0 %v404, 12
        %v890 = vpop.permute.xlu0 %889
        %891 = vrot.lane.b32.xlu0 %v405, 12
        %v892 = vpop.permute.xlu0 %891
        %893 = vrot.lane.b32.xlu0 %v407, 12
        %v894 = vpop.permute.xlu0 %893
        %895 = vrot.lane.b32.xlu0 %v408, 12
        %v896 = vpop.permute.xlu0 %895
        %897 = vrot.lane.b32.xlu0 %v410, 12
        %v898 = vpop.permute.xlu0 %897
        %899 = vrot.lane.b32.xlu0 %v411, 12
        %v900 = vpop.permute.xlu0 %899
        %901 = vrot.lane.b32.xlu0 %v413, 12
        %v902 = vpop.permute.xlu0 %901
        %903 = vrot.lane.b32.xlu0 %v414, 12
        %v904 = vpop.permute.xlu0 %903
        %905 = vrot.lane.b32.xlu0 %v416, 12
        %v906 = vpop.permute.xlu0 %905
        %907 = vrot.lane.b32.xlu0 %v417, 12
        %v908 = vpop.permute.xlu0 %907
        %909 = vrot.lane.b32.xlu0 %v419, 12
        %v910 = vpop.permute.xlu0 %909
        %911 = vrot.lane.b32.xlu0 %v420, 12
        %v912 = vpop.permute.xlu0 %911
        %913 = vrot.lane.b32.xlu0 %v422, 12
        %v914 = vpop.permute.xlu0 %913
        %915 = vrot.lane.b32.xlu0 %v423, 12
        %v916 = vpop.permute.xlu0 %915
        %917 = vrot.lane.b32.xlu0 %v425, 12
        %v918 = vpop.permute.xlu0 %917
        %919 = vrot.lane.b32.xlu0 %v426, 12
        %v920 = vpop.permute.xlu0 %919
        %921 = vrot.lane.b32.xlu0 %v428, 12
        %v922 = vpop.permute.xlu0 %921
        %923 = vrot.lane.b32.xlu0 %v429, 12
        %v924 = vpop.permute.xlu0 %923
        %925 = vrot.lane.b32.xlu0 %v431, 12
        %v926 = vpop.permute.xlu0 %925
        %927 = vrot.lane.b32.xlu0 %v432, 12
        %v928 = vpop.permute.xlu0 %927
        %961 = vrot.lane.b32.xlu0 %v493, 16
        %v962 = vpop.permute.xlu0 %961
        %963 = vrot.lane.b32.xlu0 %v495, 16
        %v964 = vpop.permute.xlu0 %963
        %965 = vrot.lane.b32.xlu0 %v498, 16
        %v966 = vpop.permute.xlu0 %965
        %967 = vrot.lane.b32.xlu0 %v500, 16
        %v968 = vpop.permute.xlu0 %967
        %969 = vrot.lane.b32.xlu0 %v503, 16
        %v970 = vpop.permute.xlu0 %969
        %971 = vrot.lane.b32.xlu0 %v505, 16
        %v972 = vpop.permute.xlu0 %971
        %973 = vrot.lane.b32.xlu0 %v508, 16
        %v974 = vpop.permute.xlu0 %973
        %975 = vrot.lane.b32.xlu0 %v510, 16
        %v976 = vpop.permute.xlu0 %975
        %977 = vrot.lane.b32.xlu0 %v513, 16
        %v978 = vpop.permute.xlu0 %977
        %979 = vrot.lane.b32.xlu0 %v515, 16
        %v980 = vpop.permute.xlu0 %979
        %981 = vrot.lane.b32.xlu0 %v518, 16
        %v982 = vpop.permute.xlu0 %981
        %983 = vrot.lane.b32.xlu0 %v520, 16
        %v984 = vpop.permute.xlu0 %983
        %985 = vrot.lane.b32.xlu0 %v523, 16
        %v986 = vpop.permute.xlu0 %985
        %987 = vrot.lane.b32.xlu0 %v525, 16
        %v988 = vpop.permute.xlu0 %987
        %989 = vrot.lane.b32.xlu0 %v528, 16
        %v990 = vpop.permute.xlu0 %989
        %991 = vrot.lane.b32.xlu0 %v530, 16
        %v992 = vpop.permute.xlu0 %991
        %993 = vrot.lane.b32.xlu0 %v533, 16
        %v994 = vpop.permute.xlu0 %993
        %995 = vrot.lane.b32.xlu0 %v535, 16
        %v996 = vpop.permute.xlu0 %995
        %997 = vrot.lane.b32.xlu0 %v538, 16
        %v998 = vpop.permute.xlu0 %997
        %999 = vrot.lane.b32.xlu0 %v540, 16
        %v1000 = vpop.permute.xlu0 %999
        %1001 = vrot.lane.b32.xlu0 %v543, 16
        %v1002 = vpop.permute.xlu0 %1001
        %1003 = vrot.lane.b32.xlu0 %v545, 16
        %v1004 = vpop.permute.xlu0 %1003
        %1005 = vrot.lane.b32.xlu0 %v548, 16
        %v1006 = vpop.permute.xlu0 %1005
        %1007 = vrot.lane.b32.xlu0 %v550, 16
        %v1008 = vpop.permute.xlu0 %1007
        %1009 = vrot.lane.b32.xlu0 %v553, 16
        %v1010 = vpop.permute.xlu0 %1009
        %1011 = vrot.lane.b32.xlu0 %v555, 16
        %v1012 = vpop.permute.xlu0 %1011
        %1013 = vrot.lane.b32.xlu0 %v558, 16
        %v1014 = vpop.permute.xlu0 %1013
        %1015 = vrot.lane.b32.xlu0 %v560, 16
        %v1016 = vpop.permute.xlu0 %1015
        %1017 = vrot.lane.b32.xlu0 %v563, 16
        %v1018 = vpop.permute.xlu0 %1017
        %1019 = vrot.lane.b32.xlu0 %v565, 16
        %v1020 = vpop.permute.xlu0 %1019
        %1021 = vrot.lane.b32.xlu0 %v652, 16
        %v1022 = vpop.permute.xlu0 %1021
        %1023 = vrot.lane.b32.xlu0 %v654, 16
        %v1024 = vpop.permute.xlu0 %1023
        %1057 = vrot.lane.b32.xlu0 %v574, 20
        %v1058 = vpop.permute.xlu0 %1057
        %1059 = vrot.lane.b32.xlu0 %v576, 20
        %v1060 = vpop.permute.xlu0 %1059
        %1061 = vrot.lane.b32.xlu0 %v579, 20
        %v1062 = vpop.permute.xlu0 %1061
        %1063 = vrot.lane.b32.xlu0 %v581, 20
        %v1064 = vpop.permute.xlu0 %1063
        %1065 = vrot.lane.b32.xlu0 %v584, 20
        %v1066 = vpop.permute.xlu0 %1065
        %1067 = vrot.lane.b32.xlu0 %v586, 20
        %v1068 = vpop.permute.xlu0 %1067
        %1069 = vrot.lane.b32.xlu0 %v589, 20
        %v1070 = vpop.permute.xlu0 %1069
        %1071 = vrot.lane.b32.xlu0 %v591, 20
        %v1072 = vpop.permute.xlu0 %1071
        %1073 = vrot.lane.b32.xlu0 %v594, 20
        %v1074 = vpop.permute.xlu0 %1073
        %1075 = vrot.lane.b32.xlu0 %v596, 20
        %v1076 = vpop.permute.xlu0 %1075
        %1077 = vrot.lane.b32.xlu0 %v599, 20
        %v1078 = vpop.permute.xlu0 %1077
        %1079 = vrot.lane.b32.xlu0 %v601, 20
        %v1080 = vpop.permute.xlu0 %1079
        %1081 = vrot.lane.b32.xlu0 %v604, 20
        %v1082 = vpop.permute.xlu0 %1081
        %1083 = vrot.lane.b32.xlu0 %v606, 20
        %v1084 = vpop.permute.xlu0 %1083
        %1085 = vrot.lane.b32.xlu0 %v609, 20
        %v1086 = vpop.permute.xlu0 %1085
        %1087 = vrot.lane.b32.xlu0 %v611, 20
        %v1088 = vpop.permute.xlu0 %1087
        %1089 = vrot.lane.b32.xlu0 %v614, 20
        %v1090 = vpop.permute.xlu0 %1089
        %1091 = vrot.lane.b32.xlu0 %v616, 20
        %v1092 = vpop.permute.xlu0 %1091
        %1093 = vrot.lane.b32.xlu0 %v619, 20
        %v1094 = vpop.permute.xlu0 %1093
        %1095 = vrot.lane.b32.xlu0 %v621, 20
        %v1096 = vpop.permute.xlu0 %1095
        %1097 = vrot.lane.b32.xlu0 %v624, 20
        %v1098 = vpop.permute.xlu0 %1097
        %1099 = vrot.lane.b32.xlu0 %v626, 20
        %v1100 = vpop.permute.xlu0 %1099
        %1101 = vrot.lane.b32.xlu0 %v629, 20
        %v1102 = vpop.permute.xlu0 %1101
        %1103 = vrot.lane.b32.xlu0 %v631, 20
        %v1104 = vpop.permute.xlu0 %1103
        %1105 = vrot.lane.b32.xlu0 %v634, 20
        %v1106 = vpop.permute.xlu0 %1105
        %1107 = vrot.lane.b32.xlu0 %v636, 20
        %v1108 = vpop.permute.xlu0 %1107
        %1109 = vrot.lane.b32.xlu0 %v639, 20
        %v1110 = vpop.permute.xlu0 %1109
        %1111 = vrot.lane.b32.xlu0 %v641, 20
        %v1112 = vpop.permute.xlu0 %1111
        %1113 = vrot.lane.b32.xlu0 %v644, 20
        %v1114 = vpop.permute.xlu0 %1113
        %1115 = vrot.lane.b32.xlu0 %v646, 20
        %v1116 = vpop.permute.xlu0 %1115
        %1117 = vrot.lane.b32.xlu0 %v657, 20
        %v1118 = vpop.permute.xlu0 %1117
        %1119 = vrot.lane.b32.xlu0 %v659, 20
        %v1120 = vpop.permute.xlu0 %1119
        %1153 = vrot.lane.b32.xlu0 %v389, 24
        %v1154 = vpop.permute.xlu0 %1153
        %1155 = vrot.lane.b32.xlu0 %v390, 24
        %v1156 = vpop.permute.xlu0 %1155
        %1157 = vrot.lane.b32.xlu0 %v392, 24
        %v1158 = vpop.permute.xlu0 %1157
        %1159 = vrot.lane.b32.xlu0 %v393, 24
        %v1160 = vpop.permute.xlu0 %1159
        %1161 = vrot.lane.b32.xlu0 %v395, 24
        %v1162 = vpop.permute.xlu0 %1161
        %1163 = vrot.lane.b32.xlu0 %v396, 24
        %v1164 = vpop.permute.xlu0 %1163
        %1165 = vrot.lane.b32.xlu0 %v398, 24
        %v1166 = vpop.permute.xlu0 %1165
        %1167 = vrot.lane.b32.xlu0 %v399, 24
        %v1168 = vpop.permute.xlu0 %1167
        %1169 = vrot.lane.b32.xlu0 %v401, 24
        %v1170 = vpop.permute.xlu0 %1169
        %1171 = vrot.lane.b32.xlu0 %v402, 24
        %v1172 = vpop.permute.xlu0 %1171
        %1173 = vrot.lane.b32.xlu0 %v404, 24
        %v1174 = vpop.permute.xlu0 %1173
        %1175 = vrot.lane.b32.xlu0 %v405, 24
        %v1176 = vpop.permute.xlu0 %1175
        %1177 = vrot.lane.b32.xlu0 %v407, 24
        %v1178 = vpop.permute.xlu0 %1177
        %1179 = vrot.lane.b32.xlu0 %v408, 24
        %v1180 = vpop.permute.xlu0 %1179
        %1181 = vrot.lane.b32.xlu0 %v410, 24
        %v1182 = vpop.permute.xlu0 %1181
        %1183 = vrot.lane.b32.xlu0 %v411, 24
        %v1184 = vpop.permute.xlu0 %1183
        %1185 = vrot.lane.b32.xlu0 %v413, 24
        %v1186 = vpop.permute.xlu0 %1185
        %1187 = vrot.lane.b32.xlu0 %v414, 24
        %v1188 = vpop.permute.xlu0 %1187
        %1189 = vrot.lane.b32.xlu0 %v416, 24
        %v1190 = vpop.permute.xlu0 %1189
        %1191 = vrot.lane.b32.xlu0 %v417, 24
        %v1192 = vpop.permute.xlu0 %1191
        %1193 = vrot.lane.b32.xlu0 %v419, 24
        %v1194 = vpop.permute.xlu0 %1193
        %1195 = vrot.lane.b32.xlu0 %v420, 24
        %v1196 = vpop.permute.xlu0 %1195
        %1197 = vrot.lane.b32.xlu0 %v422, 24
        %v1198 = vpop.permute.xlu0 %1197
        %1199 = vrot.lane.b32.xlu0 %v423, 24
        %v1200 = vpop.permute.xlu0 %1199
        %1201 = vrot.lane.b32.xlu0 %v425, 24
        %v1202 = vpop.permute.xlu0 %1201
        %1203 = vrot.lane.b32.xlu0 %v426, 24
        %v1204 = vpop.permute.xlu0 %1203
        %1205 = vrot.lane.b32.xlu0 %v428, 24
        %v1206 = vpop.permute.xlu0 %1205
        %1207 = vrot.lane.b32.xlu0 %v429, 24
        %v1208 = vpop.permute.xlu0 %1207
        %1209 = vrot.lane.b32.xlu0 %v431, 24
        %v1210 = vpop.permute.xlu0 %1209
        %1211 = vrot.lane.b32.xlu0 %v432, 24
        %v1212 = vpop.permute.xlu0 %1211
        %1213 = vrot.lane.b32.xlu0 %v434, 24
        %v1214 = vpop.permute.xlu0 %1213
        %1215 = vrot.lane.b32.xlu0 %v435, 24
        %v1216 = vpop.permute.xlu0 %1215
        %1249 = vrot.lane.b32.xlu0 %v498, 28
        %v1250 = vpop.permute.xlu0 %1249
        %1251 = vrot.lane.b32.xlu0 %v500, 28
        %v1252 = vpop.permute.xlu0 %1251
        %1253 = vrot.lane.b32.xlu0 %v503, 28
        %v1254 = vpop.permute.xlu0 %1253
        %1255 = vrot.lane.b32.xlu0 %v505, 28
        %v1256 = vpop.permute.xlu0 %1255
        %1257 = vrot.lane.b32.xlu0 %v508, 28
        %v1258 = vpop.permute.xlu0 %1257
        %1259 = vrot.lane.b32.xlu0 %v510, 28
        %v1260 = vpop.permute.xlu0 %1259
        %1261 = vrot.lane.b32.xlu0 %v513, 28
        %v1262 = vpop.permute.xlu0 %1261
        %1263 = vrot.lane.b32.xlu0 %v515, 28
        %v1264 = vpop.permute.xlu0 %1263
        %1265 = vrot.lane.b32.xlu0 %v518, 28
        %v1266 = vpop.permute.xlu0 %1265
        %1267 = vrot.lane.b32.xlu0 %v520, 28
        %v1268 = vpop.permute.xlu0 %1267
        %1269 = vrot.lane.b32.xlu0 %v523, 28
        %v1270 = vpop.permute.xlu0 %1269
        %1271 = vrot.lane.b32.xlu0 %v525, 28
        %v1272 = vpop.permute.xlu0 %1271
        %1273 = vrot.lane.b32.xlu0 %v528, 28
        %v1274 = vpop.permute.xlu0 %1273
        %1275 = vrot.lane.b32.xlu0 %v530, 28
        %v1276 = vpop.permute.xlu0 %1275
        %1277 = vrot.lane.b32.xlu0 %v533, 28
        %v1278 = vpop.permute.xlu0 %1277
        %1279 = vrot.lane.b32.xlu0 %v535, 28
        %v1280 = vpop.permute.xlu0 %1279
        %1281 = vrot.lane.b32.xlu0 %v538, 28
        %v1282 = vpop.permute.xlu0 %1281
        %1283 = vrot.lane.b32.xlu0 %v540, 28
        %v1284 = vpop.permute.xlu0 %1283
        %1285 = vrot.lane.b32.xlu0 %v543, 28
        %v1286 = vpop.permute.xlu0 %1285
        %1287 = vrot.lane.b32.xlu0 %v545, 28
        %v1288 = vpop.permute.xlu0 %1287
        %1289 = vrot.lane.b32.xlu0 %v548, 28
        %v1290 = vpop.permute.xlu0 %1289
        %1291 = vrot.lane.b32.xlu0 %v550, 28
        %v1292 = vpop.permute.xlu0 %1291
        %1293 = vrot.lane.b32.xlu0 %v553, 28
        %v1294 = vpop.permute.xlu0 %1293
        %1295 = vrot.lane.b32.xlu0 %v555, 28
        %v1296 = vpop.permute.xlu0 %1295
        %1297 = vrot.lane.b32.xlu0 %v558, 28
        %v1298 = vpop.permute.xlu0 %1297
        %1299 = vrot.lane.b32.xlu0 %v560, 28
        %v1300 = vpop.permute.xlu0 %1299
        %1301 = vrot.lane.b32.xlu0 %v563, 28
        %v1302 = vpop.permute.xlu0 %1301
        %1303 = vrot.lane.b32.xlu0 %v565, 28
        %v1304 = vpop.permute.xlu0 %1303
        %1305 = vrot.lane.b32.xlu0 %v652, 28
        %v1306 = vpop.permute.xlu0 %1305
        %1307 = vrot.lane.b32.xlu0 %v654, 28
        %v1308 = vpop.permute.xlu0 %1307
        %1309 = vrot.lane.b32.xlu0 %v665, 28
        %v1310 = vpop.permute.xlu0 %1309
        %1311 = vrot.lane.b32.xlu0 %v667, 28
        %v1312 = vpop.permute.xlu0 %1311
        %1345 = vrot.lane.b32.xlu0 %v579, 32
        %v1346 = vpop.permute.xlu0 %1345
        %1347 = vrot.lane.b32.xlu0 %v581, 32
        %v1348 = vpop.permute.xlu0 %1347
        %1349 = vrot.lane.b32.xlu0 %v584, 32
        %v1350 = vpop.permute.xlu0 %1349
        %1351 = vrot.lane.b32.xlu0 %v586, 32
        %v1352 = vpop.permute.xlu0 %1351
        %1353 = vrot.lane.b32.xlu0 %v589, 32
        %v1354 = vpop.permute.xlu0 %1353
        %1355 = vrot.lane.b32.xlu0 %v591, 32
        %v1356 = vpop.permute.xlu0 %1355
        %1357 = vrot.lane.b32.xlu0 %v594, 32
        %v1358 = vpop.permute.xlu0 %1357
        %1359 = vrot.lane.b32.xlu0 %v596, 32
        %v1360 = vpop.permute.xlu0 %1359
        %1361 = vrot.lane.b32.xlu0 %v599, 32
        %v1362 = vpop.permute.xlu0 %1361
        %1363 = vrot.lane.b32.xlu0 %v601, 32
        %v1364 = vpop.permute.xlu0 %1363
        %1365 = vrot.lane.b32.xlu0 %v604, 32
        %v1366 = vpop.permute.xlu0 %1365
        %1367 = vrot.lane.b32.xlu0 %v606, 32
        %v1368 = vpop.permute.xlu0 %1367
        %1369 = vrot.lane.b32.xlu0 %v609, 32
        %v1370 = vpop.permute.xlu0 %1369
        %1371 = vrot.lane.b32.xlu0 %v611, 32
        %v1372 = vpop.permute.xlu0 %1371
        %1373 = vrot.lane.b32.xlu0 %v614, 32
        %v1374 = vpop.permute.xlu0 %1373
        %1375 = vrot.lane.b32.xlu0 %v616, 32
        %v1376 = vpop.permute.xlu0 %1375
        %1377 = vrot.lane.b32.xlu0 %v619, 32
        %v1378 = vpop.permute.xlu0 %1377
        %1379 = vrot.lane.b32.xlu0 %v621, 32
        %v1380 = vpop.permute.xlu0 %1379
        %1381 = vrot.lane.b32.xlu0 %v624, 32
        %v1382 = vpop.permute.xlu0 %1381
        %1383 = vrot.lane.b32.xlu0 %v626, 32
        %v1384 = vpop.permute.xlu0 %1383
        %1385 = vrot.lane.b32.xlu0 %v629, 32
        %v1386 = vpop.permute.xlu0 %1385
        %1387 = vrot.lane.b32.xlu0 %v631, 32
        %v1388 = vpop.permute.xlu0 %1387
        %1389 = vrot.lane.b32.xlu0 %v634, 32
        %v1390 = vpop.permute.xlu0 %1389
        %1391 = vrot.lane.b32.xlu0 %v636, 32
        %v1392 = vpop.permute.xlu0 %1391
        %1393 = vrot.lane.b32.xlu0 %v639, 32
        %v1394 = vpop.permute.xlu0 %1393
        %1395 = vrot.lane.b32.xlu0 %v641, 32
        %v1396 = vpop.permute.xlu0 %1395
        %1397 = vrot.lane.b32.xlu0 %v644, 32
        %v1398 = vpop.permute.xlu0 %1397
        %1399 = vrot.lane.b32.xlu0 %v646, 32
        %v1400 = vpop.permute.xlu0 %1399
        %1401 = vrot.lane.b32.xlu0 %v657, 32
        %v1402 = vpop.permute.xlu0 %1401
        %1403 = vrot.lane.b32.xlu0 %v659, 32
        %v1404 = vpop.permute.xlu0 %1403
        %1405 = vrot.lane.b32.xlu0 %v670, 32
        %v1406 = vpop.permute.xlu0 %1405
        %1407 = vrot.lane.b32.xlu0 %v672, 32
        %v1408 = vpop.permute.xlu0 %1407
        %v1441 = vsel %vm262, %v383, %v674
        %v1442 = vsel %vm262, %v384, %v676
        %v1443 = vsel %vm262, %v386, %v678
        %v1444 = vsel %vm262, %v387, %v680
        %v1445 = vsel %vm262, %v389, %v682
        %v1446 = vsel %vm262, %v390, %v684
        %v1447 = vsel %vm262, %v392, %v686
        %v1448 = vsel %vm262, %v393, %v688
        %v1449 = vsel %vm262, %v395, %v690
        %v1450 = vsel %vm262, %v396, %v692
        %v1451 = vsel %vm262, %v398, %v694
        %v1452 = vsel %vm262, %v399, %v696
        %v1453 = vsel %vm262, %v401, %v698
        %v1454 = vsel %vm262, %v402, %v700
        %v1455 = vsel %vm262, %v404, %v702
        %v1456 = vsel %vm262, %v405, %v704
        %v1457 = vsel %vm262, %v407, %v706
        %v1458 = vsel %vm262, %v408, %v708
        %v1459 = vsel %vm262, %v410, %v710
        %v1460 = vsel %vm262, %v411, %v712
        %v1461 = vsel %vm262, %v413, %v714
        %v1462 = vsel %vm262, %v414, %v716
        %v1463 = vsel %vm262, %v416, %v718
        %v1464 = vsel %vm262, %v417, %v720
        %v1465 = vsel %vm262, %v419, %v722
        %v1466 = vsel %vm262, %v420, %v724
        %v1467 = vsel %vm262, %v422, %v726
        %v1468 = vsel %vm262, %v423, %v728
        %v1469 = vsel %vm262, %v425, %v730
        %v1470 = vsel %vm262, %v426, %v732
        %v1471 = vsel %vm262, %v428, %v734
        %v1472 = vsel %vm262, %v429, %v736
        %vm1473 = vcmask 64512
        %v1474 = vsel %vm1473, %v1441, %v770
        %v1475 = vsel %vm1473, %v1442, %v772
        %v1476 = vsel %vm1473, %v1443, %v774
        %v1477 = vsel %vm1473, %v1444, %v776
        %v1478 = vsel %vm1473, %v1445, %v778
        %v1479 = vsel %vm1473, %v1446, %v780
        %v1480 = vsel %vm1473, %v1447, %v782
        %v1481 = vsel %vm1473, %v1448, %v784
        %v1482 = vsel %vm1473, %v1449, %v786
        %v1483 = vsel %vm1473, %v1450, %v788
        %v1484 = vsel %vm1473, %v1451, %v790
        %v1485 = vsel %vm1473, %v1452, %v792
        %v1486 = vsel %vm1473, %v1453, %v794
        %v1487 = vsel %vm1473, %v1454, %v796
        %v1488 = vsel %vm1473, %v1455, %v798
        %v1489 = vsel %vm1473, %v1456, %v800
        %v1490 = vsel %vm1473, %v1457, %v802
        %v1491 = vsel %vm1473, %v1458, %v804
        %v1492 = vsel %vm1473, %v1459, %v806
        %v1493 = vsel %vm1473, %v1460, %v808
        %v1494 = vsel %vm1473, %v1461, %v810
        %v1495 = vsel %vm1473, %v1462, %v812
        %v1496 = vsel %vm1473, %v1463, %v814
        %v1497 = vsel %vm1473, %v1464, %v816
        %v1498 = vsel %vm1473, %v1465, %v818
        %v1499 = vsel %vm1473, %v1466, %v820
        %v1500 = vsel %vm1473, %v1467, %v822
        %v1501 = vsel %vm1473, %v1468, %v824
        %v1502 = vsel %vm1473, %v1469, %v826
        %v1503 = vsel %vm1473, %v1470, %v828
        %v1504 = vsel %vm1473, %v1471, %v830
        %v1505 = vsel %vm1473, %v1472, %v832
        %vm1506 = vcmask 97280
        %v1507 = vsel %vm1506, %v1474, %v866
        %v1508 = vsel %vm1506, %v1475, %v868
        %v1509 = vsel %vm1506, %v1476, %v870
        %v1510 = vsel %vm1506, %v1477, %v872
        %v1511 = vsel %vm1506, %v1478, %v874
        %v1512 = vsel %vm1506, %v1479, %v876
        %v1513 = vsel %vm1506, %v1480, %v878
        %v1514 = vsel %vm1506, %v1481, %v880
        %v1515 = vsel %vm1506, %v1482, %v882
        %v1516 = vsel %vm1506, %v1483, %v884
        %v1517 = vsel %vm1506, %v1484, %v886
        %v1518 = vsel %vm1506, %v1485, %v888
        %v1519 = vsel %vm1506, %v1486, %v890
        %v1520 = vsel %vm1506, %v1487, %v892
        %v1521 = vsel %vm1506, %v1488, %v894
        %v1522 = vsel %vm1506, %v1489, %v896
        %v1523 = vsel %vm1506, %v1490, %v898
        %v1524 = vsel %vm1506, %v1491, %v900
        %v1525 = vsel %vm1506, %v1492, %v902
        %v1526 = vsel %vm1506, %v1493, %v904
        %v1527 = vsel %vm1506, %v1494, %v906
        %v1528 = vsel %vm1506, %v1495, %v908
        %v1529 = vsel %vm1506, %v1496, %v910
        %v1530 = vsel %vm1506, %v1497, %v912
        %v1531 = vsel %vm1506, %v1498, %v914
        %v1532 = vsel %vm1506, %v1499, %v916
        %v1533 = vsel %vm1506, %v1500, %v918
        %v1534 = vsel %vm1506, %v1501, %v920
        %v1535 = vsel %vm1506, %v1502, %v922
        %v1536 = vsel %vm1506, %v1503, %v924
        %v1537 = vsel %vm1506, %v1504, %v926
        %v1538 = vsel %vm1506, %v1505, %v928
        %vm1539 = vcmask 130048
        %v1540 = vsel %vm1539, %v1507, %v962
        %v1541 = vsel %vm1539, %v1508, %v964
        %v1542 = vsel %vm1539, %v1509, %v966
        %v1543 = vsel %vm1539, %v1510, %v968
        %v1544 = vsel %vm1539, %v1511, %v970
        %v1545 = vsel %vm1539, %v1512, %v972
        %v1546 = vsel %vm1539, %v1513, %v974
        %v1547 = vsel %vm1539, %v1514, %v976
        %v1548 = vsel %vm1539, %v1515, %v978
        %v1549 = vsel %vm1539, %v1516, %v980
        %v1550 = vsel %vm1539, %v1517, %v982
        %v1551 = vsel %vm1539, %v1518, %v984
        %v1552 = vsel %vm1539, %v1519, %v986
        %v1553 = vsel %vm1539, %v1520, %v988
        %v1554 = vsel %vm1539, %v1521, %v990
        %v1555 = vsel %vm1539, %v1522, %v992
        %v1556 = vsel %vm1539, %v1523, %v994
        %v1557 = vsel %vm1539, %v1524, %v996
        %v1558 = vsel %vm1539, %v1525, %v998
        %v1559 = vsel %vm1539, %v1526, %v1000
        %v1560 = vsel %vm1539, %v1527, %v1002
        %v1561 = vsel %vm1539, %v1528, %v1004
        %v1562 = vsel %vm1539, %v1529, %v1006
        %v1563 = vsel %vm1539, %v1530, %v1008
        %v1564 = vsel %vm1539, %v1531, %v1010
        %v1565 = vsel %vm1539, %v1532, %v1012
        %v1566 = vsel %vm1539, %v1533, %v1014
        %v1567 = vsel %vm1539, %v1534, %v1016
        %v1568 = vsel %vm1539, %v1535, %v1018
        %v1569 = vsel %vm1539, %v1536, %v1020
        %v1570 = vsel %vm1539, %v1537, %v1022
        %v1571 = vsel %vm1539, %v1538, %v1024
        %vm1572 = vcmask 162816
        %v1573 = vsel %vm1572, %v1540, %v1058
        %v1574 = vsel %vm1572, %v1541, %v1060
        %v1575 = vsel %vm1572, %v1542, %v1062
        %v1576 = vsel %vm1572, %v1543, %v1064
        %v1577 = vsel %vm1572, %v1544, %v1066
        %v1578 = vsel %vm1572, %v1545, %v1068
        %v1579 = vsel %vm1572, %v1546, %v1070
        %v1580 = vsel %vm1572, %v1547, %v1072
        %v1581 = vsel %vm1572, %v1548, %v1074
        %v1582 = vsel %vm1572, %v1549, %v1076
        %v1583 = vsel %vm1572, %v1550, %v1078
        %v1584 = vsel %vm1572, %v1551, %v1080
        %v1585 = vsel %vm1572, %v1552, %v1082
        %v1586 = vsel %vm1572, %v1553, %v1084
        %v1587 = vsel %vm1572, %v1554, %v1086
        %v1588 = vsel %vm1572, %v1555, %v1088
        %v1589 = vsel %vm1572, %v1556, %v1090
        %v1590 = vsel %vm1572, %v1557, %v1092
        %v1591 = vsel %vm1572, %v1558, %v1094
        %v1592 = vsel %vm1572, %v1559, %v1096
        %v1593 = vsel %vm1572, %v1560, %v1098
        %v1594 = vsel %vm1572, %v1561, %v1100
        %v1595 = vsel %vm1572, %v1562, %v1102
        %v1596 = vsel %vm1572, %v1563, %v1104
        %v1597 = vsel %vm1572, %v1564, %v1106
        %v1598 = vsel %vm1572, %v1565, %v1108
        %v1599 = vsel %vm1572, %v1566, %v1110
        %v1600 = vsel %vm1572, %v1567, %v1112
        %v1601 = vsel %vm1572, %v1568, %v1114
        %v1602 = vsel %vm1572, %v1569, %v1116
        %v1603 = vsel %vm1572, %v1570, %v1118
        %v1604 = vsel %vm1572, %v1571, %v1120
        %vm1605 = vcmask 195584
        %v1606 = vsel %vm1605, %v1573, %v1154
        %v1607 = vsel %vm1605, %v1574, %v1156
        %v1608 = vsel %vm1605, %v1575, %v1158
        %v1609 = vsel %vm1605, %v1576, %v1160
        %v1610 = vsel %vm1605, %v1577, %v1162
        %v1611 = vsel %vm1605, %v1578, %v1164
        %v1612 = vsel %vm1605, %v1579, %v1166
        %v1613 = vsel %vm1605, %v1580, %v1168
        %v1614 = vsel %vm1605, %v1581, %v1170
        %v1615 = vsel %vm1605, %v1582, %v1172
        %v1616 = vsel %vm1605, %v1583, %v1174
        %v1617 = vsel %vm1605, %v1584, %v1176
        %v1618 = vsel %vm1605, %v1585, %v1178
        %v1619 = vsel %vm1605, %v1586, %v1180
        %v1620 = vsel %vm1605, %v1587, %v1182
        %v1621 = vsel %vm1605, %v1588, %v1184
        %v1622 = vsel %vm1605, %v1589, %v1186
        %v1623 = vsel %vm1605, %v1590, %v1188
        %v1624 = vsel %vm1605, %v1591, %v1190
        %v1625 = vsel %vm1605, %v1592, %v1192
        %v1626 = vsel %vm1605, %v1593, %v1194
        %v1627 = vsel %vm1605, %v1594, %v1196
        %v1628 = vsel %vm1605, %v1595, %v1198
        %v1629 = vsel %vm1605, %v1596, %v1200
        %v1630 = vsel %vm1605, %v1597, %v1202
        %v1631 = vsel %vm1605, %v1598, %v1204
        %v1632 = vsel %vm1605, %v1599, %v1206
        %v1633 = vsel %vm1605, %v1600, %v1208
        %v1634 = vsel %vm1605, %v1601, %v1210
        %v1635 = vsel %vm1605, %v1602, %v1212
        %v1636 = vsel %vm1605, %v1603, %v1214
        %v1637 = vsel %vm1605, %v1604, %v1216
        %vm1638 = vcmask 228352
        %v1639 = vsel %vm1638, %v1606, %v1250
        %v1640 = vsel %vm1638, %v1607, %v1252
        %v1641 = vsel %vm1638, %v1608, %v1254
        %v1642 = vsel %vm1638, %v1609, %v1256
        %v1643 = vsel %vm1638, %v1610, %v1258
        %v1644 = vsel %vm1638, %v1611, %v1260
        %v1645 = vsel %vm1638, %v1612, %v1262
        %v1646 = vsel %vm1638, %v1613, %v1264
        %v1647 = vsel %vm1638, %v1614, %v1266
        %v1648 = vsel %vm1638, %v1615, %v1268
        %v1649 = vsel %vm1638, %v1616, %v1270
        %v1650 = vsel %vm1638, %v1617, %v1272
        %v1651 = vsel %vm1638, %v1618, %v1274
        %v1652 = vsel %vm1638, %v1619, %v1276
        %v1653 = vsel %vm1638, %v1620, %v1278
        %v1654 = vsel %vm1638, %v1621, %v1280
        %v1655 = vsel %vm1638, %v1622, %v1282
        %v1656 = vsel %vm1638, %v1623, %v1284
        %v1657 = vsel %vm1638, %v1624, %v1286
        %v1658 = vsel %vm1638, %v1625, %v1288
        %v1659 = vsel %vm1638, %v1626, %v1290
        %v1660 = vsel %vm1638, %v1627, %v1292
        %v1661 = vsel %vm1638, %v1628, %v1294
        %v1662 = vsel %vm1638, %v1629, %v1296
        %v1663 = vsel %vm1638, %v1630, %v1298
        %v1664 = vsel %vm1638, %v1631, %v1300
        %v1665 = vsel %vm1638, %v1632, %v1302
        %v1666 = vsel %vm1638, %v1633, %v1304
        %v1667 = vsel %vm1638, %v1634, %v1306
        %v1668 = vsel %vm1638, %v1635, %v1308
        %v1669 = vsel %vm1638, %v1636, %v1310
        %v1670 = vsel %vm1638, %v1637, %v1312
        %vm1671 = vcmask 261120
        %v1672 = vsel %vm1671, %v1639, %v1346
        %v1673 = vsel %vm1671, %v1640, %v1348
        %v1674 = vsel %vm1671, %v1641, %v1350
        %v1675 = vsel %vm1671, %v1642, %v1352
        %v1676 = vsel %vm1671, %v1643, %v1354
        %v1677 = vsel %vm1671, %v1644, %v1356
        %v1678 = vsel %vm1671, %v1645, %v1358
        %v1679 = vsel %vm1671, %v1646, %v1360
        %v1680 = vsel %vm1671, %v1647, %v1362
        %v1681 = vsel %vm1671, %v1648, %v1364
        %v1682 = vsel %vm1671, %v1649, %v1366
        %v1683 = vsel %vm1671, %v1650, %v1368
        %v1684 = vsel %vm1671, %v1651, %v1370
        %v1685 = vsel %vm1671, %v1652, %v1372
        %v1686 = vsel %vm1671, %v1653, %v1374
        %v1687 = vsel %vm1671, %v1654, %v1376
        %v1688 = vsel %vm1671, %v1655, %v1378
        %v1689 = vsel %vm1671, %v1656, %v1380
        %v1690 = vsel %vm1671, %v1657, %v1382
        %v1691 = vsel %vm1671, %v1658, %v1384
        %v1692 = vsel %vm1671, %v1659, %v1386
        %v1693 = vsel %vm1671, %v1660, %v1388
        %v1694 = vsel %vm1671, %v1661, %v1390
        %v1695 = vsel %vm1671, %v1662, %v1392
        %v1696 = vsel %vm1671, %v1663, %v1394
        %v1697 = vsel %vm1671, %v1664, %v1396
        %v1698 = vsel %vm1671, %v1665, %v1398
        %v1699 = vsel %vm1671, %v1666, %v1400
        %v1700 = vsel %vm1671, %v1667, %v1402
        %v1701 = vsel %vm1671, %v1668, %v1404
        %v1702 = vsel %vm1671, %v1669, %v1406
        %v1703 = vsel %vm1671, %v1670, %v1408
        %v1704 = vpack.c.bf16 %v1673, %v1672
        %v1705 = vpack.c.bf16 %v1675, %v1674
        %v1706 = vpack.c.bf16 %v1677, %v1676
        %v1707 = vpack.c.bf16 %v1679, %v1678
        %v1708 = vpack.c.bf16 %v1681, %v1680
        %v1709 = vpack.c.bf16 %v1683, %v1682
        %v1710 = vpack.c.bf16 %v1685, %v1684
        %v1711 = vpack.c.bf16 %v1687, %v1686
        %v1712 = vpack.c.bf16 %v1689, %v1688
        %v1713 = vpack.c.bf16 %v1691, %v1690
        %v1714 = vpack.c.bf16 %v1693, %v1692
        %v1715 = vpack.c.bf16 %v1695, %v1694
        %v1716 = vpack.c.bf16 %v1697, %v1696
        %v1717 = vpack.c.bf16 %v1699, %v1698
        %v1718 = vpack.c.bf16 %v1701, %v1700
        %v1719 = vpack.c.bf16 %v1703, %v1702
        %v1720 = vld [vmem:[%s1] sm:$0xf]
        %v1721 = vld [vmem:[%s1 + $0x4] sm:$0xf]
        %v1722 = vld [vmem:[%s1 + $0x8] sm:$0xf]
        %v1723 = vld [vmem:[%s1 + $0xc] sm:$0xf]
        %v1724 = vld [vmem:[%s1 + $0x10] sm:$0x3]
        %v1725 = vld [vmem:[#allocation4] sm:$0x1]
        %v1727 = vlaneseq
        %v1728 = vshrl.u32 %v1727, 7
        %v1729 = vsub.s32 0, %v1728
        %v1730 = vrot.slane %v1725, %v1729
        %v1737 = vunpack.c.l.b16 %v1720
        %v1738 = vunpack.c.l.b16 %v1721
        %v1739 = vunpack.c.l.b16 %v1722
        %v1740 = vunpack.c.l.b16 %v1723
        %v1741 = vunpack.c.l.b16 %v1724
        %v1742 = vpack.c.b16 %v1738, %v1737
        %v1743 = vpack.c.b16 %v1740, %v1739
        %v1744 = vpack.c.b16 %v1741, %v1741
        %vm1747 = vcmask 293888
        %v1749 = vsel %vm1747, %v1704, 0
        %v1752 = vsel %vm1747, %v1705, 0
        %v1755 = vsel %vm1747, %v1706, 0
        %v1758 = vsel %vm1747, %v1707, 0
        %v1761 = vsel %vm1747, %v1708, 0
        %v1764 = vsel %vm1747, %v1709, 0
        %v1767 = vsel %vm1747, %v1710, 0
        %v1770 = vsel %vm1747, %v1711, 0
        %v1773 = vsel %vm1747, %v1712, 0
        %v1776 = vsel %vm1747, %v1713, 0
        %v1779 = vsel %vm1747, %v1714, 0
        %v1782 = vsel %vm1747, %v1715, 0
        %v1785 = vsel %vm1747, %v1716, 0
        %v1788 = vsel %vm1747, %v1717, 0
        %v1791 = vsel %vm1747, %v1718, 0
        %v1794 = vsel %vm1747, %v1719, 0
        %vm1796 = vcmask 1041408
        %v1798 = vsel %vm1796, %v1744, 0
        %1800 = vmatprep.subr.bf16.mxu0 0
        %1801 = vmatpush1.bf16.msra.mxu0 %v1742
        %1802 = vmatprep.subr.bf16.mxu0 0
        %1803 = vmatpush1.bf16.msra.mxu0 %v1743
        %1804 = vmatprep.subr.bf16.mxu0 0
        %1805 = vmatpush1.bf16.msra.mxu0 %v1798
        %1806 = vmatprep.subr.bf16.mxu0 0
        %1807 = vmatpush1.bf16.msra.mxu0 0
        %1808 = vmatprep.subr.bf16.mxu0 0
        %1809 = vmatpush1.bf16.msra.mxu0 0
        %1810 = vmatprep.subr.bf16.mxu0 0
        %1811 = vmatpush1.bf16.msra.mxu0 0
        %1812 = vmatprep.subr.bf16.mxu0 0
        %1813 = vmatpush1.bf16.msra.mxu0 0
        %1814 = vmatprep.subr.bf16.mxu0 0
        %1815 = vmatpush1.bf16.msra.mxu0 0
        %1816 = vmatprep.subr.bf16.mxu0 0
        %1817 = vmatpush1.bf16.msra.mxu0 0
        %1818 = vmatprep.subr.bf16.mxu0 0
        %1819 = vmatpush1.bf16.msra.mxu0 0
        %1820 = vmatprep.subr.bf16.mxu0 0
        %1821 = vmatpush1.bf16.msra.mxu0 0
        %1822 = vmatprep.subr.bf16.mxu0 0
        %1823 = vmatpush1.bf16.msra.mxu0 0
        %1824 = vmatprep.subr.bf16.mxu0 0
        %1825 = vmatpush1.bf16.msra.mxu0 0
        %1826 = vmatprep.subr.bf16.mxu0 0
        %1827 = vmatpush1.bf16.msra.mxu0 0
        %1828 = vmatprep.subr.bf16.mxu0 0
        %1829 = vmatpush1.bf16.msra.mxu0 0
        %1830 = vmatprep.subr.bf16.mxu0 0
        %1831 = vmatpush1.bf16.msra.mxu0 0
        %1832 = vmatprep.mubr.bf16.mxu0 0
        %1833 = vmatmul.mubr.bf16.gmra.mrb[0].mxu0 %v1749
        %v1834 = vpop.f32.mrb[0].mxu0
        %v1835 = vadd.f32 %v1730, %v1834
        %v1836 = vpop.f32.mrb[0].mxu0
        %v1837 = vpop.f32.mrb[0].mxu0
        %v1838 = vadd.f32 %v1730, %v1837
        %v1839 = vpop.f32.mrb[0].mxu0
        %1840 = vmatprep.mubr.bf16.mxu0 0
        %1841 = vmatmul.mubr.bf16.gmra.mrb[0].mxu0 %v1752
        %v1842 = vpop.f32.mrb[0].mxu0
        %v1843 = vadd.f32 %v1730, %v1842
        %v1844 = vpop.f32.mrb[0].mxu0
        %v1845 = vpop.f32.mrb[0].mxu0
        %v1846 = vadd.f32 %v1730, %v1845
        %v1847 = vpop.f32.mrb[0].mxu0
        %1848 = vmatprep.mubr.bf16.mxu0 0
        %1849 = vmatmul.mubr.bf16.gmra.mrb[0].mxu0 %v1755
        %v1850 = vpop.f32.mrb[0].mxu0
        %v1851 = vadd.f32 %v1730, %v1850
        %v1852 = vpop.f32.mrb[0].mxu0
        %v1853 = vpop.f32.mrb[0].mxu0
        %v1854 = vadd.f32 %v1730, %v1853
        %v1855 = vpop.f32.mrb[0].mxu0
        %1856 = vmatprep.mubr.bf16.mxu0 0
        %1857 = vmatmul.mubr.bf16.gmra.mrb[0].mxu0 %v1758
        %v1858 = vpop.f32.mrb[0].mxu0
        %v1859 = vadd.f32 %v1730, %v1858
        %v1860 = vpop.f32.mrb[0].mxu0
        %v1861 = vpop.f32.mrb[0].mxu0
        %v1862 = vadd.f32 %v1730, %v1861
        %v1863 = vpop.f32.mrb[0].mxu0
        %1864 = vmatprep.mubr.bf16.mxu0 0
        %1865 = vmatmul.mubr.bf16.gmra.mrb[0].mxu0 %v1761
        %v1866 = vpop.f32.mrb[0].mxu0
        %v1867 = vadd.f32 %v1730, %v1866
        %v1868 = vpop.f32.mrb[0].mxu0
        %v1869 = vpop.f32.mrb[0].mxu0
        %v1870 = vadd.f32 %v1730, %v1869
        %v1871 = vpop.f32.mrb[0].mxu0
        %1872 = vmatprep.mubr.bf16.mxu0 0
        %1873 = vmatmul.mubr.bf16.gmra.mrb[0].mxu0 %v1764
        %v1874 = vpop.f32.mrb[0].mxu0
        %v1875 = vadd.f32 %v1730, %v1874
        %v1876 = vpop.f32.mrb[0].mxu0
        %v1877 = vpop.f32.mrb[0].mxu0
        %v1878 = vadd.f32 %v1730, %v1877
        %v1879 = vpop.f32.mrb[0].mxu0
        %1880 = vmatprep.mubr.bf16.mxu0 0
        %1881 = vmatmul.mubr.bf16.gmra.mrb[0].mxu0 %v1767
        %v1882 = vpop.f32.mrb[0].mxu0
        %v1883 = vadd.f32 %v1730, %v1882
        %v1884 = vpop.f32.mrb[0].mxu0
        %v1885 = vpop.f32.mrb[0].mxu0
        %v1886 = vadd.f32 %v1730, %v1885
        %v1887 = vpop.f32.mrb[0].mxu0
        %1888 = vmatprep.mubr.bf16.mxu0 0
        %1889 = vmatmul.mubr.bf16.gmra.mrb[0].mxu0 %v1770
        %v1890 = vpop.f32.mrb[0].mxu0
        %v1891 = vadd.f32 %v1730, %v1890
        %v1892 = vpop.f32.mrb[0].mxu0
        %v1893 = vpop.f32.mrb[0].mxu0
        %v1894 = vadd.f32 %v1730, %v1893
        %v1895 = vpop.f32.mrb[0].mxu0
        %1896 = vmatprep.mubr.bf16.mxu0 0
        %1897 = vmatmul.mubr.bf16.gmra.mrb[0].mxu0 %v1773
        %v1898 = vpop.f32.mrb[0].mxu0
        %v1899 = vadd.f32 %v1730, %v1898
        %v1900 = vpop.f32.mrb[0].mxu0
        %v1901 = vpop.f32.mrb[0].mxu0
        %v1902 = vadd.f32 %v1730, %v1901
        %v1903 = vpop.f32.mrb[0].mxu0
        %1904 = vmatprep.mubr.bf16.mxu0 0
        %1905 = vmatmul.mubr.bf16.gmra.mrb[0].mxu0 %v1776
        %v1906 = vpop.f32.mrb[0].mxu0
        %v1907 = vadd.f32 %v1730, %v1906
        %v1908 = vpop.f32.mrb[0].mxu0
        %v1909 = vpop.f32.mrb[0].mxu0
        %v1910 = vadd.f32 %v1730, %v1909
        %v1911 = vpop.f32.mrb[0].mxu0
        %1912 = vmatprep.mubr.bf16.mxu0 0
        %1913 = vmatmul.mubr.bf16.gmra.mrb[0].mxu0 %v1779
        %v1914 = vpop.f32.mrb[0].mxu0
        %v1915 = vadd.f32 %v1730, %v1914
        %v1916 = vpop.f32.mrb[0].mxu0
        %v1917 = vpop.f32.mrb[0].mxu0
        %v1918 = vadd.f32 %v1730, %v1917
        %v1919 = vpop.f32.mrb[0].mxu0
        %1920 = vmatprep.mubr.bf16.mxu0 0
        %1921 = vmatmul.mubr.bf16.gmra.mrb[0].mxu0 %v1782
        %v1922 = vpop.f32.mrb[0].mxu0
        %v1923 = vadd.f32 %v1730, %v1922
        %v1924 = vpop.f32.mrb[0].mxu0
        %v1925 = vpop.f32.mrb[0].mxu0
        %v1926 = vadd.f32 %v1730, %v1925
        %v1927 = vpop.f32.mrb[0].mxu0
        %1928 = vmatprep.mubr.bf16.mxu0 0
        %1929 = vmatmul.mubr.bf16.gmra.mrb[0].mxu0 %v1785
        %v1930 = vpop.f32.mrb[0].mxu0
        %v1931 = vadd.f32 %v1730, %v1930
        %v1932 = vpop.f32.mrb[0].mxu0
        %v1933 = vpop.f32.mrb[0].mxu0
        %v1934 = vadd.f32 %v1730, %v1933
        %v1935 = vpop.f32.mrb[0].mxu0
        %1936 = vmatprep.mubr.bf16.mxu0 0
        %1937 = vmatmul.mubr.bf16.gmra.mrb[0].mxu0 %v1788
        %v1938 = vpop.f32.mrb[0].mxu0
        %v1939 = vadd.f32 %v1730, %v1938
        %v1940 = vpop.f32.mrb[0].mxu0
        %v1941 = vpop.f32.mrb[0].mxu0
        %v1942 = vadd.f32 %v1730, %v1941
        %v1943 = vpop.f32.mrb[0].mxu0
        %1944 = vmatprep.mubr.bf16.mxu0 0
        %1945 = vmatmul.mubr.bf16.gmra.mrb[0].mxu0 %v1791
        %v1946 = vpop.f32.mrb[0].mxu0
        %v1947 = vadd.f32 %v1730, %v1946
        %v1948 = vpop.f32.mrb[0].mxu0
        %v1949 = vpop.f32.mrb[0].mxu0
        %v1950 = vadd.f32 %v1730, %v1949
        %v1951 = vpop.f32.mrb[0].mxu0
        %1952 = vmatprep.mubr.bf16.mxu0 0
        %1953 = vmatmul.mubr.bf16.gmra.mrb[0].mxu0 %v1794
        %v1954 = vpop.f32.mrb[0].mxu0
        %v1955 = vadd.f32 %v1730, %v1954
        %v1956 = vpop.f32.mrb[0].mxu0
        %v1957 = vpop.f32.mrb[0].mxu0
        %v1958 = vadd.f32 %v1730, %v1957
        %v1959 = vpop.f32.mrb[0].mxu0
        %1960 = vdwg.mxu0
        %1961 = vst.msk [vmem:[#allocation3] sm:$0xff] %vm1671, 0.0
        %1962 = vst.msk [vmem:[#allocation3 + $0x8] sm:$0xff] %vm1671, 0.0
        %vm1963 = vcmask 254976
        %1964 = vst.msk [vmem:[#allocation3 + $0x10] sm:$0x3] %vm1963, 0.0
        %1965 = vst.msk [vmem:[#allocation3 + $0x18] sm:$0xff] %vm1671, 0.0
        %1966 = vst.msk [vmem:[#allocation3 + $0x20] sm:$0xff] %vm1671, 0.0
        %1967 = vst.msk [vmem:[#allocation3 + $0x28] sm:$0x3] %vm1963, 0.0
        %1968 = vst.msk [vmem:[#allocation3 + $0x30] sm:$0xff] %vm1671, 0.0
        %1969 = vst.msk [vmem:[#allocation3 + $0x38] sm:$0xff] %vm1671, 0.0
        %1970 = vst.msk [vmem:[#allocation3 + $0x40] sm:$0x3] %vm1963, 0.0
        %1971 = vst.msk [vmem:[#allocation3 + $0x48] sm:$0xff] %vm1671, 0.0
        %1972 = vst.msk [vmem:[#allocation3 + $0x50] sm:$0xff] %vm1671, 0.0
        %1973 = vst.msk [vmem:[#allocation3 + $0x58] sm:$0x3] %vm1963, 0.0
        %1974 = vst.msk [vmem:[#allocation3 + $0x60] sm:$0xff] %vm1671, 0.0
        %1975 = vst.msk [vmem:[#allocation3 + $0x68] sm:$0xff] %vm1671, 0.0
        %1976 = vst.msk [vmem:[#allocation3 + $0x70] sm:$0x3] %vm1963, 0.0
        %1977 = vst.msk [vmem:[#allocation3 + $0x78] sm:$0xff] %vm1671, 0.0
        %1978 = vst.msk [vmem:[#allocation3 + $0x80] sm:$0xff] %vm1671, 0.0
        %1979 = vst.msk [vmem:[#allocation3 + $0x88] sm:$0x3] %vm1963, 0.0
        %1980 = vst.msk [vmem:[#allocation3 + $0x90] sm:$0xff] %vm1671, 0.0
        %1981 = vst.msk [vmem:[#allocation3 + $0x98] sm:$0xff] %vm1671, 0.0
        %1982 = vst.msk [vmem:[#allocation3 + $0xa0] sm:$0x3] %vm1963, 0.0
        %1983 = vst.msk [vmem:[#allocation3 + $0xa8] sm:$0xff] %vm1671, 0.0
        %1984 = vst.msk [vmem:[#allocation3 + $0xb0] sm:$0xff] %vm1671, 0.0
        %1985 = vst.msk [vmem:[#allocation3 + $0xb8] sm:$0x3] %vm1963, 0.0
        %1986 = vst.msk [vmem:[#allocation3 + $0xc0] sm:$0xff] %vm1671, 0.0
        %1987 = vst.msk [vmem:[#allocation3 + $0xc8] sm:$0xff] %vm1671, 0.0
        %1988 = vst.msk [vmem:[#allocation3 + $0xd0] sm:$0x3] %vm1963, 0.0
        %1989 = vst.msk [vmem:[#allocation3 + $0xd8] sm:$0xff] %vm1671, 0.0
        %1990 = vst.msk [vmem:[#allocation3 + $0xe0] sm:$0xff] %vm1671, 0.0
        %1991 = vst.msk [vmem:[#allocation3 + $0xe8] sm:$0x3] %vm1963, 0.0
        %1992 = vst.msk [vmem:[#allocation3 + $0xf0] sm:$0xff] %vm1671, 0.0
        %1993 = vst.msk [vmem:[#allocation3 + $0xf8] sm:$0xff] %vm1671, 0.0
        %1994 = vst.msk [vmem:[#allocation3 + $0x100] sm:$0x3] %vm1963, 0.0
        %1995 = vst.msk [vmem:[#allocation3 + $0x108] sm:$0xff] %vm1671, 0.0
        %1996 = vst.msk [vmem:[#allocation3 + $0x110] sm:$0xff] %vm1671, 0.0
        %1997 = vst.msk [vmem:[#allocation3 + $0x118] sm:$0x3] %vm1963, 0.0
        %1998 = vst.msk [vmem:[#allocation3 + $0x120] sm:$0xff] %vm1671, 0.0
        %1999 = vst.msk [vmem:[#allocation3 + $0x128] sm:$0xff] %vm1671, 0.0
        %2000 = vst.msk [vmem:[#allocation3 + $0x130] sm:$0x3] %vm1963, 0.0
        %2001 = vst.msk [vmem:[#allocation3 + $0x138] sm:$0xff] %vm1671, 0.0
        %2002 = vst.msk [vmem:[#allocation3 + $0x140] sm:$0xff] %vm1671, 0.0
        %2003 = vst.msk [vmem:[#allocation3 + $0x148] sm:$0x3] %vm1963, 0.0
        %2004 = vst.msk [vmem:[#allocation3 + $0x150] sm:$0xff] %vm1671, 0.0
        %2005 = vst.msk [vmem:[#allocation3 + $0x158] sm:$0xff] %vm1671, 0.0
        %2006 = vst.msk [vmem:[#allocation3 + $0x160] sm:$0x3] %vm1963, 0.0
        %2007 = vst.msk [vmem:[#allocation3 + $0x168] sm:$0xff] %vm1671, 0.0
        %2008 = vst.msk [vmem:[#allocation3 + $0x170] sm:$0xff] %vm1671, 0.0
        %2009 = vst.msk [vmem:[#allocation3 + $0x178] sm:$0x3] %vm1963, 0.0
        %2010 = vst.msk [vmem:[#allocation3 + $0x180] sm:$0xff] %vm1671, 0.0
        %2011 = vst.msk [vmem:[#allocation3 + $0x188] sm:$0xff] %vm1671, 0.0
        %2012 = vst.msk [vmem:[#allocation3 + $0x190] sm:$0x3] %vm1963, 0.0
        %2013 = vst.msk [vmem:[#allocation3 + $0x198] sm:$0xff] %vm1671, 0.0
        %2014 = vst.msk [vmem:[#allocation3 + $0x1a0] sm:$0xff] %vm1671, 0.0
        %2015 = vst.msk [vmem:[#allocation3 + $0x1a8] sm:$0x3] %vm1963, 0.0
        %s2016 = scalar_lea.vmem [#allocation3], 24
        %2017 = vst.msk [vmem:[%s2016 + $0x1] sm:$0xff] %vm1671, %v1835
        %2018 = vst.msk [vmem:[%s2016 + $0x9] sm:$0xff] %vm1671, %v1838
        %2019 = vst.msk [vmem:[%s2016 + $0x19] sm:$0xff] %vm1671, %v1843
        %2020 = vst.msk [vmem:[%s2016 + $0x21] sm:$0xff] %vm1671, %v1846
        %2021 = vst.msk [vmem:[%s2016 + $0x31] sm:$0xff] %vm1671, %v1851
        %2022 = vst.msk [vmem:[%s2016 + $0x39] sm:$0xff] %vm1671, %v1854
        %2023 = vst.msk [vmem:[%s2016 + $0x49] sm:$0xff] %vm1671, %v1859
        %2024 = vst.msk [vmem:[%s2016 + $0x51] sm:$0xff] %vm1671, %v1862
        %2025 = vst.msk [vmem:[%s2016 + $0x61] sm:$0xff] %vm1671, %v1867
        %2026 = vst.msk [vmem:[%s2016 + $0x69] sm:$0xff] %vm1671, %v1870
        %2027 = vst.msk [vmem:[%s2016 + $0x79] sm:$0xff] %vm1671, %v1875
        %2028 = vst.msk [vmem:[%s2016 + $0x81] sm:$0xff] %vm1671, %v1878
        %2029 = vst.msk [vmem:[%s2016 + $0x91] sm:$0xff] %vm1671, %v1883
        %2030 = vst.msk [vmem:[%s2016 + $0x99] sm:$0xff] %vm1671, %v1886
        %2031 = vst.msk [vmem:[%s2016 + $0xa9] sm:$0xff] %vm1671, %v1891
        %2032 = vst.msk [vmem:[%s2016 + $0xb1] sm:$0xff] %vm1671, %v1894
        %2033 = vst.msk [vmem:[%s2016 + $0xc1] sm:$0xff] %vm1671, %v1899
        %2034 = vst.msk [vmem:[%s2016 + $0xc9] sm:$0xff] %vm1671, %v1902
        %2035 = vst.msk [vmem:[%s2016 + $0xd9] sm:$0xff] %vm1671, %v1907
        %2036 = vst.msk [vmem:[%s2016 + $0xe1] sm:$0xff] %vm1671, %v1910
        %2037 = vst.msk [vmem:[%s2016 + $0xf1] sm:$0xff] %vm1671, %v1915
        %2038 = vst.msk [vmem:[%s2016 + $0xf9] sm:$0xff] %vm1671, %v1918
        %2039 = vst.msk [vmem:[%s2016 + $0x109] sm:$0xff] %vm1671, %v1923
        %2040 = vst.msk [vmem:[%s2016 + $0x111] sm:$0xff] %vm1671, %v1926
        %2041 = vst.msk [vmem:[%s2016 + $0x121] sm:$0xff] %vm1671, %v1931
        %2042 = vst.msk [vmem:[%s2016 + $0x129] sm:$0xff] %vm1671, %v1934
        %2043 = vst.msk [vmem:[%s2016 + $0x139] sm:$0xff] %vm1671, %v1939
        %2044 = vst.msk [vmem:[%s2016 + $0x141] sm:$0xff] %vm1671, %v1942
        %2045 = vst.msk [vmem:[%s2016 + $0x151] sm:$0xff] %vm1671, %v1947
        %2046 = vst.msk [vmem:[%s2016 + $0x159] sm:$0xff] %vm1671, %v1950
        %2047 = vst.msk [vmem:[%s2016 + $0x169] sm:$0xff] %vm1671, %v1955
        %2048 = vst.msk [vmem:[%s2016 + $0x171] sm:$0xff] %vm1671, %v1958
        %v2049 = vld [vmem:[#allocation3] sm:$0xff]
        %v2050 = vld [vmem:[#allocation3 + $0x8] sm:$0xff]
        %v2051 = vld [vmem:[#allocation3 + $0x10] sm:$0x3]
        %v2052 = vld [vmem:[#allocation3 + $0x18] sm:$0xff]
        %v2053 = vld [vmem:[#allocation3 + $0x20] sm:$0xff]
        %v2054 = vld [vmem:[#allocation3 + $0x28] sm:$0x3]
        %v2055 = vld [vmem:[#allocation3 + $0x30] sm:$0xff]
        %v2056 = vld [vmem:[#allocation3 + $0x38] sm:$0xff]
        %v2057 = vld [vmem:[#allocation3 + $0x40] sm:$0x3]
        %v2058 = vld [vmem:[#allocation3 + $0x48] sm:$0xff]
        %v2059 = vld [vmem:[#allocation3 + $0x50] sm:$0xff]
        %v2060 = vld [vmem:[#allocation3 + $0x58] sm:$0x3]
        %v2061 = vld [vmem:[#allocation3 + $0x60] sm:$0xff]
        %v2062 = vld [vmem:[#allocation3 + $0x68] sm:$0xff]
        %v2063 = vld [vmem:[#allocation3 + $0x70] sm:$0x3]
        %v2064 = vld [vmem:[#allocation3 + $0x78] sm:$0xff]
        %v2065 = vld [vmem:[#allocation3 + $0x80] sm:$0xff]
        %v2066 = vld [vmem:[#allocation3 + $0x88] sm:$0x3]
        %v2067 = vld [vmem:[#allocation3 + $0x90] sm:$0xff]
        %v2068 = vld [vmem:[#allocation3 + $0x98] sm:$0xff]
        %v2069 = vld [vmem:[#allocation3 + $0xa0] sm:$0x3]
        %v2070 = vld [vmem:[#allocation3 + $0xa8] sm:$0xff]
        %v2071 = vld [vmem:[#allocation3 + $0xb0] sm:$0xff]
        %v2072 = vld [vmem:[#allocation3 + $0xb8] sm:$0x3]
        %v2073 = vld [vmem:[#allocation3 + $0xc0] sm:$0xff]
        %v2074 = vld [vmem:[#allocation3 + $0xc8] sm:$0xff]
        %v2075 = vld [vmem:[#allocation3 + $0xd0] sm:$0x3]
        %v2076 = vld [vmem:[#allocation3 + $0xd8] sm:$0xff]
        %v2077 = vld [vmem:[#allocation3 + $0xe0] sm:$0xff]
        %v2078 = vld [vmem:[#allocation3 + $0xe8] sm:$0x3]
        %v2079 = vld [vmem:[#allocation3 + $0xf0] sm:$0xff]
        %v2080 = vld [vmem:[#allocation3 + $0xf8] sm:$0xff]
        %v2081 = vld [vmem:[#allocation3 + $0x100] sm:$0x3]
        %v2082 = vld [vmem:[#allocation3 + $0x108] sm:$0xff]
        %v2083 = vld [vmem:[#allocation3 + $0x110] sm:$0xff]
        %v2084 = vld [vmem:[#allocation3 + $0x118] sm:$0x3]
        %v2085 = vld [vmem:[#allocation3 + $0x120] sm:$0xff]
        %v2086 = vld [vmem:[#allocation3 + $0x128] sm:$0xff]
        %v2087 = vld [vmem:[#allocation3 + $0x130] sm:$0x3]
        %v2088 = vld [vmem:[#allocation3 + $0x138] sm:$0xff]
        %v2089 = vld [vmem:[#allocation3 + $0x140] sm:$0xff]
        %v2090 = vld [vmem:[#allocation3 + $0x148] sm:$0x3]
        %v2091 = vld [vmem:[#allocation3 + $0x150] sm:$0xff]
        %v2092 = vld [vmem:[#allocation3 + $0x158] sm:$0xff]
        %v2093 = vld [vmem:[#allocation3 + $0x160] sm:$0x3]
        %v2094 = vld [vmem:[#allocation3 + $0x168] sm:$0xff]
        %v2095 = vld [vmem:[#allocation3 + $0x170] sm:$0xff]
        %v2096 = vld [vmem:[#allocation3 + $0x178] sm:$0x3]
        %v2097 = vld [vmem:[#allocation3 + $0x180] sm:$0xff]
        %v2098 = vld [vmem:[#allocation3 + $0x188] sm:$0xff]
        %v2099 = vld [vmem:[#allocation3 + $0x190] sm:$0x3]
        %v2100 = vld [vmem:[#allocation3 + $0x198] sm:$0xff]
        %v2101 = vld [vmem:[#allocation3 + $0x1a0] sm:$0xff]
        %v2102 = vld [vmem:[#allocation3 + $0x1a8] sm:$0x3]
        %v2151 = vrot.slane %v2049, 1
        %v2152 = vrot.slane %v2050, 1
        %v2153 = vsel %vm485, %v2151, %v2152
        %v2154 = vrot.slane %v2051, 1
        %v2155 = vsel %vm485, %v2152, %v2154
        %v2156 = vrot.slane %v2052, 1
        %v2157 = vrot.slane %v2053, 1
        %v2158 = vsel %vm485, %v2156, %v2157
        %v2159 = vrot.slane %v2054, 1
        %v2160 = vsel %vm485, %v2157, %v2159
        %v2161 = vrot.slane %v2055, 1
        %v2162 = vrot.slane %v2056, 1
        %v2163 = vsel %vm485, %v2161, %v2162
        %v2164 = vrot.slane %v2057, 1
        %v2165 = vsel %vm485, %v2162, %v2164
        %v2166 = vrot.slane %v2058, 1
        %v2167 = vrot.slane %v2059, 1
        %v2168 = vsel %vm485, %v2166, %v2167
        %v2169 = vrot.slane %v2060, 1
        %v2170 = vsel %vm485, %v2167, %v2169
        %v2171 = vrot.slane %v2061, 1
        %v2172 = vrot.slane %v2062, 1
        %v2173 = vsel %vm485, %v2171, %v2172
        %v2174 = vrot.slane %v2063, 1
        %v2175 = vsel %vm485, %v2172, %v2174
        %v2176 = vrot.slane %v2064, 1
        %v2177 = vrot.slane %v2065, 1
        %v2178 = vsel %vm485, %v2176, %v2177
        %v2179 = vrot.slane %v2066, 1
        %v2180 = vsel %vm485, %v2177, %v2179
        %v2181 = vrot.slane %v2067, 1
        %v2182 = vrot.slane %v2068, 1
        %v2183 = vsel %vm485, %v2181, %v2182
        %v2184 = vrot.slane %v2069, 1
        %v2185 = vsel %vm485, %v2182, %v2184
        %v2186 = vrot.slane %v2070, 1
        %v2187 = vrot.slane %v2071, 1
        %v2188 = vsel %vm485, %v2186, %v2187
        %v2189 = vrot.slane %v2072, 1
        %v2190 = vsel %vm485, %v2187, %v2189
        %v2191 = vrot.slane %v2073, 1
        %v2192 = vrot.slane %v2074, 1
        %v2193 = vsel %vm485, %v2191, %v2192
        %v2194 = vrot.slane %v2075, 1
        %v2195 = vsel %vm485, %v2192, %v2194
        %v2196 = vrot.slane %v2076, 1
        %v2197 = vrot.slane %v2077, 1
        %v2198 = vsel %vm485, %v2196, %v2197
        %v2199 = vrot.slane %v2078, 1
        %v2200 = vsel %vm485, %v2197, %v2199
        %v2201 = vrot.slane %v2079, 1
        %v2202 = vrot.slane %v2080, 1
        %v2203 = vsel %vm485, %v2201, %v2202
        %v2204 = vrot.slane %v2081, 1
        %v2205 = vsel %vm485, %v2202, %v2204
        %v2206 = vrot.slane %v2082, 1
        %v2207 = vrot.slane %v2083, 1
        %v2208 = vsel %vm485, %v2206, %v2207
        %v2209 = vrot.slane %v2084, 1
        %v2210 = vsel %vm485, %v2207, %v2209
        %v2211 = vrot.slane %v2085, 1
        %v2212 = vrot.slane %v2086, 1
        %v2213 = vsel %vm485, %v2211, %v2212
        %v2214 = vrot.slane %v2087, 1
        %v2215 = vsel %vm485, %v2212, %v2214
        %v2216 = vrot.slane %v2088, 1
        %v2217 = vrot.slane %v2089, 1
        %v2218 = vsel %vm485, %v2216, %v2217
        %v2219 = vrot.slane %v2090, 1
        %v2220 = vsel %vm485, %v2217, %v2219
        %v2221 = vrot.slane %v2091, 1
        %v2222 = vrot.slane %v2092, 1
        %v2223 = vsel %vm485, %v2221, %v2222
        %v2224 = vrot.slane %v2093, 1
        %v2225 = vsel %vm485, %v2222, %v2224
        %v2226 = vrot.slane %v2094, 1
        %v2227 = vrot.slane %v2095, 1
        %v2228 = vsel %vm485, %v2226, %v2227
        %v2229 = vrot.slane %v2096, 1
        %v2230 = vsel %vm485, %v2227, %v2229
        %v2231 = vrot.slane %v2049, 2
        %v2232 = vrot.slane %v2050, 2
        %v2233 = vsel %vm566, %v2231, %v2232
        %v2234 = vrot.slane %v2051, 2
        %v2235 = vsel %vm566, %v2232, %v2234
        %v2236 = vrot.slane %v2052, 2
        %v2237 = vrot.slane %v2053, 2
        %v2238 = vsel %vm566, %v2236, %v2237
        %v2239 = vrot.slane %v2054, 2
        %v2240 = vsel %vm566, %v2237, %v2239
        %v2241 = vrot.slane %v2055, 2
        %v2242 = vrot.slane %v2056, 2
        %v2243 = vsel %vm566, %v2241, %v2242
        %v2244 = vrot.slane %v2057, 2
        %v2245 = vsel %vm566, %v2242, %v2244
        %v2246 = vrot.slane %v2058, 2
        %v2247 = vrot.slane %v2059, 2
        %v2248 = vsel %vm566, %v2246, %v2247
        %v2249 = vrot.slane %v2060, 2
        %v2250 = vsel %vm566, %v2247, %v2249
        %v2251 = vrot.slane %v2061, 2
        %v2252 = vrot.slane %v2062, 2
        %v2253 = vsel %vm566, %v2251, %v2252
        %v2254 = vrot.slane %v2063, 2
        %v2255 = vsel %vm566, %v2252, %v2254
        %v2256 = vrot.slane %v2064, 2
        %v2257 = vrot.slane %v2065, 2
        %v2258 = vsel %vm566, %v2256, %v2257
        %v2259 = vrot.slane %v2066, 2
        %v2260 = vsel %vm566, %v2257, %v2259
        %v2261 = vrot.slane %v2067, 2
        %v2262 = vrot.slane %v2068, 2
        %v2263 = vsel %vm566, %v2261, %v2262
        %v2264 = vrot.slane %v2069, 2
        %v2265 = vsel %vm566, %v2262, %v2264
        %v2266 = vrot.slane %v2070, 2
        %v2267 = vrot.slane %v2071, 2
        %v2268 = vsel %vm566, %v2266, %v2267
        %v2269 = vrot.slane %v2072, 2
        %v2270 = vsel %vm566, %v2267, %v2269
        %v2271 = vrot.slane %v2073, 2
        %v2272 = vrot.slane %v2074, 2
        %v2273 = vsel %vm566, %v2271, %v2272
        %v2274 = vrot.slane %v2075, 2
        %v2275 = vsel %vm566, %v2272, %v2274
        %v2276 = vrot.slane %v2076, 2
        %v2277 = vrot.slane %v2077, 2
        %v2278 = vsel %vm566, %v2276, %v2277
        %v2279 = vrot.slane %v2078, 2
        %v2280 = vsel %vm566, %v2277, %v2279
        %v2281 = vrot.slane %v2079, 2
        %v2282 = vrot.slane %v2080, 2
        %v2283 = vsel %vm566, %v2281, %v2282
        %v2284 = vrot.slane %v2081, 2
        %v2285 = vsel %vm566, %v2282, %v2284
        %v2286 = vrot.slane %v2082, 2
        %v2287 = vrot.slane %v2083, 2
        %v2288 = vsel %vm566, %v2286, %v2287
        %v2289 = vrot.slane %v2084, 2
        %v2290 = vsel %vm566, %v2287, %v2289
        %v2291 = vrot.slane %v2085, 2
        %v2292 = vrot.slane %v2086, 2
        %v2293 = vsel %vm566, %v2291, %v2292
        %v2294 = vrot.slane %v2087, 2
        %v2295 = vsel %vm566, %v2292, %v2294
        %v2296 = vrot.slane %v2088, 2
        %v2297 = vrot.slane %v2089, 2
        %v2298 = vsel %vm566, %v2296, %v2297
        %v2299 = vrot.slane %v2090, 2
        %v2300 = vsel %vm566, %v2297, %v2299
        %v2301 = vrot.slane %v2091, 2
        %v2302 = vrot.slane %v2092, 2
        %v2303 = vsel %vm566, %v2301, %v2302
        %v2304 = vrot.slane %v2093, 2
        %v2305 = vsel %vm566, %v2302, %v2304
        %v2306 = vrot.slane %v2094, 2
        %v2307 = vrot.slane %v2095, 2
        %v2308 = vsel %vm566, %v2306, %v2307
        %v2309 = vrot.slane %v2096, 2
        %v2310 = vsel %vm566, %v2307, %v2309
        %v2314 = vrot.slane %v2097, 1
        %v2315 = vrot.slane %v2098, 1
        %v2316 = vsel %vm485, %v2314, %v2315
        %v2317 = vrot.slane %v2099, 1
        %v2318 = vsel %vm485, %v2315, %v2317
        %v2351 = vrot.slane %v2097, 2
        %v2352 = vrot.slane %v2098, 2
        %v2353 = vsel %vm566, %v2351, %v2352
        %v2354 = vrot.slane %v2099, 2
        %v2355 = vsel %vm566, %v2352, %v2354
        %v2359 = vrot.slane %v2100, 1
        %v2360 = vrot.slane %v2101, 1
        %v2361 = vsel %vm485, %v2359, %v2360
        %v2362 = vrot.slane %v2102, 1
        %v2363 = vsel %vm485, %v2360, %v2362
        %v2364 = vrot.slane %v2100, 2
        %v2365 = vrot.slane %v2101, 2
        %v2366 = vsel %vm566, %v2364, %v2365
        %v2367 = vrot.slane %v2102, 2
        %v2368 = vsel %vm566, %v2365, %v2367
        %2401 = vrot.lane.b32.xlu0 %v2153, 32
        %v2402 = vpop.permute.xlu0 %2401
        %2403 = vrot.lane.b32.xlu0 %v2155, 32
        %v2404 = vpop.permute.xlu0 %2403
        %2405 = vrot.lane.b32.xlu0 %v2158, 32
        %v2406 = vpop.permute.xlu0 %2405
        %2407 = vrot.lane.b32.xlu0 %v2160, 32
        %v2408 = vpop.permute.xlu0 %2407
        %2409 = vrot.lane.b32.xlu0 %v2163, 32
        %v2410 = vpop.permute.xlu0 %2409
        %2411 = vrot.lane.b32.xlu0 %v2165, 32
        %v2412 = vpop.permute.xlu0 %2411
        %2413 = vrot.lane.b32.xlu0 %v2168, 32
        %v2414 = vpop.permute.xlu0 %2413
        %2415 = vrot.lane.b32.xlu0 %v2170, 32
        %v2416 = vpop.permute.xlu0 %2415
        %2417 = vrot.lane.b32.xlu0 %v2173, 32
        %v2418 = vpop.permute.xlu0 %2417
        %2419 = vrot.lane.b32.xlu0 %v2175, 32
        %v2420 = vpop.permute.xlu0 %2419
        %2421 = vrot.lane.b32.xlu0 %v2178, 32
        %v2422 = vpop.permute.xlu0 %2421
        %2423 = vrot.lane.b32.xlu0 %v2180, 32
        %v2424 = vpop.permute.xlu0 %2423
        %2425 = vrot.lane.b32.xlu0 %v2183, 32
        %v2426 = vpop.permute.xlu0 %2425
        %2427 = vrot.lane.b32.xlu0 %v2185, 32
        %v2428 = vpop.permute.xlu0 %2427
        %2429 = vrot.lane.b32.xlu0 %v2188, 32
        %v2430 = vpop.permute.xlu0 %2429
        %2431 = vrot.lane.b32.xlu0 %v2190, 32
        %v2432 = vpop.permute.xlu0 %2431
        %2433 = vrot.lane.b32.xlu0 %v2193, 32
        %v2434 = vpop.permute.xlu0 %2433
        %2435 = vrot.lane.b32.xlu0 %v2195, 32
        %v2436 = vpop.permute.xlu0 %2435
        %2437 = vrot.lane.b32.xlu0 %v2198, 32
        %v2438 = vpop.permute.xlu0 %2437
        %2439 = vrot.lane.b32.xlu0 %v2200, 32
        %v2440 = vpop.permute.xlu0 %2439
        %2441 = vrot.lane.b32.xlu0 %v2203, 32
        %v2442 = vpop.permute.xlu0 %2441
        %2443 = vrot.lane.b32.xlu0 %v2205, 32
        %v2444 = vpop.permute.xlu0 %2443
        %2445 = vrot.lane.b32.xlu0 %v2208, 32
        %v2446 = vpop.permute.xlu0 %2445
        %2447 = vrot.lane.b32.xlu0 %v2210, 32
        %v2448 = vpop.permute.xlu0 %2447
        %2449 = vrot.lane.b32.xlu0 %v2213, 32
        %v2450 = vpop.permute.xlu0 %2449
        %2451 = vrot.lane.b32.xlu0 %v2215, 32
        %v2452 = vpop.permute.xlu0 %2451
        %2453 = vrot.lane.b32.xlu0 %v2218, 32
        %v2454 = vpop.permute.xlu0 %2453
        %2455 = vrot.lane.b32.xlu0 %v2220, 32
        %v2456 = vpop.permute.xlu0 %2455
        %2457 = vrot.lane.b32.xlu0 %v2223, 32
        %v2458 = vpop.permute.xlu0 %2457
        %2459 = vrot.lane.b32.xlu0 %v2225, 32
        %v2460 = vpop.permute.xlu0 %2459
        %2461 = vrot.lane.b32.xlu0 %v2228, 32
        %v2462 = vpop.permute.xlu0 %2461
        %2463 = vrot.lane.b32.xlu0 %v2230, 32
        %v2464 = vpop.permute.xlu0 %2463
        %2497 = vrot.lane.b32.xlu0 %v2233, 64
        %v2498 = vpop.permute.xlu0 %2497
        %2499 = vrot.lane.b32.xlu0 %v2235, 64
        %v2500 = vpop.permute.xlu0 %2499
        %2501 = vrot.lane.b32.xlu0 %v2238, 64
        %v2502 = vpop.permute.xlu0 %2501
        %2503 = vrot.lane.b32.xlu0 %v2240, 64
        %v2504 = vpop.permute.xlu0 %2503
        %2505 = vrot.lane.b32.xlu0 %v2243, 64
        %v2506 = vpop.permute.xlu0 %2505
        %2507 = vrot.lane.b32.xlu0 %v2245, 64
        %v2508 = vpop.permute.xlu0 %2507
        %2509 = vrot.lane.b32.xlu0 %v2248, 64
        %v2510 = vpop.permute.xlu0 %2509
        %2511 = vrot.lane.b32.xlu0 %v2250, 64
        %v2512 = vpop.permute.xlu0 %2511
        %2513 = vrot.lane.b32.xlu0 %v2253, 64
        %v2514 = vpop.permute.xlu0 %2513
        %2515 = vrot.lane.b32.xlu0 %v2255, 64
        %v2516 = vpop.permute.xlu0 %2515
        %2517 = vrot.lane.b32.xlu0 %v2258, 64
        %v2518 = vpop.permute.xlu0 %2517
        %2519 = vrot.lane.b32.xlu0 %v2260, 64
        %v2520 = vpop.permute.xlu0 %2519
        %2521 = vrot.lane.b32.xlu0 %v2263, 64
        %v2522 = vpop.permute.xlu0 %2521
        %2523 = vrot.lane.b32.xlu0 %v2265, 64
        %v2524 = vpop.permute.xlu0 %2523
        %2525 = vrot.lane.b32.xlu0 %v2268, 64
        %v2526 = vpop.permute.xlu0 %2525
        %2527 = vrot.lane.b32.xlu0 %v2270, 64
        %v2528 = vpop.permute.xlu0 %2527
        %2529 = vrot.lane.b32.xlu0 %v2273, 64
        %v2530 = vpop.permute.xlu0 %2529
        %2531 = vrot.lane.b32.xlu0 %v2275, 64
        %v2532 = vpop.permute.xlu0 %2531
        %2533 = vrot.lane.b32.xlu0 %v2278, 64
        %v2534 = vpop.permute.xlu0 %2533
        %2535 = vrot.lane.b32.xlu0 %v2280, 64
        %v2536 = vpop.permute.xlu0 %2535
        %2537 = vrot.lane.b32.xlu0 %v2283, 64
        %v2538 = vpop.permute.xlu0 %2537
        %2539 = vrot.lane.b32.xlu0 %v2285, 64
        %v2540 = vpop.permute.xlu0 %2539
        %2541 = vrot.lane.b32.xlu0 %v2288, 64
        %v2542 = vpop.permute.xlu0 %2541
        %2543 = vrot.lane.b32.xlu0 %v2290, 64
        %v2544 = vpop.permute.xlu0 %2543
        %2545 = vrot.lane.b32.xlu0 %v2293, 64
        %v2546 = vpop.permute.xlu0 %2545
        %2547 = vrot.lane.b32.xlu0 %v2295, 64
        %v2548 = vpop.permute.xlu0 %2547
        %2549 = vrot.lane.b32.xlu0 %v2298, 64
        %v2550 = vpop.permute.xlu0 %2549
        %2551 = vrot.lane.b32.xlu0 %v2300, 64
        %v2552 = vpop.permute.xlu0 %2551
        %2553 = vrot.lane.b32.xlu0 %v2303, 64
        %v2554 = vpop.permute.xlu0 %2553
        %2555 = vrot.lane.b32.xlu0 %v2305, 64
        %v2556 = vpop.permute.xlu0 %2555
        %2557 = vrot.lane.b32.xlu0 %v2308, 64
        %v2558 = vpop.permute.xlu0 %2557
        %2559 = vrot.lane.b32.xlu0 %v2310, 64
        %v2560 = vpop.permute.xlu0 %2559
        %2593 = vrot.lane.b32.xlu0 %v2052, 96
        %v2594 = vpop.permute.xlu0 %2593
        %2595 = vrot.lane.b32.xlu0 %v2053, 96
        %v2596 = vpop.permute.xlu0 %2595
        %2597 = vrot.lane.b32.xlu0 %v2055, 96
        %v2598 = vpop.permute.xlu0 %2597
        %2599 = vrot.lane.b32.xlu0 %v2056, 96
        %v2600 = vpop.permute.xlu0 %2599
        %2601 = vrot.lane.b32.xlu0 %v2058, 96
        %v2602 = vpop.permute.xlu0 %2601
        %2603 = vrot.lane.b32.xlu0 %v2059, 96
        %v2604 = vpop.permute.xlu0 %2603
        %2605 = vrot.lane.b32.xlu0 %v2061, 96
        %v2606 = vpop.permute.xlu0 %2605
        %2607 = vrot.lane.b32.xlu0 %v2062, 96
        %v2608 = vpop.permute.xlu0 %2607
        %2609 = vrot.lane.b32.xlu0 %v2064, 96
        %v2610 = vpop.permute.xlu0 %2609
        %2611 = vrot.lane.b32.xlu0 %v2065, 96
        %v2612 = vpop.permute.xlu0 %2611
        %2613 = vrot.lane.b32.xlu0 %v2067, 96
        %v2614 = vpop.permute.xlu0 %2613
        %2615 = vrot.lane.b32.xlu0 %v2068, 96
        %v2616 = vpop.permute.xlu0 %2615
        %2617 = vrot.lane.b32.xlu0 %v2070, 96
        %v2618 = vpop.permute.xlu0 %2617
        %2619 = vrot.lane.b32.xlu0 %v2071, 96
        %v2620 = vpop.permute.xlu0 %2619
        %2621 = vrot.lane.b32.xlu0 %v2073, 96
        %v2622 = vpop.permute.xlu0 %2621
        %2623 = vrot.lane.b32.xlu0 %v2074, 96
        %v2624 = vpop.permute.xlu0 %2623
        %2625 = vrot.lane.b32.xlu0 %v2076, 96
        %v2626 = vpop.permute.xlu0 %2625
        %2627 = vrot.lane.b32.xlu0 %v2077, 96
        %v2628 = vpop.permute.xlu0 %2627
        %2629 = vrot.lane.b32.xlu0 %v2079, 96
        %v2630 = vpop.permute.xlu0 %2629
        %2631 = vrot.lane.b32.xlu0 %v2080, 96
        %v2632 = vpop.permute.xlu0 %2631
        %2633 = vrot.lane.b32.xlu0 %v2082, 96
        %v2634 = vpop.permute.xlu0 %2633
        %2635 = vrot.lane.b32.xlu0 %v2083, 96
        %v2636 = vpop.permute.xlu0 %2635
        %2637 = vrot.lane.b32.xlu0 %v2085, 96
        %v2638 = vpop.permute.xlu0 %2637
        %2639 = vrot.lane.b32.xlu0 %v2086, 96
        %v2640 = vpop.permute.xlu0 %2639
        %2641 = vrot.lane.b32.xlu0 %v2088, 96
        %v2642 = vpop.permute.xlu0 %2641
        %2643 = vrot.lane.b32.xlu0 %v2089, 96
        %v2644 = vpop.permute.xlu0 %2643
        %2645 = vrot.lane.b32.xlu0 %v2091, 96
        %v2646 = vpop.permute.xlu0 %2645
        %2647 = vrot.lane.b32.xlu0 %v2092, 96
        %v2648 = vpop.permute.xlu0 %2647
        %2649 = vrot.lane.b32.xlu0 %v2094, 96
        %v2650 = vpop.permute.xlu0 %2649
        %2651 = vrot.lane.b32.xlu0 %v2095, 96
        %v2652 = vpop.permute.xlu0 %2651
        %2653 = vrot.lane.b32.xlu0 %v2097, 96
        %v2654 = vpop.permute.xlu0 %2653
        %2655 = vrot.lane.b32.xlu0 %v2098, 96
        %v2656 = vpop.permute.xlu0 %2655
        %2689 = vrot.lane.b32.xlu0 %v2238, 32
        %v2690 = vpop.permute.xlu0 %2689
        %2691 = vrot.lane.b32.xlu0 %v2240, 32
        %v2692 = vpop.permute.xlu0 %2691
        %2693 = vrot.lane.b32.xlu0 %v2243, 32
        %v2694 = vpop.permute.xlu0 %2693
        %2695 = vrot.lane.b32.xlu0 %v2245, 32
        %v2696 = vpop.permute.xlu0 %2695
        %2697 = vrot.lane.b32.xlu0 %v2248, 32
        %v2698 = vpop.permute.xlu0 %2697
        %2699 = vrot.lane.b32.xlu0 %v2250, 32
        %v2700 = vpop.permute.xlu0 %2699
        %2701 = vrot.lane.b32.xlu0 %v2253, 32
        %v2702 = vpop.permute.xlu0 %2701
        %2703 = vrot.lane.b32.xlu0 %v2255, 32
        %v2704 = vpop.permute.xlu0 %2703
        %2705 = vrot.lane.b32.xlu0 %v2258, 32
        %v2706 = vpop.permute.xlu0 %2705
        %2707 = vrot.lane.b32.xlu0 %v2260, 32
        %v2708 = vpop.permute.xlu0 %2707
        %2709 = vrot.lane.b32.xlu0 %v2263, 32
        %v2710 = vpop.permute.xlu0 %2709
        %2711 = vrot.lane.b32.xlu0 %v2265, 32
        %v2712 = vpop.permute.xlu0 %2711
        %2713 = vrot.lane.b32.xlu0 %v2268, 32
        %v2714 = vpop.permute.xlu0 %2713
        %2715 = vrot.lane.b32.xlu0 %v2270, 32
        %v2716 = vpop.permute.xlu0 %2715
        %2717 = vrot.lane.b32.xlu0 %v2273, 32
        %v2718 = vpop.permute.xlu0 %2717
        %2719 = vrot.lane.b32.xlu0 %v2275, 32
        %v2720 = vpop.permute.xlu0 %2719
        %2721 = vrot.lane.b32.xlu0 %v2278, 32
        %v2722 = vpop.permute.xlu0 %2721
        %2723 = vrot.lane.b32.xlu0 %v2280, 32
        %v2724 = vpop.permute.xlu0 %2723
        %2725 = vrot.lane.b32.xlu0 %v2283, 32
        %v2726 = vpop.permute.xlu0 %2725
        %2727 = vrot.lane.b32.xlu0 %v2285, 32
        %v2728 = vpop.permute.xlu0 %2727
        %2729 = vrot.lane.b32.xlu0 %v2288, 32
        %v2730 = vpop.permute.xlu0 %2729
        %2731 = vrot.lane.b32.xlu0 %v2290, 32
        %v2732 = vpop.permute.xlu0 %2731
        %2733 = vrot.lane.b32.xlu0 %v2293, 32
        %v2734 = vpop.permute.xlu0 %2733
        %2735 = vrot.lane.b32.xlu0 %v2295, 32
        %v2736 = vpop.permute.xlu0 %2735
        %2737 = vrot.lane.b32.xlu0 %v2298, 32
        %v2738 = vpop.permute.xlu0 %2737
        %2739 = vrot.lane.b32.xlu0 %v2300, 32
        %v2740 = vpop.permute.xlu0 %2739
        %2741 = vrot.lane.b32.xlu0 %v2303, 32
        %v2742 = vpop.permute.xlu0 %2741
        %2743 = vrot.lane.b32.xlu0 %v2305, 32
        %v2744 = vpop.permute.xlu0 %2743
        %2745 = vrot.lane.b32.xlu0 %v2308, 32
        %v2746 = vpop.permute.xlu0 %2745
        %2747 = vrot.lane.b32.xlu0 %v2310, 32
        %v2748 = vpop.permute.xlu0 %2747
        %2749 = vrot.lane.b32.xlu0 %v2353, 32
        %v2750 = vpop.permute.xlu0 %2749
        %2751 = vrot.lane.b32.xlu0 %v2355, 32
        %v2752 = vpop.permute.xlu0 %2751
        %2785 = vrot.lane.b32.xlu0 %v2055, 64
        %v2786 = vpop.permute.xlu0 %2785
        %2787 = vrot.lane.b32.xlu0 %v2056, 64
        %v2788 = vpop.permute.xlu0 %2787
        %2789 = vrot.lane.b32.xlu0 %v2058, 64
        %v2790 = vpop.permute.xlu0 %2789
        %2791 = vrot.lane.b32.xlu0 %v2059, 64
        %v2792 = vpop.permute.xlu0 %2791
        %2793 = vrot.lane.b32.xlu0 %v2061, 64
        %v2794 = vpop.permute.xlu0 %2793
        %2795 = vrot.lane.b32.xlu0 %v2062, 64
        %v2796 = vpop.permute.xlu0 %2795
        %2797 = vrot.lane.b32.xlu0 %v2064, 64
        %v2798 = vpop.permute.xlu0 %2797
        %2799 = vrot.lane.b32.xlu0 %v2065, 64
        %v2800 = vpop.permute.xlu0 %2799
        %2801 = vrot.lane.b32.xlu0 %v2067, 64
        %v2802 = vpop.permute.xlu0 %2801
        %2803 = vrot.lane.b32.xlu0 %v2068, 64
        %v2804 = vpop.permute.xlu0 %2803
        %2805 = vrot.lane.b32.xlu0 %v2070, 64
        %v2806 = vpop.permute.xlu0 %2805
        %2807 = vrot.lane.b32.xlu0 %v2071, 64
        %v2808 = vpop.permute.xlu0 %2807
        %2809 = vrot.lane.b32.xlu0 %v2073, 64
        %v2810 = vpop.permute.xlu0 %2809
        %2811 = vrot.lane.b32.xlu0 %v2074, 64
        %v2812 = vpop.permute.xlu0 %2811
        %2813 = vrot.lane.b32.xlu0 %v2076, 64
        %v2814 = vpop.permute.xlu0 %2813
        %2815 = vrot.lane.b32.xlu0 %v2077, 64
        %v2816 = vpop.permute.xlu0 %2815
        %2817 = vrot.lane.b32.xlu0 %v2079, 64
        %v2818 = vpop.permute.xlu0 %2817
        %2819 = vrot.lane.b32.xlu0 %v2080, 64
        %v2820 = vpop.permute.xlu0 %2819
        %2821 = vrot.lane.b32.xlu0 %v2082, 64
        %v2822 = vpop.permute.xlu0 %2821
        %2823 = vrot.lane.b32.xlu0 %v2083, 64
        %v2824 = vpop.permute.xlu0 %2823
        %2825 = vrot.lane.b32.xlu0 %v2085, 64
        %v2826 = vpop.permute.xlu0 %2825
        %2827 = vrot.lane.b32.xlu0 %v2086, 64
        %v2828 = vpop.permute.xlu0 %2827
        %2829 = vrot.lane.b32.xlu0 %v2088, 64
        %v2830 = vpop.permute.xlu0 %2829
        %2831 = vrot.lane.b32.xlu0 %v2089, 64
        %v2832 = vpop.permute.xlu0 %2831
        %2833 = vrot.lane.b32.xlu0 %v2091, 64
        %v2834 = vpop.permute.xlu0 %2833
        %2835 = vrot.lane.b32.xlu0 %v2092, 64
        %v2836 = vpop.permute.xlu0 %2835
        %2837 = vrot.lane.b32.xlu0 %v2094, 64
        %v2838 = vpop.permute.xlu0 %2837
        %2839 = vrot.lane.b32.xlu0 %v2095, 64
        %v2840 = vpop.permute.xlu0 %2839
        %2841 = vrot.lane.b32.xlu0 %v2097, 64
        %v2842 = vpop.permute.xlu0 %2841
        %2843 = vrot.lane.b32.xlu0 %v2098, 64
        %v2844 = vpop.permute.xlu0 %2843
        %2845 = vrot.lane.b32.xlu0 %v2100, 64
        %v2846 = vpop.permute.xlu0 %2845
        %2847 = vrot.lane.b32.xlu0 %v2101, 64
        %v2848 = vpop.permute.xlu0 %2847
        %2881 = vrot.lane.b32.xlu0 %v2163, 96
        %v2882 = vpop.permute.xlu0 %2881
        %2883 = vrot.lane.b32.xlu0 %v2165, 96
        %v2884 = vpop.permute.xlu0 %2883
        %2885 = vrot.lane.b32.xlu0 %v2168, 96
        %v2886 = vpop.permute.xlu0 %2885
        %2887 = vrot.lane.b32.xlu0 %v2170, 96
        %v2888 = vpop.permute.xlu0 %2887
        %2889 = vrot.lane.b32.xlu0 %v2173, 96
        %v2890 = vpop.permute.xlu0 %2889
        %2891 = vrot.lane.b32.xlu0 %v2175, 96
        %v2892 = vpop.permute.xlu0 %2891
        %2893 = vrot.lane.b32.xlu0 %v2178, 96
        %v2894 = vpop.permute.xlu0 %2893
        %2895 = vrot.lane.b32.xlu0 %v2180, 96
        %v2896 = vpop.permute.xlu0 %2895
        %2897 = vrot.lane.b32.xlu0 %v2183, 96
        %v2898 = vpop.permute.xlu0 %2897
        %2899 = vrot.lane.b32.xlu0 %v2185, 96
        %v2900 = vpop.permute.xlu0 %2899
        %2901 = vrot.lane.b32.xlu0 %v2188, 96
        %v2902 = vpop.permute.xlu0 %2901
        %2903 = vrot.lane.b32.xlu0 %v2190, 96
        %v2904 = vpop.permute.xlu0 %2903
        %2905 = vrot.lane.b32.xlu0 %v2193, 96
        %v2906 = vpop.permute.xlu0 %2905
        %2907 = vrot.lane.b32.xlu0 %v2195, 96
        %v2908 = vpop.permute.xlu0 %2907
        %2909 = vrot.lane.b32.xlu0 %v2198, 96
        %v2910 = vpop.permute.xlu0 %2909
        %2911 = vrot.lane.b32.xlu0 %v2200, 96
        %v2912 = vpop.permute.xlu0 %2911
        %2913 = vrot.lane.b32.xlu0 %v2203, 96
        %v2914 = vpop.permute.xlu0 %2913
        %2915 = vrot.lane.b32.xlu0 %v2205, 96
        %v2916 = vpop.permute.xlu0 %2915
        %2917 = vrot.lane.b32.xlu0 %v2208, 96
        %v2918 = vpop.permute.xlu0 %2917
        %2919 = vrot.lane.b32.xlu0 %v2210, 96
        %v2920 = vpop.permute.xlu0 %2919
        %2921 = vrot.lane.b32.xlu0 %v2213, 96
        %v2922 = vpop.permute.xlu0 %2921
        %2923 = vrot.lane.b32.xlu0 %v2215, 96
        %v2924 = vpop.permute.xlu0 %2923
        %2925 = vrot.lane.b32.xlu0 %v2218, 96
        %v2926 = vpop.permute.xlu0 %2925
        %2927 = vrot.lane.b32.xlu0 %v2220, 96
        %v2928 = vpop.permute.xlu0 %2927
        %2929 = vrot.lane.b32.xlu0 %v2223, 96
        %v2930 = vpop.permute.xlu0 %2929
        %2931 = vrot.lane.b32.xlu0 %v2225, 96
        %v2932 = vpop.permute.xlu0 %2931
        %2933 = vrot.lane.b32.xlu0 %v2228, 96
        %v2934 = vpop.permute.xlu0 %2933
        %2935 = vrot.lane.b32.xlu0 %v2230, 96
        %v2936 = vpop.permute.xlu0 %2935
        %2937 = vrot.lane.b32.xlu0 %v2316, 96
        %v2938 = vpop.permute.xlu0 %2937
        %2939 = vrot.lane.b32.xlu0 %v2318, 96
        %v2940 = vpop.permute.xlu0 %2939
        %2941 = vrot.lane.b32.xlu0 %v2361, 96
        %v2942 = vpop.permute.xlu0 %2941
        %2943 = vrot.lane.b32.xlu0 %v2363, 96
        %v2944 = vpop.permute.xlu0 %2943
        %v2977 = vsel %vm1671, %v2049, %v2402
        %v2978 = vsel %vm1671, %v2050, %v2404
        %v2979 = vsel %vm1671, %v2052, %v2406
        %v2980 = vsel %vm1671, %v2053, %v2408
        %v2981 = vsel %vm1671, %v2055, %v2410
        %v2982 = vsel %vm1671, %v2056, %v2412
        %v2983 = vsel %vm1671, %v2058, %v2414
        %v2984 = vsel %vm1671, %v2059, %v2416
        %v2985 = vsel %vm1671, %v2061, %v2418
        %v2986 = vsel %vm1671, %v2062, %v2420
        %v2987 = vsel %vm1671, %v2064, %v2422
        %v2988 = vsel %vm1671, %v2065, %v2424
        %v2989 = vsel %vm1671, %v2067, %v2426
        %v2990 = vsel %vm1671, %v2068, %v2428
        %v2991 = vsel %vm1671, %v2070, %v2430
        %v2992 = vsel %vm1671, %v2071, %v2432
        %v2993 = vsel %vm1671, %v2073, %v2434
        %v2994 = vsel %vm1671, %v2074, %v2436
        %v2995 = vsel %vm1671, %v2076, %v2438
        %v2996 = vsel %vm1671, %v2077, %v2440
        %v2997 = vsel %vm1671, %v2079, %v2442
        %v2998 = vsel %vm1671, %v2080, %v2444
        %v2999 = vsel %vm1671, %v2082, %v2446
        %v3000 = vsel %vm1671, %v2083, %v2448
        %v3001 = vsel %vm1671, %v2085, %v2450
        %v3002 = vsel %vm1671, %v2086, %v2452
        %v3003 = vsel %vm1671, %v2088, %v2454
        %v3004 = vsel %vm1671, %v2089, %v2456
        %v3005 = vsel %vm1671, %v2091, %v2458
        %v3006 = vsel %vm1671, %v2092, %v2460
        %v3007 = vsel %vm1671, %v2094, %v2462
        %v3008 = vsel %vm1671, %v2095, %v2464
        %vm3009 = vcmask 523264
        %v3010 = vsel %vm3009, %v2977, %v2498
        %v3011 = vsel %vm3009, %v2978, %v2500
        %v3012 = vsel %vm3009, %v2979, %v2502
        %v3013 = vsel %vm3009, %v2980, %v2504
        %v3014 = vsel %vm3009, %v2981, %v2506
        %v3015 = vsel %vm3009, %v2982, %v2508
        %v3016 = vsel %vm3009, %v2983, %v2510
        %v3017 = vsel %vm3009, %v2984, %v2512
        %v3018 = vsel %vm3009, %v2985, %v2514
        %v3019 = vsel %vm3009, %v2986, %v2516
        %v3020 = vsel %vm3009, %v2987, %v2518
        %v3021 = vsel %vm3009, %v2988, %v2520
        %v3022 = vsel %vm3009, %v2989, %v2522
        %v3023 = vsel %vm3009, %v2990, %v2524
        %v3024 = vsel %vm3009, %v2991, %v2526
        %v3025 = vsel %vm3009, %v2992, %v2528
        %v3026 = vsel %vm3009, %v2993, %v2530
        %v3027 = vsel %vm3009, %v2994, %v2532
        %v3028 = vsel %vm3009, %v2995, %v2534
        %v3029 = vsel %vm3009, %v2996, %v2536
        %v3030 = vsel %vm3009, %v2997, %v2538
        %v3031 = vsel %vm3009, %v2998, %v2540
        %v3032 = vsel %vm3009, %v2999, %v2542
        %v3033 = vsel %vm3009, %v3000, %v2544
        %v3034 = vsel %vm3009, %v3001, %v2546
        %v3035 = vsel %vm3009, %v3002, %v2548
        %v3036 = vsel %vm3009, %v3003, %v2550
        %v3037 = vsel %vm3009, %v3004, %v2552
        %v3038 = vsel %vm3009, %v3005, %v2554
        %v3039 = vsel %vm3009, %v3006, %v2556
        %v3040 = vsel %vm3009, %v3007, %v2558
        %v3041 = vsel %vm3009, %v3008, %v2560
        %vm3042 = vcmask 785408
        %v3043 = vsel %vm3042, %v3010, %v2594
        %v3044 = vsel %vm3042, %v3011, %v2596
        %v3045 = vsel %vm3042, %v3012, %v2598
        %v3046 = vsel %vm3042, %v3013, %v2600
        %v3047 = vsel %vm3042, %v3014, %v2602
        %v3048 = vsel %vm3042, %v3015, %v2604
        %v3049 = vsel %vm3042, %v3016, %v2606
        %v3050 = vsel %vm3042, %v3017, %v2608
        %v3051 = vsel %vm3042, %v3018, %v2610
        %v3052 = vsel %vm3042, %v3019, %v2612
        %v3053 = vsel %vm3042, %v3020, %v2614
        %v3054 = vsel %vm3042, %v3021, %v2616
        %v3055 = vsel %vm3042, %v3022, %v2618
        %v3056 = vsel %vm3042, %v3023, %v2620
        %v3057 = vsel %vm3042, %v3024, %v2622
        %v3058 = vsel %vm3042, %v3025, %v2624
        %v3059 = vsel %vm3042, %v3026, %v2626
        %v3060 = vsel %vm3042, %v3027, %v2628
        %v3061 = vsel %vm3042, %v3028, %v2630
        %v3062 = vsel %vm3042, %v3029, %v2632
        %v3063 = vsel %vm3042, %v3030, %v2634
        %v3064 = vsel %vm3042, %v3031, %v2636
        %v3065 = vsel %vm3042, %v3032, %v2638
        %v3066 = vsel %vm3042, %v3033, %v2640
        %v3067 = vsel %vm3042, %v3034, %v2642
        %v3068 = vsel %vm3042, %v3035, %v2644
        %v3069 = vsel %vm3042, %v3036, %v2646
        %v3070 = vsel %vm3042, %v3037, %v2648
        %v3071 = vsel %vm3042, %v3038, %v2650
        %v3072 = vsel %vm3042, %v3039, %v2652
        %v3073 = vsel %vm3042, %v3040, %v2654
        %v3074 = vsel %vm3042, %v3041, %v2656
        %v3075 = vsel %vm1671, %v2158, %v2690
        %v3076 = vsel %vm1671, %v2160, %v2692
        %v3077 = vsel %vm1671, %v2163, %v2694
        %v3078 = vsel %vm1671, %v2165, %v2696
        %v3079 = vsel %vm1671, %v2168, %v2698
        %v3080 = vsel %vm1671, %v2170, %v2700
        %v3081 = vsel %vm1671, %v2173, %v2702
        %v3082 = vsel %vm1671, %v2175, %v2704
        %v3083 = vsel %vm1671, %v2178, %v2706
        %v3084 = vsel %vm1671, %v2180, %v2708
        %v3085 = vsel %vm1671, %v2183, %v2710
        %v3086 = vsel %vm1671, %v2185, %v2712
        %v3087 = vsel %vm1671, %v2188, %v2714
        %v3088 = vsel %vm1671, %v2190, %v2716
        %v3089 = vsel %vm1671, %v2193, %v2718
        %v3090 = vsel %vm1671, %v2195, %v2720
        %v3091 = vsel %vm1671, %v2198, %v2722
        %v3092 = vsel %vm1671, %v2200, %v2724
        %v3093 = vsel %vm1671, %v2203, %v2726
        %v3094 = vsel %vm1671, %v2205, %v2728
        %v3095 = vsel %vm1671, %v2208, %v2730
        %v3096 = vsel %vm1671, %v2210, %v2732
        %v3097 = vsel %vm1671, %v2213, %v2734
        %v3098 = vsel %vm1671, %v2215, %v2736
        %v3099 = vsel %vm1671, %v2218, %v2738
        %v3100 = vsel %vm1671, %v2220, %v2740
        %v3101 = vsel %vm1671, %v2223, %v2742
        %v3102 = vsel %vm1671, %v2225, %v2744
        %v3103 = vsel %vm1671, %v2228, %v2746
        %v3104 = vsel %vm1671, %v2230, %v2748
        %v3105 = vsel %vm1671, %v2316, %v2750
        %v3106 = vsel %vm1671, %v2318, %v2752
        %v3107 = vsel %vm3009, %v3075, %v2786
        %v3108 = vsel %vm3009, %v3076, %v2788
        %v3109 = vsel %vm3009, %v3077, %v2790
        %v3110 = vsel %vm3009, %v3078, %v2792
        %v3111 = vsel %vm3009, %v3079, %v2794
        %v3112 = vsel %vm3009, %v3080, %v2796
        %v3113 = vsel %vm3009, %v3081, %v2798
        %v3114 = vsel %vm3009, %v3082, %v2800
        %v3115 = vsel %vm3009, %v3083, %v2802
        %v3116 = vsel %vm3009, %v3084, %v2804
        %v3117 = vsel %vm3009, %v3085, %v2806
        %v3118 = vsel %vm3009, %v3086, %v2808
        %v3119 = vsel %vm3009, %v3087, %v2810
        %v3120 = vsel %vm3009, %v3088, %v2812
        %v3121 = vsel %vm3009, %v3089, %v2814
        %v3122 = vsel %vm3009, %v3090, %v2816
        %v3123 = vsel %vm3009, %v3091, %v2818
        %v3124 = vsel %vm3009, %v3092, %v2820
        %v3125 = vsel %vm3009, %v3093, %v2822
        %v3126 = vsel %vm3009, %v3094, %v2824
        %v3127 = vsel %vm3009, %v3095, %v2826
        %v3128 = vsel %vm3009, %v3096, %v2828
        %v3129 = vsel %vm3009, %v3097, %v2830
        %v3130 = vsel %vm3009, %v3098, %v2832
        %v3131 = vsel %vm3009, %v3099, %v2834
        %v3132 = vsel %vm3009, %v3100, %v2836
        %v3133 = vsel %vm3009, %v3101, %v2838
        %v3134 = vsel %vm3009, %v3102, %v2840
        %v3135 = vsel %vm3009, %v3103, %v2842
        %v3136 = vsel %vm3009, %v3104, %v2844
        %v3137 = vsel %vm3009, %v3105, %v2846
        %v3138 = vsel %vm3009, %v3106, %v2848
        %v3139 = vsel %vm3042, %v3107, %v2882
        %v3140 = vsel %vm3042, %v3108, %v2884
        %v3141 = vsel %vm3042, %v3109, %v2886
        %v3142 = vsel %vm3042, %v3110, %v2888
        %v3143 = vsel %vm3042, %v3111, %v2890
        %v3144 = vsel %vm3042, %v3112, %v2892
        %v3145 = vsel %vm3042, %v3113, %v2894
        %v3146 = vsel %vm3042, %v3114, %v2896
        %v3147 = vsel %vm3042, %v3115, %v2898
        %v3148 = vsel %vm3042, %v3116, %v2900
        %v3149 = vsel %vm3042, %v3117, %v2902
        %v3150 = vsel %vm3042, %v3118, %v2904
        %v3151 = vsel %vm3042, %v3119, %v2906
        %v3152 = vsel %vm3042, %v3120, %v2908
        %v3153 = vsel %vm3042, %v3121, %v2910
        %v3154 = vsel %vm3042, %v3122, %v2912
        %v3155 = vsel %vm3042, %v3123, %v2914
        %v3156 = vsel %vm3042, %v3124, %v2916
        %v3157 = vsel %vm3042, %v3125, %v2918
        %v3158 = vsel %vm3042, %v3126, %v2920
        %v3159 = vsel %vm3042, %v3127, %v2922
        %v3160 = vsel %vm3042, %v3128, %v2924
        %v3161 = vsel %vm3042, %v3129, %v2926
        %v3162 = vsel %vm3042, %v3130, %v2928
        %v3163 = vsel %vm3042, %v3131, %v2930
        %v3164 = vsel %vm3042, %v3132, %v2932
        %v3165 = vsel %vm3042, %v3133, %v2934
        %v3166 = vsel %vm3042, %v3134, %v2936
        %v3167 = vsel %vm3042, %v3135, %v2938
        %v3168 = vsel %vm3042, %v3136, %v2940
        %v3169 = vsel %vm3042, %v3137, %v2942
        %v3170 = vsel %vm3042, %v3138, %v2944
        %v3171 = vpack.c.bf16 %v3044, %v3043
        %v3172 = vpack.c.bf16 %v3140, %v3139
        %v3173 = vpack.c.bf16 %v2245, %v2243
        %v3174 = vpack.c.bf16 %v3046, %v3045
        %v3175 = vpack.c.bf16 %v3142, %v3141
        %v3176 = vpack.c.bf16 %v2250, %v2248
        %v3177 = vpack.c.bf16 %v3048, %v3047
        %v3178 = vpack.c.bf16 %v3144, %v3143
        %v3179 = vpack.c.bf16 %v2255, %v2253
        %v3180 = vpack.c.bf16 %v3050, %v3049
        %v3181 = vpack.c.bf16 %v3146, %v3145
        %v3182 = vpack.c.bf16 %v2260, %v2258
        %v3183 = vpack.c.bf16 %v3052, %v3051
        %v3184 = vpack.c.bf16 %v3148, %v3147
        %v3185 = vpack.c.bf16 %v2265, %v2263
        %v3186 = vpack.c.bf16 %v3054, %v3053
        %v3187 = vpack.c.bf16 %v3150, %v3149
        %v3188 = vpack.c.bf16 %v2270, %v2268
        %v3189 = vpack.c.bf16 %v3056, %v3055
        %v3190 = vpack.c.bf16 %v3152, %v3151
        %v3191 = vpack.c.bf16 %v2275, %v2273
        %v3192 = vpack.c.bf16 %v3058, %v3057
        %v3193 = vpack.c.bf16 %v3154, %v3153
        %v3194 = vpack.c.bf16 %v2280, %v2278
        %v3195 = vpack.c.bf16 %v3060, %v3059
        %v3196 = vpack.c.bf16 %v3156, %v3155
        %v3197 = vpack.c.bf16 %v2285, %v2283
        %v3198 = vpack.c.bf16 %v3062, %v3061
        %v3199 = vpack.c.bf16 %v3158, %v3157
        %v3200 = vpack.c.bf16 %v2290, %v2288
        %v3201 = vpack.c.bf16 %v3064, %v3063
        %v3202 = vpack.c.bf16 %v3160, %v3159
        %v3203 = vpack.c.bf16 %v2295, %v2293
        %v3204 = vpack.c.bf16 %v3066, %v3065
        %v3205 = vpack.c.bf16 %v3162, %v3161
        %v3206 = vpack.c.bf16 %v2300, %v2298
        %v3207 = vpack.c.bf16 %v3068, %v3067
        %v3208 = vpack.c.bf16 %v3164, %v3163
        %v3209 = vpack.c.bf16 %v2305, %v2303
        %v3210 = vpack.c.bf16 %v3070, %v3069
        %v3211 = vpack.c.bf16 %v3166, %v3165
        %v3212 = vpack.c.bf16 %v2310, %v2308
        %v3213 = vpack.c.bf16 %v3072, %v3071
        %v3214 = vpack.c.bf16 %v3168, %v3167
        %v3215 = vpack.c.bf16 %v2355, %v2353
        %v3216 = vpack.c.bf16 %v3074, %v3073
        %v3217 = vpack.c.bf16 %v3170, %v3169
        %v3218 = vpack.c.bf16 %v2368, %v2366
        %v3219 = vld [vmem:[#allocation6] sm:$0xf]
        %v3220 = vld [vmem:[#allocation6 + $0x4] sm:$0xf]
        %v3221 = vld [vmem:[#allocation6 + $0x8] sm:$0xf]
        %v3222 = vld [vmem:[#allocation6 + $0xc] sm:$0xf]
        %v3223 = vld [vmem:[#allocation6 + $0x10] sm:$0xf]
        %v3224 = vld [vmem:[#allocation6 + $0x14] sm:$0xf]
        %v3225 = vld [vmem:[#allocation6 + $0x18] sm:$0xf]
        %v3226 = vld [vmem:[#allocation6 + $0x1c] sm:$0xf]
        %v3227 = vld [vmem:[#allocation6 + $0x20] sm:$0xf]
        %v3228 = vld [vmem:[#allocation6 + $0x24] sm:$0xf]
        %v3229 = vld [vmem:[#allocation6 + $0x28] sm:$0xf]
        %v3230 = vld [vmem:[#allocation6 + $0x2c] sm:$0xf]
        %v3231 = vld [vmem:[#allocation6 + $0x30] sm:$0xf]
        %v3232 = vld [vmem:[#allocation6 + $0x34] sm:$0xf]
        %v3233 = vld [vmem:[#allocation6 + $0x38] sm:$0xf]
        %v3234 = vld [vmem:[#allocation6 + $0x3c] sm:$0xf]
        %v3235 = vld [vmem:[#allocation6 + $0x40] sm:$0xf]
        %v3236 = vld [vmem:[#allocation6 + $0x44] sm:$0xf]
        %v3237 = vld [vmem:[#allocation6 + $0x48] sm:$0xf]
        %v3238 = vld [vmem:[#allocation6 + $0x4c] sm:$0xf]
        %v3239 = vld [vmem:[#allocation6 + $0x50] sm:$0xf]
        %v3240 = vld [vmem:[#allocation6 + $0x54] sm:$0xf]
        %v3241 = vld [vmem:[#allocation6 + $0x58] sm:$0xf]
        %v3242 = vld [vmem:[#allocation6 + $0x5c] sm:$0xf]
        %v3243 = vld [vmem:[#allocation6 + $0x60] sm:$0xf]
        %v3244 = vld [vmem:[#allocation6 + $0x64] sm:$0xf]
        %v3245 = vld [vmem:[#allocation6 + $0x68] sm:$0xf]
        %v3246 = vld [vmem:[#allocation6 + $0x6c] sm:$0xf]
        %v3247 = vld [vmem:[#allocation6 + $0x70] sm:$0xf]
        %v3248 = vld [vmem:[#allocation6 + $0x74] sm:$0xf]
        %v3249 = vld [vmem:[#allocation6 + $0x78] sm:$0xf]
        %v3250 = vld [vmem:[#allocation6 + $0x7c] sm:$0xf]
        %v3251 = vld [vmem:[#allocation6 + $0x80] sm:$0xf]
        %v3252 = vld [vmem:[#allocation6 + $0x84] sm:$0xf]
        %v3253 = vld [vmem:[#allocation6 + $0x88] sm:$0xf]
        %v3254 = vld [vmem:[#allocation6 + $0x8c] sm:$0xf]
        %v3255 = vld [vmem:[#allocation8] sm:$0x1]
        %v3257 = vlaneseq
        %v3258 = vshrl.u32 %v3257, 7
        %v3259 = vsub.s32 0, %v3258
        %v3260 = vrot.slane %v3255, %v3259
        %v3298 = vunpack.c.l.b16 %v3219
        %v3299 = vunpack.c.l.b16 %v3220
        %v3300 = vunpack.c.l.b16 %v3221
        %v3301 = vunpack.c.l.b16 %v3222
        %v3302 = vunpack.c.l.b16 %v3223
        %v3303 = vunpack.c.l.b16 %v3224
        %v3304 = vunpack.c.l.b16 %v3225
        %v3305 = vunpack.c.l.b16 %v3226
        %v3306 = vunpack.c.l.b16 %v3227
        %v3307 = vunpack.c.l.b16 %v3228
        %v3308 = vunpack.c.l.b16 %v3229
        %v3309 = vunpack.c.l.b16 %v3230
        %v3310 = vunpack.c.l.b16 %v3231
        %v3311 = vunpack.c.l.b16 %v3232
        %v3312 = vunpack.c.l.b16 %v3233
        %v3313 = vunpack.c.l.b16 %v3234
        %v3314 = vunpack.c.l.b16 %v3235
        %v3315 = vunpack.c.l.b16 %v3236
        %v3316 = vunpack.c.l.b16 %v3237
        %v3317 = vunpack.c.l.b16 %v3238
        %v3318 = vunpack.c.l.b16 %v3239
        %v3319 = vunpack.c.l.b16 %v3240
        %v3320 = vunpack.c.l.b16 %v3241
        %v3321 = vunpack.c.l.b16 %v3242
        %v3322 = vunpack.c.l.b16 %v3243
        %v3323 = vunpack.c.l.b16 %v3244
        %v3324 = vunpack.c.l.b16 %v3245
        %v3325 = vunpack.c.l.b16 %v3246
        %v3326 = vunpack.c.l.b16 %v3247
        %v3327 = vunpack.c.l.b16 %v3248
        %v3328 = vunpack.c.l.b16 %v3249
        %v3329 = vunpack.c.l.b16 %v3250
        %v3330 = vunpack.c.l.b16 %v3251
        %v3331 = vunpack.c.l.b16 %v3252
        %v3332 = vunpack.c.l.b16 %v3253
        %v3333 = vunpack.c.l.b16 %v3254
        %v3334 = vpack.c.b16 %v3299, %v3298
        %v3335 = vpack.c.b16 %v3301, %v3300
        %v3336 = vpack.c.b16 %v3303, %v3302
        %v3337 = vpack.c.b16 %v3305, %v3304
        %v3338 = vpack.c.b16 %v3307, %v3306
        %v3339 = vpack.c.b16 %v3309, %v3308
        %v3340 = vpack.c.b16 %v3311, %v3310
        %v3341 = vpack.c.b16 %v3313, %v3312
        %v3342 = vpack.c.b16 %v3315, %v3314
        %v3343 = vpack.c.b16 %v3317, %v3316
        %v3344 = vpack.c.b16 %v3319, %v3318
        %v3345 = vpack.c.b16 %v3321, %v3320
        %v3346 = vpack.c.b16 %v3323, %v3322
        %v3347 = vpack.c.b16 %v3325, %v3324
        %v3348 = vpack.c.b16 %v3327, %v3326
        %v3349 = vpack.c.b16 %v3329, %v3328
        %v3350 = vpack.c.b16 %v3331, %v3330
        %v3351 = vpack.c.b16 %v3333, %v3332
        %v3371 = vsel %vm1671, %v3173, 0
        %v3374 = vsel %vm1671, %v3176, 0
        %v3377 = vsel %vm1671, %v3179, 0
        %v3380 = vsel %vm1671, %v3182, 0
        %v3383 = vsel %vm1671, %v3185, 0
        %v3386 = vsel %vm1671, %v3188, 0
        %v3389 = vsel %vm1671, %v3191, 0
        %v3392 = vsel %vm1671, %v3194, 0
        %v3395 = vsel %vm1671, %v3197, 0
        %v3398 = vsel %vm1671, %v3200, 0
        %v3401 = vsel %vm1671, %v3203, 0
        %v3404 = vsel %vm1671, %v3206, 0
        %v3407 = vsel %vm1671, %v3209, 0
        %v3410 = vsel %vm1671, %v3212, 0
        %v3413 = vsel %vm1671, %v3215, 0
        %v3416 = vsel %vm1671, %v3218, 0
        %3418 = vmatprep.subr.bf16.mxu0 0
        %3419 = vmatpush1.bf16.msra.mxu0 %v3334
        %3420 = vmatprep.subr.bf16.mxu0 0
        %3421 = vmatpush1.bf16.msra.mxu0 %v3335
        %3422 = vmatprep.subr.bf16.mxu0 0
        %3423 = vmatpush1.bf16.msra.mxu0 %v3336
        %3424 = vmatprep.subr.bf16.mxu0 0
        %3425 = vmatpush1.bf16.msra.mxu0 %v3337
        %3426 = vmatprep.subr.bf16.mxu0 0
        %3427 = vmatpush1.bf16.msra.mxu0 %v3338
        %3428 = vmatprep.subr.bf16.mxu0 0
        %3429 = vmatpush1.bf16.msra.mxu0 %v3339
        %3430 = vmatprep.subr.bf16.mxu0 0
        %3431 = vmatpush1.bf16.msra.mxu0 %v3340
        %3432 = vmatprep.subr.bf16.mxu0 0
        %3433 = vmatpush1.bf16.msra.mxu0 %v3341
        %3434 = vmatprep.subr.bf16.mxu0 0
        %3435 = vmatpush1.bf16.msra.mxu0 %v3342
        %3436 = vmatprep.subr.bf16.mxu0 0
        %3437 = vmatpush1.bf16.msra.mxu0 %v3343
        %3438 = vmatprep.subr.bf16.mxu0 0
        %3439 = vmatpush1.bf16.msra.mxu0 %v3344
        %3440 = vmatprep.subr.bf16.mxu0 0
        %3441 = vmatpush1.bf16.msra.mxu0 %v3345
        %3442 = vmatprep.subr.bf16.mxu0 0
        %3443 = vmatpush1.bf16.msra.mxu0 %v3346
        %3444 = vmatprep.subr.bf16.mxu0 0
        %3445 = vmatpush1.bf16.msra.mxu0 %v3347
        %3446 = vmatprep.subr.bf16.mxu0 0
        %3447 = vmatpush1.bf16.msra.mxu0 %v3348
        %3448 = vmatprep.subr.bf16.mxu0 0
        %3449 = vmatpush1.bf16.msra.mxu0 %v3349
        %3450 = vmatprep.mubr.bf16.mxu0 %v3172
        %3451 = vmatmul.mubr.bf16.gmra.mrb[0].mxu0 %v3171
        %v3452 = vpop.f32.mrb[0].mxu0
        %v3453 = vadd.f32 %v3260, %v3452
        %v3454 = vpop.f32.mrb[0].mxu0
        %v3455 = vpop.f32.mrb[0].mxu0
        %v3456 = vadd.f32 %v3260, %v3455
        %v3457 = vpop.f32.mrb[0].mxu0
        %3458 = vmatprep.mubr.bf16.mxu0 %v3175
        %3459 = vmatmul.mubr.bf16.gmra.mrb[0].mxu0 %v3174
        %v3460 = vpop.f32.mrb[0].mxu0
        %v3461 = vadd.f32 %v3260, %v3460
        %v3462 = vpop.f32.mrb[0].mxu0
        %v3463 = vpop.f32.mrb[0].mxu0
        %v3464 = vadd.f32 %v3260, %v3463
        %v3465 = vpop.f32.mrb[0].mxu0
        %3466 = vmatprep.mubr.bf16.mxu0 %v3178
        %3467 = vmatmul.mubr.bf16.gmra.mrb[0].mxu0 %v3177
        %v3468 = vpop.f32.mrb[0].mxu0
        %v3469 = vadd.f32 %v3260, %v3468
        %v3470 = vpop.f32.mrb[0].mxu0
        %v3471 = vpop.f32.mrb[0].mxu0
        %v3472 = vadd.f32 %v3260, %v3471
        %v3473 = vpop.f32.mrb[0].mxu0
        %3474 = vmatprep.mubr.bf16.mxu0 %v3181
        %3475 = vmatmul.mubr.bf16.gmra.mrb[0].mxu0 %v3180
        %v3476 = vpop.f32.mrb[0].mxu0
        %v3477 = vadd.f32 %v3260, %v3476
        %v3478 = vpop.f32.mrb[0].mxu0
        %v3479 = vpop.f32.mrb[0].mxu0
        %v3480 = vadd.f32 %v3260, %v3479
        %v3481 = vpop.f32.mrb[0].mxu0
        %3482 = vmatprep.mubr.bf16.mxu0 %v3184
        %3483 = vmatmul.mubr.bf16.gmra.mrb[0].mxu0 %v3183
        %v3484 = vpop.f32.mrb[0].mxu0
        %v3485 = vadd.f32 %v3260, %v3484
        %v3486 = vpop.f32.mrb[0].mxu0
        %v3487 = vpop.f32.mrb[0].mxu0
        %v3488 = vadd.f32 %v3260, %v3487
        %v3489 = vpop.f32.mrb[0].mxu0
        %3490 = vmatprep.mubr.bf16.mxu0 %v3187
        %3491 = vmatmul.mubr.bf16.gmra.mrb[0].mxu0 %v3186
        %v3492 = vpop.f32.mrb[0].mxu0
        %v3493 = vadd.f32 %v3260, %v3492
        %v3494 = vpop.f32.mrb[0].mxu0
        %v3495 = vpop.f32.mrb[0].mxu0
        %v3496 = vadd.f32 %v3260, %v3495
        %v3497 = vpop.f32.mrb[0].mxu0
        %3498 = vmatprep.mubr.bf16.mxu0 %v3190
        %3499 = vmatmul.mubr.bf16.gmra.mrb[0].mxu0 %v3189
        %v3500 = vpop.f32.mrb[0].mxu0
        %v3501 = vadd.f32 %v3260, %v3500
        %v3502 = vpop.f32.mrb[0].mxu0
        %v3503 = vpop.f32.mrb[0].mxu0
        %v3504 = vadd.f32 %v3260, %v3503
        %v3505 = vpop.f32.mrb[0].mxu0
        %3506 = vmatprep.mubr.bf16.mxu0 %v3193
        %3507 = vmatmul.mubr.bf16.gmra.mrb[0].mxu0 %v3192
        %v3508 = vpop.f32.mrb[0].mxu0
        %v3509 = vadd.f32 %v3260, %v3508
        %v3510 = vpop.f32.mrb[0].mxu0
        %v3511 = vpop.f32.mrb[0].mxu0
        %v3512 = vadd.f32 %v3260, %v3511
        %v3513 = vpop.f32.mrb[0].mxu0
        %3514 = vmatprep.mubr.bf16.mxu0 %v3196
        %3515 = vmatmul.mubr.bf16.gmra.mrb[0].mxu0 %v3195
        %v3516 = vpop.f32.mrb[0].mxu0
        %v3517 = vadd.f32 %v3260, %v3516
        %v3518 = vpop.f32.mrb[0].mxu0
        %v3519 = vpop.f32.mrb[0].mxu0
        %v3520 = vadd.f32 %v3260, %v3519
        %v3521 = vpop.f32.mrb[0].mxu0
        %3522 = vmatprep.mubr.bf16.mxu0 %v3199
        %3523 = vmatmul.mubr.bf16.gmra.mrb[0].mxu0 %v3198
        %v3524 = vpop.f32.mrb[0].mxu0
        %v3525 = vadd.f32 %v3260, %v3524
        %v3526 = vpop.f32.mrb[0].mxu0
        %v3527 = vpop.f32.mrb[0].mxu0
        %v3528 = vadd.f32 %v3260, %v3527
        %v3529 = vpop.f32.mrb[0].mxu0
        %3530 = vmatprep.mubr.bf16.mxu0 %v3202
        %3531 = vmatmul.mubr.bf16.gmra.mrb[0].mxu0 %v3201
        %v3532 = vpop.f32.mrb[0].mxu0
        %v3533 = vadd.f32 %v3260, %v3532
        %v3534 = vpop.f32.mrb[0].mxu0
        %v3535 = vpop.f32.mrb[0].mxu0
        %v3536 = vadd.f32 %v3260, %v3535
        %v3537 = vpop.f32.mrb[0].mxu0
        %3538 = vmatprep.mubr.bf16.mxu0 %v3205
        %3539 = vmatmul.mubr.bf16.gmra.mrb[0].mxu0 %v3204
        %v3540 = vpop.f32.mrb[0].mxu0
        %v3541 = vadd.f32 %v3260, %v3540
        %v3542 = vpop.f32.mrb[0].mxu0
        %v3543 = vpop.f32.mrb[0].mxu0
        %v3544 = vadd.f32 %v3260, %v3543
        %v3545 = vpop.f32.mrb[0].mxu0
        %3546 = vmatprep.mubr.bf16.mxu0 %v3208
        %3547 = vmatmul.mubr.bf16.gmra.mrb[0].mxu0 %v3207
        %v3548 = vpop.f32.mrb[0].mxu0
        %v3549 = vadd.f32 %v3260, %v3548
        %v3550 = vpop.f32.mrb[0].mxu0
        %v3551 = vpop.f32.mrb[0].mxu0
        %v3552 = vadd.f32 %v3260, %v3551
        %v3553 = vpop.f32.mrb[0].mxu0
        %3554 = vmatprep.mubr.bf16.mxu0 %v3211
        %3555 = vmatmul.mubr.bf16.gmra.mrb[0].mxu0 %v3210
        %v3556 = vpop.f32.mrb[0].mxu0
        %v3557 = vadd.f32 %v3260, %v3556
        %v3558 = vpop.f32.mrb[0].mxu0
        %v3559 = vpop.f32.mrb[0].mxu0
        %v3560 = vadd.f32 %v3260, %v3559
        %v3561 = vpop.f32.mrb[0].mxu0
        %3562 = vmatprep.mubr.bf16.mxu0 %v3214
        %3563 = vmatmul.mubr.bf16.gmra.mrb[0].mxu0 %v3213
        %v3564 = vpop.f32.mrb[0].mxu0
        %v3565 = vadd.f32 %v3260, %v3564
        %v3566 = vpop.f32.mrb[0].mxu0
        %v3567 = vpop.f32.mrb[0].mxu0
        %v3568 = vadd.f32 %v3260, %v3567
        %v3569 = vpop.f32.mrb[0].mxu0
        %3570 = vmatprep.mubr.bf16.mxu0 %v3217
        %3571 = vmatmul.mubr.bf16.gmra.mrb[0].mxu0 %v3216
        %v3572 = vpop.f32.mrb[0].mxu0
        %v3573 = vadd.f32 %v3260, %v3572
        %v3574 = vpop.f32.mrb[0].mxu0
        %v3575 = vpop.f32.mrb[0].mxu0
        %v3576 = vadd.f32 %v3260, %v3575
        %v3577 = vpop.f32.mrb[0].mxu0
        %3578 = vdwg.mxu0
        %3579 = vmatprep.subr.bf16.mxu0 0
        %3580 = vmatpush1.bf16.msra.mxu0 %v3350
        %3581 = vmatprep.subr.bf16.mxu0 0
        %3582 = vmatpush1.bf16.msra.mxu0 %v3351
        %3583 = vmatprep.subr.bf16.mxu0 0
        %3584 = vmatpush1.bf16.msra.mxu0 0
        %3585 = vmatprep.subr.bf16.mxu0 0
        %3586 = vmatpush1.bf16.msra.mxu0 0
        %3587 = vmatprep.subr.bf16.mxu0 0
        %3588 = vmatpush1.bf16.msra.mxu0 0
        %3589 = vmatprep.subr.bf16.mxu0 0
        %3590 = vmatpush1.bf16.msra.mxu0 0
        %3591 = vmatprep.subr.bf16.mxu0 0
        %3592 = vmatpush1.bf16.msra.mxu0 0
        %3593 = vmatprep.subr.bf16.mxu0 0
        %3594 = vmatpush1.bf16.msra.mxu0 0
        %3595 = vmatprep.subr.bf16.mxu0 0
        %3596 = vmatpush1.bf16.msra.mxu0 0
        %3597 = vmatprep.subr.bf16.mxu0 0
        %3598 = vmatpush1.bf16.msra.mxu0 0
        %3599 = vmatprep.subr.bf16.mxu0 0
        %3600 = vmatpush1.bf16.msra.mxu0 0
        %3601 = vmatprep.subr.bf16.mxu0 0
        %3602 = vmatpush1.bf16.msra.mxu0 0
        %3603 = vmatprep.subr.bf16.mxu0 0
        %3604 = vmatpush1.bf16.msra.mxu0 0
        %3605 = vmatprep.subr.bf16.mxu0 0
        %3606 = vmatpush1.bf16.msra.mxu0 0
        %3607 = vmatprep.subr.bf16.mxu0 0
        %3608 = vmatpush1.bf16.msra.mxu0 0
        %3609 = vmatprep.subr.bf16.mxu0 0
        %3610 = vmatpush1.bf16.msra.mxu0 0
        %3611 = vmatprep.mubr.bf16.mxu0 0
        %3612 = vmatmul.mubr.bf16.gmra.mrb[0].mxu0 %v3371
        %v3613 = vpop.f32.mrb[0].mxu0
        %v3614 = vadd.f32 %v3453, %v3613
        %v3615 = vpop.f32.mrb[0].mxu0
        %v3616 = vpop.f32.mrb[0].mxu0
        %v3617 = vadd.f32 %v3456, %v3616
        %v3618 = vpop.f32.mrb[0].mxu0
        %3619 = vmatprep.mubr.bf16.mxu0 0
        %3620 = vmatmul.mubr.bf16.gmra.mrb[0].mxu0 %v3374
        %v3621 = vpop.f32.mrb[0].mxu0
        %v3622 = vadd.f32 %v3461, %v3621
        %v3623 = vpop.f32.mrb[0].mxu0
        %v3624 = vpop.f32.mrb[0].mxu0
        %v3625 = vadd.f32 %v3464, %v3624
        %v3626 = vpop.f32.mrb[0].mxu0
        %3627 = vmatprep.mubr.bf16.mxu0 0
        %3628 = vmatmul.mubr.bf16.gmra.mrb[0].mxu0 %v3377
        %v3629 = vpop.f32.mrb[0].mxu0
        %v3630 = vadd.f32 %v3469, %v3629
        %v3631 = vpop.f32.mrb[0].mxu0
        %v3632 = vpop.f32.mrb[0].mxu0
        %v3633 = vadd.f32 %v3472, %v3632
        %v3634 = vpop.f32.mrb[0].mxu0
        %3635 = vmatprep.mubr.bf16.mxu0 0
        %3636 = vmatmul.mubr.bf16.gmra.mrb[0].mxu0 %v3380
        %v3637 = vpop.f32.mrb[0].mxu0
        %v3638 = vadd.f32 %v3477, %v3637
        %v3639 = vpop.f32.mrb[0].mxu0
        %v3640 = vpop.f32.mrb[0].mxu0
        %v3641 = vadd.f32 %v3480, %v3640
        %v3642 = vpop.f32.mrb[0].mxu0
        %3643 = vmatprep.mubr.bf16.mxu0 0
        %3644 = vmatmul.mubr.bf16.gmra.mrb[0].mxu0 %v3383
        %v3645 = vpop.f32.mrb[0].mxu0
        %v3646 = vadd.f32 %v3485, %v3645
        %v3647 = vpop.f32.mrb[0].mxu0
        %v3648 = vpop.f32.mrb[0].mxu0
        %v3649 = vadd.f32 %v3488, %v3648
        %v3650 = vpop.f32.mrb[0].mxu0
        %3651 = vmatprep.mubr.bf16.mxu0 0
        %3652 = vmatmul.mubr.bf16.gmra.mrb[0].mxu0 %v3386
        %v3653 = vpop.f32.mrb[0].mxu0
        %v3654 = vadd.f32 %v3493, %v3653
        %v3655 = vpop.f32.mrb[0].mxu0
        %v3656 = vpop.f32.mrb[0].mxu0
        %v3657 = vadd.f32 %v3496, %v3656
        %v3658 = vpop.f32.mrb[0].mxu0
        %3659 = vmatprep.mubr.bf16.mxu0 0
        %3660 = vmatmul.mubr.bf16.gmra.mrb[0].mxu0 %v3389
        %v3661 = vpop.f32.mrb[0].mxu0
        %v3662 = vadd.f32 %v3501, %v3661
        %v3663 = vpop.f32.mrb[0].mxu0
        %v3664 = vpop.f32.mrb[0].mxu0
        %v3665 = vadd.f32 %v3504, %v3664
        %v3666 = vpop.f32.mrb[0].mxu0
        %3667 = vmatprep.mubr.bf16.mxu0 0
        %3668 = vmatmul.mubr.bf16.gmra.mrb[0].mxu0 %v3392
        %v3669 = vpop.f32.mrb[0].mxu0
        %v3670 = vadd.f32 %v3509, %v3669
        %v3671 = vpop.f32.mrb[0].mxu0
        %v3672 = vpop.f32.mrb[0].mxu0
        %v3673 = vadd.f32 %v3512, %v3672
        %v3674 = vpop.f32.mrb[0].mxu0
        %3675 = vmatprep.mubr.bf16.mxu0 0
        %3676 = vmatmul.mubr.bf16.gmra.mrb[0].mxu0 %v3395
        %v3677 = vpop.f32.mrb[0].mxu0
        %v3678 = vadd.f32 %v3517, %v3677
        %v3679 = vpop.f32.mrb[0].mxu0
        %v3680 = vpop.f32.mrb[0].mxu0
        %v3681 = vadd.f32 %v3520, %v3680
        %v3682 = vpop.f32.mrb[0].mxu0
        %3683 = vmatprep.mubr.bf16.mxu0 0
        %3684 = vmatmul.mubr.bf16.gmra.mrb[0].mxu0 %v3398
        %v3685 = vpop.f32.mrb[0].mxu0
        %v3686 = vadd.f32 %v3525, %v3685
        %v3687 = vpop.f32.mrb[0].mxu0
        %v3688 = vpop.f32.mrb[0].mxu0
        %v3689 = vadd.f32 %v3528, %v3688
        %v3690 = vpop.f32.mrb[0].mxu0
        %3691 = vmatprep.mubr.bf16.mxu0 0
        %3692 = vmatmul.mubr.bf16.gmra.mrb[0].mxu0 %v3401
        %v3693 = vpop.f32.mrb[0].mxu0
        %v3694 = vadd.f32 %v3533, %v3693
        %v3695 = vpop.f32.mrb[0].mxu0
        %v3696 = vpop.f32.mrb[0].mxu0
        %v3697 = vadd.f32 %v3536, %v3696
        %v3698 = vpop.f32.mrb[0].mxu0
        %3699 = vmatprep.mubr.bf16.mxu0 0
        %3700 = vmatmul.mubr.bf16.gmra.mrb[0].mxu0 %v3404
        %v3701 = vpop.f32.mrb[0].mxu0
        %v3702 = vadd.f32 %v3541, %v3701
        %v3703 = vpop.f32.mrb[0].mxu0
        %v3704 = vpop.f32.mrb[0].mxu0
        %v3705 = vadd.f32 %v3544, %v3704
        %v3706 = vpop.f32.mrb[0].mxu0
        %3707 = vmatprep.mubr.bf16.mxu0 0
        %3708 = vmatmul.mubr.bf16.gmra.mrb[0].mxu0 %v3407
        %v3709 = vpop.f32.mrb[0].mxu0
        %v3710 = vadd.f32 %v3549, %v3709
        %v3711 = vpop.f32.mrb[0].mxu0
        %v3712 = vpop.f32.mrb[0].mxu0
        %v3713 = vadd.f32 %v3552, %v3712
        %v3714 = vpop.f32.mrb[0].mxu0
        %3715 = vmatprep.mubr.bf16.mxu0 0
        %3716 = vmatmul.mubr.bf16.gmra.mrb[0].mxu0 %v3410
        %v3717 = vpop.f32.mrb[0].mxu0
        %v3718 = vadd.f32 %v3557, %v3717
        %v3719 = vpop.f32.mrb[0].mxu0
        %v3720 = vpop.f32.mrb[0].mxu0
        %v3721 = vadd.f32 %v3560, %v3720
        %v3722 = vpop.f32.mrb[0].mxu0
        %3723 = vmatprep.mubr.bf16.mxu0 0
        %3724 = vmatmul.mubr.bf16.gmra.mrb[0].mxu0 %v3413
        %v3725 = vpop.f32.mrb[0].mxu0
        %v3726 = vadd.f32 %v3565, %v3725
        %v3727 = vpop.f32.mrb[0].mxu0
        %v3728 = vpop.f32.mrb[0].mxu0
        %v3729 = vadd.f32 %v3568, %v3728
        %v3730 = vpop.f32.mrb[0].mxu0
        %3731 = vmatprep.mubr.bf16.mxu0 0
        %3732 = vmatmul.mubr.bf16.gmra.mrb[0].mxu0 %v3416
        %v3733 = vpop.f32.mrb[0].mxu0
        %v3734 = vadd.f32 %v3573, %v3733
        %v3735 = vpop.f32.mrb[0].mxu0
        %v3736 = vpop.f32.mrb[0].mxu0
        %v3737 = vadd.f32 %v3576, %v3736
        %v3738 = vpop.f32.mrb[0].mxu0
        %3739 = vdwg.mxu0
        %3740 = vst [vmem:[%s255] sm:$0xff] %v3614
        %3741 = vst [vmem:[%s255 + $0x8] sm:$0xff] %v3617
        %3742 = vst [vmem:[%s255 + $0x10] sm:$0xff] %v3622
        %3743 = vst [vmem:[%s255 + $0x18] sm:$0xff] %v3625
        %3744 = vst [vmem:[%s255 + $0x20] sm:$0xff] %v3630
        %3745 = vst [vmem:[%s255 + $0x28] sm:$0xff] %v3633
        %3746 = vst [vmem:[%s255 + $0x30] sm:$0xff] %v3638
        %3747 = vst [vmem:[%s255 + $0x38] sm:$0xff] %v3641
        %3748 = vst [vmem:[%s255 + $0x40] sm:$0xff] %v3646
        %3749 = vst [vmem:[%s255 + $0x48] sm:$0xff] %v3649
        %3750 = vst [vmem:[%s255 + $0x50] sm:$0xff] %v3654
        %3751 = vst [vmem:[%s255 + $0x58] sm:$0xff] %v3657
        %3752 = vst [vmem:[%s255 + $0x60] sm:$0xff] %v3662
        %3753 = vst [vmem:[%s255 + $0x68] sm:$0xff] %v3665
        %3754 = vst [vmem:[%s255 + $0x70] sm:$0xff] %v3670
        %3755 = vst [vmem:[%s255 + $0x78] sm:$0xff] %v3673
        %3756 = vst [vmem:[%s255 + $0x80] sm:$0xff] %v3678
        %3757 = vst [vmem:[%s255 + $0x88] sm:$0xff] %v3681
        %3758 = vst [vmem:[%s255 + $0x90] sm:$0xff] %v3686
        %3759 = vst [vmem:[%s255 + $0x98] sm:$0xff] %v3689
        %3760 = vst [vmem:[%s255 + $0xa0] sm:$0xff] %v3694
        %3761 = vst [vmem:[%s255 + $0xa8] sm:$0xff] %v3697
        %3762 = vst [vmem:[%s255 + $0xb0] sm:$0xff] %v3702
        %3763 = vst [vmem:[%s255 + $0xb8] sm:$0xff] %v3705
        %3764 = vst [vmem:[%s255 + $0xc0] sm:$0xff] %v3710
        %3765 = vst [vmem:[%s255 + $0xc8] sm:$0xff] %v3713
        %3766 = vst [vmem:[%s255 + $0xd0] sm:$0xff] %v3718
        %3767 = vst [vmem:[%s255 + $0xd8] sm:$0xff] %v3721
        %3768 = vst [vmem:[%s255 + $0xe0] sm:$0xff] %v3726
        %3769 = vst [vmem:[%s255 + $0xe8] sm:$0xff] %v3729
        %3770 = vst [vmem:[%s255 + $0xf0] sm:$0xff] %v3734
        %3771 = vst [vmem:[%s255 + $0xf8] sm:$0xff] %v3737
        %s3772 = scalar_lea.vmem [#allocation6], 144
        %v3773 = vld [vmem:[%s3772] sm:$0xf]
        %v3774 = vld [vmem:[%s3772 + $0x4] sm:$0xf]
        %v3775 = vld [vmem:[%s3772 + $0x8] sm:$0xf]
        %v3776 = vld [vmem:[%s3772 + $0xc] sm:$0xf]
        %v3777 = vld [vmem:[%s3772 + $0x10] sm:$0xf]
        %v3778 = vld [vmem:[%s3772 + $0x14] sm:$0xf]
        %v3779 = vld [vmem:[%s3772 + $0x18] sm:$0xf]
        %v3780 = vld [vmem:[%s3772 + $0x1c] sm:$0xf]
        %v3781 = vld [vmem:[%s3772 + $0x20] sm:$0xf]
        %v3782 = vld [vmem:[%s3772 + $0x24] sm:$0xf]
        %v3783 = vld [vmem:[%s3772 + $0x28] sm:$0xf]
        %v3784 = vld [vmem:[%s3772 + $0x2c] sm:$0xf]
        %v3785 = vld [vmem:[%s3772 + $0x30] sm:$0xf]
        %v3786 = vld [vmem:[%s3772 + $0x34] sm:$0xf]
        %v3787 = vld [vmem:[%s3772 + $0x38] sm:$0xf]
        %v3788 = vld [vmem:[%s3772 + $0x3c] sm:$0xf]
        %v3789 = vld [vmem:[%s3772 + $0x40] sm:$0xf]
        %v3790 = vld [vmem:[%s3772 + $0x44] sm:$0xf]
        %v3791 = vld [vmem:[%s3772 + $0x48] sm:$0xf]
        %v3792 = vld [vmem:[%s3772 + $0x4c] sm:$0xf]
        %v3793 = vld [vmem:[%s3772 + $0x50] sm:$0xf]
        %v3794 = vld [vmem:[%s3772 + $0x54] sm:$0xf]
        %v3795 = vld [vmem:[%s3772 + $0x58] sm:$0xf]
        %v3796 = vld [vmem:[%s3772 + $0x5c] sm:$0xf]
        %v3797 = vld [vmem:[%s3772 + $0x60] sm:$0xf]
        %v3798 = vld [vmem:[%s3772 + $0x64] sm:$0xf]
        %v3799 = vld [vmem:[%s3772 + $0x68] sm:$0xf]
        %v3800 = vld [vmem:[%s3772 + $0x6c] sm:$0xf]
        %v3801 = vld [vmem:[%s3772 + $0x70] sm:$0xf]
        %v3802 = vld [vmem:[%s3772 + $0x74] sm:$0xf]
        %v3803 = vld [vmem:[%s3772 + $0x78] sm:$0xf]
        %v3804 = vld [vmem:[%s3772 + $0x7c] sm:$0xf]
        %v3805 = vld [vmem:[%s3772 + $0x80] sm:$0xf]
        %v3806 = vld [vmem:[%s3772 + $0x84] sm:$0xf]
        %v3807 = vld [vmem:[%s3772 + $0x88] sm:$0xf]
        %v3808 = vld [vmem:[%s3772 + $0x8c] sm:$0xf]
        %s3809 = scalar_lea.vmem [#allocation8], 1
        %v3810 = vld [vmem:[%s3809] sm:$0x1]
        %v3812 = vlaneseq
        %v3813 = vshrl.u32 %v3812, 7
        %v3814 = vsub.s32 0, %v3813
        %v3815 = vrot.slane %v3810, %v3814
        %v3853 = vunpack.c.l.b16 %v3773
        %v3854 = vunpack.c.l.b16 %v3774
        %v3855 = vunpack.c.l.b16 %v3775
        %v3856 = vunpack.c.l.b16 %v3776
        %v3857 = vunpack.c.l.b16 %v3777
        %v3858 = vunpack.c.l.b16 %v3778
        %v3859 = vunpack.c.l.b16 %v3779
        %v3860 = vunpack.c.l.b16 %v3780
        %v3861 = vunpack.c.l.b16 %v3781
        %v3862 = vunpack.c.l.b16 %v3782
        %v3863 = vunpack.c.l.b16 %v3783
        %v3864 = vunpack.c.l.b16 %v3784
        %v3865 = vunpack.c.l.b16 %v3785
        %v3866 = vunpack.c.l.b16 %v3786
        %v3867 = vunpack.c.l.b16 %v3787
        %v3868 = vunpack.c.l.b16 %v3788
        %v3869 = vunpack.c.l.b16 %v3789
        %v3870 = vunpack.c.l.b16 %v3790
        %v3871 = vunpack.c.l.b16 %v3791
        %v3872 = vunpack.c.l.b16 %v3792
        %v3873 = vunpack.c.l.b16 %v3793
        %v3874 = vunpack.c.l.b16 %v3794
        %v3875 = vunpack.c.l.b16 %v3795
        %v3876 = vunpack.c.l.b16 %v3796
        %v3877 = vunpack.c.l.b16 %v3797
        %v3878 = vunpack.c.l.b16 %v3798
        %v3879 = vunpack.c.l.b16 %v3799
        %v3880 = vunpack.c.l.b16 %v3800
        %v3881 = vunpack.c.l.b16 %v3801
        %v3882 = vunpack.c.l.b16 %v3802
        %v3883 = vunpack.c.l.b16 %v3803
        %v3884 = vunpack.c.l.b16 %v3804
        %v3885 = vunpack.c.l.b16 %v3805
        %v3886 = vunpack.c.l.b16 %v3806
        %v3887 = vunpack.c.l.b16 %v3807
        %v3888 = vunpack.c.l.b16 %v3808
        %v3889 = vpack.c.b16 %v3854, %v3853
        %v3890 = vpack.c.b16 %v3856, %v3855
        %v3891 = vpack.c.b16 %v3858, %v3857
        %v3892 = vpack.c.b16 %v3860, %v3859
        %v3893 = vpack.c.b16 %v3862, %v3861
        %v3894 = vpack.c.b16 %v3864, %v3863
        %v3895 = vpack.c.b16 %v3866, %v3865
        %v3896 = vpack.c.b16 %v3868, %v3867
        %v3897 = vpack.c.b16 %v3870, %v3869
        %v3898 = vpack.c.b16 %v3872, %v3871
        %v3899 = vpack.c.b16 %v3874, %v3873
        %v3900 = vpack.c.b16 %v3876, %v3875
        %v3901 = vpack.c.b16 %v3878, %v3877
        %v3902 = vpack.c.b16 %v3880, %v3879
        %v3903 = vpack.c.b16 %v3882, %v3881
        %v3904 = vpack.c.b16 %v3884, %v3883
        %v3905 = vpack.c.b16 %v3886, %v3885
        %v3906 = vpack.c.b16 %v3888, %v3887
        %3925 = vmatprep.subr.bf16.mxu0 0
        %3926 = vmatpush1.bf16.msra.mxu0 %v3889
        %3927 = vmatprep.subr.bf16.mxu0 0
        %3928 = vmatpush1.bf16.msra.mxu0 %v3890
        %3929 = vmatprep.subr.bf16.mxu0 0
        %3930 = vmatpush1.bf16.msra.mxu0 %v3891
        %3931 = vmatprep.subr.bf16.mxu0 0
        %3932 = vmatpush1.bf16.msra.mxu0 %v3892
        %3933 = vmatprep.subr.bf16.mxu0 0
        %3934 = vmatpush1.bf16.msra.mxu0 %v3893
        %3935 = vmatprep.subr.bf16.mxu0 0
        %3936 = vmatpush1.bf16.msra.mxu0 %v3894
        %3937 = vmatprep.subr.bf16.mxu0 0
        %3938 = vmatpush1.bf16.msra.mxu0 %v3895
        %3939 = vmatprep.subr.bf16.mxu0 0
        %3940 = vmatpush1.bf16.msra.mxu0 %v3896
        %3941 = vmatprep.subr.bf16.mxu0 0
        %3942 = vmatpush1.bf16.msra.mxu0 %v3897
        %3943 = vmatprep.subr.bf16.mxu0 0
        %3944 = vmatpush1.bf16.msra.mxu0 %v3898
        %3945 = vmatprep.subr.bf16.mxu0 0
        %3946 = vmatpush1.bf16.msra.mxu0 %v3899
        %3947 = vmatprep.subr.bf16.mxu0 0
        %3948 = vmatpush1.bf16.msra.mxu0 %v3900
        %3949 = vmatprep.subr.bf16.mxu0 0
        %3950 = vmatpush1.bf16.msra.mxu0 %v3901
        %3951 = vmatprep.subr.bf16.mxu0 0
        %3952 = vmatpush1.bf16.msra.mxu0 %v3902
        %3953 = vmatprep.subr.bf16.mxu0 0
        %3954 = vmatpush1.bf16.msra.mxu0 %v3903
        %3955 = vmatprep.subr.bf16.mxu0 0
        %3956 = vmatpush1.bf16.msra.mxu0 %v3904
        %3957 = vmatprep.mubr.bf16.mxu0 %v3172
        %3958 = vmatmul.mubr.bf16.gmra.mrb[0].mxu0 %v3171
        %v3959 = vpop.f32.mrb[0].mxu0
        %v3960 = vadd.f32 %v3815, %v3959
        %v3961 = vpop.f32.mrb[0].mxu0
        %v3962 = vpop.f32.mrb[0].mxu0
        %v3963 = vadd.f32 %v3815, %v3962
        %v3964 = vpop.f32.mrb[0].mxu0
        %3965 = vmatprep.mubr.bf16.mxu0 %v3175
        %3966 = vmatmul.mubr.bf16.gmra.mrb[0].mxu0 %v3174
        %v3967 = vpop.f32.mrb[0].mxu0
        %v3968 = vadd.f32 %v3815, %v3967
        %v3969 = vpop.f32.mrb[0].mxu0
        %v3970 = vpop.f32.mrb[0].mxu0
        %v3971 = vadd.f32 %v3815, %v3970
        %v3972 = vpop.f32.mrb[0].mxu0
        %3973 = vmatprep.mubr.bf16.mxu0 %v3178
        %3974 = vmatmul.mubr.bf16.gmra.mrb[0].mxu0 %v3177
        %v3975 = vpop.f32.mrb[0].mxu0
        %v3976 = vadd.f32 %v3815, %v3975
        %v3977 = vpop.f32.mrb[0].mxu0
        %v3978 = vpop.f32.mrb[0].mxu0
        %v3979 = vadd.f32 %v3815, %v3978
        %v3980 = vpop.f32.mrb[0].mxu0
        %3981 = vmatprep.mubr.bf16.mxu0 %v3181
        %3982 = vmatmul.mubr.bf16.gmra.mrb[0].mxu0 %v3180
        %v3983 = vpop.f32.mrb[0].mxu0
        %v3984 = vadd.f32 %v3815, %v3983
        %v3985 = vpop.f32.mrb[0].mxu0
        %v3986 = vpop.f32.mrb[0].mxu0
        %v3987 = vadd.f32 %v3815, %v3986
        %v3988 = vpop.f32.mrb[0].mxu0
        %3989 = vmatprep.mubr.bf16.mxu0 %v3184
        %3990 = vmatmul.mubr.bf16.gmra.mrb[0].mxu0 %v3183
        %v3991 = vpop.f32.mrb[0].mxu0
        %v3992 = vadd.f32 %v3815, %v3991
        %v3993 = vpop.f32.mrb[0].mxu0
        %v3994 = vpop.f32.mrb[0].mxu0
        %v3995 = vadd.f32 %v3815, %v3994
        %v3996 = vpop.f32.mrb[0].mxu0
        %3997 = vmatprep.mubr.bf16.mxu0 %v3187
        %3998 = vmatmul.mubr.bf16.gmra.mrb[0].mxu0 %v3186
        %v3999 = vpop.f32.mrb[0].mxu0
        %v4000 = vadd.f32 %v3815, %v3999
        %v4001 = vpop.f32.mrb[0].mxu0
        %v4002 = vpop.f32.mrb[0].mxu0
        %v4003 = vadd.f32 %v3815, %v4002
        %v4004 = vpop.f32.mrb[0].mxu0
        %4005 = vmatprep.mubr.bf16.mxu0 %v3190
        %4006 = vmatmul.mubr.bf16.gmra.mrb[0].mxu0 %v3189
        %v4007 = vpop.f32.mrb[0].mxu0
        %v4008 = vadd.f32 %v3815, %v4007
        %v4009 = vpop.f32.mrb[0].mxu0
        %v4010 = vpop.f32.mrb[0].mxu0
        %v4011 = vadd.f32 %v3815, %v4010
        %v4012 = vpop.f32.mrb[0].mxu0
        %4013 = vmatprep.mubr.bf16.mxu0 %v3193
        %4014 = vmatmul.mubr.bf16.gmra.mrb[0].mxu0 %v3192
        %v4015 = vpop.f32.mrb[0].mxu0
        %v4016 = vadd.f32 %v3815, %v4015
        %v4017 = vpop.f32.mrb[0].mxu0
        %v4018 = vpop.f32.mrb[0].mxu0
        %v4019 = vadd.f32 %v3815, %v4018
        %v4020 = vpop.f32.mrb[0].mxu0
        %4021 = vmatprep.mubr.bf16.mxu0 %v3196
        %4022 = vmatmul.mubr.bf16.gmra.mrb[0].mxu0 %v3195
        %v4023 = vpop.f32.mrb[0].mxu0
        %v4024 = vadd.f32 %v3815, %v4023
        %v4025 = vpop.f32.mrb[0].mxu0
        %v4026 = vpop.f32.mrb[0].mxu0
        %v4027 = vadd.f32 %v3815, %v4026
        %v4028 = vpop.f32.mrb[0].mxu0
        %4029 = vmatprep.mubr.bf16.mxu0 %v3199
        %4030 = vmatmul.mubr.bf16.gmra.mrb[0].mxu0 %v3198
        %v4031 = vpop.f32.mrb[0].mxu0
        %v4032 = vadd.f32 %v3815, %v4031
        %v4033 = vpop.f32.mrb[0].mxu0
        %v4034 = vpop.f32.mrb[0].mxu0
        %v4035 = vadd.f32 %v3815, %v4034
        %v4036 = vpop.f32.mrb[0].mxu0
        %4037 = vmatprep.mubr.bf16.mxu0 %v3202
        %4038 = vmatmul.mubr.bf16.gmra.mrb[0].mxu0 %v3201
        %v4039 = vpop.f32.mrb[0].mxu0
        %v4040 = vadd.f32 %v3815, %v4039
        %v4041 = vpop.f32.mrb[0].mxu0
        %v4042 = vpop.f32.mrb[0].mxu0
        %v4043 = vadd.f32 %v3815, %v4042
        %v4044 = vpop.f32.mrb[0].mxu0
        %4045 = vmatprep.mubr.bf16.mxu0 %v3205
        %4046 = vmatmul.mubr.bf16.gmra.mrb[0].mxu0 %v3204
        %v4047 = vpop.f32.mrb[0].mxu0
        %v4048 = vadd.f32 %v3815, %v4047
        %v4049 = vpop.f32.mrb[0].mxu0
        %v4050 = vpop.f32.mrb[0].mxu0
        %v4051 = vadd.f32 %v3815, %v4050
        %v4052 = vpop.f32.mrb[0].mxu0
        %4053 = vmatprep.mubr.bf16.mxu0 %v3208
        %4054 = vmatmul.mubr.bf16.gmra.mrb[0].mxu0 %v3207
        %v4055 = vpop.f32.mrb[0].mxu0
        %v4056 = vadd.f32 %v3815, %v4055
        %v4057 = vpop.f32.mrb[0].mxu0
        %v4058 = vpop.f32.mrb[0].mxu0
        %v4059 = vadd.f32 %v3815, %v4058
        %v4060 = vpop.f32.mrb[0].mxu0
        %4061 = vmatprep.mubr.bf16.mxu0 %v3211
        %4062 = vmatmul.mubr.bf16.gmra.mrb[0].mxu0 %v3210
        %v4063 = vpop.f32.mrb[0].mxu0
        %v4064 = vadd.f32 %v3815, %v4063
        %v4065 = vpop.f32.mrb[0].mxu0
        %v4066 = vpop.f32.mrb[0].mxu0
        %v4067 = vadd.f32 %v3815, %v4066
        %v4068 = vpop.f32.mrb[0].mxu0
        %4069 = vmatprep.mubr.bf16.mxu0 %v3214
        %4070 = vmatmul.mubr.bf16.gmra.mrb[0].mxu0 %v3213
        %v4071 = vpop.f32.mrb[0].mxu0
        %v4072 = vadd.f32 %v3815, %v4071
        %v4073 = vpop.f32.mrb[0].mxu0
        %v4074 = vpop.f32.mrb[0].mxu0
        %v4075 = vadd.f32 %v3815, %v4074
        %v4076 = vpop.f32.mrb[0].mxu0
        %4077 = vmatprep.mubr.bf16.mxu0 %v3217
        %4078 = vmatmul.mubr.bf16.gmra.mrb[0].mxu0 %v3216
        %v4079 = vpop.f32.mrb[0].mxu0
        %v4080 = vadd.f32 %v3815, %v4079
        %v4081 = vpop.f32.mrb[0].mxu0
        %v4082 = vpop.f32.mrb[0].mxu0
        %v4083 = vadd.f32 %v3815, %v4082
        %v4084 = vpop.f32.mrb[0].mxu0
        %4085 = vdwg.mxu0
        %4086 = vmatprep.subr.bf16.mxu0 0
        %4087 = vmatpush1.bf16.msra.mxu0 %v3905
        %4088 = vmatprep.subr.bf16.mxu0 0
        %4089 = vmatpush1.bf16.msra.mxu0 %v3906
        %4090 = vmatprep.subr.bf16.mxu0 0
        %4091 = vmatpush1.bf16.msra.mxu0 0
        %4092 = vmatprep.subr.bf16.mxu0 0
        %4093 = vmatpush1.bf16.msra.mxu0 0
        %4094 = vmatprep.subr.bf16.mxu0 0
        %4095 = vmatpush1.bf16.msra.mxu0 0
        %4096 = vmatprep.subr.bf16.mxu0 0
        %4097 = vmatpush1.bf16.msra.mxu0 0
        %4098 = vmatprep.subr.bf16.mxu0 0
        %4099 = vmatpush1.bf16.msra.mxu0 0
        %4100 = vmatprep.subr.bf16.mxu0 0
        %4101 = vmatpush1.bf16.msra.mxu0 0
        %4102 = vmatprep.subr.bf16.mxu0 0
        %4103 = vmatpush1.bf16.msra.mxu0 0
        %4104 = vmatprep.subr.bf16.mxu0 0
        %4105 = vmatpush1.bf16.msra.mxu0 0
        %4106 = vmatprep.subr.bf16.mxu0 0
        %4107 = vmatpush1.bf16.msra.mxu0 0
        %4108 = vmatprep.subr.bf16.mxu0 0
        %4109 = vmatpush1.bf16.msra.mxu0 0
        %4110 = vmatprep.subr.bf16.mxu0 0
        %4111 = vmatpush1.bf16.msra.mxu0 0
        %4112 = vmatprep.subr.bf16.mxu0 0
        %4113 = vmatpush1.bf16.msra.mxu0 0
        %4114 = vmatprep.subr.bf16.mxu0 0
        %4115 = vmatpush1.bf16.msra.mxu0 0
        %4116 = vmatprep.subr.bf16.mxu0 0
        %4117 = vmatpush1.bf16.msra.mxu0 0
        %4118 = vmatprep.mubr.bf16.mxu0 0
        %4119 = vmatmul.mubr.bf16.gmra.mrb[0].mxu0 %v3371
        %v4120 = vpop.f32.mrb[0].mxu0
        %v4121 = vadd.f32 %v3960, %v4120
        %v4122 = vpop.f32.mrb[0].mxu0
        %v4123 = vpop.f32.mrb[0].mxu0
        %v4124 = vadd.f32 %v3963, %v4123
        %v4125 = vpop.f32.mrb[0].mxu0
        %4126 = vmatprep.mubr.bf16.mxu0 0
        %4127 = vmatmul.mubr.bf16.gmra.mrb[0].mxu0 %v3374
        %v4128 = vpop.f32.mrb[0].mxu0
        %v4129 = vadd.f32 %v3968, %v4128
        %v4130 = vpop.f32.mrb[0].mxu0
        %v4131 = vpop.f32.mrb[0].mxu0
        %v4132 = vadd.f32 %v3971, %v4131
        %v4133 = vpop.f32.mrb[0].mxu0
        %4134 = vmatprep.mubr.bf16.mxu0 0
        %4135 = vmatmul.mubr.bf16.gmra.mrb[0].mxu0 %v3377
        %v4136 = vpop.f32.mrb[0].mxu0
        %v4137 = vadd.f32 %v3976, %v4136
        %v4138 = vpop.f32.mrb[0].mxu0
        %v4139 = vpop.f32.mrb[0].mxu0
        %v4140 = vadd.f32 %v3979, %v4139
        %v4141 = vpop.f32.mrb[0].mxu0
        %4142 = vmatprep.mubr.bf16.mxu0 0
        %4143 = vmatmul.mubr.bf16.gmra.mrb[0].mxu0 %v3380
        %v4144 = vpop.f32.mrb[0].mxu0
        %v4145 = vadd.f32 %v3984, %v4144
        %v4146 = vpop.f32.mrb[0].mxu0
        %v4147 = vpop.f32.mrb[0].mxu0
        %v4148 = vadd.f32 %v3987, %v4147
        %v4149 = vpop.f32.mrb[0].mxu0
        %4150 = vmatprep.mubr.bf16.mxu0 0
        %4151 = vmatmul.mubr.bf16.gmra.mrb[0].mxu0 %v3383
        %v4152 = vpop.f32.mrb[0].mxu0
        %v4153 = vadd.f32 %v3992, %v4152
        %v4154 = vpop.f32.mrb[0].mxu0
        %v4155 = vpop.f32.mrb[0].mxu0
        %v4156 = vadd.f32 %v3995, %v4155
        %v4157 = vpop.f32.mrb[0].mxu0
        %4158 = vmatprep.mubr.bf16.mxu0 0
        %4159 = vmatmul.mubr.bf16.gmra.mrb[0].mxu0 %v3386
        %v4160 = vpop.f32.mrb[0].mxu0
        %v4161 = vadd.f32 %v4000, %v4160
        %v4162 = vpop.f32.mrb[0].mxu0
        %v4163 = vpop.f32.mrb[0].mxu0
        %v4164 = vadd.f32 %v4003, %v4163
        %v4165 = vpop.f32.mrb[0].mxu0
        %4166 = vmatprep.mubr.bf16.mxu0 0
        %4167 = vmatmul.mubr.bf16.gmra.mrb[0].mxu0 %v3389
        %v4168 = vpop.f32.mrb[0].mxu0
        %v4169 = vadd.f32 %v4008, %v4168
        %v4170 = vpop.f32.mrb[0].mxu0
        %v4171 = vpop.f32.mrb[0].mxu0
        %v4172 = vadd.f32 %v4011, %v4171
        %v4173 = vpop.f32.mrb[0].mxu0
        %4174 = vmatprep.mubr.bf16.mxu0 0
        %4175 = vmatmul.mubr.bf16.gmra.mrb[0].mxu0 %v3392
        %v4176 = vpop.f32.mrb[0].mxu0
        %v4177 = vadd.f32 %v4016, %v4176
        %v4178 = vpop.f32.mrb[0].mxu0
        %v4179 = vpop.f32.mrb[0].mxu0
        %v4180 = vadd.f32 %v4019, %v4179
        %v4181 = vpop.f32.mrb[0].mxu0
        %4182 = vmatprep.mubr.bf16.mxu0 0
        %4183 = vmatmul.mubr.bf16.gmra.mrb[0].mxu0 %v3395
        %v4184 = vpop.f32.mrb[0].mxu0
        %v4185 = vadd.f32 %v4024, %v4184
        %v4186 = vpop.f32.mrb[0].mxu0
        %v4187 = vpop.f32.mrb[0].mxu0
        %v4188 = vadd.f32 %v4027, %v4187
        %v4189 = vpop.f32.mrb[0].mxu0
        %4190 = vmatprep.mubr.bf16.mxu0 0
        %4191 = vmatmul.mubr.bf16.gmra.mrb[0].mxu0 %v3398
        %v4192 = vpop.f32.mrb[0].mxu0
        %v4193 = vadd.f32 %v4032, %v4192
        %v4194 = vpop.f32.mrb[0].mxu0
        %v4195 = vpop.f32.mrb[0].mxu0
        %v4196 = vadd.f32 %v4035, %v4195
        %v4197 = vpop.f32.mrb[0].mxu0
        %4198 = vmatprep.mubr.bf16.mxu0 0
        %4199 = vmatmul.mubr.bf16.gmra.mrb[0].mxu0 %v3401
        %v4200 = vpop.f32.mrb[0].mxu0
        %v4201 = vadd.f32 %v4040, %v4200
        %v4202 = vpop.f32.mrb[0].mxu0
        %v4203 = vpop.f32.mrb[0].mxu0
        %v4204 = vadd.f32 %v4043, %v4203
        %v4205 = vpop.f32.mrb[0].mxu0
        %4206 = vmatprep.mubr.bf16.mxu0 0
        %4207 = vmatmul.mubr.bf16.gmra.mrb[0].mxu0 %v3404
        %v4208 = vpop.f32.mrb[0].mxu0
        %v4209 = vadd.f32 %v4048, %v4208
        %v4210 = vpop.f32.mrb[0].mxu0
        %v4211 = vpop.f32.mrb[0].mxu0
        %v4212 = vadd.f32 %v4051, %v4211
        %v4213 = vpop.f32.mrb[0].mxu0
        %4214 = vmatprep.mubr.bf16.mxu0 0
        %4215 = vmatmul.mubr.bf16.gmra.mrb[0].mxu0 %v3407
        %v4216 = vpop.f32.mrb[0].mxu0
        %v4217 = vadd.f32 %v4056, %v4216
        %v4218 = vpop.f32.mrb[0].mxu0
        %v4219 = vpop.f32.mrb[0].mxu0
        %v4220 = vadd.f32 %v4059, %v4219
        %v4221 = vpop.f32.mrb[0].mxu0
        %4222 = vmatprep.mubr.bf16.mxu0 0
        %4223 = vmatmul.mubr.bf16.gmra.mrb[0].mxu0 %v3410
        %v4224 = vpop.f32.mrb[0].mxu0
        %v4225 = vadd.f32 %v4064, %v4224
        %v4226 = vpop.f32.mrb[0].mxu0
        %v4227 = vpop.f32.mrb[0].mxu0
        %v4228 = vadd.f32 %v4067, %v4227
        %v4229 = vpop.f32.mrb[0].mxu0
        %4230 = vmatprep.mubr.bf16.mxu0 0
        %4231 = vmatmul.mubr.bf16.gmra.mrb[0].mxu0 %v3413
        %v4232 = vpop.f32.mrb[0].mxu0
        %v4233 = vadd.f32 %v4072, %v4232
        %v4234 = vpop.f32.mrb[0].mxu0
        %v4235 = vpop.f32.mrb[0].mxu0
        %v4236 = vadd.f32 %v4075, %v4235
        %v4237 = vpop.f32.mrb[0].mxu0
        %4238 = vmatprep.mubr.bf16.mxu0 0
        %4239 = vmatmul.mubr.bf16.gmra.mrb[0].mxu0 %v3416
        %v4240 = vpop.f32.mrb[0].mxu0
        %v4241 = vadd.f32 %v4080, %v4240
        %v4242 = vpop.f32.mrb[0].mxu0
        %v4243 = vpop.f32.mrb[0].mxu0
        %v4244 = vadd.f32 %v4083, %v4243
        %v4245 = vpop.f32.mrb[0].mxu0
        %4246 = vdwg.mxu0
        %s4247 = scalar_lea.vmem %s255, 256 [#allocation9]
        %4248 = vst [vmem:[%s4247] sm:$0xff] %v4121
        %4249 = vst [vmem:[%s4247 + $0x8] sm:$0xff] %v4124
        %4250 = vst [vmem:[%s4247 + $0x10] sm:$0xff] %v4129
        %4251 = vst [vmem:[%s4247 + $0x18] sm:$0xff] %v4132
        %4252 = vst [vmem:[%s4247 + $0x20] sm:$0xff] %v4137
        %4253 = vst [vmem:[%s4247 + $0x28] sm:$0xff] %v4140
        %4254 = vst [vmem:[%s4247 + $0x30] sm:$0xff] %v4145
        %4255 = vst [vmem:[%s4247 + $0x38] sm:$0xff] %v4148
        %4256 = vst [vmem:[%s4247 + $0x40] sm:$0xff] %v4153
        %4257 = vst [vmem:[%s4247 + $0x48] sm:$0xff] %v4156
        %4258 = vst [vmem:[%s4247 + $0x50] sm:$0xff] %v4161
        %4259 = vst [vmem:[%s4247 + $0x58] sm:$0xff] %v4164
        %4260 = vst [vmem:[%s4247 + $0x60] sm:$0xff] %v4169
        %4261 = vst [vmem:[%s4247 + $0x68] sm:$0xff] %v4172
        %4262 = vst [vmem:[%s4247 + $0x70] sm:$0xff] %v4177
        %4263 = vst [vmem:[%s4247 + $0x78] sm:$0xff] %v4180
        %4264 = vst [vmem:[%s4247 + $0x80] sm:$0xff] %v4185
        %4265 = vst [vmem:[%s4247 + $0x88] sm:$0xff] %v4188
        %4266 = vst [vmem:[%s4247 + $0x90] sm:$0xff] %v4193
        %4267 = vst [vmem:[%s4247 + $0x98] sm:$0xff] %v4196
        %4268 = vst [vmem:[%s4247 + $0xa0] sm:$0xff] %v4201
        %4269 = vst [vmem:[%s4247 + $0xa8] sm:$0xff] %v4204
        %4270 = vst [vmem:[%s4247 + $0xb0] sm:$0xff] %v4209
        %4271 = vst [vmem:[%s4247 + $0xb8] sm:$0xff] %v4212
        %4272 = vst [vmem:[%s4247 + $0xc0] sm:$0xff] %v4217
        %4273 = vst [vmem:[%s4247 + $0xc8] sm:$0xff] %v4220
        %4274 = vst [vmem:[%s4247 + $0xd0] sm:$0xff] %v4225
        %4275 = vst [vmem:[%s4247 + $0xd8] sm:$0xff] %v4228
        %4276 = vst [vmem:[%s4247 + $0xe0] sm:$0xff] %v4233
        %4277 = vst [vmem:[%s4247 + $0xe8] sm:$0xff] %v4236
        %4278 = vst [vmem:[%s4247 + $0xf0] sm:$0xff] %v4241
        %4279 = vst [vmem:[%s4247 + $0xf8] sm:$0xff] %v4244
        %s4280 = sand.u32 %s136, 1
        %s4281 = sand.u32 %s136, 1
        %s4282 = smul.addr %s4281, 512
        %s4283 = scalar_lea.vmem [#allocation9], %s4282
        // Predicated region
        $region53: #{birnn_classifier.3} parent=39 // pred_check
          %p4284 = pneg %p146
        $region54: #{birnn_classifier.3} parent=39 // pred_check_branch
          %4286 = sbr.rel (%p4284) target = $region56
        $region55: #{birnn_classifier.3} parent=39 // pred_region
          %s4287 = smul.addr %s18, 32
          %s4288 = smul.addr %s4287, 8
          %s4289 = scalar_lea.vmem %s5, %s4288
          // Predicated region
          $region57: #{birnn_classifier.3} parent=55 // pred_check
            _
          $region58: #{birnn_classifier.3} parent=55 // pred_check_branch
            %4291 = sbr.rel (0) target = $region60
          $region59: #{birnn_classifier.3} parent=55 // pred_region
            // Predicated region
            $region61: #{birnn_classifier.3} parent=59 // pred_check
              _
            $region62: #{birnn_classifier.3} parent=59 // pred_check_branch
              %4293 = sbr.rel (0) target = $region64
            $region63: #{birnn_classifier.3} parent=59 // pred_region
              // Predicated region
              $region76: #{birnn_classifier.3} parent=63 // pred_check
                _
              $region77: #{birnn_classifier.3} parent=63 // pred_check_branch
                %4434 = sbr.rel (0) target = $region79
              $region78: #{birnn_classifier.3} parent=63 // pred_region
                loop: start=0, step=1, limit=1
                $region80: #{birnn_classifier.3} parent=78 // loop_pre_header
                  _
                $region81: #{birnn_classifier.3} parent=78 // loop_header
                  %s4436 = sphi 0, %s4440
                  %p4437 = scmp.ge.s32.totalorder %s4436, 1
                  %s4441 = sphi %s4283, %s4283
                  %s4442 = sphi %s4289, %s4289
                $region82: #{birnn_classifier.3} parent=78 // loop_header_branch
                  %4439 = sbr.rel (%p4437) target = $region86
                $region83: #{birnn_classifier.3} parent=78 // loop_body
                  %v4443 = vld [vmem:[%s4441] sm:$0xff]
                  %4444 = vst [vmem:[%s4442] sm:$0xff] %v4443
                  %v4445 = vld [vmem:[%s4441 + $0x8] sm:$0xff]
                  %4446 = vst [vmem:[%s4442 + $0x8] sm:$0xff] %v4445
                  %v4447 = vld [vmem:[%s4441 + $0x10] sm:$0xff]
                  %4448 = vst [vmem:[%s4442 + $0x10] sm:$0xff] %v4447
                  %v4449 = vld [vmem:[%s4441 + $0x18] sm:$0xff]
                  %4450 = vst [vmem:[%s4442 + $0x18] sm:$0xff] %v4449
                  %v4451 = vld [vmem:[%s4441 + $0x20] sm:$0xff]
                  %4452 = vst [vmem:[%s4442 + $0x20] sm:$0xff] %v4451
                  %v4453 = vld [vmem:[%s4441 + $0x28] sm:$0xff]
                  %4454 = vst [vmem:[%s4442 + $0x28] sm:$0xff] %v4453
                  %v4455 = vld [vmem:[%s4441 + $0x30] sm:$0xff]
                  %4456 = vst [vmem:[%s4442 + $0x30] sm:$0xff] %v4455
                  %v4457 = vld [vmem:[%s4441 + $0x38] sm:$0xff]
                  %4458 = vst [vmem:[%s4442 + $0x38] sm:$0xff] %v4457
                  %v4459 = vld [vmem:[%s4441 + $0x40] sm:$0xff]
                  %4460 = vst [vmem:[%s4442 + $0x40] sm:$0xff] %v4459
                  %v4461 = vld [vmem:[%s4441 + $0x48] sm:$0xff]
                  %4462 = vst [vmem:[%s4442 + $0x48] sm:$0xff] %v4461
                  %v4463 = vld [vmem:[%s4441 + $0x50] sm:$0xff]
                  %4464 = vst [vmem:[%s4442 + $0x50] sm:$0xff] %v4463
                  %v4465 = vld [vmem:[%s4441 + $0x58] sm:$0xff]
                  %4466 = vst [vmem:[%s4442 + $0x58] sm:$0xff] %v4465
                  %v4467 = vld [vmem:[%s4441 + $0x60] sm:$0xff]
                  %4468 = vst [vmem:[%s4442 + $0x60] sm:$0xff] %v4467
                  %v4469 = vld [vmem:[%s4441 + $0x68] sm:$0xff]
                  %4470 = vst [vmem:[%s4442 + $0x68] sm:$0xff] %v4469
                  %v4471 = vld [vmem:[%s4441 + $0x70] sm:$0xff]
                  %4472 = vst [vmem:[%s4442 + $0x70] sm:$0xff] %v4471
                  %v4473 = vld [vmem:[%s4441 + $0x78] sm:$0xff]
                  %4474 = vst [vmem:[%s4442 + $0x78] sm:$0xff] %v4473
                  %v4475 = vld [vmem:[%s4441 + $0x80] sm:$0xff]
                  %4476 = vst [vmem:[%s4442 + $0x80] sm:$0xff] %v4475
                  %v4477 = vld [vmem:[%s4441 + $0x88] sm:$0xff]
                  %4478 = vst [vmem:[%s4442 + $0x88] sm:$0xff] %v4477
                  %v4479 = vld [vmem:[%s4441 + $0x90] sm:$0xff]
                  %4480 = vst [vmem:[%s4442 + $0x90] sm:$0xff] %v4479
                  %v4481 = vld [vmem:[%s4441 + $0x98] sm:$0xff]
                  %4482 = vst [vmem:[%s4442 + $0x98] sm:$0xff] %v4481
                  %v4483 = vld [vmem:[%s4441 + $0xa0] sm:$0xff]
                  %4484 = vst [vmem:[%s4442 + $0xa0] sm:$0xff] %v4483
                  %v4485 = vld [vmem:[%s4441 + $0xa8] sm:$0xff]
                  %4486 = vst [vmem:[%s4442 + $0xa8] sm:$0xff] %v4485
                  %v4487 = vld [vmem:[%s4441 + $0xb0] sm:$0xff]
                  %4488 = vst [vmem:[%s4442 + $0xb0] sm:$0xff] %v4487
                  %v4489 = vld [vmem:[%s4441 + $0xb8] sm:$0xff]
                  %4490 = vst [vmem:[%s4442 + $0xb8] sm:$0xff] %v4489
                  %v4491 = vld [vmem:[%s4441 + $0xc0] sm:$0xff]
                  %4492 = vst [vmem:[%s4442 + $0xc0] sm:$0xff] %v4491
                  %v4493 = vld [vmem:[%s4441 + $0xc8] sm:$0xff]
                  %4494 = vst [vmem:[%s4442 + $0xc8] sm:$0xff] %v4493
                  %v4495 = vld [vmem:[%s4441 + $0xd0] sm:$0xff]
                  %4496 = vst [vmem:[%s4442 + $0xd0] sm:$0xff] %v4495
                  %v4497 = vld [vmem:[%s4441 + $0xd8] sm:$0xff]
                  %4498 = vst [vmem:[%s4442 + $0xd8] sm:$0xff] %v4497
                  %v4499 = vld [vmem:[%s4441 + $0xe0] sm:$0xff]
                  %4500 = vst [vmem:[%s4442 + $0xe0] sm:$0xff] %v4499
                  %v4501 = vld [vmem:[%s4441 + $0xe8] sm:$0xff]
                  %4502 = vst [vmem:[%s4442 + $0xe8] sm:$0xff] %v4501
                  %v4503 = vld [vmem:[%s4441 + $0xf0] sm:$0xff]
                  %4504 = vst [vmem:[%s4442 + $0xf0] sm:$0xff] %v4503
                  %v4505 = vld [vmem:[%s4441 + $0xf8] sm:$0xff]
                  %4506 = vst [vmem:[%s4442 + $0xf8] sm:$0xff] %v4505
                  %v4507 = vld [vmem:[%s4441 + $0x100] sm:$0xff]
                  %4508 = vst [vmem:[%s4442 + $0x1000] sm:$0xff] %v4507
                  %v4509 = vld [vmem:[%s4441 + $0x108] sm:$0xff]
                  %4510 = vst [vmem:[%s4442 + $0x1008] sm:$0xff] %v4509
                  %v4511 = vld [vmem:[%s4441 + $0x110] sm:$0xff]
                  %4512 = vst [vmem:[%s4442 + $0x1010] sm:$0xff] %v4511
                  %v4513 = vld [vmem:[%s4441 + $0x118] sm:$0xff]
                  %4514 = vst [vmem:[%s4442 + $0x1018] sm:$0xff] %v4513
                  %v4515 = vld [vmem:[%s4441 + $0x120] sm:$0xff]
                  %4516 = vst [vmem:[%s4442 + $0x1020] sm:$0xff] %v4515
                  %v4517 = vld [vmem:[%s4441 + $0x128] sm:$0xff]
                  %4518 = vst [vmem:[%s4442 + $0x1028] sm:$0xff] %v4517
                  %v4519 = vld [vmem:[%s4441 + $0x130] sm:$0xff]
                  %4520 = vst [vmem:[%s4442 + $0x1030] sm:$0xff] %v4519
                  %v4521 = vld [vmem:[%s4441 + $0x138] sm:$0xff]
                  %4522 = vst [vmem:[%s4442 + $0x1038] sm:$0xff] %v4521
                  %v4523 = vld [vmem:[%s4441 + $0x140] sm:$0xff]
                  %4524 = vst [vmem:[%s4442 + $0x1040] sm:$0xff] %v4523
                  %v4525 = vld [vmem:[%s4441 + $0x148] sm:$0xff]
                  %4526 = vst [vmem:[%s4442 + $0x1048] sm:$0xff] %v4525
                  %v4527 = vld [vmem:[%s4441 + $0x150] sm:$0xff]
                  %4528 = vst [vmem:[%s4442 + $0x1050] sm:$0xff] %v4527
                  %v4529 = vld [vmem:[%s4441 + $0x158] sm:$0xff]
                  %4530 = vst [vmem:[%s4442 + $0x1058] sm:$0xff] %v4529
                  %v4531 = vld [vmem:[%s4441 + $0x160] sm:$0xff]
                  %4532 = vst [vmem:[%s4442 + $0x1060] sm:$0xff] %v4531
                  %v4533 = vld [vmem:[%s4441 + $0x168] sm:$0xff]
                  %4534 = vst [vmem:[%s4442 + $0x1068] sm:$0xff] %v4533
                  %v4535 = vld [vmem:[%s4441 + $0x170] sm:$0xff]
                  %4536 = vst [vmem:[%s4442 + $0x1070] sm:$0xff] %v4535
                  %v4537 = vld [vmem:[%s4441 + $0x178] sm:$0xff]
                  %4538 = vst [vmem:[%s4442 + $0x1078] sm:$0xff] %v4537
                  %v4539 = vld [vmem:[%s4441 + $0x180] sm:$0xff]
                  %4540 = vst [vmem:[%s4442 + $0x1080] sm:$0xff] %v4539
                  %v4541 = vld [vmem:[%s4441 + $0x188] sm:$0xff]
                  %4542 = vst [vmem:[%s4442 + $0x1088] sm:$0xff] %v4541
                  %v4543 = vld [vmem:[%s4441 + $0x190] sm:$0xff]
                  %4544 = vst [vmem:[%s4442 + $0x1090] sm:$0xff] %v4543
                  %v4545 = vld [vmem:[%s4441 + $0x198] sm:$0xff]
                  %4546 = vst [vmem:[%s4442 + $0x1098] sm:$0xff] %v4545
                  %v4547 = vld [vmem:[%s4441 + $0x1a0] sm:$0xff]
                  %4548 = vst [vmem:[%s4442 + $0x10a0] sm:$0xff] %v4547
                  %v4549 = vld [vmem:[%s4441 + $0x1a8] sm:$0xff]
                  %4550 = vst [vmem:[%s4442 + $0x10a8] sm:$0xff] %v4549
                  %v4551 = vld [vmem:[%s4441 + $0x1b0] sm:$0xff]
                  %4552 = vst [vmem:[%s4442 + $0x10b0] sm:$0xff] %v4551
                  %v4553 = vld [vmem:[%s4441 + $0x1b8] sm:$0xff]
                  %4554 = vst [vmem:[%s4442 + $0x10b8] sm:$0xff] %v4553
                  %v4555 = vld [vmem:[%s4441 + $0x1c0] sm:$0xff]
                  %4556 = vst [vmem:[%s4442 + $0x10c0] sm:$0xff] %v4555
                  %v4557 = vld [vmem:[%s4441 + $0x1c8] sm:$0xff]
                  %4558 = vst [vmem:[%s4442 + $0x10c8] sm:$0xff] %v4557
                  %v4559 = vld [vmem:[%s4441 + $0x1d0] sm:$0xff]
                  %4560 = vst [vmem:[%s4442 + $0x10d0] sm:$0xff] %v4559
                  %v4561 = vld [vmem:[%s4441 + $0x1d8] sm:$0xff]
                  %4562 = vst [vmem:[%s4442 + $0x10d8] sm:$0xff] %v4561
                  %v4563 = vld [vmem:[%s4441 + $0x1e0] sm:$0xff]
                  %4564 = vst [vmem:[%s4442 + $0x10e0] sm:$0xff] %v4563
                  %v4565 = vld [vmem:[%s4441 + $0x1e8] sm:$0xff]
                  %4566 = vst [vmem:[%s4442 + $0x10e8] sm:$0xff] %v4565
                  %v4567 = vld [vmem:[%s4441 + $0x1f0] sm:$0xff]
                  %4568 = vst [vmem:[%s4442 + $0x10f0] sm:$0xff] %v4567
                  %v4569 = vld [vmem:[%s4441 + $0x1f8] sm:$0xff]
                  %4570 = vst [vmem:[%s4442 + $0x10f8] sm:$0xff] %v4569
                $region84: #{birnn_classifier.3} parent=78 // loop_footer
                  %s4440 = sadd.s32 1, %s4436
                $region85: #{birnn_classifier.3} parent=78 // loop_footer_branch
                  %4435 = sbr.rel target = $region81
                $region86: #{birnn_classifier.3} parent=78 // loop_exit
                  _
              $region79: #{birnn_classifier.3} parent=63 // pred_fallthru
                _
              // Predicated region
              $region87: #{birnn_classifier.3} parent=63 // pred_check
                _
              $region88: #{birnn_classifier.3} parent=63 // pred_check_branch
                %4572 = sbr.rel target = $region90
              $region89: #{birnn_classifier.3} parent=63 // pred_region
                _
              $region90: #{birnn_classifier.3} parent=63 // pred_fallthru
                _
            $region64: #{birnn_classifier.3} parent=59 // pred_fallthru
              _
            // Predicated region
            $region65: #{birnn_classifier.3} parent=59 // pred_check
              _
            $region66: #{birnn_classifier.3} parent=59 // pred_check_branch
              %4295 = sbr.rel target = $region68
            $region67: #{birnn_classifier.3} parent=59 // pred_region
              loop: start=0, step=1, limit=1
              $region69: #{birnn_classifier.3} parent=67 // loop_pre_header
                _
              $region70: #{birnn_classifier.3} parent=67 // loop_header
                %s4298 = sphi 0, %s4302
                %p4299 = scmp.ge.s32.totalorder %s4298, 1
                %s4303 = sphi %s4283, %s4283
                %s4304 = sphi %s4289, %s4289
              $region71: #{birnn_classifier.3} parent=67 // loop_header_branch
                %4301 = sbr.rel (%p4299) target = $region75
              $region72: #{birnn_classifier.3} parent=67 // loop_body
                %v4305 = vld [vmem:[%s4303] sm:$0xff]
                %4306 = vst [vmem:[%s4304] sm:$0xff] %v4305
                %v4307 = vld [vmem:[%s4303 + $0x8] sm:$0xff]
                %4308 = vst [vmem:[%s4304 + $0x8] sm:$0xff] %v4307
                %v4309 = vld [vmem:[%s4303 + $0x10] sm:$0xff]
                %4310 = vst [vmem:[%s4304 + $0x10] sm:$0xff] %v4309
                %v4311 = vld [vmem:[%s4303 + $0x18] sm:$0xff]
                %4312 = vst [vmem:[%s4304 + $0x18] sm:$0xff] %v4311
                %v4313 = vld [vmem:[%s4303 + $0x20] sm:$0xff]
                %4314 = vst [vmem:[%s4304 + $0x20] sm:$0xff] %v4313
                %v4315 = vld [vmem:[%s4303 + $0x28] sm:$0xff]
                %4316 = vst [vmem:[%s4304 + $0x28] sm:$0xff] %v4315
                %v4317 = vld [vmem:[%s4303 + $0x30] sm:$0xff]
                %4318 = vst [vmem:[%s4304 + $0x30] sm:$0xff] %v4317
                %v4319 = vld [vmem:[%s4303 + $0x38] sm:$0xff]
                %4320 = vst [vmem:[%s4304 + $0x38] sm:$0xff] %v4319
                %v4321 = vld [vmem:[%s4303 + $0x40] sm:$0xff]
                %4322 = vst [vmem:[%s4304 + $0x40] sm:$0xff] %v4321
                %v4323 = vld [vmem:[%s4303 + $0x48] sm:$0xff]
                %4324 = vst [vmem:[%s4304 + $0x48] sm:$0xff] %v4323
                %v4325 = vld [vmem:[%s4303 + $0x50] sm:$0xff]
                %4326 = vst [vmem:[%s4304 + $0x50] sm:$0xff] %v4325
                %v4327 = vld [vmem:[%s4303 + $0x58] sm:$0xff]
                %4328 = vst [vmem:[%s4304 + $0x58] sm:$0xff] %v4327
                %v4329 = vld [vmem:[%s4303 + $0x60] sm:$0xff]
                %4330 = vst [vmem:[%s4304 + $0x60] sm:$0xff] %v4329
                %v4331 = vld [vmem:[%s4303 + $0x68] sm:$0xff]
                %4332 = vst [vmem:[%s4304 + $0x68] sm:$0xff] %v4331
                %v4333 = vld [vmem:[%s4303 + $0x70] sm:$0xff]
                %4334 = vst [vmem:[%s4304 + $0x70] sm:$0xff] %v4333
                %v4335 = vld [vmem:[%s4303 + $0x78] sm:$0xff]
                %4336 = vst [vmem:[%s4304 + $0x78] sm:$0xff] %v4335
                %v4337 = vld [vmem:[%s4303 + $0x80] sm:$0xff]
                %4338 = vst [vmem:[%s4304 + $0x80] sm:$0xff] %v4337
                %v4339 = vld [vmem:[%s4303 + $0x88] sm:$0xff]
                %4340 = vst [vmem:[%s4304 + $0x88] sm:$0xff] %v4339
                %v4341 = vld [vmem:[%s4303 + $0x90] sm:$0xff]
                %4342 = vst [vmem:[%s4304 + $0x90] sm:$0xff] %v4341
                %v4343 = vld [vmem:[%s4303 + $0x98] sm:$0xff]
                %4344 = vst [vmem:[%s4304 + $0x98] sm:$0xff] %v4343
                %v4345 = vld [vmem:[%s4303 + $0xa0] sm:$0xff]
                %4346 = vst [vmem:[%s4304 + $0xa0] sm:$0xff] %v4345
                %v4347 = vld [vmem:[%s4303 + $0xa8] sm:$0xff]
                %4348 = vst [vmem:[%s4304 + $0xa8] sm:$0xff] %v4347
                %v4349 = vld [vmem:[%s4303 + $0xb0] sm:$0xff]
                %4350 = vst [vmem:[%s4304 + $0xb0] sm:$0xff] %v4349
                %v4351 = vld [vmem:[%s4303 + $0xb8] sm:$0xff]
                %4352 = vst [vmem:[%s4304 + $0xb8] sm:$0xff] %v4351
                %v4353 = vld [vmem:[%s4303 + $0xc0] sm:$0xff]
                %4354 = vst [vmem:[%s4304 + $0xc0] sm:$0xff] %v4353
                %v4355 = vld [vmem:[%s4303 + $0xc8] sm:$0xff]
                %4356 = vst [vmem:[%s4304 + $0xc8] sm:$0xff] %v4355
                %v4357 = vld [vmem:[%s4303 + $0xd0] sm:$0xff]
                %4358 = vst [vmem:[%s4304 + $0xd0] sm:$0xff] %v4357
                %v4359 = vld [vmem:[%s4303 + $0xd8] sm:$0xff]
                %4360 = vst [vmem:[%s4304 + $0xd8] sm:$0xff] %v4359
                %v4361 = vld [vmem:[%s4303 + $0xe0] sm:$0xff]
                %4362 = vst [vmem:[%s4304 + $0xe0] sm:$0xff] %v4361
                %v4363 = vld [vmem:[%s4303 + $0xe8] sm:$0xff]
                %4364 = vst [vmem:[%s4304 + $0xe8] sm:$0xff] %v4363
                %v4365 = vld [vmem:[%s4303 + $0xf0] sm:$0xff]
                %4366 = vst [vmem:[%s4304 + $0xf0] sm:$0xff] %v4365
                %v4367 = vld [vmem:[%s4303 + $0xf8] sm:$0xff]
                %4368 = vst [vmem:[%s4304 + $0xf8] sm:$0xff] %v4367
                %v4369 = vld [vmem:[%s4303 + $0x100] sm:$0xff]
                %4370 = vst [vmem:[%s4304 + $0x1000] sm:$0xff] %v4369
                %v4371 = vld [vmem:[%s4303 + $0x108] sm:$0xff]
                %4372 = vst [vmem:[%s4304 + $0x1008] sm:$0xff] %v4371
                %v4373 = vld [vmem:[%s4303 + $0x110] sm:$0xff]
                %4374 = vst [vmem:[%s4304 + $0x1010] sm:$0xff] %v4373
                %v4375 = vld [vmem:[%s4303 + $0x118] sm:$0xff]
                %4376 = vst [vmem:[%s4304 + $0x1018] sm:$0xff] %v4375
                %v4377 = vld [vmem:[%s4303 + $0x120] sm:$0xff]
                %4378 = vst [vmem:[%s4304 + $0x1020] sm:$0xff] %v4377
                %v4379 = vld [vmem:[%s4303 + $0x128] sm:$0xff]
                %4380 = vst [vmem:[%s4304 + $0x1028] sm:$0xff] %v4379
                %v4381 = vld [vmem:[%s4303 + $0x130] sm:$0xff]
                %4382 = vst [vmem:[%s4304 + $0x1030] sm:$0xff] %v4381
                %v4383 = vld [vmem:[%s4303 + $0x138] sm:$0xff]
                %4384 = vst [vmem:[%s4304 + $0x1038] sm:$0xff] %v4383
                %v4385 = vld [vmem:[%s4303 + $0x140] sm:$0xff]
                %4386 = vst [vmem:[%s4304 + $0x1040] sm:$0xff] %v4385
                %v4387 = vld [vmem:[%s4303 + $0x148] sm:$0xff]
                %4388 = vst [vmem:[%s4304 + $0x1048] sm:$0xff] %v4387
                %v4389 = vld [vmem:[%s4303 + $0x150] sm:$0xff]
                %4390 = vst [vmem:[%s4304 + $0x1050] sm:$0xff] %v4389
                %v4391 = vld [vmem:[%s4303 + $0x158] sm:$0xff]
                %4392 = vst [vmem:[%s4304 + $0x1058] sm:$0xff] %v4391
                %v4393 = vld [vmem:[%s4303 + $0x160] sm:$0xff]
                %4394 = vst [vmem:[%s4304 + $0x1060] sm:$0xff] %v4393
                %v4395 = vld [vmem:[%s4303 + $0x168] sm:$0xff]
                %4396 = vst [vmem:[%s4304 + $0x1068] sm:$0xff] %v4395
                %v4397 = vld [vmem:[%s4303 + $0x170] sm:$0xff]
                %4398 = vst [vmem:[%s4304 + $0x1070] sm:$0xff] %v4397
                %v4399 = vld [vmem:[%s4303 + $0x178] sm:$0xff]
                %4400 = vst [vmem:[%s4304 + $0x1078] sm:$0xff] %v4399
                %v4401 = vld [vmem:[%s4303 + $0x180] sm:$0xff]
                %4402 = vst [vmem:[%s4304 + $0x1080] sm:$0xff] %v4401
                %v4403 = vld [vmem:[%s4303 + $0x188] sm:$0xff]
                %4404 = vst [vmem:[%s4304 + $0x1088] sm:$0xff] %v4403
                %v4405 = vld [vmem:[%s4303 + $0x190] sm:$0xff]
                %4406 = vst [vmem:[%s4304 + $0x1090] sm:$0xff] %v4405
                %v4407 = vld [vmem:[%s4303 + $0x198] sm:$0xff]
                %4408 = vst [vmem:[%s4304 + $0x1098] sm:$0xff] %v4407
                %v4409 = vld [vmem:[%s4303 + $0x1a0] sm:$0xff]
                %4410 = vst [vmem:[%s4304 + $0x10a0] sm:$0xff] %v4409
                %v4411 = vld [vmem:[%s4303 + $0x1a8] sm:$0xff]
                %4412 = vst [vmem:[%s4304 + $0x10a8] sm:$0xff] %v4411
                %v4413 = vld [vmem:[%s4303 + $0x1b0] sm:$0xff]
                %4414 = vst [vmem:[%s4304 + $0x10b0] sm:$0xff] %v4413
                %v4415 = vld [vmem:[%s4303 + $0x1b8] sm:$0xff]
                %4416 = vst [vmem:[%s4304 + $0x10b8] sm:$0xff] %v4415
                %v4417 = vld [vmem:[%s4303 + $0x1c0] sm:$0xff]
                %4418 = vst [vmem:[%s4304 + $0x10c0] sm:$0xff] %v4417
                %v4419 = vld [vmem:[%s4303 + $0x1c8] sm:$0xff]
                %4420 = vst [vmem:[%s4304 + $0x10c8] sm:$0xff] %v4419
                %v4421 = vld [vmem:[%s4303 + $0x1d0] sm:$0xff]
                %4422 = vst [vmem:[%s4304 + $0x10d0] sm:$0xff] %v4421
                %v4423 = vld [vmem:[%s4303 + $0x1d8] sm:$0xff]
                %4424 = vst [vmem:[%s4304 + $0x10d8] sm:$0xff] %v4423
                %v4425 = vld [vmem:[%s4303 + $0x1e0] sm:$0xff]
                %4426 = vst [vmem:[%s4304 + $0x10e0] sm:$0xff] %v4425
                %v4427 = vld [vmem:[%s4303 + $0x1e8] sm:$0xff]
                %4428 = vst [vmem:[%s4304 + $0x10e8] sm:$0xff] %v4427
                %v4429 = vld [vmem:[%s4303 + $0x1f0] sm:$0xff]
                %4430 = vst [vmem:[%s4304 + $0x10f0] sm:$0xff] %v4429
                %v4431 = vld [vmem:[%s4303 + $0x1f8] sm:$0xff]
                %4432 = vst [vmem:[%s4304 + $0x10f8] sm:$0xff] %v4431
              $region73: #{birnn_classifier.3} parent=67 // loop_footer
                %s4302 = sadd.s32 1, %s4298
              $region74: #{birnn_classifier.3} parent=67 // loop_footer_branch
                %4297 = sbr.rel target = $region70
              $region75: #{birnn_classifier.3} parent=67 // loop_exit
                _
            $region68: #{birnn_classifier.3} parent=59 // pred_fallthru
              _
          $region60: #{birnn_classifier.3} parent=55 // pred_fallthru
            _
          %4573 = vnop
        $region56: #{birnn_classifier.3} parent=39 // pred_fallthru
          _
      $region40: #{birnn_classifier.3} parent=5 // pred_fallthru
        _
      %p4574 = scmp.le.s32.totalorder 2, %s13
      // Predicated region
      $region91: #{birnn_classifier.3} parent=5 // pred_check
        %p4575 = pneg %p4574
      $region92: #{birnn_classifier.3} parent=5 // pred_check_branch
        %4577 = sbr.rel (%p4575) target = $region94
      $region93: #{birnn_classifier.3} parent=5 // pred_region
        %s4578 = ssub.s32 %s13, 2
        // Predicated region
        $region95: #{birnn_classifier.3} parent=93 // pred_check
          %p4579 = pneg %p152
        $region96: #{birnn_classifier.3} parent=93 // pred_check_branch
          %4581 = sbr.rel (%p4579) target = $region98
        $region97: #{birnn_classifier.3} parent=93 // pred_region
          %s4582 = sand.u32 %s137, 1
          %s4583 = sand.u32 %s137, 1
          %s4584 = smul.addr %s4583, 512
          %s4585 = scalar_lea.vmem [#allocation9], %s4584
        $region98: #{birnn_classifier.3} parent=93 // pred_fallthru
          _
      $region94: #{birnn_classifier.3} parent=5 // pred_fallthru
        _
    $region6: #{birnn_classifier.3} parent=1 // loop_footer
      %s17 = sadd.s32 1, %s13
    $region7: #{birnn_classifier.3} parent=1 // loop_footer_branch
      %12 = sbr.rel target = $region3
    $region8: #{birnn_classifier.3} parent=1 // loop_exit
      _
    %4586 = vsyncpa [#allocation5], 1
    %s4587 = scalar_lea.sflag [#allocation5], 1
    %4588 = vsyncpa %s4587, 1
    %4589 = vsyncpa [#allocation7], 1

// kernel: birnn_classifier.5
$region0: #{birnn_classifier.5}
  #allocation0 [shape = 'u32[]', space=smem, size = 0x4, offset = 0x4, fixed_abs, tag = 'smem constant byte address 0x4 - core index']
  #allocation1 [shape = 'u32[144,128]{1,0:T(1,128)}', space=vmem, size = 0x12000, scoped, tag = 'internal scratch']
  #allocation2 [shape = 'f32[18,18,64]{2,1,0:T(8,128)}', space=vmem, size = 0x36000, scoped, tag = 'scratch operand']
  %s0 = inlined_call_operand.vmem [shape: f32[2,2,256,32], index: 0, kind: input, shape index: {}]
  %s1 = inlined_call_operand.vmem [shape: f32[2,256,1], index: 1, kind: input, shape index: {}]
  %s2 = inlined_call_operand.vmem [shape: bf16[576,8], index: 2, kind: input, shape index: {}]
  %s3 = inlined_call_operand.vmem [shape: f32[1,8], index: 3, kind: input, shape index: {}]
  %s4 = inlined_call_operand.hbm [shape: f32[2,1,8], index: 4, kind: output, shape index: {}]
  %s5 = sld [smem:[#allocation0]]
  $region87: #{birnn_classifier.5} parent=0
    _
  %s7 = ssub.s32 1, %s5
  %s8 = scalar_select 0, %s7, %s5
  $region1: #{birnn_classifier.5} parent=0
    #allocation3 [shape = 'u8[524288]{0}', space=vmem, size = 0x80000, scoped, tag = 'input window, operand 0']
    #allocation4 [shape = 'u8[1024]{0}', space=vmem, size = 0x400, scoped, tag = 'output window, operand 0']
    #allocation5 [shape = 's32[2]{0}', space=sflag, size = 0x8, scoped, tag = 'scoped memory for birnn_classifier.5']
    %9 = vsyncpa [#allocation5], 0
    %s10 = scalar_lea.sflag [#allocation5], 1
    %11 = vsyncpa %s10, 0
    loop: start=0, step=1, limit=4
    $region2: #{birnn_classifier.5} parent=1 // loop_pre_header
      _
    $region3: #{birnn_classifier.5} parent=1 // loop_header
      %s13 = sphi 0, %s17
      %p14 = scmp.ge.s32.totalorder %s13, 4
      %s23 = sphi 0, %s25
      %s26 = sphi 0, %s23
      %s27 = sphi 0, %s26
      %s43 = sphi 0, %s27
      %s49 = sphi 0, %s51
      %s52 = sphi 0, %s49
      %s53 = sphi 0, %s52
      %s69 = sphi 0, %s53
      %s73 = sphi 0, %s73
      %s75 = sphi 0, %s73
      %s76 = sphi 0, %s75
      %s90 = sphi 0, %s76
      %s94 = sphi 0, %s94
      %s96 = sphi 0, %s94
      %s97 = sphi 0, %s96
      %s111 = sphi 0, %s97
      %s117 = sphi 0, %s119
      %s120 = sphi 0, %s117
      %s121 = sphi 0, %s120
      %s137 = sphi 0, %s121
    $region4: #{birnn_classifier.5} parent=1 // loop_header_branch
      %16 = sbr.rel (%p14) target = $region8
    $region5: #{birnn_classifier.5} parent=1 // loop_body
      %s18 = ssub.s32 %s13, 1
      %s19 = ssub.s32 %s13, 2
      %s20 = sadd.s32 %s13, 1
      %s21 = ssub.s32 %s13, %s20
      %p22 = scmp.eq.s32.totalorder %s21, 0
      %s24 = sadd.s32 %s23, 1
      %s25 = scalar_select %p22, %s23, %s24
      %p28 = pneg %p22
      %p29 = scmp.eq.s32.totalorder %s13, 1
      %p30 = por %p28, %p29
      %p31 = scmp.ne.s32.totalorder %s23, %s26
      %p32 = scmp.eq.s32.totalorder %s13, 0
      %p33 = por %p31, %p32
      %p34 = scmp.ne.s32.totalorder %s23, %s26
      %p35 = scmp.eq.s32.totalorder %s18, 1
      %p36 = por %p34, %p35
      %p37 = scmp.ne.s32.totalorder %s26, %s27
      %p38 = scmp.eq.s32.totalorder %s18, 0
      %p39 = por %p37, %p38
      %p40 = scmp.ne.s32.totalorder %s26, %s27
      %p41 = scmp.eq.s32.totalorder %s19, 1
      %p42 = por %p40, %p41
      %p44 = scmp.ne.s32.totalorder %s27, %s43
      %p45 = scmp.eq.s32.totalorder %s19, 0
      %p46 = por %p44, %p45
      %s47 = ssub.s32 %s13, %s20
      %p48 = scmp.eq.s32.totalorder %s47, 0
      %s50 = sadd.s32 %s49, 1
      %s51 = scalar_select %p48, %s49, %s50
      %p54 = pneg %p48
      %p55 = scmp.eq.s32.totalorder %s13, 1
      %p56 = por %p54, %p55
      %p57 = scmp.ne.s32.totalorder %s49, %s52
      %p58 = scmp.eq.s32.totalorder %s13, 0
      %p59 = por %p57, %p58
      %p60 = scmp.ne.s32.totalorder %s49, %s52
      %p61 = scmp.eq.s32.totalorder %s18, 1
      %p62 = por %p60, %p61
      %p63 = scmp.ne.s32.totalorder %s52, %s53
      %p64 = scmp.eq.s32.totalorder %s18, 0
      %p65 = por %p63, %p64
      %p66 = scmp.ne.s32.totalorder %s52, %s53
      %p67 = scmp.eq.s32.totalorder %s19, 1
      %p68 = por %p66, %p67
      %p70 = scmp.ne.s32.totalorder %s53, %s69
      %p71 = scmp.eq.s32.totalorder %s19, 0
      %p72 = por %p70, %p71
      %s74 = sadd.s32 %s73, 1
      %p77 = scmp.eq.s32.totalorder %s13, 1
      %p78 = scmp.ne.s32.totalorder %s73, %s75
      %p79 = scmp.eq.s32.totalorder %s13, 0
      %p80 = por %p78, %p79
      %p81 = scmp.ne.s32.totalorder %s73, %s75
      %p82 = scmp.eq.s32.totalorder %s18, 1
      %p83 = por %p81, %p82
      %p84 = scmp.ne.s32.totalorder %s75, %s76
      %p85 = scmp.eq.s32.totalorder %s18, 0
      %p86 = por %p84, %p85
      %p87 = scmp.ne.s32.totalorder %s75, %s76
      %p88 = scmp.eq.s32.totalorder %s19, 1
      %p89 = por %p87, %p88
      %p91 = scmp.ne.s32.totalorder %s76, %s90
      %p92 = scmp.eq.s32.totalorder %s19, 0
      %p93 = por %p91, %p92
      %s95 = sadd.s32 %s94, 1
      %p98 = scmp.eq.s32.totalorder %s13, 1
      %p99 = scmp.ne.s32.totalorder %s94, %s96
      %p100 = scmp.eq.s32.totalorder %s13, 0
      %p101 = por %p99, %p100
      %p102 = scmp.ne.s32.totalorder %s94, %s96
      %p103 = scmp.eq.s32.totalorder %s18, 1
      %p104 = por %p102, %p103
      %p105 = scmp.ne.s32.totalorder %s96, %s97
      %p106 = scmp.eq.s32.totalorder %s18, 0
      %p107 = por %p105, %p106
      %p108 = scmp.ne.s32.totalorder %s96, %s97
      %p109 = scmp.eq.s32.totalorder %s19, 1
      %p110 = por %p108, %p109
      %p112 = scmp.ne.s32.totalorder %s97, %s111
      %p113 = scmp.eq.s32.totalorder %s19, 0
      %p114 = por %p112, %p113
      %s115 = ssub.s32 %s13, %s20
      %p116 = scmp.eq.s32.totalorder %s115, 0
      %s118 = sadd.s32 %s117, 1
      %s119 = scalar_select %p116, %s117, %s118
      %p122 = pneg %p116
      %p123 = scmp.eq.s32.totalorder %s13, 1
      %p124 = por %p122, %p123
      %p125 = scmp.ne.s32.totalorder %s117, %s120
      %p126 = scmp.eq.s32.totalorder %s13, 0
      %p127 = por %p125, %p126
      %p128 = scmp.ne.s32.totalorder %s117, %s120
      %p129 = scmp.eq.s32.totalorder %s18, 1
      %p130 = por %p128, %p129
      %p131 = scmp.ne.s32.totalorder %s120, %s121
      %p132 = scmp.eq.s32.totalorder %s18, 0
      %p133 = por %p131, %p132
      %p134 = scmp.ne.s32.totalorder %s120, %s121
      %p135 = scmp.eq.s32.totalorder %s19, 1
      %p136 = por %p134, %p135
      %p138 = scmp.ne.s32.totalorder %s121, %s137
      %p139 = scmp.eq.s32.totalorder %s19, 0
      %p140 = por %p138, %p139
      %p141 = scmp.le.s32.totalorder 1, %s13
      %p142 = scmp.lt.s32.totalorder %s13, 3
      %p143 = pnand %p141, %p142
      %p144 = pneg %p143
      // Predicated region
      $region9: #{birnn_classifier.5} parent=5 // pred_check
        _
      $region10: #{birnn_classifier.5} parent=5 // pred_check_branch
        %146 = sbr.rel (%p143) target = $region12
      $region11: #{birnn_classifier.5} parent=5 // pred_region
        %s147 = ssub.s32 %s13, 1
        // Predicated region
        $region13: #{birnn_classifier.5} parent=11 // pred_check
          %p148 = pneg %p86
        $region14: #{birnn_classifier.5} parent=11 // pred_check_branch
          %150 = sbr.rel (%p148) target = $region16
        $region15: #{birnn_classifier.5} parent=11 // pred_region
          _
        $region16: #{birnn_classifier.5} parent=11 // pred_fallthru
          _
        // Predicated region
        $region17: #{birnn_classifier.5} parent=11 // pred_check
          %p151 = pneg %p107
        $region18: #{birnn_classifier.5} parent=11 // pred_check_branch
          %153 = sbr.rel (%p151) target = $region20
        $region19: #{birnn_classifier.5} parent=11 // pred_region
          _
        $region20: #{birnn_classifier.5} parent=11 // pred_fallthru
          _
      $region12: #{birnn_classifier.5} parent=5 // pred_fallthru
        _
      %p154 = scmp.lt.s32.totalorder %s13, 2
      // Predicated region
      $region21: #{birnn_classifier.5} parent=5 // pred_check
        %p155 = pneg %p154
      $region22: #{birnn_classifier.5} parent=5 // pred_check_branch
        %157 = sbr.rel (%p155) target = $region24
      $region23: #{birnn_classifier.5} parent=5 // pred_region
        // Predicated region
        $region25: #{birnn_classifier.5} parent=23 // pred_check
          %p158 = pneg %p33
        $region26: #{birnn_classifier.5} parent=23 // pred_check_branch
          %160 = sbr.rel (%p158) target = $region28
        $region27: #{birnn_classifier.5} parent=23 // pred_region
          %s161 = sand.u32 %s23, 1
          %s162 = sand.u32 %s23, 1
          %s163 = smul.addr %s162, 512
          %s164 = scalar_lea.vmem [#allocation3], %s163
          %s165 = smul.addr %s13, 32
          %s166 = smul.addr %s165, 8
          %s167 = scalar_lea.vmem %s0, %s166
          // Predicated region
          $region29: #{birnn_classifier.5} parent=27 // pred_check
            _
          $region30: #{birnn_classifier.5} parent=27 // pred_check_branch
            %169 = sbr.rel (0) target = $region32
          $region31: #{birnn_classifier.5} parent=27 // pred_region
            // Predicated region
            $region33: #{birnn_classifier.5} parent=31 // pred_check
              _
            $region34: #{birnn_classifier.5} parent=31 // pred_check_branch
              %171 = sbr.rel (0) target = $region36
            $region35: #{birnn_classifier.5} parent=31 // pred_region
              // Predicated region
              $region48: #{birnn_classifier.5} parent=35 // pred_check
                _
              $region49: #{birnn_classifier.5} parent=35 // pred_check_branch
                %312 = sbr.rel (0) target = $region51
              $region50: #{birnn_classifier.5} parent=35 // pred_region
                loop: start=0, step=1, limit=1
                $region52: #{birnn_classifier.5} parent=50 // loop_pre_header
                  _
                $region53: #{birnn_classifier.5} parent=50 // loop_header
                  %s314 = sphi 0, %s318
                  %p315 = scmp.ge.s32.totalorder %s314, 1
                  %s319 = sphi %s167, %s167
                  %s320 = sphi %s164, %s164
                $region54: #{birnn_classifier.5} parent=50 // loop_header_branch
                  %317 = sbr.rel (%p315) target = $region58
                $region55: #{birnn_classifier.5} parent=50 // loop_body
                  %v321 = vld [vmem:[%s319] sm:$0xff]
                  %322 = vst [vmem:[%s320] sm:$0xff] %v321
                  %v323 = vld [vmem:[%s319 + $0x8] sm:$0xff]
                  %324 = vst [vmem:[%s320 + $0x8] sm:$0xff] %v323
                  %v325 = vld [vmem:[%s319 + $0x10] sm:$0xff]
                  %326 = vst [vmem:[%s320 + $0x10] sm:$0xff] %v325
                  %v327 = vld [vmem:[%s319 + $0x18] sm:$0xff]
                  %328 = vst [vmem:[%s320 + $0x18] sm:$0xff] %v327
                  %v329 = vld [vmem:[%s319 + $0x20] sm:$0xff]
                  %330 = vst [vmem:[%s320 + $0x20] sm:$0xff] %v329
                  %v331 = vld [vmem:[%s319 + $0x28] sm:$0xff]
                  %332 = vst [vmem:[%s320 + $0x28] sm:$0xff] %v331
                  %v333 = vld [vmem:[%s319 + $0x30] sm:$0xff]
                  %334 = vst [vmem:[%s320 + $0x30] sm:$0xff] %v333
                  %v335 = vld [vmem:[%s319 + $0x38] sm:$0xff]
                  %336 = vst [vmem:[%s320 + $0x38] sm:$0xff] %v335
                  %v337 = vld [vmem:[%s319 + $0x40] sm:$0xff]
                  %338 = vst [vmem:[%s320 + $0x40] sm:$0xff] %v337
                  %v339 = vld [vmem:[%s319 + $0x48] sm:$0xff]
                  %340 = vst [vmem:[%s320 + $0x48] sm:$0xff] %v339
                  %v341 = vld [vmem:[%s319 + $0x50] sm:$0xff]
                  %342 = vst [vmem:[%s320 + $0x50] sm:$0xff] %v341
                  %v343 = vld [vmem:[%s319 + $0x58] sm:$0xff]
                  %344 = vst [vmem:[%s320 + $0x58] sm:$0xff] %v343
                  %v345 = vld [vmem:[%s319 + $0x60] sm:$0xff]
                  %346 = vst [vmem:[%s320 + $0x60] sm:$0xff] %v345
                  %v347 = vld [vmem:[%s319 + $0x68] sm:$0xff]
                  %348 = vst [vmem:[%s320 + $0x68] sm:$0xff] %v347
                  %v349 = vld [vmem:[%s319 + $0x70] sm:$0xff]
                  %350 = vst [vmem:[%s320 + $0x70] sm:$0xff] %v349
                  %v351 = vld [vmem:[%s319 + $0x78] sm:$0xff]
                  %352 = vst [vmem:[%s320 + $0x78] sm:$0xff] %v351
                  %v353 = vld [vmem:[%s319 + $0x80] sm:$0xff]
                  %354 = vst [vmem:[%s320 + $0x80] sm:$0xff] %v353
                  %v355 = vld [vmem:[%s319 + $0x88] sm:$0xff]
                  %356 = vst [vmem:[%s320 + $0x88] sm:$0xff] %v355
                  %v357 = vld [vmem:[%s319 + $0x90] sm:$0xff]
                  %358 = vst [vmem:[%s320 + $0x90] sm:$0xff] %v357
                  %v359 = vld [vmem:[%s319 + $0x98] sm:$0xff]
                  %360 = vst [vmem:[%s320 + $0x98] sm:$0xff] %v359
                  %v361 = vld [vmem:[%s319 + $0xa0] sm:$0xff]
                  %362 = vst [vmem:[%s320 + $0xa0] sm:$0xff] %v361
                  %v363 = vld [vmem:[%s319 + $0xa8] sm:$0xff]
                  %364 = vst [vmem:[%s320 + $0xa8] sm:$0xff] %v363
                  %v365 = vld [vmem:[%s319 + $0xb0] sm:$0xff]
                  %366 = vst [vmem:[%s320 + $0xb0] sm:$0xff] %v365
                  %v367 = vld [vmem:[%s319 + $0xb8] sm:$0xff]
                  %368 = vst [vmem:[%s320 + $0xb8] sm:$0xff] %v367
                  %v369 = vld [vmem:[%s319 + $0xc0] sm:$0xff]
                  %370 = vst [vmem:[%s320 + $0xc0] sm:$0xff] %v369
                  %v371 = vld [vmem:[%s319 + $0xc8] sm:$0xff]
                  %372 = vst [vmem:[%s320 + $0xc8] sm:$0xff] %v371
                  %v373 = vld [vmem:[%s319 + $0xd0] sm:$0xff]
                  %374 = vst [vmem:[%s320 + $0xd0] sm:$0xff] %v373
                  %v375 = vld [vmem:[%s319 + $0xd8] sm:$0xff]
                  %376 = vst [vmem:[%s320 + $0xd8] sm:$0xff] %v375
                  %v377 = vld [vmem:[%s319 + $0xe0] sm:$0xff]
                  %378 = vst [vmem:[%s320 + $0xe0] sm:$0xff] %v377
                  %v379 = vld [vmem:[%s319 + $0xe8] sm:$0xff]
                  %380 = vst [vmem:[%s320 + $0xe8] sm:$0xff] %v379
                  %v381 = vld [vmem:[%s319 + $0xf0] sm:$0xff]
                  %382 = vst [vmem:[%s320 + $0xf0] sm:$0xff] %v381
                  %v383 = vld [vmem:[%s319 + $0xf8] sm:$0xff]
                  %384 = vst [vmem:[%s320 + $0xf8] sm:$0xff] %v383
                  %v385 = vld [vmem:[%s319 + $0x200] sm:$0xff]
                  %386 = vst [vmem:[%s320 + $0x100] sm:$0xff] %v385
                  %v387 = vld [vmem:[%s319 + $0x208] sm:$0xff]
                  %388 = vst [vmem:[%s320 + $0x108] sm:$0xff] %v387
                  %v389 = vld [vmem:[%s319 + $0x210] sm:$0xff]
                  %390 = vst [vmem:[%s320 + $0x110] sm:$0xff] %v389
                  %v391 = vld [vmem:[%s319 + $0x218] sm:$0xff]
                  %392 = vst [vmem:[%s320 + $0x118] sm:$0xff] %v391
                  %v393 = vld [vmem:[%s319 + $0x220] sm:$0xff]
                  %394 = vst [vmem:[%s320 + $0x120] sm:$0xff] %v393
                  %v395 = vld [vmem:[%s319 + $0x228] sm:$0xff]
                  %396 = vst [vmem:[%s320 + $0x128] sm:$0xff] %v395
                  %v397 = vld [vmem:[%s319 + $0x230] sm:$0xff]
                  %398 = vst [vmem:[%s320 + $0x130] sm:$0xff] %v397
                  %v399 = vld [vmem:[%s319 + $0x238] sm:$0xff]
                  %400 = vst [vmem:[%s320 + $0x138] sm:$0xff] %v399
                  %v401 = vld [vmem:[%s319 + $0x240] sm:$0xff]
                  %402 = vst [vmem:[%s320 + $0x140] sm:$0xff] %v401
                  %v403 = vld [vmem:[%s319 + $0x248] sm:$0xff]
                  %404 = vst [vmem:[%s320 + $0x148] sm:$0xff] %v403
                  %v405 = vld [vmem:[%s319 + $0x250] sm:$0xff]
                  %406 = vst [vmem:[%s320 + $0x150] sm:$0xff] %v405
                  %v407 = vld [vmem:[%s319 + $0x258] sm:$0xff]
                  %408 = vst [vmem:[%s320 + $0x158] sm:$0xff] %v407
                  %v409 = vld [vmem:[%s319 + $0x260] sm:$0xff]
                  %410 = vst [vmem:[%s320 + $0x160] sm:$0xff] %v409
                  %v411 = vld [vmem:[%s319 + $0x268] sm:$0xff]
                  %412 = vst [vmem:[%s320 + $0x168] sm:$0xff] %v411
                  %v413 = vld [vmem:[%s319 + $0x270] sm:$0xff]
                  %414 = vst [vmem:[%s320 + $0x170] sm:$0xff] %v413
                  %v415 = vld [vmem:[%s319 + $0x278] sm:$0xff]
                  %416 = vst [vmem:[%s320 + $0x178] sm:$0xff] %v415
                  %v417 = vld [vmem:[%s319 + $0x280] sm:$0xff]
                  %418 = vst [vmem:[%s320 + $0x180] sm:$0xff] %v417
                  %v419 = vld [vmem:[%s319 + $0x288] sm:$0xff]
                  %420 = vst [vmem:[%s320 + $0x188] sm:$0xff] %v419
                  %v421 = vld [vmem:[%s319 + $0x290] sm:$0xff]
                  %422 = vst [vmem:[%s320 + $0x190] sm:$0xff] %v421
                  %v423 = vld [vmem:[%s319 + $0x298] sm:$0xff]
                  %424 = vst [vmem:[%s320 + $0x198] sm:$0xff] %v423
                  %v425 = vld [vmem:[%s319 + $0x2a0] sm:$0xff]
                  %426 = vst [vmem:[%s320 + $0x1a0] sm:$0xff] %v425
                  %v427 = vld [vmem:[%s319 + $0x2a8] sm:$0xff]
                  %428 = vst [vmem:[%s320 + $0x1a8] sm:$0xff] %v427
                  %v429 = vld [vmem:[%s319 + $0x2b0] sm:$0xff]
                  %430 = vst [vmem:[%s320 + $0x1b0] sm:$0xff] %v429
                  %v431 = vld [vmem:[%s319 + $0x2b8] sm:$0xff]
                  %432 = vst [vmem:[%s320 + $0x1b8] sm:$0xff] %v431
                  %v433 = vld [vmem:[%s319 + $0x2c0] sm:$0xff]
                  %434 = vst [vmem:[%s320 + $0x1c0] sm:$0xff] %v433
                  %v435 = vld [vmem:[%s319 + $0x2c8] sm:$0xff]
                  %436 = vst [vmem:[%s320 + $0x1c8] sm:$0xff] %v435
                  %v437 = vld [vmem:[%s319 + $0x2d0] sm:$0xff]
                  %438 = vst [vmem:[%s320 + $0x1d0] sm:$0xff] %v437
                  %v439 = vld [vmem:[%s319 + $0x2d8] sm:$0xff]
                  %440 = vst [vmem:[%s320 + $0x1d8] sm:$0xff] %v439
                  %v441 = vld [vmem:[%s319 + $0x2e0] sm:$0xff]
                  %442 = vst [vmem:[%s320 + $0x1e0] sm:$0xff] %v441
                  %v443 = vld [vmem:[%s319 + $0x2e8] sm:$0xff]
                  %444 = vst [vmem:[%s320 + $0x1e8] sm:$0xff] %v443
                  %v445 = vld [vmem:[%s319 + $0x2f0] sm:$0xff]
                  %446 = vst [vmem:[%s320 + $0x1f0] sm:$0xff] %v445
                  %v447 = vld [vmem:[%s319 + $0x2f8] sm:$0xff]
                  %448 = vst [vmem:[%s320 + $0x1f8] sm:$0xff] %v447
                $region56: #{birnn_classifier.5} parent=50 // loop_footer
                  %s318 = sadd.s32 1, %s314
                $region57: #{birnn_classifier.5} parent=50 // loop_footer_branch
                  %313 = sbr.rel target = $region53
                $region58: #{birnn_classifier.5} parent=50 // loop_exit
                  _
              $region51: #{birnn_classifier.5} parent=35 // pred_fallthru
                _
              // Predicated region
              $region59: #{birnn_classifier.5} parent=35 // pred_check
                _
              $region60: #{birnn_classifier.5} parent=35 // pred_check_branch
                %450 = sbr.rel target = $region62
              $region61: #{birnn_classifier.5} parent=35 // pred_region
                _
              $region62: #{birnn_classifier.5} parent=35 // pred_fallthru
                _
            $region36: #{birnn_classifier.5} parent=31 // pred_fallthru
              _
            // Predicated region
            $region37: #{birnn_classifier.5} parent=31 // pred_check
              _
            $region38: #{birnn_classifier.5} parent=31 // pred_check_branch
              %173 = sbr.rel target = $region40
            $region39: #{birnn_classifier.5} parent=31 // pred_region
              loop: start=0, step=1, limit=1
              $region41: #{birnn_classifier.5} parent=39 // loop_pre_header
                _
              $region42: #{birnn_classifier.5} parent=39 // loop_header
                %s176 = sphi 0, %s180
                %p177 = scmp.ge.s32.totalorder %s176, 1
                %s181 = sphi %s167, %s167
                %s182 = sphi %s164, %s164
              $region43: #{birnn_classifier.5} parent=39 // loop_header_branch
                %179 = sbr.rel (%p177) target = $region47
              $region44: #{birnn_classifier.5} parent=39 // loop_body
                %v183 = vld [vmem:[%s181] sm:$0xff]
                %184 = vst [vmem:[%s182] sm:$0xff] %v183
                %v185 = vld [vmem:[%s181 + $0x8] sm:$0xff]
                %186 = vst [vmem:[%s182 + $0x8] sm:$0xff] %v185
                %v187 = vld [vmem:[%s181 + $0x10] sm:$0xff]
                %188 = vst [vmem:[%s182 + $0x10] sm:$0xff] %v187
                %v189 = vld [vmem:[%s181 + $0x18] sm:$0xff]
                %190 = vst [vmem:[%s182 + $0x18] sm:$0xff] %v189
                %v191 = vld [vmem:[%s181 + $0x20] sm:$0xff]
                %192 = vst [vmem:[%s182 + $0x20] sm:$0xff] %v191
                %v193 = vld [vmem:[%s181 + $0x28] sm:$0xff]
                %194 = vst [vmem:[%s182 + $0x28] sm:$0xff] %v193
                %v195 = vld [vmem:[%s181 + $0x30] sm:$0xff]
                %196 = vst [vmem:[%s182 + $0x30] sm:$0xff] %v195
                %v197 = vld [vmem:[%s181 + $0x38] sm:$0xff]
                %198 = vst [vmem:[%s182 + $0x38] sm:$0xff] %v197
                %v199 = vld [vmem:[%s181 + $0x40] sm:$0xff]
                %200 = vst [vmem:[%s182 + $0x40] sm:$0xff] %v199
                %v201 = vld [vmem:[%s181 + $0x48] sm:$0xff]
                %202 = vst [vmem:[%s182 + $0x48] sm:$0xff] %v201
                %v203 = vld [vmem:[%s181 + $0x50] sm:$0xff]
                %204 = vst [vmem:[%s182 + $0x50] sm:$0xff] %v203
                %v205 = vld [vmem:[%s181 + $0x58] sm:$0xff]
                %206 = vst [vmem:[%s182 + $0x58] sm:$0xff] %v205
                %v207 = vld [vmem:[%s181 + $0x60] sm:$0xff]
                %208 = vst [vmem:[%s182 + $0x60] sm:$0xff] %v207
                %v209 = vld [vmem:[%s181 + $0x68] sm:$0xff]
                %210 = vst [vmem:[%s182 + $0x68] sm:$0xff] %v209
                %v211 = vld [vmem:[%s181 + $0x70] sm:$0xff]
                %212 = vst [vmem:[%s182 + $0x70] sm:$0xff] %v211
                %v213 = vld [vmem:[%s181 + $0x78] sm:$0xff]
                %214 = vst [vmem:[%s182 + $0x78] sm:$0xff] %v213
                %v215 = vld [vmem:[%s181 + $0x80] sm:$0xff]
                %216 = vst [vmem:[%s182 + $0x80] sm:$0xff] %v215
                %v217 = vld [vmem:[%s181 + $0x88] sm:$0xff]
                %218 = vst [vmem:[%s182 + $0x88] sm:$0xff] %v217
                %v219 = vld [vmem:[%s181 + $0x90] sm:$0xff]
                %220 = vst [vmem:[%s182 + $0x90] sm:$0xff] %v219
                %v221 = vld [vmem:[%s181 + $0x98] sm:$0xff]
                %222 = vst [vmem:[%s182 + $0x98] sm:$0xff] %v221
                %v223 = vld [vmem:[%s181 + $0xa0] sm:$0xff]
                %224 = vst [vmem:[%s182 + $0xa0] sm:$0xff] %v223
                %v225 = vld [vmem:[%s181 + $0xa8] sm:$0xff]
                %226 = vst [vmem:[%s182 + $0xa8] sm:$0xff] %v225
                %v227 = vld [vmem:[%s181 + $0xb0] sm:$0xff]
                %228 = vst [vmem:[%s182 + $0xb0] sm:$0xff] %v227
                %v229 = vld [vmem:[%s181 + $0xb8] sm:$0xff]
                %230 = vst [vmem:[%s182 + $0xb8] sm:$0xff] %v229
                %v231 = vld [vmem:[%s181 + $0xc0] sm:$0xff]
                %232 = vst [vmem:[%s182 + $0xc0] sm:$0xff] %v231
                %v233 = vld [vmem:[%s181 + $0xc8] sm:$0xff]
                %234 = vst [vmem:[%s182 + $0xc8] sm:$0xff] %v233
                %v235 = vld [vmem:[%s181 + $0xd0] sm:$0xff]
                %236 = vst [vmem:[%s182 + $0xd0] sm:$0xff] %v235
                %v237 = vld [vmem:[%s181 + $0xd8] sm:$0xff]
                %238 = vst [vmem:[%s182 + $0xd8] sm:$0xff] %v237
                %v239 = vld [vmem:[%s181 + $0xe0] sm:$0xff]
                %240 = vst [vmem:[%s182 + $0xe0] sm:$0xff] %v239
                %v241 = vld [vmem:[%s181 + $0xe8] sm:$0xff]
                %242 = vst [vmem:[%s182 + $0xe8] sm:$0xff] %v241
                %v243 = vld [vmem:[%s181 + $0xf0] sm:$0xff]
                %244 = vst [vmem:[%s182 + $0xf0] sm:$0xff] %v243
                %v245 = vld [vmem:[%s181 + $0xf8] sm:$0xff]
                %246 = vst [vmem:[%s182 + $0xf8] sm:$0xff] %v245
                %v247 = vld [vmem:[%s181 + $0x200] sm:$0xff]
                %248 = vst [vmem:[%s182 + $0x100] sm:$0xff] %v247
                %v249 = vld [vmem:[%s181 + $0x208] sm:$0xff]
                %250 = vst [vmem:[%s182 + $0x108] sm:$0xff] %v249
                %v251 = vld [vmem:[%s181 + $0x210] sm:$0xff]
                %252 = vst [vmem:[%s182 + $0x110] sm:$0xff] %v251
                %v253 = vld [vmem:[%s181 + $0x218] sm:$0xff]
                %254 = vst [vmem:[%s182 + $0x118] sm:$0xff] %v253
                %v255 = vld [vmem:[%s181 + $0x220] sm:$0xff]
                %256 = vst [vmem:[%s182 + $0x120] sm:$0xff] %v255
                %v257 = vld [vmem:[%s181 + $0x228] sm:$0xff]
                %258 = vst [vmem:[%s182 + $0x128] sm:$0xff] %v257
                %v259 = vld [vmem:[%s181 + $0x230] sm:$0xff]
                %260 = vst [vmem:[%s182 + $0x130] sm:$0xff] %v259
                %v261 = vld [vmem:[%s181 + $0x238] sm:$0xff]
                %262 = vst [vmem:[%s182 + $0x138] sm:$0xff] %v261
                %v263 = vld [vmem:[%s181 + $0x240] sm:$0xff]
                %264 = vst [vmem:[%s182 + $0x140] sm:$0xff] %v263
                %v265 = vld [vmem:[%s181 + $0x248] sm:$0xff]
                %266 = vst [vmem:[%s182 + $0x148] sm:$0xff] %v265
                %v267 = vld [vmem:[%s181 + $0x250] sm:$0xff]
                %268 = vst [vmem:[%s182 + $0x150] sm:$0xff] %v267
                %v269 = vld [vmem:[%s181 + $0x258] sm:$0xff]
                %270 = vst [vmem:[%s182 + $0x158] sm:$0xff] %v269
                %v271 = vld [vmem:[%s181 + $0x260] sm:$0xff]
                %272 = vst [vmem:[%s182 + $0x160] sm:$0xff] %v271
                %v273 = vld [vmem:[%s181 + $0x268] sm:$0xff]
                %274 = vst [vmem:[%s182 + $0x168] sm:$0xff] %v273
                %v275 = vld [vmem:[%s181 + $0x270] sm:$0xff]
                %276 = vst [vmem:[%s182 + $0x170] sm:$0xff] %v275
                %v277 = vld [vmem:[%s181 + $0x278] sm:$0xff]
                %278 = vst [vmem:[%s182 + $0x178] sm:$0xff] %v277
                %v279 = vld [vmem:[%s181 + $0x280] sm:$0xff]
                %280 = vst [vmem:[%s182 + $0x180] sm:$0xff] %v279
                %v281 = vld [vmem:[%s181 + $0x288] sm:$0xff]
                %282 = vst [vmem:[%s182 + $0x188] sm:$0xff] %v281
                %v283 = vld [vmem:[%s181 + $0x290] sm:$0xff]
                %284 = vst [vmem:[%s182 + $0x190] sm:$0xff] %v283
                %v285 = vld [vmem:[%s181 + $0x298] sm:$0xff]
                %286 = vst [vmem:[%s182 + $0x198] sm:$0xff] %v285
                %v287 = vld [vmem:[%s181 + $0x2a0] sm:$0xff]
                %288 = vst [vmem:[%s182 + $0x1a0] sm:$0xff] %v287
                %v289 = vld [vmem:[%s181 + $0x2a8] sm:$0xff]
                %290 = vst [vmem:[%s182 + $0x1a8] sm:$0xff] %v289
                %v291 = vld [vmem:[%s181 + $0x2b0] sm:$0xff]
                %292 = vst [vmem:[%s182 + $0x1b0] sm:$0xff] %v291
                %v293 = vld [vmem:[%s181 + $0x2b8] sm:$0xff]
                %294 = vst [vmem:[%s182 + $0x1b8] sm:$0xff] %v293
                %v295 = vld [vmem:[%s181 + $0x2c0] sm:$0xff]
                %296 = vst [vmem:[%s182 + $0x1c0] sm:$0xff] %v295
                %v297 = vld [vmem:[%s181 + $0x2c8] sm:$0xff]
                %298 = vst [vmem:[%s182 + $0x1c8] sm:$0xff] %v297
                %v299 = vld [vmem:[%s181 + $0x2d0] sm:$0xff]
                %300 = vst [vmem:[%s182 + $0x1d0] sm:$0xff] %v299
                %v301 = vld [vmem:[%s181 + $0x2d8] sm:$0xff]
                %302 = vst [vmem:[%s182 + $0x1d8] sm:$0xff] %v301
                %v303 = vld [vmem:[%s181 + $0x2e0] sm:$0xff]
                %304 = vst [vmem:[%s182 + $0x1e0] sm:$0xff] %v303
                %v305 = vld [vmem:[%s181 + $0x2e8] sm:$0xff]
                %306 = vst [vmem:[%s182 + $0x1e8] sm:$0xff] %v305
                %v307 = vld [vmem:[%s181 + $0x2f0] sm:$0xff]
                %308 = vst [vmem:[%s182 + $0x1f0] sm:$0xff] %v307
                %v309 = vld [vmem:[%s181 + $0x2f8] sm:$0xff]
                %310 = vst [vmem:[%s182 + $0x1f8] sm:$0xff] %v309
              $region45: #{birnn_classifier.5} parent=39 // loop_footer
                %s180 = sadd.s32 1, %s176
              $region46: #{birnn_classifier.5} parent=39 // loop_footer_branch
                %175 = sbr.rel target = $region42
              $region47: #{birnn_classifier.5} parent=39 // loop_exit
                _
            $region40: #{birnn_classifier.5} parent=31 // pred_fallthru
              _
          $region32: #{birnn_classifier.5} parent=27 // pred_fallthru
            _
          %451 = vnop
        $region28: #{birnn_classifier.5} parent=23 // pred_fallthru
          _
        // Predicated region
        $region63: #{birnn_classifier.5} parent=23 // pred_check
          %p452 = pneg %p59
        $region64: #{birnn_classifier.5} parent=23 // pred_check_branch
          %454 = sbr.rel (%p452) target = $region66
        $region65: #{birnn_classifier.5} parent=23 // pred_region
          %p455 = scmp.lt.s32.totalorder %s13, 1
          %s456 = scalar_select %p455, %s13, 1
          %s457 = smul.addr %s456, 32
          %s458 = smul.addr %s457, 8
          %s459 = scalar_lea.vmem %s1, %s458
        $region66: #{birnn_classifier.5} parent=23 // pred_fallthru
          _
      $region24: #{birnn_classifier.5} parent=5 // pred_fallthru
        _
      %p460 = scmp.le.s32.totalorder 1, %s13
      %p461 = scmp.lt.s32.totalorder %s13, 3
      %p462 = pnand %p460, %p461
      %p463 = pneg %p462
      // Predicated region
      $region67: #{birnn_classifier.5} parent=5 // pred_check
        _
      $region68: #{birnn_classifier.5} parent=5 // pred_check_branch
        %465 = sbr.rel (%p462) target = $region70
      $region69: #{birnn_classifier.5} parent=5 // pred_region
        %s466 = ssub.s32 %s13, 1
        %s467 = sand.u32 %s26, 1
        %s468 = sand.u32 %s26, 1
        %s469 = smul.addr %s468, 512
        %s470 = scalar_lea.vmem [#allocation3], %s469
        // Predicated region
        $region71: #{birnn_classifier.5} parent=69 // pred_check
          %p471 = pneg %p39
        $region72: #{birnn_classifier.5} parent=69 // pred_check_branch
          %473 = sbr.rel (%p471) target = $region74
        $region73: #{birnn_classifier.5} parent=69 // pred_region
          _
        $region74: #{birnn_classifier.5} parent=69 // pred_fallthru
          _
        %s474 = sand.u32 %s26, 1
        %s475 = sand.u32 %s26, 1
        %s476 = smul.addr %s475, 512
        %s477 = scalar_lea.vmem [#allocation3], %s476
        %p478 = pneg %p39
        %p479 = pneg %p36
        %p480 = scmp.lt.s32.totalorder %s18, 1
        %s481 = scalar_select %p480, %s18, 1
        %s482 = smul.addr %s481, 32
        %s483 = smul.addr %s482, 8
        %s484 = scalar_lea.vmem %s1, %s483
        %p485 = pneg %p65
        %p486 = pneg %p62
        %p487 = pneg %p86
        %p488 = pneg %p83
        %p489 = pneg %p107
        %p490 = pneg %p104
        %p491 = pneg %p133
        %p492 = pneg %p130
        %s493 = sand.u32 %s120, 1
        %s494 = scalar_lea.sflag [#allocation5], %s493
        %s495 = sand.u32 %s120, 1
        %s496 = scalar_lea.vmem [#allocation4], %s495
        %p497 = scmp.lt.s32.totalorder %s18, 1
        %s498 = scalar_select %p497, %s18, 1
        %s499 = smul.addr %s498, 32
        %s500 = smul.addr %s499, 8
        %s501 = scalar_lea.vmem %s1, %s500
        %v503 = vld [vmem:[%s470] sm:$0xff]
        %v504 = vld [vmem:[%s470 + $0x8] sm:$0xff]
        %v505 = vld [vmem:[%s470 + $0x10] sm:$0xff]
        %v506 = vld [vmem:[%s470 + $0x18] sm:$0xff]
        %v507 = vld [vmem:[%s470 + $0x20] sm:$0xff]
        %v508 = vld [vmem:[%s470 + $0x28] sm:$0xff]
        %v509 = vld [vmem:[%s470 + $0x30] sm:$0xff]
        %v510 = vld [vmem:[%s470 + $0x38] sm:$0xff]
        %v511 = vld [vmem:[%s470 + $0x40] sm:$0xff]
        %v512 = vld [vmem:[%s470 + $0x48] sm:$0xff]
        %v513 = vld [vmem:[%s470 + $0x50] sm:$0xff]
        %v514 = vld [vmem:[%s470 + $0x58] sm:$0xff]
        %v515 = vld [vmem:[%s470 + $0x60] sm:$0xff]
        %v516 = vld [vmem:[%s470 + $0x68] sm:$0xff]
        %v517 = vld [vmem:[%s470 + $0x70] sm:$0xff]
        %v518 = vld [vmem:[%s470 + $0x78] sm:$0xff]
        %v519 = vld [vmem:[%s470 + $0x80] sm:$0xff]
        %v520 = vld [vmem:[%s470 + $0x88] sm:$0xff]
        %v521 = vld [vmem:[%s470 + $0x90] sm:$0xff]
        %v522 = vld [vmem:[%s470 + $0x98] sm:$0xff]
        %v523 = vld [vmem:[%s470 + $0xa0] sm:$0xff]
        %v524 = vld [vmem:[%s470 + $0xa8] sm:$0xff]
        %v525 = vld [vmem:[%s470 + $0xb0] sm:$0xff]
        %v526 = vld [vmem:[%s470 + $0xb8] sm:$0xff]
        %v527 = vld [vmem:[%s470 + $0xc0] sm:$0xff]
        %v528 = vld [vmem:[%s470 + $0xc8] sm:$0xff]
        %v529 = vld [vmem:[%s470 + $0xd0] sm:$0xff]
        %v530 = vld [vmem:[%s470 + $0xd8] sm:$0xff]
        %v531 = vld [vmem:[%s470 + $0xe0] sm:$0xff]
        %v532 = vld [vmem:[%s470 + $0xe8] sm:$0xff]
        %v533 = vld [vmem:[%s470 + $0xf0] sm:$0xff]
        %v534 = vld [vmem:[%s470 + $0xf8] sm:$0xff]
        %s535 = scalar_lea.vmem %s470, 256 [#allocation3]
        %v536 = vld [vmem:[%s535] sm:$0xff]
        %v537 = vld [vmem:[%s535 + $0x8] sm:$0xff]
        %v538 = vld [vmem:[%s535 + $0x10] sm:$0xff]
        %v539 = vld [vmem:[%s535 + $0x18] sm:$0xff]
        %v540 = vld [vmem:[%s535 + $0x20] sm:$0xff]
        %v541 = vld [vmem:[%s535 + $0x28] sm:$0xff]
        %v542 = vld [vmem:[%s535 + $0x30] sm:$0xff]
        %v543 = vld [vmem:[%s535 + $0x38] sm:$0xff]
        %v544 = vld [vmem:[%s535 + $0x40] sm:$0xff]
        %v545 = vld [vmem:[%s535 + $0x48] sm:$0xff]
        %v546 = vld [vmem:[%s535 + $0x50] sm:$0xff]
        %v547 = vld [vmem:[%s535 + $0x58] sm:$0xff]
        %v548 = vld [vmem:[%s535 + $0x60] sm:$0xff]
        %v549 = vld [vmem:[%s535 + $0x68] sm:$0xff]
        %v550 = vld [vmem:[%s535 + $0x70] sm:$0xff]
        %v551 = vld [vmem:[%s535 + $0x78] sm:$0xff]
        %v552 = vld [vmem:[%s535 + $0x80] sm:$0xff]
        %v553 = vld [vmem:[%s535 + $0x88] sm:$0xff]
        %v554 = vld [vmem:[%s535 + $0x90] sm:$0xff]
        %v555 = vld [vmem:[%s535 + $0x98] sm:$0xff]
        %v556 = vld [vmem:[%s535 + $0xa0] sm:$0xff]
        %v557 = vld [vmem:[%s535 + $0xa8] sm:$0xff]
        %v558 = vld [vmem:[%s535 + $0xb0] sm:$0xff]
        %v559 = vld [vmem:[%s535 + $0xb8] sm:$0xff]
        %v560 = vld [vmem:[%s535 + $0xc0] sm:$0xff]
        %v561 = vld [vmem:[%s535 + $0xc8] sm:$0xff]
        %v562 = vld [vmem:[%s535 + $0xd0] sm:$0xff]
        %v563 = vld [vmem:[%s535 + $0xd8] sm:$0xff]
        %v564 = vld [vmem:[%s535 + $0xe0] sm:$0xff]
        %v565 = vld [vmem:[%s535 + $0xe8] sm:$0xff]
        %v566 = vld [vmem:[%s535 + $0xf0] sm:$0xff]
        %v567 = vld [vmem:[%s535 + $0xf8] sm:$0xff]
        %600 = vrot.lane.b32.xlu0 %v536, 32
        %v601 = vpop.permute.xlu0 %600
        %602 = vrot.lane.b32.xlu0 %v537, 32
        %v603 = vpop.permute.xlu0 %602
        %604 = vrot.lane.b32.xlu0 %v538, 32
        %v605 = vpop.permute.xlu0 %604
        %606 = vrot.lane.b32.xlu0 %v539, 32
        %v607 = vpop.permute.xlu0 %606
        %608 = vrot.lane.b32.xlu0 %v540, 32
        %v609 = vpop.permute.xlu0 %608
        %610 = vrot.lane.b32.xlu0 %v541, 32
        %v611 = vpop.permute.xlu0 %610
        %612 = vrot.lane.b32.xlu0 %v542, 32
        %v613 = vpop.permute.xlu0 %612
        %614 = vrot.lane.b32.xlu0 %v543, 32
        %v615 = vpop.permute.xlu0 %614
        %616 = vrot.lane.b32.xlu0 %v544, 32
        %v617 = vpop.permute.xlu0 %616
        %618 = vrot.lane.b32.xlu0 %v545, 32
        %v619 = vpop.permute.xlu0 %618
        %620 = vrot.lane.b32.xlu0 %v546, 32
        %v621 = vpop.permute.xlu0 %620
        %622 = vrot.lane.b32.xlu0 %v547, 32
        %v623 = vpop.permute.xlu0 %622
        %624 = vrot.lane.b32.xlu0 %v548, 32
        %v625 = vpop.permute.xlu0 %624
        %626 = vrot.lane.b32.xlu0 %v549, 32
        %v627 = vpop.permute.xlu0 %626
        %628 = vrot.lane.b32.xlu0 %v550, 32
        %v629 = vpop.permute.xlu0 %628
        %630 = vrot.lane.b32.xlu0 %v551, 32
        %v631 = vpop.permute.xlu0 %630
        %632 = vrot.lane.b32.xlu0 %v552, 32
        %v633 = vpop.permute.xlu0 %632
        %634 = vrot.lane.b32.xlu0 %v553, 32
        %v635 = vpop.permute.xlu0 %634
        %636 = vrot.lane.b32.xlu0 %v554, 32
        %v637 = vpop.permute.xlu0 %636
        %638 = vrot.lane.b32.xlu0 %v555, 32
        %v639 = vpop.permute.xlu0 %638
        %640 = vrot.lane.b32.xlu0 %v556, 32
        %v641 = vpop.permute.xlu0 %640
        %642 = vrot.lane.b32.xlu0 %v557, 32
        %v643 = vpop.permute.xlu0 %642
        %644 = vrot.lane.b32.xlu0 %v558, 32
        %v645 = vpop.permute.xlu0 %644
        %646 = vrot.lane.b32.xlu0 %v559, 32
        %v647 = vpop.permute.xlu0 %646
        %648 = vrot.lane.b32.xlu0 %v560, 32
        %v649 = vpop.permute.xlu0 %648
        %650 = vrot.lane.b32.xlu0 %v561, 32
        %v651 = vpop.permute.xlu0 %650
        %652 = vrot.lane.b32.xlu0 %v562, 32
        %v653 = vpop.permute.xlu0 %652
        %654 = vrot.lane.b32.xlu0 %v563, 32
        %v655 = vpop.permute.xlu0 %654
        %656 = vrot.lane.b32.xlu0 %v564, 32
        %v657 = vpop.permute.xlu0 %656
        %658 = vrot.lane.b32.xlu0 %v565, 32
        %v659 = vpop.permute.xlu0 %658
        %660 = vrot.lane.b32.xlu0 %v566, 32
        %v661 = vpop.permute.xlu0 %660
        %662 = vrot.lane.b32.xlu0 %v567, 32
        %v663 = vpop.permute.xlu0 %662
        %vm696 = vcmask 261120
        %v697 = vsel %vm696, %v503, %v601
        %v698 = vsel %vm696, %v504, %v603
        %v699 = vsel %vm696, %v505, %v605
        %v700 = vsel %vm696, %v506, %v607
        %v701 = vsel %vm696, %v507, %v609
        %v702 = vsel %vm696, %v508, %v611
        %v703 = vsel %vm696, %v509, %v613
        %v704 = vsel %vm696, %v510, %v615
        %v705 = vsel %vm696, %v511, %v617
        %v706 = vsel %vm696, %v512, %v619
        %v707 = vsel %vm696, %v513, %v621
        %v708 = vsel %vm696, %v514, %v623
        %v709 = vsel %vm696, %v515, %v625
        %v710 = vsel %vm696, %v516, %v627
        %v711 = vsel %vm696, %v517, %v629
        %v712 = vsel %vm696, %v518, %v631
        %v713 = vsel %vm696, %v519, %v633
        %v714 = vsel %vm696, %v520, %v635
        %v715 = vsel %vm696, %v521, %v637
        %v716 = vsel %vm696, %v522, %v639
        %v717 = vsel %vm696, %v523, %v641
        %v718 = vsel %vm696, %v524, %v643
        %v719 = vsel %vm696, %v525, %v645
        %v720 = vsel %vm696, %v526, %v647
        %v721 = vsel %vm696, %v527, %v649
        %v722 = vsel %vm696, %v528, %v651
        %v723 = vsel %vm696, %v529, %v653
        %v724 = vsel %vm696, %v530, %v655
        %v725 = vsel %vm696, %v531, %v657
        %v726 = vsel %vm696, %v532, %v659
        %v727 = vsel %vm696, %v533, %v661
        %v728 = vsel %vm696, %v534, %v663
        %vm729 = vcmask 523264
        %730 = vst.msk [vmem:[#allocation2] sm:$0xff] %vm729, 0.0
        %731 = vst.msk [vmem:[#allocation2 + $0x8] sm:$0xff] %vm729, 0.0
        %vm732 = vcmask 517120
        %733 = vst.msk [vmem:[#allocation2 + $0x10] sm:$0x3] %vm732, 0.0
        %734 = vst.msk [vmem:[#allocation2 + $0x18] sm:$0xff] %vm729, 0.0
        %735 = vst.msk [vmem:[#allocation2 + $0x20] sm:$0xff] %vm729, 0.0
        %736 = vst.msk [vmem:[#allocation2 + $0x28] sm:$0x3] %vm732, 0.0
        %737 = vst.msk [vmem:[#allocation2 + $0x30] sm:$0xff] %vm729, 0.0
        %738 = vst.msk [vmem:[#allocation2 + $0x38] sm:$0xff] %vm729, 0.0
        %739 = vst.msk [vmem:[#allocation2 + $0x40] sm:$0x3] %vm732, 0.0
        %740 = vst.msk [vmem:[#allocation2 + $0x48] sm:$0xff] %vm729, 0.0
        %741 = vst.msk [vmem:[#allocation2 + $0x50] sm:$0xff] %vm729, 0.0
        %742 = vst.msk [vmem:[#allocation2 + $0x58] sm:$0x3] %vm732, 0.0
        %743 = vst.msk [vmem:[#allocation2 + $0x60] sm:$0xff] %vm729, 0.0
        %744 = vst.msk [vmem:[#allocation2 + $0x68] sm:$0xff] %vm729, 0.0
        %745 = vst.msk [vmem:[#allocation2 + $0x70] sm:$0x3] %vm732, 0.0
        %746 = vst.msk [vmem:[#allocation2 + $0x78] sm:$0xff] %vm729, 0.0
        %747 = vst.msk [vmem:[#allocation2 + $0x80] sm:$0xff] %vm729, 0.0
        %748 = vst.msk [vmem:[#allocation2 + $0x88] sm:$0x3] %vm732, 0.0
        %749 = vst.msk [vmem:[#allocation2 + $0x90] sm:$0xff] %vm729, 0.0
        %750 = vst.msk [vmem:[#allocation2 + $0x98] sm:$0xff] %vm729, 0.0
        %751 = vst.msk [vmem:[#allocation2 + $0xa0] sm:$0x3] %vm732, 0.0
        %752 = vst.msk [vmem:[#allocation2 + $0xa8] sm:$0xff] %vm729, 0.0
        %753 = vst.msk [vmem:[#allocation2 + $0xb0] sm:$0xff] %vm729, 0.0
        %754 = vst.msk [vmem:[#allocation2 + $0xb8] sm:$0x3] %vm732, 0.0
        %755 = vst.msk [vmem:[#allocation2 + $0xc0] sm:$0xff] %vm729, 0.0
        %756 = vst.msk [vmem:[#allocation2 + $0xc8] sm:$0xff] %vm729, 0.0
        %757 = vst.msk [vmem:[#allocation2 + $0xd0] sm:$0x3] %vm732, 0.0
        %758 = vst.msk [vmem:[#allocation2 + $0xd8] sm:$0xff] %vm729, 0.0
        %759 = vst.msk [vmem:[#allocation2 + $0xe0] sm:$0xff] %vm729, 0.0
        %760 = vst.msk [vmem:[#allocation2 + $0xe8] sm:$0x3] %vm732, 0.0
        %761 = vst.msk [vmem:[#allocation2 + $0xf0] sm:$0xff] %vm729, 0.0
        %762 = vst.msk [vmem:[#allocation2 + $0xf8] sm:$0xff] %vm729, 0.0
        %763 = vst.msk [vmem:[#allocation2 + $0x100] sm:$0x3] %vm732, 0.0
        %764 = vst.msk [vmem:[#allocation2 + $0x108] sm:$0xff] %vm729, 0.0
        %765 = vst.msk [vmem:[#allocation2 + $0x110] sm:$0xff] %vm729, 0.0
        %766 = vst.msk [vmem:[#allocation2 + $0x118] sm:$0x3] %vm732, 0.0
        %767 = vst.msk [vmem:[#allocation2 + $0x120] sm:$0xff] %vm729, 0.0
        %768 = vst.msk [vmem:[#allocation2 + $0x128] sm:$0xff] %vm729, 0.0
        %769 = vst.msk [vmem:[#allocation2 + $0x130] sm:$0x3] %vm732, 0.0
        %770 = vst.msk [vmem:[#allocation2 + $0x138] sm:$0xff] %vm729, 0.0
        %771 = vst.msk [vmem:[#allocation2 + $0x140] sm:$0xff] %vm729, 0.0
        %772 = vst.msk [vmem:[#allocation2 + $0x148] sm:$0x3] %vm732, 0.0
        %773 = vst.msk [vmem:[#allocation2 + $0x150] sm:$0xff] %vm729, 0.0
        %774 = vst.msk [vmem:[#allocation2 + $0x158] sm:$0xff] %vm729, 0.0
        %775 = vst.msk [vmem:[#allocation2 + $0x160] sm:$0x3] %vm732, 0.0
        %776 = vst.msk [vmem:[#allocation2 + $0x168] sm:$0xff] %vm729, 0.0
        %777 = vst.msk [vmem:[#allocation2 + $0x170] sm:$0xff] %vm729, 0.0
        %778 = vst.msk [vmem:[#allocation2 + $0x178] sm:$0x3] %vm732, 0.0
        %779 = vst.msk [vmem:[#allocation2 + $0x180] sm:$0xff] %vm729, 0.0
        %780 = vst.msk [vmem:[#allocation2 + $0x188] sm:$0xff] %vm729, 0.0
        %781 = vst.msk [vmem:[#allocation2 + $0x190] sm:$0x3] %vm732, 0.0
        %782 = vst.msk [vmem:[#allocation2 + $0x198] sm:$0xff] %vm729, 0.0
        %783 = vst.msk [vmem:[#allocation2 + $0x1a0] sm:$0xff] %vm729, 0.0
        %784 = vst.msk [vmem:[#allocation2 + $0x1a8] sm:$0x3] %vm732, 0.0
        %s785 = scalar_lea.vmem [#allocation2], 24
        %786 = vst.msk [vmem:[%s785 + $0x1] sm:$0xff] %vm729, %v697
        %787 = vst.msk [vmem:[%s785 + $0x9] sm:$0xff] %vm729, %v698
        %788 = vst.msk [vmem:[%s785 + $0x19] sm:$0xff] %vm729, %v699
        %789 = vst.msk [vmem:[%s785 + $0x21] sm:$0xff] %vm729, %v700
        %790 = vst.msk [vmem:[%s785 + $0x31] sm:$0xff] %vm729, %v701
        %791 = vst.msk [vmem:[%s785 + $0x39] sm:$0xff] %vm729, %v702
        %792 = vst.msk [vmem:[%s785 + $0x49] sm:$0xff] %vm729, %v703
        %793 = vst.msk [vmem:[%s785 + $0x51] sm:$0xff] %vm729, %v704
        %794 = vst.msk [vmem:[%s785 + $0x61] sm:$0xff] %vm729, %v705
        %795 = vst.msk [vmem:[%s785 + $0x69] sm:$0xff] %vm729, %v706
        %796 = vst.msk [vmem:[%s785 + $0x79] sm:$0xff] %vm729, %v707
        %797 = vst.msk [vmem:[%s785 + $0x81] sm:$0xff] %vm729, %v708
        %798 = vst.msk [vmem:[%s785 + $0x91] sm:$0xff] %vm729, %v709
        %799 = vst.msk [vmem:[%s785 + $0x99] sm:$0xff] %vm729, %v710
        %800 = vst.msk [vmem:[%s785 + $0xa9] sm:$0xff] %vm729, %v711
        %801 = vst.msk [vmem:[%s785 + $0xb1] sm:$0xff] %vm729, %v712
        %802 = vst.msk [vmem:[%s785 + $0xc1] sm:$0xff] %vm729, %v713
        %803 = vst.msk [vmem:[%s785 + $0xc9] sm:$0xff] %vm729, %v714
        %804 = vst.msk [vmem:[%s785 + $0xd9] sm:$0xff] %vm729, %v715
        %805 = vst.msk [vmem:[%s785 + $0xe1] sm:$0xff] %vm729, %v716
        %806 = vst.msk [vmem:[%s785 + $0xf1] sm:$0xff] %vm729, %v717
        %807 = vst.msk [vmem:[%s785 + $0xf9] sm:$0xff] %vm729, %v718
        %808 = vst.msk [vmem:[%s785 + $0x109] sm:$0xff] %vm729, %v719
        %809 = vst.msk [vmem:[%s785 + $0x111] sm:$0xff] %vm729, %v720
        %810 = vst.msk [vmem:[%s785 + $0x121] sm:$0xff] %vm729, %v721
        %811 = vst.msk [vmem:[%s785 + $0x129] sm:$0xff] %vm729, %v722
        %812 = vst.msk [vmem:[%s785 + $0x139] sm:$0xff] %vm729, %v723
        %813 = vst.msk [vmem:[%s785 + $0x141] sm:$0xff] %vm729, %v724
        %814 = vst.msk [vmem:[%s785 + $0x151] sm:$0xff] %vm729, %v725
        %815 = vst.msk [vmem:[%s785 + $0x159] sm:$0xff] %vm729, %v726
        %816 = vst.msk [vmem:[%s785 + $0x169] sm:$0xff] %vm729, %v727
        %817 = vst.msk [vmem:[%s785 + $0x171] sm:$0xff] %vm729, %v728
        %v818 = vld [vmem:[#allocation2] sm:$0xff]
        %v819 = vld [vmem:[#allocation2 + $0x8] sm:$0xff]
        %v820 = vld [vmem:[#allocation2 + $0x10] sm:$0x3]
        %v821 = vld [vmem:[#allocation2 + $0x18] sm:$0xff]
        %v822 = vld [vmem:[#allocation2 + $0x20] sm:$0xff]
        %v823 = vld [vmem:[#allocation2 + $0x28] sm:$0x3]
        %v824 = vld [vmem:[#allocation2 + $0x30] sm:$0xff]
        %v825 = vld [vmem:[#allocation2 + $0x38] sm:$0xff]
        %v826 = vld [vmem:[#allocation2 + $0x40] sm:$0x3]
        %v827 = vld [vmem:[#allocation2 + $0x48] sm:$0xff]
        %v828 = vld [vmem:[#allocation2 + $0x50] sm:$0xff]
        %v829 = vld [vmem:[#allocation2 + $0x58] sm:$0x3]
        %v830 = vld [vmem:[#allocation2 + $0x60] sm:$0xff]
        %v831 = vld [vmem:[#allocation2 + $0x68] sm:$0xff]
        %v832 = vld [vmem:[#allocation2 + $0x70] sm:$0x3]
        %v833 = vld [vmem:[#allocation2 + $0x78] sm:$0xff]
        %v834 = vld [vmem:[#allocation2 + $0x80] sm:$0xff]
        %v835 = vld [vmem:[#allocation2 + $0x88] sm:$0x3]
        %v836 = vld [vmem:[#allocation2 + $0x90] sm:$0xff]
        %v837 = vld [vmem:[#allocation2 + $0x98] sm:$0xff]
        %v838 = vld [vmem:[#allocation2 + $0xa0] sm:$0x3]
        %v839 = vld [vmem:[#allocation2 + $0xa8] sm:$0xff]
        %v840 = vld [vmem:[#allocation2 + $0xb0] sm:$0xff]
        %v841 = vld [vmem:[#allocation2 + $0xb8] sm:$0x3]
        %v842 = vld [vmem:[#allocation2 + $0xc0] sm:$0xff]
        %v843 = vld [vmem:[#allocation2 + $0xc8] sm:$0xff]
        %v844 = vld [vmem:[#allocation2 + $0xd0] sm:$0x3]
        %v845 = vld [vmem:[#allocation2 + $0xd8] sm:$0xff]
        %v846 = vld [vmem:[#allocation2 + $0xe0] sm:$0xff]
        %v847 = vld [vmem:[#allocation2 + $0xe8] sm:$0x3]
        %v848 = vld [vmem:[#allocation2 + $0xf0] sm:$0xff]
        %v849 = vld [vmem:[#allocation2 + $0xf8] sm:$0xff]
        %v850 = vld [vmem:[#allocation2 + $0x100] sm:$0x3]
        %v851 = vld [vmem:[#allocation2 + $0x108] sm:$0xff]
        %v852 = vld [vmem:[#allocation2 + $0x110] sm:$0xff]
        %v853 = vld [vmem:[#allocation2 + $0x118] sm:$0x3]
        %v854 = vld [vmem:[#allocation2 + $0x120] sm:$0xff]
        %v855 = vld [vmem:[#allocation2 + $0x128] sm:$0xff]
        %v856 = vld [vmem:[#allocation2 + $0x130] sm:$0x3]
        %v857 = vld [vmem:[#allocation2 + $0x138] sm:$0xff]
        %v858 = vld [vmem:[#allocation2 + $0x140] sm:$0xff]
        %v859 = vld [vmem:[#allocation2 + $0x148] sm:$0x3]
        %v860 = vld [vmem:[#allocation2 + $0x150] sm:$0xff]
        %v861 = vld [vmem:[#allocation2 + $0x158] sm:$0xff]
        %v862 = vld [vmem:[#allocation2 + $0x160] sm:$0x3]
        %v863 = vld [vmem:[#allocation2 + $0x168] sm:$0xff]
        %v864 = vld [vmem:[#allocation2 + $0x170] sm:$0xff]
        %v865 = vld [vmem:[#allocation2 + $0x178] sm:$0x3]
        %v866 = vld [vmem:[#allocation2 + $0x180] sm:$0xff]
        %v867 = vld [vmem:[#allocation2 + $0x188] sm:$0xff]
        %v868 = vld [vmem:[#allocation2 + $0x190] sm:$0x3]
        %v869 = vld [vmem:[#allocation2 + $0x198] sm:$0xff]
        %v870 = vld [vmem:[#allocation2 + $0x1a0] sm:$0xff]
        %v871 = vld [vmem:[#allocation2 + $0x1a8] sm:$0x3]
        %vm920 = vcmask 1046528
        %v921 = vrot.slane %v818, 1
        %v922 = vrot.slane %v819, 1
        %v923 = vsel %vm920, %v921, %v922
        %v924 = vrot.slane %v820, 1
        %v925 = vsel %vm920, %v922, %v924
        %v926 = vrot.slane %v821, 1
        %v927 = vrot.slane %v822, 1
        %v928 = vsel %vm920, %v926, %v927
        %v929 = vrot.slane %v823, 1
        %v930 = vsel %vm920, %v927, %v929
        %v931 = vrot.slane %v824, 1
        %v932 = vrot.slane %v825, 1
        %v933 = vsel %vm920, %v931, %v932
        %v934 = vrot.slane %v826, 1
        %v935 = vsel %vm920, %v932, %v934
        %v936 = vrot.slane %v827, 1
        %v937 = vrot.slane %v828, 1
        %v938 = vsel %vm920, %v936, %v937
        %v939 = vrot.slane %v829, 1
        %v940 = vsel %vm920, %v937, %v939
        %v941 = vrot.slane %v830, 1
        %v942 = vrot.slane %v831, 1
        %v943 = vsel %vm920, %v941, %v942
        %v944 = vrot.slane %v832, 1
        %v945 = vsel %vm920, %v942, %v944
        %v946 = vrot.slane %v833, 1
        %v947 = vrot.slane %v834, 1
        %v948 = vsel %vm920, %v946, %v947
        %v949 = vrot.slane %v835, 1
        %v950 = vsel %vm920, %v947, %v949
        %v951 = vrot.slane %v836, 1
        %v952 = vrot.slane %v837, 1
        %v953 = vsel %vm920, %v951, %v952
        %v954 = vrot.slane %v838, 1
        %v955 = vsel %vm920, %v952, %v954
        %v956 = vrot.slane %v839, 1
        %v957 = vrot.slane %v840, 1
        %v958 = vsel %vm920, %v956, %v957
        %v959 = vrot.slane %v841, 1
        %v960 = vsel %vm920, %v957, %v959
        %v961 = vrot.slane %v842, 1
        %v962 = vrot.slane %v843, 1
        %v963 = vsel %vm920, %v961, %v962
        %v964 = vrot.slane %v844, 1
        %v965 = vsel %vm920, %v962, %v964
        %v966 = vrot.slane %v845, 1
        %v967 = vrot.slane %v846, 1
        %v968 = vsel %vm920, %v966, %v967
        %v969 = vrot.slane %v847, 1
        %v970 = vsel %vm920, %v967, %v969
        %v971 = vrot.slane %v848, 1
        %v972 = vrot.slane %v849, 1
        %v973 = vsel %vm920, %v971, %v972
        %v974 = vrot.slane %v850, 1
        %v975 = vsel %vm920, %v972, %v974
        %v976 = vrot.slane %v851, 1
        %v977 = vrot.slane %v852, 1
        %v978 = vsel %vm920, %v976, %v977
        %v979 = vrot.slane %v853, 1
        %v980 = vsel %vm920, %v977, %v979
        %v981 = vrot.slane %v854, 1
        %v982 = vrot.slane %v855, 1
        %v983 = vsel %vm920, %v981, %v982
        %v984 = vrot.slane %v856, 1
        %v985 = vsel %vm920, %v982, %v984
        %v986 = vrot.slane %v857, 1
        %v987 = vrot.slane %v858, 1
        %v988 = vsel %vm920, %v986, %v987
        %v989 = vrot.slane %v859, 1
        %v990 = vsel %vm920, %v987, %v989
        %v991 = vrot.slane %v860, 1
        %v992 = vrot.slane %v861, 1
        %v993 = vsel %vm920, %v991, %v992
        %v994 = vrot.slane %v862, 1
        %v995 = vsel %vm920, %v992, %v994
        %v996 = vrot.slane %v863, 1
        %v997 = vrot.slane %v864, 1
        %v998 = vsel %vm920, %v996, %v997
        %v999 = vrot.slane %v865, 1
        %v1000 = vsel %vm920, %v997, %v999
        %vm1001 = vcmask 1045504
        %v1002 = vrot.slane %v818, 2
        %v1003 = vrot.slane %v819, 2
        %v1004 = vsel %vm1001, %v1002, %v1003
        %v1005 = vrot.slane %v820, 2
        %v1006 = vsel %vm1001, %v1003, %v1005
        %v1007 = vrot.slane %v821, 2
        %v1008 = vrot.slane %v822, 2
        %v1009 = vsel %vm1001, %v1007, %v1008
        %v1010 = vrot.slane %v823, 2
        %v1011 = vsel %vm1001, %v1008, %v1010
        %v1012 = vrot.slane %v824, 2
        %v1013 = vrot.slane %v825, 2
        %v1014 = vsel %vm1001, %v1012, %v1013
        %v1015 = vrot.slane %v826, 2
        %v1016 = vsel %vm1001, %v1013, %v1015
        %v1017 = vrot.slane %v827, 2
        %v1018 = vrot.slane %v828, 2
        %v1019 = vsel %vm1001, %v1017, %v1018
        %v1020 = vrot.slane %v829, 2
        %v1021 = vsel %vm1001, %v1018, %v1020
        %v1022 = vrot.slane %v830, 2
        %v1023 = vrot.slane %v831, 2
        %v1024 = vsel %vm1001, %v1022, %v1023
        %v1025 = vrot.slane %v832, 2
        %v1026 = vsel %vm1001, %v1023, %v1025
        %v1027 = vrot.slane %v833, 2
        %v1028 = vrot.slane %v834, 2
        %v1029 = vsel %vm1001, %v1027, %v1028
        %v1030 = vrot.slane %v835, 2
        %v1031 = vsel %vm1001, %v1028, %v1030
        %v1032 = vrot.slane %v836, 2
        %v1033 = vrot.slane %v837, 2
        %v1034 = vsel %vm1001, %v1032, %v1033
        %v1035 = vrot.slane %v838, 2
        %v1036 = vsel %vm1001, %v1033, %v1035
        %v1037 = vrot.slane %v839, 2
        %v1038 = vrot.slane %v840, 2
        %v1039 = vsel %vm1001, %v1037, %v1038
        %v1040 = vrot.slane %v841, 2
        %v1041 = vsel %vm1001, %v1038, %v1040
        %v1042 = vrot.slane %v842, 2
        %v1043 = vrot.slane %v843, 2
        %v1044 = vsel %vm1001, %v1042, %v1043
        %v1045 = vrot.slane %v844, 2
        %v1046 = vsel %vm1001, %v1043, %v1045
        %v1047 = vrot.slane %v845, 2
        %v1048 = vrot.slane %v846, 2
        %v1049 = vsel %vm1001, %v1047, %v1048
        %v1050 = vrot.slane %v847, 2
        %v1051 = vsel %vm1001, %v1048, %v1050
        %v1052 = vrot.slane %v848, 2
        %v1053 = vrot.slane %v849, 2
        %v1054 = vsel %vm1001, %v1052, %v1053
        %v1055 = vrot.slane %v850, 2
        %v1056 = vsel %vm1001, %v1053, %v1055
        %v1057 = vrot.slane %v851, 2
        %v1058 = vrot.slane %v852, 2
        %v1059 = vsel %vm1001, %v1057, %v1058
        %v1060 = vrot.slane %v853, 2
        %v1061 = vsel %vm1001, %v1058, %v1060
        %v1062 = vrot.slane %v854, 2
        %v1063 = vrot.slane %v855, 2
        %v1064 = vsel %vm1001, %v1062, %v1063
        %v1065 = vrot.slane %v856, 2
        %v1066 = vsel %vm1001, %v1063, %v1065
        %v1067 = vrot.slane %v857, 2
        %v1068 = vrot.slane %v858, 2
        %v1069 = vsel %vm1001, %v1067, %v1068
        %v1070 = vrot.slane %v859, 2
        %v1071 = vsel %vm1001, %v1068, %v1070
        %v1072 = vrot.slane %v860, 2
        %v1073 = vrot.slane %v861, 2
        %v1074 = vsel %vm1001, %v1072, %v1073
        %v1075 = vrot.slane %v862, 2
        %v1076 = vsel %vm1001, %v1073, %v1075
        %v1077 = vrot.slane %v863, 2
        %v1078 = vrot.slane %v864, 2
        %v1079 = vsel %vm1001, %v1077, %v1078
        %v1080 = vrot.slane %v865, 2
        %v1081 = vsel %vm1001, %v1078, %v1080
        %v1117 = vrot.slane %v866, 1
        %v1118 = vrot.slane %v867, 1
        %v1119 = vsel %vm920, %v1117, %v1118
        %v1120 = vrot.slane %v868, 1
        %v1121 = vsel %vm920, %v1118, %v1120
        %v1154 = vrot.slane %v866, 2
        %v1155 = vrot.slane %v867, 2
        %v1156 = vsel %vm1001, %v1154, %v1155
        %v1157 = vrot.slane %v868, 2
        %v1158 = vsel %vm1001, %v1155, %v1157
        %v1162 = vrot.slane %v869, 1
        %v1163 = vrot.slane %v870, 1
        %v1164 = vsel %vm920, %v1162, %v1163
        %v1165 = vrot.slane %v871, 1
        %v1166 = vsel %vm920, %v1163, %v1165
        %v1167 = vrot.slane %v869, 2
        %v1168 = vrot.slane %v870, 2
        %v1169 = vsel %vm1001, %v1167, %v1168
        %v1170 = vrot.slane %v871, 2
        %v1171 = vsel %vm1001, %v1168, %v1170
        %1176 = vrot.lane.b32.xlu0 %v923, 64
        %v1177 = vpop.permute.xlu0 %1176
        %1178 = vrot.lane.b32.xlu0 %v925, 64
        %v1179 = vpop.permute.xlu0 %1178
        %1180 = vrot.lane.b32.xlu0 %v928, 64
        %v1181 = vpop.permute.xlu0 %1180
        %1182 = vrot.lane.b32.xlu0 %v930, 64
        %v1183 = vpop.permute.xlu0 %1182
        %1184 = vrot.lane.b32.xlu0 %v933, 64
        %v1185 = vpop.permute.xlu0 %1184
        %1186 = vrot.lane.b32.xlu0 %v935, 64
        %v1187 = vpop.permute.xlu0 %1186
        %1188 = vrot.lane.b32.xlu0 %v938, 64
        %v1189 = vpop.permute.xlu0 %1188
        %1190 = vrot.lane.b32.xlu0 %v940, 64
        %v1191 = vpop.permute.xlu0 %1190
        %1192 = vrot.lane.b32.xlu0 %v943, 64
        %v1193 = vpop.permute.xlu0 %1192
        %1194 = vrot.lane.b32.xlu0 %v945, 64
        %v1195 = vpop.permute.xlu0 %1194
        %1196 = vrot.lane.b32.xlu0 %v948, 64
        %v1197 = vpop.permute.xlu0 %1196
        %1198 = vrot.lane.b32.xlu0 %v950, 64
        %v1199 = vpop.permute.xlu0 %1198
        %1200 = vrot.lane.b32.xlu0 %v953, 64
        %v1201 = vpop.permute.xlu0 %1200
        %1202 = vrot.lane.b32.xlu0 %v955, 64
        %v1203 = vpop.permute.xlu0 %1202
        %1204 = vrot.lane.b32.xlu0 %v958, 64
        %v1205 = vpop.permute.xlu0 %1204
        %1206 = vrot.lane.b32.xlu0 %v960, 64
        %v1207 = vpop.permute.xlu0 %1206
        %1208 = vrot.lane.b32.xlu0 %v963, 64
        %v1209 = vpop.permute.xlu0 %1208
        %1210 = vrot.lane.b32.xlu0 %v965, 64
        %v1211 = vpop.permute.xlu0 %1210
        %1212 = vrot.lane.b32.xlu0 %v968, 64
        %v1213 = vpop.permute.xlu0 %1212
        %1214 = vrot.lane.b32.xlu0 %v970, 64
        %v1215 = vpop.permute.xlu0 %1214
        %1216 = vrot.lane.b32.xlu0 %v973, 64
        %v1217 = vpop.permute.xlu0 %1216
        %1218 = vrot.lane.b32.xlu0 %v975, 64
        %v1219 = vpop.permute.xlu0 %1218
        %1220 = vrot.lane.b32.xlu0 %v978, 64
        %v1221 = vpop.permute.xlu0 %1220
        %1222 = vrot.lane.b32.xlu0 %v980, 64
        %v1223 = vpop.permute.xlu0 %1222
        %1224 = vrot.lane.b32.xlu0 %v983, 64
        %v1225 = vpop.permute.xlu0 %1224
        %1226 = vrot.lane.b32.xlu0 %v985, 64
        %v1227 = vpop.permute.xlu0 %1226
        %1228 = vrot.lane.b32.xlu0 %v988, 64
        %v1229 = vpop.permute.xlu0 %1228
        %1230 = vrot.lane.b32.xlu0 %v990, 64
        %v1231 = vpop.permute.xlu0 %1230
        %1232 = vrot.lane.b32.xlu0 %v993, 64
        %v1233 = vpop.permute.xlu0 %1232
        %1234 = vrot.lane.b32.xlu0 %v995, 64
        %v1235 = vpop.permute.xlu0 %1234
        %1236 = vrot.lane.b32.xlu0 %v998, 64
        %v1237 = vpop.permute.xlu0 %1236
        %1238 = vrot.lane.b32.xlu0 %v1000, 64
        %v1239 = vpop.permute.xlu0 %1238
        %1272 = vrot.lane.b32.xlu0 %v821, 64
        %v1273 = vpop.permute.xlu0 %1272
        %1274 = vrot.lane.b32.xlu0 %v822, 64
        %v1275 = vpop.permute.xlu0 %1274
        %1276 = vrot.lane.b32.xlu0 %v824, 64
        %v1277 = vpop.permute.xlu0 %1276
        %1278 = vrot.lane.b32.xlu0 %v825, 64
        %v1279 = vpop.permute.xlu0 %1278
        %1280 = vrot.lane.b32.xlu0 %v827, 64
        %v1281 = vpop.permute.xlu0 %1280
        %1282 = vrot.lane.b32.xlu0 %v828, 64
        %v1283 = vpop.permute.xlu0 %1282
        %1284 = vrot.lane.b32.xlu0 %v830, 64
        %v1285 = vpop.permute.xlu0 %1284
        %1286 = vrot.lane.b32.xlu0 %v831, 64
        %v1287 = vpop.permute.xlu0 %1286
        %1288 = vrot.lane.b32.xlu0 %v833, 64
        %v1289 = vpop.permute.xlu0 %1288
        %1290 = vrot.lane.b32.xlu0 %v834, 64
        %v1291 = vpop.permute.xlu0 %1290
        %1292 = vrot.lane.b32.xlu0 %v836, 64
        %v1293 = vpop.permute.xlu0 %1292
        %1294 = vrot.lane.b32.xlu0 %v837, 64
        %v1295 = vpop.permute.xlu0 %1294
        %1296 = vrot.lane.b32.xlu0 %v839, 64
        %v1297 = vpop.permute.xlu0 %1296
        %1298 = vrot.lane.b32.xlu0 %v840, 64
        %v1299 = vpop.permute.xlu0 %1298
        %1300 = vrot.lane.b32.xlu0 %v842, 64
        %v1301 = vpop.permute.xlu0 %1300
        %1302 = vrot.lane.b32.xlu0 %v843, 64
        %v1303 = vpop.permute.xlu0 %1302
        %1304 = vrot.lane.b32.xlu0 %v845, 64
        %v1305 = vpop.permute.xlu0 %1304
        %1306 = vrot.lane.b32.xlu0 %v846, 64
        %v1307 = vpop.permute.xlu0 %1306
        %1308 = vrot.lane.b32.xlu0 %v848, 64
        %v1309 = vpop.permute.xlu0 %1308
        %1310 = vrot.lane.b32.xlu0 %v849, 64
        %v1311 = vpop.permute.xlu0 %1310
        %1312 = vrot.lane.b32.xlu0 %v851, 64
        %v1313 = vpop.permute.xlu0 %1312
        %1314 = vrot.lane.b32.xlu0 %v852, 64
        %v1315 = vpop.permute.xlu0 %1314
        %1316 = vrot.lane.b32.xlu0 %v854, 64
        %v1317 = vpop.permute.xlu0 %1316
        %1318 = vrot.lane.b32.xlu0 %v855, 64
        %v1319 = vpop.permute.xlu0 %1318
        %1320 = vrot.lane.b32.xlu0 %v857, 64
        %v1321 = vpop.permute.xlu0 %1320
        %1322 = vrot.lane.b32.xlu0 %v858, 64
        %v1323 = vpop.permute.xlu0 %1322
        %1324 = vrot.lane.b32.xlu0 %v860, 64
        %v1325 = vpop.permute.xlu0 %1324
        %1326 = vrot.lane.b32.xlu0 %v861, 64
        %v1327 = vpop.permute.xlu0 %1326
        %1328 = vrot.lane.b32.xlu0 %v863, 64
        %v1329 = vpop.permute.xlu0 %1328
        %1330 = vrot.lane.b32.xlu0 %v864, 64
        %v1331 = vpop.permute.xlu0 %1330
        %1332 = vrot.lane.b32.xlu0 %v866, 64
        %v1333 = vpop.permute.xlu0 %1332
        %1334 = vrot.lane.b32.xlu0 %v867, 64
        %v1335 = vpop.permute.xlu0 %1334
        %1368 = vrot.lane.b32.xlu0 %v1009, 64
        %v1369 = vpop.permute.xlu0 %1368
        %1370 = vrot.lane.b32.xlu0 %v1011, 64
        %v1371 = vpop.permute.xlu0 %1370
        %1372 = vrot.lane.b32.xlu0 %v1014, 64
        %v1373 = vpop.permute.xlu0 %1372
        %1374 = vrot.lane.b32.xlu0 %v1016, 64
        %v1375 = vpop.permute.xlu0 %1374
        %1376 = vrot.lane.b32.xlu0 %v1019, 64
        %v1377 = vpop.permute.xlu0 %1376
        %1378 = vrot.lane.b32.xlu0 %v1021, 64
        %v1379 = vpop.permute.xlu0 %1378
        %1380 = vrot.lane.b32.xlu0 %v1024, 64
        %v1381 = vpop.permute.xlu0 %1380
        %1382 = vrot.lane.b32.xlu0 %v1026, 64
        %v1383 = vpop.permute.xlu0 %1382
        %1384 = vrot.lane.b32.xlu0 %v1029, 64
        %v1385 = vpop.permute.xlu0 %1384
        %1386 = vrot.lane.b32.xlu0 %v1031, 64
        %v1387 = vpop.permute.xlu0 %1386
        %1388 = vrot.lane.b32.xlu0 %v1034, 64
        %v1389 = vpop.permute.xlu0 %1388
        %1390 = vrot.lane.b32.xlu0 %v1036, 64
        %v1391 = vpop.permute.xlu0 %1390
        %1392 = vrot.lane.b32.xlu0 %v1039, 64
        %v1393 = vpop.permute.xlu0 %1392
        %1394 = vrot.lane.b32.xlu0 %v1041, 64
        %v1395 = vpop.permute.xlu0 %1394
        %1396 = vrot.lane.b32.xlu0 %v1044, 64
        %v1397 = vpop.permute.xlu0 %1396
        %1398 = vrot.lane.b32.xlu0 %v1046, 64
        %v1399 = vpop.permute.xlu0 %1398
        %1400 = vrot.lane.b32.xlu0 %v1049, 64
        %v1401 = vpop.permute.xlu0 %1400
        %1402 = vrot.lane.b32.xlu0 %v1051, 64
        %v1403 = vpop.permute.xlu0 %1402
        %1404 = vrot.lane.b32.xlu0 %v1054, 64
        %v1405 = vpop.permute.xlu0 %1404
        %1406 = vrot.lane.b32.xlu0 %v1056, 64
        %v1407 = vpop.permute.xlu0 %1406
        %1408 = vrot.lane.b32.xlu0 %v1059, 64
        %v1409 = vpop.permute.xlu0 %1408
        %1410 = vrot.lane.b32.xlu0 %v1061, 64
        %v1411 = vpop.permute.xlu0 %1410
        %1412 = vrot.lane.b32.xlu0 %v1064, 64
        %v1413 = vpop.permute.xlu0 %1412
        %1414 = vrot.lane.b32.xlu0 %v1066, 64
        %v1415 = vpop.permute.xlu0 %1414
        %1416 = vrot.lane.b32.xlu0 %v1069, 64
        %v1417 = vpop.permute.xlu0 %1416
        %1418 = vrot.lane.b32.xlu0 %v1071, 64
        %v1419 = vpop.permute.xlu0 %1418
        %1420 = vrot.lane.b32.xlu0 %v1074, 64
        %v1421 = vpop.permute.xlu0 %1420
        %1422 = vrot.lane.b32.xlu0 %v1076, 64
        %v1423 = vpop.permute.xlu0 %1422
        %1424 = vrot.lane.b32.xlu0 %v1079, 64
        %v1425 = vpop.permute.xlu0 %1424
        %1426 = vrot.lane.b32.xlu0 %v1081, 64
        %v1427 = vpop.permute.xlu0 %1426
        %1428 = vrot.lane.b32.xlu0 %v1156, 64
        %v1429 = vpop.permute.xlu0 %1428
        %1430 = vrot.lane.b32.xlu0 %v1158, 64
        %v1431 = vpop.permute.xlu0 %1430
        %1464 = vrot.lane.b32.xlu0 %v1119, 64
        %v1465 = vpop.permute.xlu0 %1464
        %1466 = vrot.lane.b32.xlu0 %v1121, 64
        %v1467 = vpop.permute.xlu0 %1466
        %1468 = vrot.lane.b32.xlu0 %v1164, 64
        %v1469 = vpop.permute.xlu0 %1468
        %1470 = vrot.lane.b32.xlu0 %v1166, 64
        %v1471 = vpop.permute.xlu0 %1470
        %v1476 = vsel %vm729, %v818, %v1177
        %v1477 = vsel %vm729, %v819, %v1179
        %v1478 = vsel %vm729, %v821, %v1181
        %v1479 = vsel %vm729, %v822, %v1183
        %v1480 = vsel %vm729, %v824, %v1185
        %v1481 = vsel %vm729, %v825, %v1187
        %v1482 = vsel %vm729, %v827, %v1189
        %v1483 = vsel %vm729, %v828, %v1191
        %v1484 = vsel %vm729, %v830, %v1193
        %v1485 = vsel %vm729, %v831, %v1195
        %v1486 = vsel %vm729, %v833, %v1197
        %v1487 = vsel %vm729, %v834, %v1199
        %v1488 = vsel %vm729, %v836, %v1201
        %v1489 = vsel %vm729, %v837, %v1203
        %v1490 = vsel %vm729, %v839, %v1205
        %v1491 = vsel %vm729, %v840, %v1207
        %v1492 = vsel %vm729, %v842, %v1209
        %v1493 = vsel %vm729, %v843, %v1211
        %v1494 = vsel %vm729, %v845, %v1213
        %v1495 = vsel %vm729, %v846, %v1215
        %v1496 = vsel %vm729, %v848, %v1217
        %v1497 = vsel %vm729, %v849, %v1219
        %v1498 = vsel %vm729, %v851, %v1221
        %v1499 = vsel %vm729, %v852, %v1223
        %v1500 = vsel %vm729, %v854, %v1225
        %v1501 = vsel %vm729, %v855, %v1227
        %v1502 = vsel %vm729, %v857, %v1229
        %v1503 = vsel %vm729, %v858, %v1231
        %v1504 = vsel %vm729, %v860, %v1233
        %v1505 = vsel %vm729, %v861, %v1235
        %v1506 = vsel %vm729, %v863, %v1237
        %v1507 = vsel %vm729, %v864, %v1239
        %v1508 = vsel %vm729, %v1004, %v1273
        %v1509 = vsel %vm729, %v1006, %v1275
        %v1510 = vsel %vm729, %v1009, %v1277
        %v1511 = vsel %vm729, %v1011, %v1279
        %v1512 = vsel %vm729, %v1014, %v1281
        %v1513 = vsel %vm729, %v1016, %v1283
        %v1514 = vsel %vm729, %v1019, %v1285
        %v1515 = vsel %vm729, %v1021, %v1287
        %v1516 = vsel %vm729, %v1024, %v1289
        %v1517 = vsel %vm729, %v1026, %v1291
        %v1518 = vsel %vm729, %v1029, %v1293
        %v1519 = vsel %vm729, %v1031, %v1295
        %v1520 = vsel %vm729, %v1034, %v1297
        %v1521 = vsel %vm729, %v1036, %v1299
        %v1522 = vsel %vm729, %v1039, %v1301
        %v1523 = vsel %vm729, %v1041, %v1303
        %v1524 = vsel %vm729, %v1044, %v1305
        %v1525 = vsel %vm729, %v1046, %v1307
        %v1526 = vsel %vm729, %v1049, %v1309
        %v1527 = vsel %vm729, %v1051, %v1311
        %v1528 = vsel %vm729, %v1054, %v1313
        %v1529 = vsel %vm729, %v1056, %v1315
        %v1530 = vsel %vm729, %v1059, %v1317
        %v1531 = vsel %vm729, %v1061, %v1319
        %v1532 = vsel %vm729, %v1064, %v1321
        %v1533 = vsel %vm729, %v1066, %v1323
        %v1534 = vsel %vm729, %v1069, %v1325
        %v1535 = vsel %vm729, %v1071, %v1327
        %v1536 = vsel %vm729, %v1074, %v1329
        %v1537 = vsel %vm729, %v1076, %v1331
        %v1538 = vsel %vm729, %v1079, %v1333
        %v1539 = vsel %vm729, %v1081, %v1335
        %v1540 = vsel %vm729, %v928, %v1369
        %v1541 = vsel %vm729, %v930, %v1371
        %v1542 = vsel %vm729, %v933, %v1373
        %v1543 = vsel %vm729, %v935, %v1375
        %v1544 = vsel %vm729, %v938, %v1377
        %v1545 = vsel %vm729, %v940, %v1379
        %v1546 = vsel %vm729, %v943, %v1381
        %v1547 = vsel %vm729, %v945, %v1383
        %v1548 = vsel %vm729, %v948, %v1385
        %v1549 = vsel %vm729, %v950, %v1387
        %v1550 = vsel %vm729, %v953, %v1389
        %v1551 = vsel %vm729, %v955, %v1391
        %v1552 = vsel %vm729, %v958, %v1393
        %v1553 = vsel %vm729, %v960, %v1395
        %v1554 = vsel %vm729, %v963, %v1397
        %v1555 = vsel %vm729, %v965, %v1399
        %v1556 = vsel %vm729, %v968, %v1401
        %v1557 = vsel %vm729, %v970, %v1403
        %v1558 = vsel %vm729, %v973, %v1405
        %v1559 = vsel %vm729, %v975, %v1407
        %v1560 = vsel %vm729, %v978, %v1409
        %v1561 = vsel %vm729, %v980, %v1411
        %v1562 = vsel %vm729, %v983, %v1413
        %v1563 = vsel %vm729, %v985, %v1415
        %v1564 = vsel %vm729, %v988, %v1417
        %v1565 = vsel %vm729, %v990, %v1419
        %v1566 = vsel %vm729, %v993, %v1421
        %v1567 = vsel %vm729, %v995, %v1423
        %v1568 = vsel %vm729, %v998, %v1425
        %v1569 = vsel %vm729, %v1000, %v1427
        %v1570 = vsel %vm729, %v1119, %v1429
        %v1571 = vsel %vm729, %v1121, %v1431
        %v1572 = vsel %vm729, %v866, %v1465
        %v1573 = vsel %vm729, %v867, %v1467
        %v1574 = vsel %vm729, %v869, %v1469
        %v1575 = vsel %vm729, %v870, %v1471
        %v1576 = vpack.c.bf16 %v1477, %v1476
        %v1577 = vpack.c.bf16 %v1509, %v1508
        %v1578 = vpack.c.bf16 %v1541, %v1540
        %v1579 = vpack.c.bf16 %v1481, %v1480
        %v1580 = vpack.c.bf16 %v1016, %v1014
        %v1581 = vpack.c.bf16 %v1479, %v1478
        %v1582 = vpack.c.bf16 %v1511, %v1510
        %v1583 = vpack.c.bf16 %v1543, %v1542
        %v1584 = vpack.c.bf16 %v1483, %v1482
        %v1585 = vpack.c.bf16 %v1021, %v1019
        %v1586 = vpack.c.bf16 %v1513, %v1512
        %v1587 = vpack.c.bf16 %v1545, %v1544
        %v1588 = vpack.c.bf16 %v1485, %v1484
        %v1589 = vpack.c.bf16 %v1026, %v1024
        %v1590 = vpack.c.bf16 %v1515, %v1514
        %v1591 = vpack.c.bf16 %v1547, %v1546
        %v1592 = vpack.c.bf16 %v1487, %v1486
        %v1593 = vpack.c.bf16 %v1031, %v1029
        %v1594 = vpack.c.bf16 %v1517, %v1516
        %v1595 = vpack.c.bf16 %v1549, %v1548
        %v1596 = vpack.c.bf16 %v1489, %v1488
        %v1597 = vpack.c.bf16 %v1036, %v1034
        %v1598 = vpack.c.bf16 %v1519, %v1518
        %v1599 = vpack.c.bf16 %v1551, %v1550
        %v1600 = vpack.c.bf16 %v1491, %v1490
        %v1601 = vpack.c.bf16 %v1041, %v1039
        %v1602 = vpack.c.bf16 %v1521, %v1520
        %v1603 = vpack.c.bf16 %v1553, %v1552
        %v1604 = vpack.c.bf16 %v1493, %v1492
        %v1605 = vpack.c.bf16 %v1046, %v1044
        %v1606 = vpack.c.bf16 %v1523, %v1522
        %v1607 = vpack.c.bf16 %v1555, %v1554
        %v1608 = vpack.c.bf16 %v1495, %v1494
        %v1609 = vpack.c.bf16 %v1051, %v1049
        %v1610 = vpack.c.bf16 %v1525, %v1524
        %v1611 = vpack.c.bf16 %v1557, %v1556
        %v1612 = vpack.c.bf16 %v1497, %v1496
        %v1613 = vpack.c.bf16 %v1056, %v1054
        %v1614 = vpack.c.bf16 %v1527, %v1526
        %v1615 = vpack.c.bf16 %v1559, %v1558
        %v1616 = vpack.c.bf16 %v1499, %v1498
        %v1617 = vpack.c.bf16 %v1061, %v1059
        %v1618 = vpack.c.bf16 %v1529, %v1528
        %v1619 = vpack.c.bf16 %v1561, %v1560
        %v1620 = vpack.c.bf16 %v1501, %v1500
        %v1621 = vpack.c.bf16 %v1066, %v1064
        %v1622 = vpack.c.bf16 %v1531, %v1530
        %v1623 = vpack.c.bf16 %v1563, %v1562
        %v1624 = vpack.c.bf16 %v1503, %v1502
        %v1625 = vpack.c.bf16 %v1071, %v1069
        %v1626 = vpack.c.bf16 %v1533, %v1532
        %v1627 = vpack.c.bf16 %v1565, %v1564
        %v1628 = vpack.c.bf16 %v1505, %v1504
        %v1629 = vpack.c.bf16 %v1076, %v1074
        %v1630 = vpack.c.bf16 %v1535, %v1534
        %v1631 = vpack.c.bf16 %v1567, %v1566
        %v1632 = vpack.c.bf16 %v1507, %v1506
        %v1633 = vpack.c.bf16 %v1081, %v1079
        %v1634 = vpack.c.bf16 %v1537, %v1536
        %v1635 = vpack.c.bf16 %v1569, %v1568
        %v1636 = vpack.c.bf16 %v1573, %v1572
        %v1637 = vpack.c.bf16 %v1158, %v1156
        %v1638 = vpack.c.bf16 %v1539, %v1538
        %v1639 = vpack.c.bf16 %v1571, %v1570
        %v1640 = vpack.c.bf16 %v1575, %v1574
        %v1641 = vpack.c.bf16 %v1171, %v1169
        %v1642 = vld [vmem:[%s2] sm:$0xf]
        %v1643 = vld [vmem:[%s2 + $0x4] sm:$0xf]
        %v1644 = vld [vmem:[%s2 + $0x8] sm:$0xf]
        %v1645 = vld [vmem:[%s2 + $0xc] sm:$0xf]
        %v1646 = vld [vmem:[%s2 + $0x10] sm:$0xf]
        %v1647 = vld [vmem:[%s2 + $0x14] sm:$0xf]
        %v1648 = vld [vmem:[%s2 + $0x18] sm:$0xf]
        %v1649 = vld [vmem:[%s2 + $0x1c] sm:$0xf]
        %v1650 = vld [vmem:[%s2 + $0x20] sm:$0xf]
        %v1651 = vld [vmem:[%s2 + $0x24] sm:$0xf]
        %v1652 = vld [vmem:[%s2 + $0x28] sm:$0xf]
        %v1653 = vld [vmem:[%s2 + $0x2c] sm:$0xf]
        %v1654 = vld [vmem:[%s2 + $0x30] sm:$0xf]
        %v1655 = vld [vmem:[%s2 + $0x34] sm:$0xf]
        %v1656 = vld [vmem:[%s2 + $0x38] sm:$0xf]
        %v1657 = vld [vmem:[%s2 + $0x3c] sm:$0xf]
        %v1658 = vld [vmem:[%s2 + $0x40] sm:$0xf]
        %v1659 = vld [vmem:[%s2 + $0x44] sm:$0xf]
        %v1660 = vld [vmem:[%s2 + $0x48] sm:$0xf]
        %v1661 = vld [vmem:[%s2 + $0x4c] sm:$0xf]
        %v1662 = vld [vmem:[%s2 + $0x50] sm:$0xf]
        %v1663 = vld [vmem:[%s2 + $0x54] sm:$0xf]
        %v1664 = vld [vmem:[%s2 + $0x58] sm:$0xf]
        %v1665 = vld [vmem:[%s2 + $0x5c] sm:$0xf]
        %v1666 = vld [vmem:[%s2 + $0x60] sm:$0xf]
        %v1667 = vld [vmem:[%s2 + $0x64] sm:$0xf]
        %v1668 = vld [vmem:[%s2 + $0x68] sm:$0xf]
        %v1669 = vld [vmem:[%s2 + $0x6c] sm:$0xf]
        %v1670 = vld [vmem:[%s2 + $0x70] sm:$0xf]
        %v1671 = vld [vmem:[%s2 + $0x74] sm:$0xf]
        %v1672 = vld [vmem:[%s2 + $0x78] sm:$0xf]
        %v1673 = vld [vmem:[%s2 + $0x7c] sm:$0xf]
        %v1674 = vld [vmem:[%s2 + $0x80] sm:$0xf]
        %v1675 = vld [vmem:[%s2 + $0x84] sm:$0xf]
        %v1676 = vld [vmem:[%s2 + $0x88] sm:$0xf]
        %v1677 = vld [vmem:[%s2 + $0x8c] sm:$0xf]
        %v1678 = vld [vmem:[%s2 + $0x90] sm:$0xf]
        %v1679 = vld [vmem:[%s2 + $0x94] sm:$0xf]
        %v1680 = vld [vmem:[%s2 + $0x98] sm:$0xf]
        %v1681 = vld [vmem:[%s2 + $0x9c] sm:$0xf]
        %v1682 = vld [vmem:[%s2 + $0xa0] sm:$0xf]
        %v1683 = vld [vmem:[%s2 + $0xa4] sm:$0xf]
        %v1684 = vld [vmem:[%s2 + $0xa8] sm:$0xf]
        %v1685 = vld [vmem:[%s2 + $0xac] sm:$0xf]
        %v1686 = vld [vmem:[%s2 + $0xb0] sm:$0xf]
        %v1687 = vld [vmem:[%s2 + $0xb4] sm:$0xf]
        %v1688 = vld [vmem:[%s2 + $0xb8] sm:$0xf]
        %v1689 = vld [vmem:[%s2 + $0xbc] sm:$0xf]
        %v1690 = vld [vmem:[%s2 + $0xc0] sm:$0xf]
        %v1691 = vld [vmem:[%s2 + $0xc4] sm:$0xf]
        %v1692 = vld [vmem:[%s2 + $0xc8] sm:$0xf]
        %v1693 = vld [vmem:[%s2 + $0xcc] sm:$0xf]
        %v1694 = vld [vmem:[%s2 + $0xd0] sm:$0xf]
        %v1695 = vld [vmem:[%s2 + $0xd4] sm:$0xf]
        %v1696 = vld [vmem:[%s2 + $0xd8] sm:$0xf]
        %v1697 = vld [vmem:[%s2 + $0xdc] sm:$0xf]
        %v1698 = vld [vmem:[%s2 + $0xe0] sm:$0xf]
        %v1699 = vld [vmem:[%s2 + $0xe4] sm:$0xf]
        %v1700 = vld [vmem:[%s2 + $0xe8] sm:$0xf]
        %v1701 = vld [vmem:[%s2 + $0xec] sm:$0xf]
        %v1702 = vld [vmem:[%s2 + $0xf0] sm:$0xf]
        %v1703 = vld [vmem:[%s2 + $0xf4] sm:$0xf]
        %v1704 = vld [vmem:[%s2 + $0xf8] sm:$0xf]
        %v1705 = vld [vmem:[%s2 + $0xfc] sm:$0xf]
        %v1706 = vld [vmem:[%s2 + $0x100] sm:$0xf]
        %v1707 = vld [vmem:[%s2 + $0x104] sm:$0xf]
        %v1708 = vld [vmem:[%s2 + $0x108] sm:$0xf]
        %v1709 = vld [vmem:[%s2 + $0x10c] sm:$0xf]
        %v1710 = vld [vmem:[%s2 + $0x110] sm:$0xf]
        %v1711 = vld [vmem:[%s2 + $0x114] sm:$0xf]
        %v1712 = vld [vmem:[%s2 + $0x118] sm:$0xf]
        %v1713 = vld [vmem:[%s2 + $0x11c] sm:$0xf]
        %v1714 = vld [vmem:[%s3] sm:$0x1]
        %v1716 = vlaneseq
        %v1717 = vshrl.u32 %v1716, 7
        %v1718 = vsub.s32 0, %v1717
        %v1719 = vrot.slane %v1714, %v1718
        %v1793 = vunpack.c.l.b16 %v1642
        %v1794 = vunpack.c.l.b16 %v1643
        %v1795 = vunpack.c.l.b16 %v1644
        %v1796 = vunpack.c.l.b16 %v1645
        %v1797 = vunpack.c.l.b16 %v1646
        %v1798 = vunpack.c.l.b16 %v1647
        %v1799 = vunpack.c.l.b16 %v1648
        %v1800 = vunpack.c.l.b16 %v1649
        %v1801 = vunpack.c.l.b16 %v1650
        %v1802 = vunpack.c.l.b16 %v1651
        %v1803 = vunpack.c.l.b16 %v1652
        %v1804 = vunpack.c.l.b16 %v1653
        %v1805 = vunpack.c.l.b16 %v1654
        %v1806 = vunpack.c.l.b16 %v1655
        %v1807 = vunpack.c.l.b16 %v1656
        %v1808 = vunpack.c.l.b16 %v1657
        %v1809 = vunpack.c.l.b16 %v1658
        %v1810 = vunpack.c.l.b16 %v1659
        %v1811 = vunpack.c.l.b16 %v1660
        %v1812 = vunpack.c.l.b16 %v1661
        %v1813 = vunpack.c.l.b16 %v1662
        %v1814 = vunpack.c.l.b16 %v1663
        %v1815 = vunpack.c.l.b16 %v1664
        %v1816 = vunpack.c.l.b16 %v1665
        %v1817 = vunpack.c.l.b16 %v1666
        %v1818 = vunpack.c.l.b16 %v1667
        %v1819 = vunpack.c.l.b16 %v1668
        %v1820 = vunpack.c.l.b16 %v1669
        %v1821 = vunpack.c.l.b16 %v1670
        %v1822 = vunpack.c.l.b16 %v1671
        %v1823 = vunpack.c.l.b16 %v1672
        %v1824 = vunpack.c.l.b16 %v1673
        %v1825 = vunpack.c.l.b16 %v1674
        %v1826 = vunpack.c.l.b16 %v1675
        %v1827 = vunpack.c.l.b16 %v1676
        %v1828 = vunpack.c.l.b16 %v1677
        %v1829 = vunpack.c.l.b16 %v1678
        %v1830 = vunpack.c.l.b16 %v1679
        %v1831 = vunpack.c.l.b16 %v1680
        %v1832 = vunpack.c.l.b16 %v1681
        %v1833 = vunpack.c.l.b16 %v1682
        %v1834 = vunpack.c.l.b16 %v1683
        %v1835 = vunpack.c.l.b16 %v1684
        %v1836 = vunpack.c.l.b16 %v1685
        %v1837 = vunpack.c.l.b16 %v1686
        %v1838 = vunpack.c.l.b16 %v1687
        %v1839 = vunpack.c.l.b16 %v1688
        %v1840 = vunpack.c.l.b16 %v1689
        %v1841 = vunpack.c.l.b16 %v1690
        %v1842 = vunpack.c.l.b16 %v1691
        %v1843 = vunpack.c.l.b16 %v1692
        %v1844 = vunpack.c.l.b16 %v1693
        %v1845 = vunpack.c.l.b16 %v1694
        %v1846 = vunpack.c.l.b16 %v1695
        %v1847 = vunpack.c.l.b16 %v1696
        %v1848 = vunpack.c.l.b16 %v1697
        %v1849 = vunpack.c.l.b16 %v1698
        %v1850 = vunpack.c.l.b16 %v1699
        %v1851 = vunpack.c.l.b16 %v1700
        %v1852 = vunpack.c.l.b16 %v1701
        %v1853 = vunpack.c.l.b16 %v1702
        %v1854 = vunpack.c.l.b16 %v1703
        %v1855 = vunpack.c.l.b16 %v1704
        %v1856 = vunpack.c.l.b16 %v1705
        %v1857 = vunpack.c.l.b16 %v1706
        %v1858 = vunpack.c.l.b16 %v1707
        %v1859 = vunpack.c.l.b16 %v1708
        %v1860 = vunpack.c.l.b16 %v1709
        %v1861 = vunpack.c.l.b16 %v1710
        %v1862 = vunpack.c.l.b16 %v1711
        %v1863 = vunpack.c.l.b16 %v1712
        %v1864 = vunpack.c.l.b16 %v1713
        %v1865 = vpack.c.b16 %v1794, %v1793
        %v1866 = vpack.c.b16 %v1796, %v1795
        %v1867 = vpack.c.b16 %v1798, %v1797
        %v1868 = vpack.c.b16 %v1800, %v1799
        %v1869 = vpack.c.b16 %v1802, %v1801
        %v1870 = vpack.c.b16 %v1804, %v1803
        %v1871 = vpack.c.b16 %v1806, %v1805
        %v1872 = vpack.c.b16 %v1808, %v1807
        %v1873 = vpack.c.b16 %v1810, %v1809
        %v1874 = vpack.c.b16 %v1812, %v1811
        %v1875 = vpack.c.b16 %v1814, %v1813
        %v1876 = vpack.c.b16 %v1816, %v1815
        %v1877 = vpack.c.b16 %v1818, %v1817
        %v1878 = vpack.c.b16 %v1820, %v1819
        %v1879 = vpack.c.b16 %v1822, %v1821
        %v1880 = vpack.c.b16 %v1824, %v1823
        %v1881 = vpack.c.b16 %v1826, %v1825
        %v1882 = vpack.c.b16 %v1828, %v1827
        %v1883 = vpack.c.b16 %v1830, %v1829
        %v1884 = vpack.c.b16 %v1832, %v1831
        %v1885 = vpack.c.b16 %v1834, %v1833
        %v1886 = vpack.c.b16 %v1836, %v1835
        %v1887 = vpack.c.b16 %v1838, %v1837
        %v1888 = vpack.c.b16 %v1840, %v1839
        %v1889 = vpack.c.b16 %v1842, %v1841
        %v1890 = vpack.c.b16 %v1844, %v1843
        %v1891 = vpack.c.b16 %v1846, %v1845
        %v1892 = vpack.c.b16 %v1848, %v1847
        %v1893 = vpack.c.b16 %v1850, %v1849
        %v1894 = vpack.c.b16 %v1852, %v1851
        %v1895 = vpack.c.b16 %v1854, %v1853
        %v1896 = vpack.c.b16 %v1856, %v1855
        %v1897 = vpack.c.b16 %v1858, %v1857
        %v1898 = vpack.c.b16 %v1860, %v1859
        %v1899 = vpack.c.b16 %v1862, %v1861
        %v1900 = vpack.c.b16 %v1864, %v1863
        %v1938 = vsel %vm729, %v1580, 0
        %v1941 = vsel %vm729, %v1585, 0
        %v1944 = vsel %vm729, %v1589, 0
        %v1947 = vsel %vm729, %v1593, 0
        %v1950 = vsel %vm729, %v1597, 0
        %v1953 = vsel %vm729, %v1601, 0
        %v1956 = vsel %vm729, %v1605, 0
        %v1959 = vsel %vm729, %v1609, 0
        %v1962 = vsel %vm729, %v1613, 0
        %v1965 = vsel %vm729, %v1617, 0
        %v1968 = vsel %vm729, %v1621, 0
        %v1971 = vsel %vm729, %v1625, 0
        %v1974 = vsel %vm729, %v1629, 0
        %v1977 = vsel %vm729, %v1633, 0
        %v1980 = vsel %vm729, %v1637, 0
        %v1983 = vsel %vm729, %v1641, 0
        %1985 = vmatprep.subr.bf16.mxu0 0
        %1986 = vmatpush1.bf16.msra.mxu0 %v1865
        %1987 = vmatprep.subr.bf16.mxu0 0
        %1988 = vmatpush1.bf16.msra.mxu0 %v1866
        %1989 = vmatprep.subr.bf16.mxu0 0
        %1990 = vmatpush1.bf16.msra.mxu0 %v1867
        %1991 = vmatprep.subr.bf16.mxu0 0
        %1992 = vmatpush1.bf16.msra.mxu0 %v1868
        %1993 = vmatprep.subr.bf16.mxu0 0
        %1994 = vmatpush1.bf16.msra.mxu0 %v1869
        %1995 = vmatprep.subr.bf16.mxu0 0
        %1996 = vmatpush1.bf16.msra.mxu0 %v1870
        %1997 = vmatprep.subr.bf16.mxu0 0
        %1998 = vmatpush1.bf16.msra.mxu0 %v1871
        %1999 = vmatprep.subr.bf16.mxu0 0
        %2000 = vmatpush1.bf16.msra.mxu0 %v1872
        %2001 = vmatprep.subr.bf16.mxu0 0
        %2002 = vmatpush1.bf16.msra.mxu0 %v1873
        %2003 = vmatprep.subr.bf16.mxu0 0
        %2004 = vmatpush1.bf16.msra.mxu0 %v1874
        %2005 = vmatprep.subr.bf16.mxu0 0
        %2006 = vmatpush1.bf16.msra.mxu0 %v1875
        %2007 = vmatprep.subr.bf16.mxu0 0
        %2008 = vmatpush1.bf16.msra.mxu0 %v1876
        %2009 = vmatprep.subr.bf16.mxu0 0
        %2010 = vmatpush1.bf16.msra.mxu0 %v1877
        %2011 = vmatprep.subr.bf16.mxu0 0
        %2012 = vmatpush1.bf16.msra.mxu0 %v1878
        %2013 = vmatprep.subr.bf16.mxu0 0
        %2014 = vmatpush1.bf16.msra.mxu0 %v1879
        %2015 = vmatprep.subr.bf16.mxu0 0
        %2016 = vmatpush1.bf16.msra.mxu0 %v1880
        %2017 = vmatprep.mubr.bf16.mxu0 %v1577
        %2018 = vmatmul.mubr.bf16.gmra.mrb[0].mxu0 %v1576
        %v2019 = vpop.f32.mrb[0].mxu0
        %v2020 = vadd.f32 %v1719, %v2019
        %v2021 = vpop.f32.mrb[0].mxu0
        %v2022 = vpop.f32.mrb[0].mxu0
        %v2023 = vadd.f32 %v1719, %v2022
        %v2024 = vpop.f32.mrb[0].mxu0
        %2025 = vmatprep.mubr.bf16.mxu0 %v1582
        %2026 = vmatmul.mubr.bf16.gmra.mrb[0].mxu0 %v1581
        %v2027 = vpop.f32.mrb[0].mxu0
        %v2028 = vadd.f32 %v1719, %v2027
        %v2029 = vpop.f32.mrb[0].mxu0
        %v2030 = vpop.f32.mrb[0].mxu0
        %v2031 = vadd.f32 %v1719, %v2030
        %v2032 = vpop.f32.mrb[0].mxu0
        %2033 = vmatprep.mubr.bf16.mxu0 %v1586
        %2034 = vmatmul.mubr.bf16.gmra.mrb[0].mxu0 %v1579
        %v2035 = vpop.f32.mrb[0].mxu0
        %v2036 = vadd.f32 %v1719, %v2035
        %v2037 = vpop.f32.mrb[0].mxu0
        %v2038 = vpop.f32.mrb[0].mxu0
        %v2039 = vadd.f32 %v1719, %v2038
        %v2040 = vpop.f32.mrb[0].mxu0
        %2041 = vmatprep.mubr.bf16.mxu0 %v1590
        %2042 = vmatmul.mubr.bf16.gmra.mrb[0].mxu0 %v1584
        %v2043 = vpop.f32.mrb[0].mxu0
        %v2044 = vadd.f32 %v1719, %v2043
        %v2045 = vpop.f32.mrb[0].mxu0
        %v2046 = vpop.f32.mrb[0].mxu0
        %v2047 = vadd.f32 %v1719, %v2046
        %v2048 = vpop.f32.mrb[0].mxu0
        %2049 = vmatprep.mubr.bf16.mxu0 %v1594
        %2050 = vmatmul.mubr.bf16.gmra.mrb[0].mxu0 %v1588
        %v2051 = vpop.f32.mrb[0].mxu0
        %v2052 = vadd.f32 %v1719, %v2051
        %v2053 = vpop.f32.mrb[0].mxu0
        %v2054 = vpop.f32.mrb[0].mxu0
        %v2055 = vadd.f32 %v1719, %v2054
        %v2056 = vpop.f32.mrb[0].mxu0
        %2057 = vmatprep.mubr.bf16.mxu0 %v1598
        %2058 = vmatmul.mubr.bf16.gmra.mrb[0].mxu0 %v1592
        %v2059 = vpop.f32.mrb[0].mxu0
        %v2060 = vadd.f32 %v1719, %v2059
        %v2061 = vpop.f32.mrb[0].mxu0
        %v2062 = vpop.f32.mrb[0].mxu0
        %v2063 = vadd.f32 %v1719, %v2062
        %v2064 = vpop.f32.mrb[0].mxu0
        %2065 = vmatprep.mubr.bf16.mxu0 %v1602
        %2066 = vmatmul.mubr.bf16.gmra.mrb[0].mxu0 %v1596
        %v2067 = vpop.f32.mrb[0].mxu0
        %v2068 = vadd.f32 %v1719, %v2067
        %v2069 = vpop.f32.mrb[0].mxu0
        %v2070 = vpop.f32.mrb[0].mxu0
        %v2071 = vadd.f32 %v1719, %v2070
        %v2072 = vpop.f32.mrb[0].mxu0
        %2073 = vmatprep.mubr.bf16.mxu0 %v1606
        %2074 = vmatmul.mubr.bf16.gmra.mrb[0].mxu0 %v1600
        %v2075 = vpop.f32.mrb[0].mxu0
        %v2076 = vadd.f32 %v1719, %v2075
        %v2077 = vpop.f32.mrb[0].mxu0
        %v2078 = vpop.f32.mrb[0].mxu0
        %v2079 = vadd.f32 %v1719, %v2078
        %v2080 = vpop.f32.mrb[0].mxu0
        %2081 = vmatprep.mubr.bf16.mxu0 %v1610
        %2082 = vmatmul.mubr.bf16.gmra.mrb[0].mxu0 %v1604
        %v2083 = vpop.f32.mrb[0].mxu0
        %v2084 = vadd.f32 %v1719, %v2083
        %v2085 = vpop.f32.mrb[0].mxu0
        %v2086 = vpop.f32.mrb[0].mxu0
        %v2087 = vadd.f32 %v1719, %v2086
        %v2088 = vpop.f32.mrb[0].mxu0
        %2089 = vmatprep.mubr.bf16.mxu0 %v1614
        %2090 = vmatmul.mubr.bf16.gmra.mrb[0].mxu0 %v1608
        %v2091 = vpop.f32.mrb[0].mxu0
        %v2092 = vadd.f32 %v1719, %v2091
        %v2093 = vpop.f32.mrb[0].mxu0
        %v2094 = vpop.f32.mrb[0].mxu0
        %v2095 = vadd.f32 %v1719, %v2094
        %v2096 = vpop.f32.mrb[0].mxu0
        %2097 = vmatprep.mubr.bf16.mxu0 %v1618
        %2098 = vmatmul.mubr.bf16.gmra.mrb[0].mxu0 %v1612
        %v2099 = vpop.f32.mrb[0].mxu0
        %v2100 = vadd.f32 %v1719, %v2099
        %v2101 = vpop.f32.mrb[0].mxu0
        %v2102 = vpop.f32.mrb[0].mxu0
        %v2103 = vadd.f32 %v1719, %v2102
        %v2104 = vpop.f32.mrb[0].mxu0
        %2105 = vmatprep.mubr.bf16.mxu0 %v1622
        %2106 = vmatmul.mubr.bf16.gmra.mrb[0].mxu0 %v1616
        %v2107 = vpop.f32.mrb[0].mxu0
        %v2108 = vadd.f32 %v1719, %v2107
        %v2109 = vpop.f32.mrb[0].mxu0
        %v2110 = vpop.f32.mrb[0].mxu0
        %v2111 = vadd.f32 %v1719, %v2110
        %v2112 = vpop.f32.mrb[0].mxu0
        %2113 = vmatprep.mubr.bf16.mxu0 %v1626
        %2114 = vmatmul.mubr.bf16.gmra.mrb[0].mxu0 %v1620
        %v2115 = vpop.f32.mrb[0].mxu0
        %v2116 = vadd.f32 %v1719, %v2115
        %v2117 = vpop.f32.mrb[0].mxu0
        %v2118 = vpop.f32.mrb[0].mxu0
        %v2119 = vadd.f32 %v1719, %v2118
        %v2120 = vpop.f32.mrb[0].mxu0
        %2121 = vmatprep.mubr.bf16.mxu0 %v1630
        %2122 = vmatmul.mubr.bf16.gmra.mrb[0].mxu0 %v1624
        %v2123 = vpop.f32.mrb[0].mxu0
        %v2124 = vadd.f32 %v1719, %v2123
        %v2125 = vpop.f32.mrb[0].mxu0
        %v2126 = vpop.f32.mrb[0].mxu0
        %v2127 = vadd.f32 %v1719, %v2126
        %v2128 = vpop.f32.mrb[0].mxu0
        %2129 = vmatprep.mubr.bf16.mxu0 %v1634
        %2130 = vmatmul.mubr.bf16.gmra.mrb[0].mxu0 %v1628
        %v2131 = vpop.f32.mrb[0].mxu0
        %v2132 = vadd.f32 %v1719, %v2131
        %v2133 = vpop.f32.mrb[0].mxu0
        %v2134 = vpop.f32.mrb[0].mxu0
        %v2135 = vadd.f32 %v1719, %v2134
        %v2136 = vpop.f32.mrb[0].mxu0
        %2137 = vmatprep.mubr.bf16.mxu0 %v1638
        %2138 = vmatmul.mubr.bf16.gmra.mrb[0].mxu0 %v1632
        %v2139 = vpop.f32.mrb[0].mxu0
        %v2140 = vadd.f32 %v1719, %v2139
        %v2141 = vpop.f32.mrb[0].mxu0
        %v2142 = vpop.f32.mrb[0].mxu0
        %v2143 = vadd.f32 %v1719, %v2142
        %v2144 = vpop.f32.mrb[0].mxu0
        %2145 = vdwg.mxu0
        %2146 = vmatprep.subr.bf16.mxu0 0
        %2147 = vmatpush1.bf16.msra.mxu0 %v1881
        %2148 = vmatprep.subr.bf16.mxu0 0
        %2149 = vmatpush1.bf16.msra.mxu0 %v1882
        %2150 = vmatprep.subr.bf16.mxu0 0
        %2151 = vmatpush1.bf16.msra.mxu0 %v1883
        %2152 = vmatprep.subr.bf16.mxu0 0
        %2153 = vmatpush1.bf16.msra.mxu0 %v1884
        %2154 = vmatprep.subr.bf16.mxu0 0
        %2155 = vmatpush1.bf16.msra.mxu0 %v1885
        %2156 = vmatprep.subr.bf16.mxu0 0
        %2157 = vmatpush1.bf16.msra.mxu0 %v1886
        %2158 = vmatprep.subr.bf16.mxu0 0
        %2159 = vmatpush1.bf16.msra.mxu0 %v1887
        %2160 = vmatprep.subr.bf16.mxu0 0
        %2161 = vmatpush1.bf16.msra.mxu0 %v1888
        %2162 = vmatprep.subr.bf16.mxu0 0
        %2163 = vmatpush1.bf16.msra.mxu0 %v1889
        %2164 = vmatprep.subr.bf16.mxu0 0
        %2165 = vmatpush1.bf16.msra.mxu0 %v1890
        %2166 = vmatprep.subr.bf16.mxu0 0
        %2167 = vmatpush1.bf16.msra.mxu0 %v1891
        %2168 = vmatprep.subr.bf16.mxu0 0
        %2169 = vmatpush1.bf16.msra.mxu0 %v1892
        %2170 = vmatprep.subr.bf16.mxu0 0
        %2171 = vmatpush1.bf16.msra.mxu0 %v1893
        %2172 = vmatprep.subr.bf16.mxu0 0
        %2173 = vmatpush1.bf16.msra.mxu0 %v1894
        %2174 = vmatprep.subr.bf16.mxu0 0
        %2175 = vmatpush1.bf16.msra.mxu0 %v1895
        %2176 = vmatprep.subr.bf16.mxu0 0
        %2177 = vmatpush1.bf16.msra.mxu0 %v1896
        %2178 = vmatprep.mubr.bf16.mxu0 %v1579
        %2179 = vmatmul.mubr.bf16.gmra.mrb[0].mxu0 %v1578
        %v2180 = vpop.f32.mrb[0].mxu0
        %v2181 = vadd.f32 %v2020, %v2180
        %v2182 = vpop.f32.mrb[0].mxu0
        %v2183 = vpop.f32.mrb[0].mxu0
        %v2184 = vadd.f32 %v2023, %v2183
        %v2185 = vpop.f32.mrb[0].mxu0
        %2186 = vmatprep.mubr.bf16.mxu0 %v1584
        %2187 = vmatmul.mubr.bf16.gmra.mrb[0].mxu0 %v1583
        %v2188 = vpop.f32.mrb[0].mxu0
        %v2189 = vadd.f32 %v2028, %v2188
        %v2190 = vpop.f32.mrb[0].mxu0
        %v2191 = vpop.f32.mrb[0].mxu0
        %v2192 = vadd.f32 %v2031, %v2191
        %v2193 = vpop.f32.mrb[0].mxu0
        %2194 = vmatprep.mubr.bf16.mxu0 %v1588
        %2195 = vmatmul.mubr.bf16.gmra.mrb[0].mxu0 %v1587
        %v2196 = vpop.f32.mrb[0].mxu0
        %v2197 = vadd.f32 %v2036, %v2196
        %v2198 = vpop.f32.mrb[0].mxu0
        %v2199 = vpop.f32.mrb[0].mxu0
        %v2200 = vadd.f32 %v2039, %v2199
        %v2201 = vpop.f32.mrb[0].mxu0
        %2202 = vmatprep.mubr.bf16.mxu0 %v1592
        %2203 = vmatmul.mubr.bf16.gmra.mrb[0].mxu0 %v1591
        %v2204 = vpop.f32.mrb[0].mxu0
        %v2205 = vadd.f32 %v2044, %v2204
        %v2206 = vpop.f32.mrb[0].mxu0
        %v2207 = vpop.f32.mrb[0].mxu0
        %v2208 = vadd.f32 %v2047, %v2207
        %v2209 = vpop.f32.mrb[0].mxu0
        %2210 = vmatprep.mubr.bf16.mxu0 %v1596
        %2211 = vmatmul.mubr.bf16.gmra.mrb[0].mxu0 %v1595
        %v2212 = vpop.f32.mrb[0].mxu0
        %v2213 = vadd.f32 %v2052, %v2212
        %v2214 = vpop.f32.mrb[0].mxu0
        %v2215 = vpop.f32.mrb[0].mxu0
        %v2216 = vadd.f32 %v2055, %v2215
        %v2217 = vpop.f32.mrb[0].mxu0
        %2218 = vmatprep.mubr.bf16.mxu0 %v1600
        %2219 = vmatmul.mubr.bf16.gmra.mrb[0].mxu0 %v1599
        %v2220 = vpop.f32.mrb[0].mxu0
        %v2221 = vadd.f32 %v2060, %v2220
        %v2222 = vpop.f32.mrb[0].mxu0
        %v2223 = vpop.f32.mrb[0].mxu0
        %v2224 = vadd.f32 %v2063, %v2223
        %v2225 = vpop.f32.mrb[0].mxu0
        %2226 = vmatprep.mubr.bf16.mxu0 %v1604
        %2227 = vmatmul.mubr.bf16.gmra.mrb[0].mxu0 %v1603
        %v2228 = vpop.f32.mrb[0].mxu0
        %v2229 = vadd.f32 %v2068, %v2228
        %v2230 = vpop.f32.mrb[0].mxu0
        %v2231 = vpop.f32.mrb[0].mxu0
        %v2232 = vadd.f32 %v2071, %v2231
        %v2233 = vpop.f32.mrb[0].mxu0
        %2234 = vmatprep.mubr.bf16.mxu0 %v1608
        %2235 = vmatmul.mubr.bf16.gmra.mrb[0].mxu0 %v1607
        %v2236 = vpop.f32.mrb[0].mxu0
        %v2237 = vadd.f32 %v2076, %v2236
        %v2238 = vpop.f32.mrb[0].mxu0
        %v2239 = vpop.f32.mrb[0].mxu0
        %v2240 = vadd.f32 %v2079, %v2239
        %v2241 = vpop.f32.mrb[0].mxu0
        %2242 = vmatprep.mubr.bf16.mxu0 %v1612
        %2243 = vmatmul.mubr.bf16.gmra.mrb[0].mxu0 %v1611
        %v2244 = vpop.f32.mrb[0].mxu0
        %v2245 = vadd.f32 %v2084, %v2244
        %v2246 = vpop.f32.mrb[0].mxu0
        %v2247 = vpop.f32.mrb[0].mxu0
        %v2248 = vadd.f32 %v2087, %v2247
        %v2249 = vpop.f32.mrb[0].mxu0
        %2250 = vmatprep.mubr.bf16.mxu0 %v1616
        %2251 = vmatmul.mubr.bf16.gmra.mrb[0].mxu0 %v1615
        %v2252 = vpop.f32.mrb[0].mxu0
        %v2253 = vadd.f32 %v2092, %v2252
        %v2254 = vpop.f32.mrb[0].mxu0
        %v2255 = vpop.f32.mrb[0].mxu0
        %v2256 = vadd.f32 %v2095, %v2255
        %v2257 = vpop.f32.mrb[0].mxu0
        %2258 = vmatprep.mubr.bf16.mxu0 %v1620
        %2259 = vmatmul.mubr.bf16.gmra.mrb[0].mxu0 %v1619
        %v2260 = vpop.f32.mrb[0].mxu0
        %v2261 = vadd.f32 %v2100, %v2260
        %v2262 = vpop.f32.mrb[0].mxu0
        %v2263 = vpop.f32.mrb[0].mxu0
        %v2264 = vadd.f32 %v2103, %v2263
        %v2265 = vpop.f32.mrb[0].mxu0
        %2266 = vmatprep.mubr.bf16.mxu0 %v1624
        %2267 = vmatmul.mubr.bf16.gmra.mrb[0].mxu0 %v1623
        %v2268 = vpop.f32.mrb[0].mxu0
        %v2269 = vadd.f32 %v2108, %v2268
        %v2270 = vpop.f32.mrb[0].mxu0
        %v2271 = vpop.f32.mrb[0].mxu0
        %v2272 = vadd.f32 %v2111, %v2271
        %v2273 = vpop.f32.mrb[0].mxu0
        %2274 = vmatprep.mubr.bf16.mxu0 %v1628
        %2275 = vmatmul.mubr.bf16.gmra.mrb[0].mxu0 %v1627
        %v2276 = vpop.f32.mrb[0].mxu0
        %v2277 = vadd.f32 %v2116, %v2276
        %v2278 = vpop.f32.mrb[0].mxu0
        %v2279 = vpop.f32.mrb[0].mxu0
        %v2280 = vadd.f32 %v2119, %v2279
        %v2281 = vpop.f32.mrb[0].mxu0
        %2282 = vmatprep.mubr.bf16.mxu0 %v1632
        %2283 = vmatmul.mubr.bf16.gmra.mrb[0].mxu0 %v1631
        %v2284 = vpop.f32.mrb[0].mxu0
        %v2285 = vadd.f32 %v2124, %v2284
        %v2286 = vpop.f32.mrb[0].mxu0
        %v2287 = vpop.f32.mrb[0].mxu0
        %v2288 = vadd.f32 %v2127, %v2287
        %v2289 = vpop.f32.mrb[0].mxu0
        %2290 = vmatprep.mubr.bf16.mxu0 %v1636
        %2291 = vmatmul.mubr.bf16.gmra.mrb[0].mxu0 %v1635
        %v2292 = vpop.f32.mrb[0].mxu0
        %v2293 = vadd.f32 %v2132, %v2292
        %v2294 = vpop.f32.mrb[0].mxu0
        %v2295 = vpop.f32.mrb[0].mxu0
        %v2296 = vadd.f32 %v2135, %v2295
        %v2297 = vpop.f32.mrb[0].mxu0
        %2298 = vmatprep.mubr.bf16.mxu0 %v1640
        %2299 = vmatmul.mubr.bf16.gmra.mrb[0].mxu0 %v1639
        %v2300 = vpop.f32.mrb[0].mxu0
        %v2301 = vadd.f32 %v2140, %v2300
        %v2302 = vpop.f32.mrb[0].mxu0
        %v2303 = vpop.f32.mrb[0].mxu0
        %v2304 = vadd.f32 %v2143, %v2303
        %v2305 = vpop.f32.mrb[0].mxu0
        %2306 = vdwg.mxu0
        %2307 = vmatprep.subr.bf16.mxu0 0
        %2308 = vmatpush1.bf16.msra.mxu0 %v1897
        %2309 = vmatprep.subr.bf16.mxu0 0
        %2310 = vmatpush1.bf16.msra.mxu0 %v1898
        %2311 = vmatprep.subr.bf16.mxu0 0
        %2312 = vmatpush1.bf16.msra.mxu0 %v1899
        %2313 = vmatprep.subr.bf16.mxu0 0
        %2314 = vmatpush1.bf16.msra.mxu0 %v1900
        %2315 = vmatprep.subr.bf16.mxu0 0
        %2316 = vmatpush1.bf16.msra.mxu0 0
        %2317 = vmatprep.subr.bf16.mxu0 0
        %2318 = vmatpush1.bf16.msra.mxu0 0
        %2319 = vmatprep.subr.bf16.mxu0 0
        %2320 = vmatpush1.bf16.msra.mxu0 0
        %2321 = vmatprep.subr.bf16.mxu0 0
        %2322 = vmatpush1.bf16.msra.mxu0 0
        %2323 = vmatprep.subr.bf16.mxu0 0
        %2324 = vmatpush1.bf16.msra.mxu0 0
        %2325 = vmatprep.subr.bf16.mxu0 0
        %2326 = vmatpush1.bf16.msra.mxu0 0
        %2327 = vmatprep.subr.bf16.mxu0 0
        %2328 = vmatpush1.bf16.msra.mxu0 0
        %2329 = vmatprep.subr.bf16.mxu0 0
        %2330 = vmatpush1.bf16.msra.mxu0 0
        %2331 = vmatprep.subr.bf16.mxu0 0
        %2332 = vmatpush1.bf16.msra.mxu0 0
        %2333 = vmatprep.subr.bf16.mxu0 0
        %2334 = vmatpush1.bf16.msra.mxu0 0
        %2335 = vmatprep.subr.bf16.mxu0 0
        %2336 = vmatpush1.bf16.msra.mxu0 0
        %2337 = vmatprep.subr.bf16.mxu0 0
        %2338 = vmatpush1.bf16.msra.mxu0 0
        %2339 = vmatprep.mubr.bf16.mxu0 0
        %2340 = vmatmul.mubr.bf16.gmra.mrb[0].mxu0 %v1938
        %v2341 = vpop.f32.mrb[0].mxu0
        %v2342 = vadd.f32 %v2181, %v2341
        %v2343 = vpop.f32.mrb[0].mxu0
        %v2344 = vpop.f32.mrb[0].mxu0
        %v2345 = vadd.f32 %v2184, %v2344
        %v2346 = vpop.f32.mrb[0].mxu0
        %2347 = vmatprep.mubr.bf16.mxu0 0
        %2348 = vmatmul.mubr.bf16.gmra.mrb[0].mxu0 %v1941
        %v2349 = vpop.f32.mrb[0].mxu0
        %v2350 = vadd.f32 %v2189, %v2349
        %v2351 = vpop.f32.mrb[0].mxu0
        %v2352 = vpop.f32.mrb[0].mxu0
        %v2353 = vadd.f32 %v2192, %v2352
        %v2354 = vpop.f32.mrb[0].mxu0
        %2355 = vmatprep.mubr.bf16.mxu0 0
        %2356 = vmatmul.mubr.bf16.gmra.mrb[0].mxu0 %v1944
        %v2357 = vpop.f32.mrb[0].mxu0
        %v2358 = vadd.f32 %v2197, %v2357
        %v2359 = vpop.f32.mrb[0].mxu0
        %v2360 = vpop.f32.mrb[0].mxu0
        %v2361 = vadd.f32 %v2200, %v2360
        %v2362 = vpop.f32.mrb[0].mxu0
        %2363 = vmatprep.mubr.bf16.mxu0 0
        %2364 = vmatmul.mubr.bf16.gmra.mrb[0].mxu0 %v1947
        %v2365 = vpop.f32.mrb[0].mxu0
        %v2366 = vadd.f32 %v2205, %v2365
        %v2367 = vpop.f32.mrb[0].mxu0
        %v2368 = vpop.f32.mrb[0].mxu0
        %v2369 = vadd.f32 %v2208, %v2368
        %v2370 = vpop.f32.mrb[0].mxu0
        %2371 = vmatprep.mubr.bf16.mxu0 0
        %2372 = vmatmul.mubr.bf16.gmra.mrb[0].mxu0 %v1950
        %v2373 = vpop.f32.mrb[0].mxu0
        %v2374 = vadd.f32 %v2213, %v2373
        %v2375 = vpop.f32.mrb[0].mxu0
        %v2376 = vpop.f32.mrb[0].mxu0
        %v2377 = vadd.f32 %v2216, %v2376
        %v2378 = vpop.f32.mrb[0].mxu0
        %2379 = vmatprep.mubr.bf16.mxu0 0
        %2380 = vmatmul.mubr.bf16.gmra.mrb[0].mxu0 %v1953
        %v2381 = vpop.f32.mrb[0].mxu0
        %v2382 = vadd.f32 %v2221, %v2381
        %v2383 = vpop.f32.mrb[0].mxu0
        %v2384 = vpop.f32.mrb[0].mxu0
        %v2385 = vadd.f32 %v2224, %v2384
        %v2386 = vpop.f32.mrb[0].mxu0
        %2387 = vmatprep.mubr.bf16.mxu0 0
        %2388 = vmatmul.mubr.bf16.gmra.mrb[0].mxu0 %v1956
        %v2389 = vpop.f32.mrb[0].mxu0
        %v2390 = vadd.f32 %v2229, %v2389
        %v2391 = vpop.f32.mrb[0].mxu0
        %v2392 = vpop.f32.mrb[0].mxu0
        %v2393 = vadd.f32 %v2232, %v2392
        %v2394 = vpop.f32.mrb[0].mxu0
        %2395 = vmatprep.mubr.bf16.mxu0 0
        %2396 = vmatmul.mubr.bf16.gmra.mrb[0].mxu0 %v1959
        %v2397 = vpop.f32.mrb[0].mxu0
        %v2398 = vadd.f32 %v2237, %v2397
        %v2399 = vpop.f32.mrb[0].mxu0
        %v2400 = vpop.f32.mrb[0].mxu0
        %v2401 = vadd.f32 %v2240, %v2400
        %v2402 = vpop.f32.mrb[0].mxu0
        %2403 = vmatprep.mubr.bf16.mxu0 0
        %2404 = vmatmul.mubr.bf16.gmra.mrb[0].mxu0 %v1962
        %v2405 = vpop.f32.mrb[0].mxu0
        %v2406 = vadd.f32 %v2245, %v2405
        %v2407 = vpop.f32.mrb[0].mxu0
        %v2408 = vpop.f32.mrb[0].mxu0
        %v2409 = vadd.f32 %v2248, %v2408
        %v2410 = vpop.f32.mrb[0].mxu0
        %2411 = vmatprep.mubr.bf16.mxu0 0
        %2412 = vmatmul.mubr.bf16.gmra.mrb[0].mxu0 %v1965
        %v2413 = vpop.f32.mrb[0].mxu0
        %v2414 = vadd.f32 %v2253, %v2413
        %v2415 = vpop.f32.mrb[0].mxu0
        %v2416 = vpop.f32.mrb[0].mxu0
        %v2417 = vadd.f32 %v2256, %v2416
        %v2418 = vpop.f32.mrb[0].mxu0
        %2419 = vmatprep.mubr.bf16.mxu0 0
        %2420 = vmatmul.mubr.bf16.gmra.mrb[0].mxu0 %v1968
        %v2421 = vpop.f32.mrb[0].mxu0
        %v2422 = vadd.f32 %v2261, %v2421
        %v2423 = vpop.f32.mrb[0].mxu0
        %v2424 = vpop.f32.mrb[0].mxu0
        %v2425 = vadd.f32 %v2264, %v2424
        %v2426 = vpop.f32.mrb[0].mxu0
        %2427 = vmatprep.mubr.bf16.mxu0 0
        %2428 = vmatmul.mubr.bf16.gmra.mrb[0].mxu0 %v1971
        %v2429 = vpop.f32.mrb[0].mxu0
        %v2430 = vadd.f32 %v2269, %v2429
        %v2431 = vpop.f32.mrb[0].mxu0
        %v2432 = vpop.f32.mrb[0].mxu0
        %v2433 = vadd.f32 %v2272, %v2432
        %v2434 = vpop.f32.mrb[0].mxu0
        %2435 = vmatprep.mubr.bf16.mxu0 0
        %2436 = vmatmul.mubr.bf16.gmra.mrb[0].mxu0 %v1974
        %v2437 = vpop.f32.mrb[0].mxu0
        %v2438 = vadd.f32 %v2277, %v2437
        %v2439 = vpop.f32.mrb[0].mxu0
        %v2440 = vpop.f32.mrb[0].mxu0
        %v2441 = vadd.f32 %v2280, %v2440
        %v2442 = vpop.f32.mrb[0].mxu0
        %2443 = vmatprep.mubr.bf16.mxu0 0
        %2444 = vmatmul.mubr.bf16.gmra.mrb[0].mxu0 %v1977
        %v2445 = vpop.f32.mrb[0].mxu0
        %v2446 = vadd.f32 %v2285, %v2445
        %v2447 = vpop.f32.mrb[0].mxu0
        %v2448 = vpop.f32.mrb[0].mxu0
        %v2449 = vadd.f32 %v2288, %v2448
        %v2450 = vpop.f32.mrb[0].mxu0
        %2451 = vmatprep.mubr.bf16.mxu0 0
        %2452 = vmatmul.mubr.bf16.gmra.mrb[0].mxu0 %v1980
        %v2453 = vpop.f32.mrb[0].mxu0
        %v2454 = vadd.f32 %v2293, %v2453
        %v2455 = vpop.f32.mrb[0].mxu0
        %v2456 = vpop.f32.mrb[0].mxu0
        %v2457 = vadd.f32 %v2296, %v2456
        %v2458 = vpop.f32.mrb[0].mxu0
        %2459 = vmatprep.mubr.bf16.mxu0 0
        %2460 = vmatmul.mubr.bf16.gmra.mrb[0].mxu0 %v1983
        %v2461 = vpop.f32.mrb[0].mxu0
        %v2462 = vadd.f32 %v2301, %v2461
        %v2463 = vpop.f32.mrb[0].mxu0
        %v2464 = vpop.f32.mrb[0].mxu0
        %v2465 = vadd.f32 %v2304, %v2464
        %v2466 = vpop.f32.mrb[0].mxu0
        %2467 = vdwg.mxu0
        %vm2468 = vcmask 64512
        %v2469 = vsel %vm2468, %v2342, -inf
        %2470 = vmax.xlane.f32.xlu0 %v2469
        %v2471 = vpop.xlane.xlu0 %2470
        %v2472 = vsel %vm2468, %v2345, -inf
        %2473 = vmax.xlane.f32.xlu0 %v2472
        %v2474 = vpop.xlane.xlu0 %2473
        %v2475 = vsel %vm2468, %v2350, -inf
        %2476 = vmax.xlane.f32.xlu0 %v2475
        %v2477 = vpop.xlane.xlu0 %2476
        %v2478 = vsel %vm2468, %v2353, -inf
        %2479 = vmax.xlane.f32.xlu0 %v2478
        %v2480 = vpop.xlane.xlu0 %2479
        %v2481 = vsel %vm2468, %v2358, -inf
        %2482 = vmax.xlane.f32.xlu0 %v2481
        %v2483 = vpop.xlane.xlu0 %2482
        %v2484 = vsel %vm2468, %v2361, -inf
        %2485 = vmax.xlane.f32.xlu0 %v2484
        %v2486 = vpop.xlane.xlu0 %2485
        %v2487 = vsel %vm2468, %v2366, -inf
        %2488 = vmax.xlane.f32.xlu0 %v2487
        %v2489 = vpop.xlane.xlu0 %2488
        %v2490 = vsel %vm2468, %v2369, -inf
        %2491 = vmax.xlane.f32.xlu0 %v2490
        %v2492 = vpop.xlane.xlu0 %2491
        %v2493 = vsel %vm2468, %v2374, -inf
        %2494 = vmax.xlane.f32.xlu0 %v2493
        %v2495 = vpop.xlane.xlu0 %2494
        %v2496 = vsel %vm2468, %v2377, -inf
        %2497 = vmax.xlane.f32.xlu0 %v2496
        %v2498 = vpop.xlane.xlu0 %2497
        %v2499 = vsel %vm2468, %v2382, -inf
        %2500 = vmax.xlane.f32.xlu0 %v2499
        %v2501 = vpop.xlane.xlu0 %2500
        %v2502 = vsel %vm2468, %v2385, -inf
        %2503 = vmax.xlane.f32.xlu0 %v2502
        %v2504 = vpop.xlane.xlu0 %2503
        %v2505 = vsel %vm2468, %v2390, -inf
        %2506 = vmax.xlane.f32.xlu0 %v2505
        %v2507 = vpop.xlane.xlu0 %2506
        %v2508 = vsel %vm2468, %v2393, -inf
        %2509 = vmax.xlane.f32.xlu0 %v2508
        %v2510 = vpop.xlane.xlu0 %2509
        %v2511 = vsel %vm2468, %v2398, -inf
        %2512 = vmax.xlane.f32.xlu0 %v2511
        %v2513 = vpop.xlane.xlu0 %2512
        %v2514 = vsel %vm2468, %v2401, -inf
        %2515 = vmax.xlane.f32.xlu0 %v2514
        %v2516 = vpop.xlane.xlu0 %2515
        %v2517 = vsel %vm2468, %v2406, -inf
        %2518 = vmax.xlane.f32.xlu0 %v2517
        %v2519 = vpop.xlane.xlu0 %2518
        %v2520 = vsel %vm2468, %v2409, -inf
        %2521 = vmax.xlane.f32.xlu0 %v2520
        %v2522 = vpop.xlane.xlu0 %2521
        %v2523 = vsel %vm2468, %v2414, -inf
        %2524 = vmax.xlane.f32.xlu0 %v2523
        %v2525 = vpop.xlane.xlu0 %2524
        %v2526 = vsel %vm2468, %v2417, -inf
        %2527 = vmax.xlane.f32.xlu0 %v2526
        %v2528 = vpop.xlane.xlu0 %2527
        %v2529 = vsel %vm2468, %v2422, -inf
        %2530 = vmax.xlane.f32.xlu0 %v2529
        %v2531 = vpop.xlane.xlu0 %2530
        %v2532 = vsel %vm2468, %v2425, -inf
        %2533 = vmax.xlane.f32.xlu0 %v2532
        %v2534 = vpop.xlane.xlu0 %2533
        %v2535 = vsel %vm2468, %v2430, -inf
        %2536 = vmax.xlane.f32.xlu0 %v2535
        %v2537 = vpop.xlane.xlu0 %2536
        %v2538 = vsel %vm2468, %v2433, -inf
        %2539 = vmax.xlane.f32.xlu0 %v2538
        %v2540 = vpop.xlane.xlu0 %2539
        %v2541 = vsel %vm2468, %v2438, -inf
        %2542 = vmax.xlane.f32.xlu0 %v2541
        %v2543 = vpop.xlane.xlu0 %2542
        %v2544 = vsel %vm2468, %v2441, -inf
        %2545 = vmax.xlane.f32.xlu0 %v2544
        %v2546 = vpop.xlane.xlu0 %2545
        %v2547 = vsel %vm2468, %v2446, -inf
        %2548 = vmax.xlane.f32.xlu0 %v2547
        %v2549 = vpop.xlane.xlu0 %2548
        %v2550 = vsel %vm2468, %v2449, -inf
        %2551 = vmax.xlane.f32.xlu0 %v2550
        %v2552 = vpop.xlane.xlu0 %2551
        %v2553 = vsel %vm2468, %v2454, -inf
        %2554 = vmax.xlane.f32.xlu0 %v2553
        %v2555 = vpop.xlane.xlu0 %2554
        %v2556 = vsel %vm2468, %v2457, -inf
        %2557 = vmax.xlane.f32.xlu0 %v2556
        %v2558 = vpop.xlane.xlu0 %2557
        %v2559 = vsel %vm2468, %v2462, -inf
        %2560 = vmax.xlane.f32.xlu0 %v2559
        %v2561 = vpop.xlane.xlu0 %2560
        %v2562 = vsel %vm2468, %v2465, -inf
        %2563 = vmax.xlane.f32.xlu0 %v2562
        %v2564 = vpop.xlane.xlu0 %2563
        %v2565 = vsub.f32 %v2342, %v2471
        %v2566 = vsub.f32 %v2345, %v2474
        %v2567 = vsub.f32 %v2350, %v2477
        %v2568 = vsub.f32 %v2353, %v2480
        %v2569 = vsub.f32 %v2358, %v2483
        %v2570 = vsub.f32 %v2361, %v2486
        %v2571 = vsub.f32 %v2366, %v2489
        %v2572 = vsub.f32 %v2369, %v2492
        %v2573 = vsub.f32 %v2374, %v2495
        %v2574 = vsub.f32 %v2377, %v2498
        %v2575 = vsub.f32 %v2382, %v2501
        %v2576 = vsub.f32 %v2385, %v2504
        %v2577 = vsub.f32 %v2390, %v2507
        %v2578 = vsub.f32 %v2393, %v2510
        %v2579 = vsub.f32 %v2398, %v2513
        %v2580 = vsub.f32 %v2401, %v2516
        %v2581 = vsub.f32 %v2406, %v2519
        %v2582 = vsub.f32 %v2409, %v2522
        %v2583 = vsub.f32 %v2414, %v2525
        %v2584 = vsub.f32 %v2417, %v2528
        %v2585 = vsub.f32 %v2422, %v2531
        %v2586 = vsub.f32 %v2425, %v2534
        %v2587 = vsub.f32 %v2430, %v2537
        %v2588 = vsub.f32 %v2433, %v2540
        %v2589 = vsub.f32 %v2438, %v2543
        %v2590 = vsub.f32 %v2441, %v2546
        %v2591 = vsub.f32 %v2446, %v2549
        %v2592 = vsub.f32 %v2449, %v2552
        %v2593 = vsub.f32 %v2454, %v2555
        %v2594 = vsub.f32 %v2457, %v2558
        %v2595 = vsub.f32 %v2462, %v2561
        %v2596 = vsub.f32 %v2465, %v2564
        %v2597 = vmul.f32 %v2565, 1.442695
        %v2598 = vpow.pop %v2597
        %v2599 = vmul.f32 %v2566, 1.442695
        %v2600 = vpow.pop %v2599
        %v2601 = vmul.f32 %v2567, 1.442695
        %v2602 = vpow.pop %v2601
        %v2603 = vmul.f32 %v2568, 1.442695
        %v2604 = vpow.pop %v2603
        %v2605 = vmul.f32 %v2569, 1.442695
        %v2606 = vpow.pop %v2605
        %v2607 = vmul.f32 %v2570, 1.442695
        %v2608 = vpow.pop %v2607
        %v2609 = vmul.f32 %v2571, 1.442695
        %v2610 = vpow.pop %v2609
        %v2611 = vmul.f32 %v2572, 1.442695
        %v2612 = vpow.pop %v2611
        %v2613 = vmul.f32 %v2573, 1.442695
        %v2614 = vpow.pop %v2613
        %v2615 = vmul.f32 %v2574, 1.442695
        %v2616 = vpow.pop %v2615
        %v2617 = vmul.f32 %v2575, 1.442695
        %v2618 = vpow.pop %v2617
        %v2619 = vmul.f32 %v2576, 1.442695
        %v2620 = vpow.pop %v2619
        %v2621 = vmul.f32 %v2577, 1.442695
        %v2622 = vpow.pop %v2621
        %v2623 = vmul.f32 %v2578, 1.442695
        %v2624 = vpow.pop %v2623
        %v2625 = vmul.f32 %v2579, 1.442695
        %v2626 = vpow.pop %v2625
        %v2627 = vmul.f32 %v2580, 1.442695
        %v2628 = vpow.pop %v2627
        %v2629 = vmul.f32 %v2581, 1.442695
        %v2630 = vpow.pop %v2629
        %v2631 = vmul.f32 %v2582, 1.442695
        %v2632 = vpow.pop %v2631
        %v2633 = vmul.f32 %v2583, 1.442695
        %v2634 = vpow.pop %v2633
        %v2635 = vmul.f32 %v2584, 1.442695
        %v2636 = vpow.pop %v2635
        %v2637 = vmul.f32 %v2585, 1.442695
        %v2638 = vpow.pop %v2637
        %v2639 = vmul.f32 %v2586, 1.442695
        %v2640 = vpow.pop %v2639
        %v2641 = vmul.f32 %v2587, 1.442695
        %v2642 = vpow.pop %v2641
        %v2643 = vmul.f32 %v2588, 1.442695
        %v2644 = vpow.pop %v2643
        %v2645 = vmul.f32 %v2589, 1.442695
        %v2646 = vpow.pop %v2645
        %v2647 = vmul.f32 %v2590, 1.442695
        %v2648 = vpow.pop %v2647
        %v2649 = vmul.f32 %v2591, 1.442695
        %v2650 = vpow.pop %v2649
        %v2651 = vmul.f32 %v2592, 1.442695
        %v2652 = vpow.pop %v2651
        %v2653 = vmul.f32 %v2593, 1.442695
        %v2654 = vpow.pop %v2653
        %v2655 = vmul.f32 %v2594, 1.442695
        %v2656 = vpow.pop %v2655
        %v2657 = vmul.f32 %v2595, 1.442695
        %v2658 = vpow.pop %v2657
        %v2659 = vmul.f32 %v2596, 1.442695
        %v2660 = vpow.pop %v2659
        %v2661 = vsel %vm2468, %v2598, 0.0
        %2662 = vadd.xlane.f32.xlu0 %v2661
        %v2663 = vpop.xlane.xlu0 %2662
        %v2664 = vsel %vm2468, %v2600, 0.0
        %2665 = vadd.xlane.f32.xlu0 %v2664
        %v2666 = vpop.xlane.xlu0 %2665
        %v2667 = vsel %vm2468, %v2602, 0.0
        %2668 = vadd.xlane.f32.xlu0 %v2667
        %v2669 = vpop.xlane.xlu0 %2668
        %v2670 = vsel %vm2468, %v2604, 0.0
        %2671 = vadd.xlane.f32.xlu0 %v2670
        %v2672 = vpop.xlane.xlu0 %2671
        %v2673 = vsel %vm2468, %v2606, 0.0
        %2674 = vadd.xlane.f32.xlu0 %v2673
        %v2675 = vpop.xlane.xlu0 %2674
        %v2676 = vsel %vm2468, %v2608, 0.0
        %2677 = vadd.xlane.f32.xlu0 %v2676
        %v2678 = vpop.xlane.xlu0 %2677
        %v2679 = vsel %vm2468, %v2610, 0.0
        %2680 = vadd.xlane.f32.xlu0 %v2679
        %v2681 = vpop.xlane.xlu0 %2680
        %v2682 = vsel %vm2468, %v2612, 0.0
        %2683 = vadd.xlane.f32.xlu0 %v2682
        %v2684 = vpop.xlane.xlu0 %2683
        %v2685 = vsel %vm2468, %v2614, 0.0
        %2686 = vadd.xlane.f32.xlu0 %v2685
        %v2687 = vpop.xlane.xlu0 %2686
        %v2688 = vsel %vm2468, %v2616, 0.0
        %2689 = vadd.xlane.f32.xlu0 %v2688
        %v2690 = vpop.xlane.xlu0 %2689
        %v2691 = vsel %vm2468, %v2618, 0.0
        %2692 = vadd.xlane.f32.xlu0 %v2691
        %v2693 = vpop.xlane.xlu0 %2692
        %v2694 = vsel %vm2468, %v2620, 0.0
        %2695 = vadd.xlane.f32.xlu0 %v2694
        %v2696 = vpop.xlane.xlu0 %2695
        %v2697 = vsel %vm2468, %v2622, 0.0
        %2698 = vadd.xlane.f32.xlu0 %v2697
        %v2699 = vpop.xlane.xlu0 %2698
        %v2700 = vsel %vm2468, %v2624, 0.0
        %2701 = vadd.xlane.f32.xlu0 %v2700
        %v2702 = vpop.xlane.xlu0 %2701
        %v2703 = vsel %vm2468, %v2626, 0.0
        %2704 = vadd.xlane.f32.xlu0 %v2703
        %v2705 = vpop.xlane.xlu0 %2704
        %v2706 = vsel %vm2468, %v2628, 0.0
        %2707 = vadd.xlane.f32.xlu0 %v2706
        %v2708 = vpop.xlane.xlu0 %2707
        %v2709 = vsel %vm2468, %v2630, 0.0
        %2710 = vadd.xlane.f32.xlu0 %v2709
        %v2711 = vpop.xlane.xlu0 %2710
        %v2712 = vsel %vm2468, %v2632, 0.0
        %2713 = vadd.xlane.f32.xlu0 %v2712
        %v2714 = vpop.xlane.xlu0 %2713
        %v2715 = vsel %vm2468, %v2634, 0.0
        %2716 = vadd.xlane.f32.xlu0 %v2715
        %v2717 = vpop.xlane.xlu0 %2716
        %v2718 = vsel %vm2468, %v2636, 0.0
        %2719 = vadd.xlane.f32.xlu0 %v2718
        %v2720 = vpop.xlane.xlu0 %2719
        %v2721 = vsel %vm2468, %v2638, 0.0
        %2722 = vadd.xlane.f32.xlu0 %v2721
        %v2723 = vpop.xlane.xlu0 %2722
        %v2724 = vsel %vm2468, %v2640, 0.0
        %2725 = vadd.xlane.f32.xlu0 %v2724
        %v2726 = vpop.xlane.xlu0 %2725
        %v2727 = vsel %vm2468, %v2642, 0.0
        %2728 = vadd.xlane.f32.xlu0 %v2727
        %v2729 = vpop.xlane.xlu0 %2728
        %v2730 = vsel %vm2468, %v2644, 0.0
        %2731 = vadd.xlane.f32.xlu0 %v2730
        %v2732 = vpop.xlane.xlu0 %2731
        %v2733 = vsel %vm2468, %v2646, 0.0
        %2734 = vadd.xlane.f32.xlu0 %v2733
        %v2735 = vpop.xlane.xlu0 %2734
        %v2736 = vsel %vm2468, %v2648, 0.0
        %2737 = vadd.xlane.f32.xlu0 %v2736
        %v2738 = vpop.xlane.xlu0 %2737
        %v2739 = vsel %vm2468, %v2650, 0.0
        %2740 = vadd.xlane.f32.xlu0 %v2739
        %v2741 = vpop.xlane.xlu0 %2740
        %v2742 = vsel %vm2468, %v2652, 0.0
        %2743 = vadd.xlane.f32.xlu0 %v2742
        %v2744 = vpop.xlane.xlu0 %2743
        %v2745 = vsel %vm2468, %v2654, 0.0
        %2746 = vadd.xlane.f32.xlu0 %v2745
        %v2747 = vpop.xlane.xlu0 %2746
        %v2748 = vsel %vm2468, %v2656, 0.0
        %2749 = vadd.xlane.f32.xlu0 %v2748
        %v2750 = vpop.xlane.xlu0 %2749
        %v2751 = vsel %vm2468, %v2658, 0.0
        %2752 = vadd.xlane.f32.xlu0 %v2751
        %v2753 = vpop.xlane.xlu0 %2752
        %v2754 = vsel %vm2468, %v2660, 0.0
        %2755 = vadd.xlane.f32.xlu0 %v2754
        %v2756 = vpop.xlane.xlu0 %2755
        %v2757 = vlog2.pop %v2663
        %v2758 = vmul.f32 %v2757, 0.6931472
        %v2759 = vlog2.pop %v2666
        %v2760 = vmul.f32 %v2759, 0.6931472
        %v2761 = vlog2.pop %v2669
        %v2762 = vmul.f32 %v2761, 0.6931472
        %v2763 = vlog2.pop %v2672
        %v2764 = vmul.f32 %v2763, 0.6931472
        %v2765 = vlog2.pop %v2675
        %v2766 = vmul.f32 %v2765, 0.6931472
        %v2767 = vlog2.pop %v2678
        %v2768 = vmul.f32 %v2767, 0.6931472
        %v2769 = vlog2.pop %v2681
        %v2770 = vmul.f32 %v2769, 0.6931472
        %v2771 = vlog2.pop %v2684
        %v2772 = vmul.f32 %v2771, 0.6931472
        %v2773 = vlog2.pop %v2687
        %v2774 = vmul.f32 %v2773, 0.6931472
        %v2775 = vlog2.pop %v2690
        %v2776 = vmul.f32 %v2775, 0.6931472
        %v2777 = vlog2.pop %v2693
        %v2778 = vmul.f32 %v2777, 0.6931472
        %v2779 = vlog2.pop %v2696
        %v2780 = vmul.f32 %v2779, 0.6931472
        %v2781 = vlog2.pop %v2699
        %v2782 = vmul.f32 %v2781, 0.6931472
        %v2783 = vlog2.pop %v2702
        %v2784 = vmul.f32 %v2783, 0.6931472
        %v2785 = vlog2.pop %v2705
        %v2786 = vmul.f32 %v2785, 0.6931472
        %v2787 = vlog2.pop %v2708
        %v2788 = vmul.f32 %v2787, 0.6931472
        %v2789 = vlog2.pop %v2711
        %v2790 = vmul.f32 %v2789, 0.6931472
        %v2791 = vlog2.pop %v2714
        %v2792 = vmul.f32 %v2791, 0.6931472
        %v2793 = vlog2.pop %v2717
        %v2794 = vmul.f32 %v2793, 0.6931472
        %v2795 = vlog2.pop %v2720
        %v2796 = vmul.f32 %v2795, 0.6931472
        %v2797 = vlog2.pop %v2723
        %v2798 = vmul.f32 %v2797, 0.6931472
        %v2799 = vlog2.pop %v2726
        %v2800 = vmul.f32 %v2799, 0.6931472
        %v2801 = vlog2.pop %v2729
        %v2802 = vmul.f32 %v2801, 0.6931472
        %v2803 = vlog2.pop %v2732
        %v2804 = vmul.f32 %v2803, 0.6931472
        %v2805 = vlog2.pop %v2735
        %v2806 = vmul.f32 %v2805, 0.6931472
        %v2807 = vlog2.pop %v2738
        %v2808 = vmul.f32 %v2807, 0.6931472
        %v2809 = vlog2.pop %v2741
        %v2810 = vmul.f32 %v2809, 0.6931472
        %v2811 = vlog2.pop %v2744
        %v2812 = vmul.f32 %v2811, 0.6931472
        %v2813 = vlog2.pop %v2747
        %v2814 = vmul.f32 %v2813, 0.6931472
        %v2815 = vlog2.pop %v2750
        %v2816 = vmul.f32 %v2815, 0.6931472
        %v2817 = vlog2.pop %v2753
        %v2818 = vmul.f32 %v2817, 0.6931472
        %v2819 = vlog2.pop %v2756
        %v2820 = vmul.f32 %v2819, 0.6931472
        %v2821 = vsub.f32 %v2565, %v2758
        %v2822 = vsub.f32 %v2566, %v2760
        %v2823 = vsub.f32 %v2567, %v2762
        %v2824 = vsub.f32 %v2568, %v2764
        %v2825 = vsub.f32 %v2569, %v2766
        %v2826 = vsub.f32 %v2570, %v2768
        %v2827 = vsub.f32 %v2571, %v2770
        %v2828 = vsub.f32 %v2572, %v2772
        %v2829 = vsub.f32 %v2573, %v2774
        %v2830 = vsub.f32 %v2574, %v2776
        %v2831 = vsub.f32 %v2575, %v2778
        %v2832 = vsub.f32 %v2576, %v2780
        %v2833 = vsub.f32 %v2577, %v2782
        %v2834 = vsub.f32 %v2578, %v2784
        %v2835 = vsub.f32 %v2579, %v2786
        %v2836 = vsub.f32 %v2580, %v2788
        %v2837 = vsub.f32 %v2581, %v2790
        %v2838 = vsub.f32 %v2582, %v2792
        %v2839 = vsub.f32 %v2583, %v2794
        %v2840 = vsub.f32 %v2584, %v2796
        %v2841 = vsub.f32 %v2585, %v2798
        %v2842 = vsub.f32 %v2586, %v2800
        %v2843 = vsub.f32 %v2587, %v2802
        %v2844 = vsub.f32 %v2588, %v2804
        %v2845 = vsub.f32 %v2589, %v2806
        %v2846 = vsub.f32 %v2590, %v2808
        %v2847 = vsub.f32 %v2591, %v2810
        %v2848 = vsub.f32 %v2592, %v2812
        %v2849 = vsub.f32 %v2593, %v2814
        %v2850 = vsub.f32 %v2594, %v2816
        %v2851 = vsub.f32 %v2595, %v2818
        %v2852 = vsub.f32 %v2596, %v2820
        %v2853 = vld [vmem:[%s501] sm:$0xff]
        %v2854 = vld [vmem:[%s501 + $0x8] sm:$0xff]
        %v2855 = vld [vmem:[%s501 + $0x10] sm:$0xff]
        %v2856 = vld [vmem:[%s501 + $0x18] sm:$0xff]
        %v2857 = vld [vmem:[%s501 + $0x20] sm:$0xff]
        %v2858 = vld [vmem:[%s501 + $0x28] sm:$0xff]
        %v2859 = vld [vmem:[%s501 + $0x30] sm:$0xff]
        %v2860 = vld [vmem:[%s501 + $0x38] sm:$0xff]
        %v2861 = vld [vmem:[%s501 + $0x40] sm:$0xff]
        %v2862 = vld [vmem:[%s501 + $0x48] sm:$0xff]
        %v2863 = vld [vmem:[%s501 + $0x50] sm:$0xff]
        %v2864 = vld [vmem:[%s501 + $0x58] sm:$0xff]
        %v2865 = vld [vmem:[%s501 + $0x60] sm:$0xff]
        %v2866 = vld [vmem:[%s501 + $0x68] sm:$0xff]
        %v2867 = vld [vmem:[%s501 + $0x70] sm:$0xff]
        %v2868 = vld [vmem:[%s501 + $0x78] sm:$0xff]
        %v2869 = vld [vmem:[%s501 + $0x80] sm:$0xff]
        %v2870 = vld [vmem:[%s501 + $0x88] sm:$0xff]
        %v2871 = vld [vmem:[%s501 + $0x90] sm:$0xff]
        %v2872 = vld [vmem:[%s501 + $0x98] sm:$0xff]
        %v2873 = vld [vmem:[%s501 + $0xa0] sm:$0xff]
        %v2874 = vld [vmem:[%s501 + $0xa8] sm:$0xff]
        %v2875 = vld [vmem:[%s501 + $0xb0] sm:$0xff]
        %v2876 = vld [vmem:[%s501 + $0xb8] sm:$0xff]
        %v2877 = vld [vmem:[%s501 + $0xc0] sm:$0xff]
        %v2878 = vld [vmem:[%s501 + $0xc8] sm:$0xff]
        %v2879 = vld [vmem:[%s501 + $0xd0] sm:$0xff]
        %v2880 = vld [vmem:[%s501 + $0xd8] sm:$0xff]
        %v2881 = vld [vmem:[%s501 + $0xe0] sm:$0xff]
        %v2882 = vld [vmem:[%s501 + $0xe8] sm:$0xff]
        %v2883 = vld [vmem:[%s501 + $0xf0] sm:$0xff]
        %v2884 = vld [vmem:[%s501 + $0xf8] sm:$0xff]
        %vm2885 = vcmask 7168
        %v2886 = vsel %vm2885, %v2853, 0.0
        %v2887 = vsel %vm2885, %v2854, 0.0
        %v2888 = vadd.f32 %v2886, %v2887
        %v2889 = vsel %vm2885, %v2855, 0.0
        %v2890 = vadd.f32 %v2888, %v2889
        %v2891 = vsel %vm2885, %v2856, 0.0
        %v2892 = vadd.f32 %v2890, %v2891
        %v2893 = vsel %vm2885, %v2857, 0.0
        %v2894 = vadd.f32 %v2892, %v2893
        %v2895 = vsel %vm2885, %v2858, 0.0
        %v2896 = vadd.f32 %v2894, %v2895
        %v2897 = vsel %vm2885, %v2859, 0.0
        %v2898 = vadd.f32 %v2896, %v2897
        %v2899 = vsel %vm2885, %v2860, 0.0
        %v2900 = vadd.f32 %v2898, %v2899
        %v2901 = vsel %vm2885, %v2861, 0.0
        %v2902 = vadd.f32 %v2900, %v2901
        %v2903 = vsel %vm2885, %v2862, 0.0
        %v2904 = vadd.f32 %v2902, %v2903
        %v2905 = vsel %vm2885, %v2863, 0.0
        %v2906 = vadd.f32 %v2904, %v2905
        %v2907 = vsel %vm2885, %v2864, 0.0
        %v2908 = vadd.f32 %v2906, %v2907
        %v2909 = vsel %vm2885, %v2865, 0.0
        %v2910 = vadd.f32 %v2908, %v2909
        %v2911 = vsel %vm2885, %v2866, 0.0
        %v2912 = vadd.f32 %v2910, %v2911
        %v2913 = vsel %vm2885, %v2867, 0.0
        %v2914 = vadd.f32 %v2912, %v2913
        %v2915 = vsel %vm2885, %v2868, 0.0
        %v2916 = vadd.f32 %v2914, %v2915
        %v2917 = vsel %vm2885, %v2869, 0.0
        %v2918 = vadd.f32 %v2916, %v2917
        %v2919 = vsel %vm2885, %v2870, 0.0
        %v2920 = vadd.f32 %v2918, %v2919
        %v2921 = vsel %vm2885, %v2871, 0.0
        %v2922 = vadd.f32 %v2920, %v2921
        %v2923 = vsel %vm2885, %v2872, 0.0
        %v2924 = vadd.f32 %v2922, %v2923
        %v2925 = vsel %vm2885, %v2873, 0.0
        %v2926 = vadd.f32 %v2924, %v2925
        %v2927 = vsel %vm2885, %v2874, 0.0
        %v2928 = vadd.f32 %v2926, %v2927
        %v2929 = vsel %vm2885, %v2875, 0.0
        %v2930 = vadd.f32 %v2928, %v2929
        %v2931 = vsel %vm2885, %v2876, 0.0
        %v2932 = vadd.f32 %v2930, %v2931
        %v2933 = vsel %vm2885, %v2877, 0.0
        %v2934 = vadd.f32 %v2932, %v2933
        %v2935 = vsel %vm2885, %v2878, 0.0
        %v2936 = vadd.f32 %v2934, %v2935
        %v2937 = vsel %vm2885, %v2879, 0.0
        %v2938 = vadd.f32 %v2936, %v2937
        %v2939 = vsel %vm2885, %v2880, 0.0
        %v2940 = vadd.f32 %v2938, %v2939
        %v2941 = vsel %vm2885, %v2881, 0.0
        %v2942 = vadd.f32 %v2940, %v2941
        %v2943 = vsel %vm2885, %v2882, 0.0
        %v2944 = vadd.f32 %v2942, %v2943
        %v2945 = vsel %vm2885, %v2883, 0.0
        %v2946 = vadd.f32 %v2944, %v2945
        %v2947 = vsel %vm2885, %v2884, 0.0
        %v2948 = vadd.f32 %v2946, %v2947
        %2949 = vadd.xlane.f32.xlu0 %v2948
        %v2950 = vpop.xlane.xlu0 %2949
        %v2951 = vrot.slane %v2950, 4
        %v2952 = vadd.f32 %v2950, %v2951
        %v2953 = vrot.slane %v2952, 2
        %v2954 = vadd.f32 %v2952, %v2953
        %v2955 = vrot.slane %v2954, 1
        %v2956 = vadd.f32 %v2954, %v2955
        %s2957 = vtos %v2956
        %2959 = vset.pattern.permute.xlu0 0
        %2960 = vperm.xlu0 %2959, %v2853
        %v2961 = vpop.permute.xlu0 %2960
        %2964 = vset.pattern.permute.xlu0 0
        %2965 = vperm.xlu0 %2964, %v2854
        %v2966 = vpop.permute.xlu0 %2965
        %2969 = vset.pattern.permute.xlu0 0
        %2970 = vperm.xlu0 %2969, %v2855
        %v2971 = vpop.permute.xlu0 %2970
        %2974 = vset.pattern.permute.xlu0 0
        %2975 = vperm.xlu0 %2974, %v2856
        %v2976 = vpop.permute.xlu0 %2975
        %2979 = vset.pattern.permute.xlu0 0
        %2980 = vperm.xlu0 %2979, %v2857
        %v2981 = vpop.permute.xlu0 %2980
        %2984 = vset.pattern.permute.xlu0 0
        %2985 = vperm.xlu0 %2984, %v2858
        %v2986 = vpop.permute.xlu0 %2985
        %2989 = vset.pattern.permute.xlu0 0
        %2990 = vperm.xlu0 %2989, %v2859
        %v2991 = vpop.permute.xlu0 %2990
        %2994 = vset.pattern.permute.xlu0 0
        %2995 = vperm.xlu0 %2994, %v2860
        %v2996 = vpop.permute.xlu0 %2995
        %2999 = vset.pattern.permute.xlu0 0
        %3000 = vperm.xlu0 %2999, %v2861
        %v3001 = vpop.permute.xlu0 %3000
        %3004 = vset.pattern.permute.xlu0 0
        %3005 = vperm.xlu0 %3004, %v2862
        %v3006 = vpop.permute.xlu0 %3005
        %3009 = vset.pattern.permute.xlu0 0
        %3010 = vperm.xlu0 %3009, %v2863
        %v3011 = vpop.permute.xlu0 %3010
        %3014 = vset.pattern.permute.xlu0 0
        %3015 = vperm.xlu0 %3014, %v2864
        %v3016 = vpop.permute.xlu0 %3015
        %3019 = vset.pattern.permute.xlu0 0
        %3020 = vperm.xlu0 %3019, %v2865
        %v3021 = vpop.permute.xlu0 %3020
        %3024 = vset.pattern.permute.xlu0 0
        %3025 = vperm.xlu0 %3024, %v2866
        %v3026 = vpop.permute.xlu0 %3025
        %3029 = vset.pattern.permute.xlu0 0
        %3030 = vperm.xlu0 %3029, %v2867
        %v3031 = vpop.permute.xlu0 %3030
        %3034 = vset.pattern.permute.xlu0 0
        %3035 = vperm.xlu0 %3034, %v2868
        %v3036 = vpop.permute.xlu0 %3035
        %3039 = vset.pattern.permute.xlu0 0
        %3040 = vperm.xlu0 %3039, %v2869
        %v3041 = vpop.permute.xlu0 %3040
        %3044 = vset.pattern.permute.xlu0 0
        %3045 = vperm.xlu0 %3044, %v2870
        %v3046 = vpop.permute.xlu0 %3045
        %3049 = vset.pattern.permute.xlu0 0
        %3050 = vperm.xlu0 %3049, %v2871
        %v3051 = vpop.permute.xlu0 %3050
        %3054 = vset.pattern.permute.xlu0 0
        %3055 = vperm.xlu0 %3054, %v2872
        %v3056 = vpop.permute.xlu0 %3055
        %3059 = vset.pattern.permute.xlu0 0
        %3060 = vperm.xlu0 %3059, %v2873
        %v3061 = vpop.permute.xlu0 %3060
        %3064 = vset.pattern.permute.xlu0 0
        %3065 = vperm.xlu0 %3064, %v2874
        %v3066 = vpop.permute.xlu0 %3065
        %3069 = vset.pattern.permute.xlu0 0
        %3070 = vperm.xlu0 %3069, %v2875
        %v3071 = vpop.permute.xlu0 %3070
        %3074 = vset.pattern.permute.xlu0 0
        %3075 = vperm.xlu0 %3074, %v2876
        %v3076 = vpop.permute.xlu0 %3075
        %3079 = vset.pattern.permute.xlu0 0
        %3080 = vperm.xlu0 %3079, %v2877
        %v3081 = vpop.permute.xlu0 %3080
        %3084 = vset.pattern.permute.xlu0 0
        %3085 = vperm.xlu0 %3084, %v2878
        %v3086 = vpop.permute.xlu0 %3085
        %3089 = vset.pattern.permute.xlu0 0
        %3090 = vperm.xlu0 %3089, %v2879
        %v3091 = vpop.permute.xlu0 %3090
        %3094 = vset.pattern.permute.xlu0 0
        %3095 = vperm.xlu0 %3094, %v2880
        %v3096 = vpop.permute.xlu0 %3095
        %3099 = vset.pattern.permute.xlu0 0
        %3100 = vperm.xlu0 %3099, %v2881
        %v3101 = vpop.permute.xlu0 %3100
        %3104 = vset.pattern.permute.xlu0 0
        %3105 = vperm.xlu0 %3104, %v2882
        %v3106 = vpop.permute.xlu0 %3105
        %3109 = vset.pattern.permute.xlu0 0
        %3110 = vperm.xlu0 %3109, %v2883
        %v3111 = vpop.permute.xlu0 %3110
        %3114 = vset.pattern.permute.xlu0 0
        %3115 = vperm.xlu0 %3114, %v2884
        %v3116 = vpop.permute.xlu0 %3115
        %v3118 = vmul.f32 %v2821, %v2961
        %v3119 = vmul.f32 %v2822, %v2966
        %v3120 = vmul.f32 %v2823, %v2971
        %v3121 = vmul.f32 %v2824, %v2976
        %v3122 = vmul.f32 %v2825, %v2981
        %v3123 = vmul.f32 %v2826, %v2986
        %v3124 = vmul.f32 %v2827, %v2991
        %v3125 = vmul.f32 %v2828, %v2996
        %v3126 = vmul.f32 %v2829, %v3001
        %v3127 = vmul.f32 %v2830, %v3006
        %v3128 = vmul.f32 %v2831, %v3011
        %v3129 = vmul.f32 %v2832, %v3016
        %v3130 = vmul.f32 %v2833, %v3021
        %v3131 = vmul.f32 %v2834, %v3026
        %v3132 = vmul.f32 %v2835, %v3031
        %v3133 = vmul.f32 %v2836, %v3036
        %v3134 = vmul.f32 %v2837, %v3041
        %v3135 = vmul.f32 %v2838, %v3046
        %v3136 = vmul.f32 %v2839, %v3051
        %v3137 = vmul.f32 %v2840, %v3056
        %v3138 = vmul.f32 %v2841, %v3061
        %v3139 = vmul.f32 %v2842, %v3066
        %v3140 = vmul.f32 %v2843, %v3071
        %v3141 = vmul.f32 %v2844, %v3076
        %v3142 = vmul.f32 %v2845, %v3081
        %v3143 = vmul.f32 %v2846, %v3086
        %v3144 = vmul.f32 %v2847, %v3091
        %v3145 = vmul.f32 %v2848, %v3096
        %v3146 = vmul.f32 %v2849, %v3101
        %v3147 = vmul.f32 %v2850, %v3106
        %v3148 = vmul.f32 %v2851, %v3111
        %v3149 = vmul.f32 %v2852, %v3116
        %v3150 = vsel %vm2468, %v3118, 0.0
        %v3151 = vsel %vm2468, %v3119, 0.0
        %v3152 = vadd.f32 %v3150, %v3151
        %v3153 = vsel %vm2468, %v3120, 0.0
        %v3154 = vadd.f32 %v3152, %v3153
        %v3155 = vsel %vm2468, %v3121, 0.0
        %v3156 = vadd.f32 %v3154, %v3155
        %v3157 = vsel %vm2468, %v3122, 0.0
        %v3158 = vadd.f32 %v3156, %v3157
        %v3159 = vsel %vm2468, %v3123, 0.0
        %v3160 = vadd.f32 %v3158, %v3159
        %v3161 = vsel %vm2468, %v3124, 0.0
        %v3162 = vadd.f32 %v3160, %v3161
        %v3163 = vsel %vm2468, %v3125, 0.0
        %v3164 = vadd.f32 %v3162, %v3163
        %v3165 = vsel %vm2468, %v3126, 0.0
        %v3166 = vadd.f32 %v3164, %v3165
        %v3167 = vsel %vm2468, %v3127, 0.0
        %v3168 = vadd.f32 %v3166, %v3167
        %v3169 = vsel %vm2468, %v3128, 0.0
        %v3170 = vadd.f32 %v3168, %v3169
        %v3171 = vsel %vm2468, %v3129, 0.0
        %v3172 = vadd.f32 %v3170, %v3171
        %v3173 = vsel %vm2468, %v3130, 0.0
        %v3174 = vadd.f32 %v3172, %v3173
        %v3175 = vsel %vm2468, %v3131, 0.0
        %v3176 = vadd.f32 %v3174, %v3175
        %v3177 = vsel %vm2468, %v3132, 0.0
        %v3178 = vadd.f32 %v3176, %v3177
        %v3179 = vsel %vm2468, %v3133, 0.0
        %v3180 = vadd.f32 %v3178, %v3179
        %v3181 = vsel %vm2468, %v3134, 0.0
        %v3182 = vadd.f32 %v3180, %v3181
        %v3183 = vsel %vm2468, %v3135, 0.0
        %v3184 = vadd.f32 %v3182, %v3183
        %v3185 = vsel %vm2468, %v3136, 0.0
        %v3186 = vadd.f32 %v3184, %v3185
        %v3187 = vsel %vm2468, %v3137, 0.0
        %v3188 = vadd.f32 %v3186, %v3187
        %v3189 = vsel %vm2468, %v3138, 0.0
        %v3190 = vadd.f32 %v3188, %v3189
        %v3191 = vsel %vm2468, %v3139, 0.0
        %v3192 = vadd.f32 %v3190, %v3191
        %v3193 = vsel %vm2468, %v3140, 0.0
        %v3194 = vadd.f32 %v3192, %v3193
        %v3195 = vsel %vm2468, %v3141, 0.0
        %v3196 = vadd.f32 %v3194, %v3195
        %v3197 = vsel %vm2468, %v3142, 0.0
        %v3198 = vadd.f32 %v3196, %v3197
        %v3199 = vsel %vm2468, %v3143, 0.0
        %v3200 = vadd.f32 %v3198, %v3199
        %v3201 = vsel %vm2468, %v3144, 0.0
        %v3202 = vadd.f32 %v3200, %v3201
        %v3203 = vsel %vm2468, %v3145, 0.0
        %v3204 = vadd.f32 %v3202, %v3203
        %v3205 = vsel %vm2468, %v3146, 0.0
        %v3206 = vadd.f32 %v3204, %v3205
        %v3207 = vsel %vm2468, %v3147, 0.0
        %v3208 = vadd.f32 %v3206, %v3207
        %v3209 = vsel %vm2468, %v3148, 0.0
        %v3210 = vadd.f32 %v3208, %v3209
        %v3211 = vsel %vm2468, %v3149, 0.0
        %v3212 = vadd.f32 %v3210, %v3211
        %v3213 = vrot.slane %v3212, 4
        %v3214 = vadd.f32 %v3212, %v3213
        %v3215 = vrot.slane %v3214, 2
        %v3216 = vadd.f32 %v3214, %v3215
        %v3217 = vrot.slane %v3216, 1
        %v3218 = vadd.f32 %v3216, %v3217
        %v3219 = vstv %s2957
        %v3220 = vrcp.pop %v3219
        %v3221 = vmul.f32 %v3218, %v3220
        %vm3222 = vcmask 57344
        %3223 = vst.msk [vmem:[%s496] sm:$0x1] %vm3222, %v3221
        %s3224 = sand.u32 %s120, 1
        %s3225 = scalar_lea.sflag [#allocation5], %s3224
        %s3226 = sand.u32 %s120, 1
        %s3227 = scalar_lea.vmem [#allocation4], %s3226
        // Predicated region
        $region75: #{birnn_classifier.5} parent=69 // pred_check
          %p3228 = pneg %p130
        $region76: #{birnn_classifier.5} parent=69 // pred_check_branch
          %3230 = sbr.rel (%p3228) target = $region78
        $region77: #{birnn_classifier.5} parent=69 // pred_region
          %s3232 = ssub.s32 16, 16
          %3233 = vsyncadd %s3225, %s3232
          %s3234 = smul.addr %s18, 16
          %s3235 = scalar_lea.hbm %s4, %s3234
          %s3237 = sshll.u32 %s3227, 4
          %s3238 = int_to_ptr.vmem [resolvable:$true] %s3237
          %3240 = dma.vmem_to_hbm [thread:$0]  %s3238, 16, %s3235, %s3225
        $region78: #{birnn_classifier.5} parent=69 // pred_fallthru
          _
      $region70: #{birnn_classifier.5} parent=5 // pred_fallthru
        _
      %p3241 = scmp.le.s32.totalorder 2, %s13
      // Predicated region
      $region79: #{birnn_classifier.5} parent=5 // pred_check
        %p3242 = pneg %p3241
      $region80: #{birnn_classifier.5} parent=5 // pred_check_branch
        %3244 = sbr.rel (%p3242) target = $region82
      $region81: #{birnn_classifier.5} parent=5 // pred_region
        %s3245 = ssub.s32 %s13, 2
        // Predicated region
        $region83: #{birnn_classifier.5} parent=81 // pred_check
          %p3246 = pneg %p136
        $region84: #{birnn_classifier.5} parent=81 // pred_check_branch
          %3248 = sbr.rel (%p3246) target = $region86
        $region85: #{birnn_classifier.5} parent=81 // pred_region
          %s3249 = sand.u32 %s121, 1
          %s3250 = scalar_lea.sflag [#allocation5], %s3249
          %s3251 = sand.u32 %s121, 1
          %s3252 = scalar_lea.vmem [#allocation4], %s3251
          %3253 = dma.done %s3250, 16
        $region86: #{birnn_classifier.5} parent=81 // pred_fallthru
          _
      $region82: #{birnn_classifier.5} parent=5 // pred_fallthru
        _
    $region6: #{birnn_classifier.5} parent=1 // loop_footer
      %s17 = sadd.s32 1, %s13
    $region7: #{birnn_classifier.5} parent=1 // loop_footer_branch
      %12 = sbr.rel target = $region3
    $region8: #{birnn_classifier.5} parent=1 // loop_exit
      _
    %3254 = vsyncpa [#allocation5], 1
    %s3255 = scalar_lea.sflag [#allocation5], 1
    %3256 = vsyncpa %s3255, 1

</llo_original>
